<compile_context>
chip_gen: v7x
topology: tpu7x:2x2x1
jax: 0.10.0
libtpu: 0.0.40
codegen_flags: <defaults>
</compile_context>

<pallas_src>
import functools

import jax
import jax.numpy as jnp
from jax.experimental import pallas as pl
from jax.experimental.pallas import tpu as pltpu

# ---- synthetic hp ----
ENC_HIDDEN = 32     # hp.encoder_hidden
FILTER     = 32     # filter size
KERNEL     = 3      # conv kernel size (halo logic below assumes 3)
LN_EPS     = 1e-5


def style_predictor_kernel(
    t_len, t_tile,                      # static (bound via functools.partial)
    xw_ref,                             # (B, t_tile + 4, H) overlapping window
    w1f_ref, b1_ref, g1_ref, be1_ref,   # (3H, F) bf16, (1, F), (1, F), (1, F)
    w2f_ref, b2_ref, g2_ref, be2_ref,   # (3F, F) bf16, (1, F), (1, F), (1, F)
    lw_ref, lb_ref,                     # (1, F), (1, 1) in SMEM
    mask_ref,                           # (B, t_tile) float32, 1.0 where masked
    out_ref,                            # (B, t_tile)
):
    i = pl.program_id(0)
    B, Tw, _ = xw_ref.shape
    F = w1f_ref.shape[1]
    T1 = Tw - 2                         # = t_tile + 2 conv1 rows needed by conv2

    def layer_norm(h, g, be):
        mean = jnp.mean(h, axis=-1, keepdims=True)
        var = jnp.mean(jnp.square(h - mean), axis=-1, keepdims=True)
        return (h - mean) * jax.lax.rsqrt(var + LN_EPS) * g + be

    # ---- conv1d_1: 3 taps fused into a single (3H)-contraction MXU matmul ----
    unf1 = jnp.concatenate(
        [xw_ref[:, 0:T1, :], xw_ref[:, 1:T1 + 1, :], xw_ref[:, 2:T1 + 2, :]],
        axis=-1,
    ).astype(jnp.bfloat16)                                   # (B, T1, 3H)
    y1 = jnp.einsum('btc,cf->btf', unf1, w1f_ref[...],
                    preferred_element_type=jnp.float32)      # (B, T1, F)
    h = layer_norm(jnp.maximum(y1 + b1_ref[...], 0.0),       # relu_1, layer_norm_1
                   g1_ref[...], be1_ref[...])
    # dropout_1: eval mode -> identity

    # Zero rows whose global time index falls outside [0, T): this reproduces
    # the zero padding that conv1d_2 sees in the reference implementation.
    g1pos = i * t_tile - 1 + jax.lax.broadcasted_iota(jnp.int32, (B, T1, F), 1)
    h = jnp.where(jnp.logical_and(g1pos >= 0, g1pos < t_len), h, 0.0)

    # ---- conv1d_2: same fused 3-tap matmul ----
    unf2 = jnp.concatenate(
        [h[:, 0:t_tile, :], h[:, 1:t_tile + 1, :], h[:, 2:t_tile + 2, :]],
        axis=-1,
    ).astype(jnp.bfloat16)                                   # (B, t_tile, 3F)
    y2 = jnp.einsum('btc,cf->btf', unf2, w2f_ref[...],
                    preferred_element_type=jnp.float32)      # (B, t_tile, F)
    h2 = layer_norm(jnp.maximum(y2 + b2_ref[...], 0.0),      # relu_2, layer_norm_2
                    g2_ref[...], be2_ref[...])
    # dropout_2: eval mode -> identity

    # ---- linear_layer (F -> 1), squeeze(-1), masked_fill(mask, 0.0) ----
    vals = jnp.sum(h2 * lw_ref[...], axis=-1) + lb_ref[0, 0]  # (B, t_tile)
    out_ref[...] = jnp.where(mask_ref[...] > 0.5, 0.0, vals)


def _round_up(a, b):
    return (a + b - 1) // b * b


def style_predictor(x, params, mask_bool, *, t_tile=256):
    """x: (B, T, H) f32; mask_bool: (B, T) bool (True = masked/pad)."""
    (w1, b1, g1, be1, w2, b2, g2, be2, lw, lb) = params
    B, T, H = x.shape
    K, _, F = w1.shape
    assert K == 3
    halo = 2                                   # receptive-field halo of 2 stacked k=3 convs

    # lane-dense tiles: t_tile is a multiple of 128, clamped to the padded length
    t_tile = max(128, min(t_tile, _round_up(T, 128)))
    T_pad = _round_up(T, t_tile)
    n_tiles = T_pad // t_tile
    Tw = t_tile + 2 * halo

    # zero-pad the time axis (conv zero padding + tile rounding), then build one
    # overlapping window per grid step: (n_tiles, B, Tw, H).
    x_p = jnp.pad(x, ((0, 0), (halo, halo + T_pad - T), (0, 0)))
    windows = jnp.stack(
        [x_p[:, i * t_tile: i * t_tile + Tw, :] for i in range(n_tiles)], axis=0)

    # fold the 3 conv taps into single (3*C_in, C_out) weights; bf16 for the MXU.
    w1f = w1.reshape(K * H, F).astype(jnp.bfloat16)
    w2f = w2.reshape(K * F, F).astype(jnp.bfloat16)

    mask_f = jnp.pad(mask_bool.astype(jnp.float32), ((0, 0), (0, T_pad - T)),
                     constant_values=1.0)

    kernel = functools.partial(style_predictor_kernel, T, t_tile)
    const = lambda i: (0, 0)                   # resident parameter blocks

    out = pl.pallas_call(
        kernel,
        out_shape=jax.ShapeDtypeStruct((B, T_pad), jnp.float32),
        grid=(n_tiles,),
        in_specs=[
            pl.BlockSpec((None, B, Tw, H), lambda i: (i, 0, 0, 0)),   # x windows
            pl.BlockSpec((K * H, F), const),                          # w1 (fused taps)
            pl.BlockSpec((1, F), const),                              # b1
            pl.BlockSpec((1, F), const),                              # ln1 gain
            pl.BlockSpec((1, F), const),                              # ln1 bias
            pl.BlockSpec((K * F, F), const),                          # w2 (fused taps)
            pl.BlockSpec((1, F), const),                              # b2
            pl.BlockSpec((1, F), const),                              # ln2 gain
            pl.BlockSpec((1, F), const),                              # ln2 bias
            pl.BlockSpec((1, F), const),                              # linear weight
            pl.BlockSpec(memory_space=pltpu.MemorySpace.SMEM),        # linear bias scalar
            pl.BlockSpec((B, t_tile), lambda i: (0, i)),              # mask tile
        ],
        out_specs=pl.BlockSpec((B, t_tile), lambda i: (0, i)),        # lane-dense out
        compiler_params=pltpu.CompilerParams(
            dimension_semantics=("parallel",),       # v7x megacore; no-op on v5e/v6e
            vmem_limit_bytes=32 * 1024 * 1024,
        ),
    )(windows, w1f, b1, g1, be1, w2f, b2, g2, be2, lw, lb, mask_f)

    return out[:, :T]


# ---- pure-JAX reference (same math, same bf16 MXU operands) ----
def ref_forward(x, params, mask_bool):
    (w1, b1, g1, be1, w2, b2, g2, be2, lw, lb) = params

    def conv(h, w, b):
        K = w.shape[0]
        T = h.shape[1]
        pad = (K - 1) // 2
        hp_ = jnp.pad(h, ((0, 0), (pad, pad), (0, 0)))
        taps = jnp.concatenate([hp_[:, k:k + T, :] for k in range(K)], axis=-1)
        wf = w.reshape(K * w.shape[1], w.shape[2])
        y = jnp.einsum('btc,cf->btf', taps.astype(jnp.bfloat16),
                       wf.astype(jnp.bfloat16),
                       preferred_element_type=jnp.float32)
        return y + b

    def ln(h, g, be):
        m = jnp.mean(h, axis=-1, keepdims=True)
        v = jnp.mean(jnp.square(h - m), axis=-1, keepdims=True)
        return (h - m) * jax.lax.rsqrt(v + LN_EPS) * g + be

    h = ln(jax.nn.relu(conv(x, w1, b1)), g1, be1)
    h = ln(jax.nn.relu(conv(h, w2, b2)), g2, be2)
    out = jnp.sum(h * lw, axis=-1) + lb[0, 0]
    return jnp.where(mask_bool, 0.0, out)


def make_params(key):
    ks = jax.random.split(key, 4)
    # conv weights stored as (K, C_in, C_out)
    w1 = jax.random.normal(ks[0], (KERNEL, ENC_HIDDEN, FILTER), jnp.float32) * 0.08
    b1 = jax.random.normal(ks[1], (1, FILTER), jnp.float32) * 0.01
    g1 = jnp.ones((1, FILTER), jnp.float32)
    be1 = jnp.zeros((1, FILTER), jnp.float32)
    w2 = jax.random.normal(ks[2], (KERNEL, FILTER, FILTER), jnp.float32) * 0.08
    b2 = jax.random.normal(ks[3], (1, FILTER), jnp.float32) * 0.01
    g2 = jnp.ones((1, FILTER), jnp.float32)
    be2 = jnp.zeros((1, FILTER), jnp.float32)
    lw = jax.random.normal(jax.random.PRNGKey(42), (1, FILTER), jnp.float32) * 0.1
    lb = jnp.zeros((1, 1), jnp.float32)
    return (w1, b1, g1, be1, w2, b2, g2, be2, lw, lb)


if __name__ == "__main__":
    key = jax.random.PRNGKey(0)
    kx, kx2, kp = jax.random.split(key, 3)
    params = make_params(kp)

    run = jax.jit(style_predictor, static_argnames=("t_tile",))

    # case 1: small shapes consistent with the module (B=2, T=8, hidden=32)
    B, T = 2, 8
    encoder_output = jax.random.normal(kx, (B, T, ENC_HIDDEN), jnp.float32)
    lengths = jnp.array([T, 5])
    mask = jnp.arange(T)[None, :] >= lengths[:, None]          # (B, T) bool
    out = jax.block_until_ready(run(encoder_output, params, mask, t_tile=128))
    ref = ref_forward(encoder_output, params, mask)
    assert out.shape == (B, T)
    assert jnp.allclose(out, ref, atol=1e-3, rtol=1e-3), (out, ref)

    # case 2: multi-tile grid (exercises the time tiling + conv halo handling)
    B2, T2 = 2, 300
    x2 = jax.random.normal(kx2, (B2, T2, ENC_HIDDEN), jnp.float32)
    lengths2 = jnp.array([T2, 257])
    mask2 = jnp.arange(T2)[None, :] >= lengths2[:, None]
    out2 = jax.block_until_ready(run(x2, params, mask2, t_tile=128))
    ref2 = ref_forward(x2, params, mask2)
    assert out2.shape == (B2, T2)
    assert jnp.allclose(out2, ref2, atol=1e-3, rtol=1e-3), (out2, ref2)

    print("KERNEL_OK")
</pallas_src>

<mosaic_0001>
module attributes {stable_mosaic.version = 11 : i64} {
  func.func @style_predictor_kernel(%arg0: i32, %arg1: memref<1x2x132x32xf32, #tpu.memory_space<vmem>>, %arg2: memref<96x32xbf16, #tpu.memory_space<vmem>>, %arg3: memref<1x32xf32, #tpu.memory_space<vmem>>, %arg4: memref<1x32xf32, #tpu.memory_space<vmem>>, %arg5: memref<1x32xf32, #tpu.memory_space<vmem>>, %arg6: memref<96x32xbf16, #tpu.memory_space<vmem>>, %arg7: memref<1x32xf32, #tpu.memory_space<vmem>>, %arg8: memref<1x32xf32, #tpu.memory_space<vmem>>, %arg9: memref<1x32xf32, #tpu.memory_space<vmem>>, %arg10: memref<1x32xf32, #tpu.memory_space<vmem>>, %arg11: memref<1x1xf32, #tpu.memory_space<smem>>, %arg12: memref<2x128xf32, #tpu.memory_space<vmem>>, %arg13: memref<2x128xf32, #tpu.memory_space<vmem>>) attributes {dimension_semantics = [#tpu.dimension_semantics<parallel>], iteration_bounds = array<i64: 1>, scalar_prefetch = 0 : i64, scratch_operands = 0 : i64, tpu.core_type = #tpu.core_type<tc>, window_params = [{transform_indices = @transform_0, window_bounds = array<i64: 1, 2, 132, 32>}, {pipeline_mode = #tpu.pipeline_mode<synchronous>, transform_indices = @transform_1, window_bounds = array<i64: 96, 32>}, {pipeline_mode = #tpu.pipeline_mode<synchronous>, transform_indices = @transform_2, window_bounds = array<i64: 1, 32>}, {pipeline_mode = #tpu.pipeline_mode<synchronous>, transform_indices = @transform_3, window_bounds = array<i64: 1, 32>}, {pipeline_mode = #tpu.pipeline_mode<synchronous>, transform_indices = @transform_4, window_bounds = array<i64: 1, 32>}, {pipeline_mode = #tpu.pipeline_mode<synchronous>, transform_indices = @transform_5, window_bounds = array<i64: 96, 32>}, {pipeline_mode = #tpu.pipeline_mode<synchronous>, transform_indices = @transform_6, window_bounds = array<i64: 1, 32>}, {pipeline_mode = #tpu.pipeline_mode<synchronous>, transform_indices = @transform_7, window_bounds = array<i64: 1, 32>}, {pipeline_mode = #tpu.pipeline_mode<synchronous>, transform_indices = @transform_8, window_bounds = array<i64: 1, 32>}, {pipeline_mode = #tpu.pipeline_mode<synchronous>, transform_indices = @transform_9, window_bounds = array<i64: 1, 32>}, {transform_indices = @transform_10, window_bounds = array<i64: 1, 1>}, {transform_indices = @transform_11, window_bounds = array<i64: 2, 128>}, {transform_indices = @transform_12, window_bounds = array<i64: 2, 128>}]} {
    %c0 = arith.constant 0 : index
    %c0_0 = arith.constant 0 : index
    %c0_1 = arith.constant 0 : index
    %c0_2 = arith.constant 0 : index
    %0 = vector.load %arg1[%c0, %c0_0, %c0_1, %c0_2] : memref<1x2x132x32xf32, #tpu.memory_space<vmem>>, vector<1x2x130x32xf32>
    %1 = vector.shape_cast %0 : vector<1x2x130x32xf32> to vector<2x130x32xf32>
    %c0_3 = arith.constant 0 : index
    %c0_4 = arith.constant 0 : index
    %c1 = arith.constant 1 : index
    %c0_5 = arith.constant 0 : index
    %2 = vector.load %arg1[%c0_3, %c0_4, %c1, %c0_5] : memref<1x2x132x32xf32, #tpu.memory_space<vmem>>, vector<1x2x130x32xf32>
    %3 = vector.shape_cast %2 : vector<1x2x130x32xf32> to vector<2x130x32xf32>
    %c0_6 = arith.constant 0 : index
    %c0_7 = arith.constant 0 : index
    %c2 = arith.constant 2 : index
    %c0_8 = arith.constant 0 : index
    %4 = vector.load %arg1[%c0_6, %c0_7, %c2, %c0_8] : memref<1x2x132x32xf32, #tpu.memory_space<vmem>>, vector<1x2x130x32xf32>
    %5 = vector.shape_cast %4 : vector<1x2x130x32xf32> to vector<2x130x32xf32>
    %6 = tpu.concatenate %1, %3, %5 in 2 : vector<2x130x32xf32>, vector<2x130x32xf32>, vector<2x130x32xf32> -> vector<2x130x96xf32>
    %7 = arith.truncf %6 : vector<2x130x96xf32> to vector<2x130x96xbf16>
    %c0_9 = arith.constant 0 : index
    %c0_10 = arith.constant 0 : index
    %8 = vector.load %arg2[%c0_9, %c0_10] : memref<96x32xbf16, #tpu.memory_space<vmem>>, vector<96x32xbf16>
    "tpu.trace_start"() <{level = 10 : i32, message = "btc,cf->btf"}> : () -> ()
    %cst = arith.constant dense<0.000000e+00> : vector<2x130x32xf32>
    %9 = tpu.matmul %7, %8, %cst {dimension_numbers = #tpu.dot_dimension_numbers<[2], [0], [0, 1], [1], [0, 0, 0, 1, 1, 1], [], []>} : vector<2x130x96xbf16>, vector<96x32xbf16>, vector<2x130x32xf32> -> vector<2x130x32xf32>
    "tpu.trace_stop"() : () -> ()
    %c0_11 = arith.constant 0 : index
    %c0_12 = arith.constant 0 : index
    %10 = vector.load %arg3[%c0_11, %c0_12] : memref<1x32xf32, #tpu.memory_space<vmem>>, vector<1x32xf32>
    %11 = vector.shape_cast %10 : vector<1x32xf32> to vector<1x1x32xf32>
    %12 = vector.broadcast %11 : vector<1x1x32xf32> to vector<2x130x32xf32>
    %13 = arith.addf %9, %12 : vector<2x130x32xf32>
    %cst_13 = arith.constant 0.000000e+00 : f32
    %14 = vector.broadcast %cst_13 : f32 to vector<2x130x32xf32>
    %15 = arith.maximumf %13, %14 : vector<2x130x32xf32>
    %c0_14 = arith.constant 0 : index
    %c0_15 = arith.constant 0 : index
    %16 = vector.load %arg4[%c0_14, %c0_15] : memref<1x32xf32, #tpu.memory_space<vmem>>, vector<1x32xf32>
    %c0_16 = arith.constant 0 : index
    %c0_17 = arith.constant 0 : index
    %17 = vector.load %arg5[%c0_16, %c0_17] : memref<1x32xf32, #tpu.memory_space<vmem>>, vector<1x32xf32>
    %cst_18 = arith.constant dense<0.000000e+00> : vector<2x130xf32>
    %18 = vector.multi_reduction <add>, %15, %cst_18 [2] : vector<2x130x32xf32> to vector<2x130xf32>
    %19 = vector.shape_cast %18 : vector<2x130xf32> to vector<2x130x1xf32>
    %cst_19 = arith.constant 3.200000e+01 : f32
    %20 = vector.broadcast %cst_19 : f32 to vector<2x130x1xf32>
    %21 = arith.divf %19, %20 : vector<2x130x1xf32>
    %22 = vector.broadcast %21 : vector<2x130x1xf32> to vector<2x130x32xf32>
    %23 = arith.subf %15, %22 : vector<2x130x32xf32>
    %24 = arith.mulf %23, %23 : vector<2x130x32xf32>
    %cst_20 = arith.constant dense<0.000000e+00> : vector<2x130xf32>
    %25 = vector.multi_reduction <add>, %24, %cst_20 [2] : vector<2x130x32xf32> to vector<2x130xf32>
    %26 = vector.shape_cast %25 : vector<2x130xf32> to vector<2x130x1xf32>
    %cst_21 = arith.constant 3.200000e+01 : f32
    %27 = vector.broadcast %cst_21 : f32 to vector<2x130x1xf32>
    %28 = arith.divf %26, %27 : vector<2x130x1xf32>
    %29 = vector.broadcast %21 : vector<2x130x1xf32> to vector<2x130x32xf32>
    %30 = arith.subf %15, %29 : vector<2x130x32xf32>
    %cst_22 = arith.constant 9.99999974E-6 : f32
    %31 = vector.broadcast %cst_22 : f32 to vector<2x130x1xf32>
    %32 = arith.addf %28, %31 : vector<2x130x1xf32>
    %33 = math.rsqrt %32 : vector<2x130x1xf32>
    %34 = vector.broadcast %33 : vector<2x130x1xf32> to vector<2x130x32xf32>
    %35 = arith.mulf %30, %34 : vector<2x130x32xf32>
    %36 = vector.shape_cast %16 : vector<1x32xf32> to vector<1x1x32xf32>
    %37 = vector.broadcast %36 : vector<1x1x32xf32> to vector<2x130x32xf32>
    %38 = arith.mulf %35, %37 : vector<2x130x32xf32>
    %39 = vector.shape_cast %17 : vector<1x32xf32> to vector<1x1x32xf32>
    %40 = vector.broadcast %39 : vector<1x1x32xf32> to vector<2x130x32xf32>
    %41 = arith.addf %38, %40 : vector<2x130x32xf32>
    %c128_i32 = arith.constant 128 : i32
    %42 = arith.muli %arg0, %c128_i32 : i32
    %c1_i32 = arith.constant 1 : i32
    %43 = arith.subi %42, %c1_i32 : i32
    %44 = tpu.iota {dimensions = array<i32: 1>} : vector<2x130x32xi32>
    %45 = vector.broadcast %43 : i32 to vector<2x130x32xi32>
    %46 = arith.addi %45, %44 : vector<2x130x32xi32>
    %c0_i32 = arith.constant 0 : i32
    %47 = vector.broadcast %c0_i32 : i32 to vector<2x130x32xi32>
    %48 = arith.cmpi sge, %46, %47 : vector<2x130x32xi32>
    %c8_i32 = arith.constant 8 : i32
    %49 = vector.broadcast %c8_i32 : i32 to vector<2x130x32xi32>
    %50 = arith.cmpi slt, %46, %49 : vector<2x130x32xi32>
    %51 = arith.andi %48, %50 : vector<2x130x32xi1>
    %cst_23 = arith.constant 0.000000e+00 : f32
    %52 = vector.broadcast %cst_23 : f32 to vector<2x130x32xf32>
    %53 = arith.select %51, %41, %52 : vector<2x130x32xi1>, vector<2x130x32xf32>
    %54 = vector.extract_strided_slice %53 {offsets = [0, 0, 0], sizes = [2, 128, 32], strides = [1, 1, 1]} : vector<2x130x32xf32> to vector<2x128x32xf32>
    %55 = vector.extract_strided_slice %53 {offsets = [0, 1, 0], sizes = [2, 128, 32], strides = [1, 1, 1]} : vector<2x130x32xf32> to vector<2x128x32xf32>
    %56 = vector.extract_strided_slice %53 {offsets = [0, 2, 0], sizes = [2, 128, 32], strides = [1, 1, 1]} : vector<2x130x32xf32> to vector<2x128x32xf32>
    %57 = tpu.concatenate %54, %55, %56 in 2 : vector<2x128x32xf32>, vector<2x128x32xf32>, vector<2x128x32xf32> -> vector<2x128x96xf32>
    %58 = arith.truncf %57 : vector<2x128x96xf32> to vector<2x128x96xbf16>
    %c0_24 = arith.constant 0 : index
    %c0_25 = arith.constant 0 : index
    %59 = vector.load %arg6[%c0_24, %c0_25] : memref<96x32xbf16, #tpu.memory_space<vmem>>, vector<96x32xbf16>
    "tpu.trace_start"() <{level = 10 : i32, message = "btc,cf->btf"}> : () -> ()
    %cst_26 = arith.constant dense<0.000000e+00> : vector<2x128x32xf32>
    %60 = tpu.matmul %58, %59, %cst_26 {dimension_numbers = #tpu.dot_dimension_numbers<[2], [0], [0, 1], [1], [0, 0, 0, 1, 1, 1], [], []>} : vector<2x128x96xbf16>, vector<96x32xbf16>, vector<2x128x32xf32> -> vector<2x128x32xf32>
    "tpu.trace_stop"() : () -> ()
    %c0_27 = arith.constant 0 : index
    %c0_28 = arith.constant 0 : index
    %61 = vector.load %arg7[%c0_27, %c0_28] : memref<1x32xf32, #tpu.memory_space<vmem>>, vector<1x32xf32>
    %62 = vector.shape_cast %61 : vector<1x32xf32> to vector<1x1x32xf32>
    %63 = vector.broadcast %62 : vector<1x1x32xf32> to vector<2x128x32xf32>
    %64 = arith.addf %60, %63 : vector<2x128x32xf32>
    %cst_29 = arith.constant 0.000000e+00 : f32
    %65 = vector.broadcast %cst_29 : f32 to vector<2x128x32xf32>
    %66 = arith.maximumf %64, %65 : vector<2x128x32xf32>
    %c0_30 = arith.constant 0 : index
    %c0_31 = arith.constant 0 : index
    %67 = vector.load %arg8[%c0_30, %c0_31] : memref<1x32xf32, #tpu.memory_space<vmem>>, vector<1x32xf32>
    %c0_32 = arith.constant 0 : index
    %c0_33 = arith.constant 0 : index
    %68 = vector.load %arg9[%c0_32, %c0_33] : memref<1x32xf32, #tpu.memory_space<vmem>>, vector<1x32xf32>
    %cst_34 = arith.constant dense<0.000000e+00> : vector<2x128xf32>
    %69 = vector.multi_reduction <add>, %66, %cst_34 [2] : vector<2x128x32xf32> to vector<2x128xf32>
    %70 = vector.shape_cast %69 : vector<2x128xf32> to vector<2x128x1xf32>
    %cst_35 = arith.constant 3.200000e+01 : f32
    %71 = vector.broadcast %cst_35 : f32 to vector<2x128x1xf32>
    %72 = arith.divf %70, %71 : vector<2x128x1xf32>
    %73 = vector.broadcast %72 : vector<2x128x1xf32> to vector<2x128x32xf32>
    %74 = arith.subf %66, %73 : vector<2x128x32xf32>
    %75 = arith.mulf %74, %74 : vector<2x128x32xf32>
    %cst_36 = arith.constant dense<0.000000e+00> : vector<2x128xf32>
    %76 = vector.multi_reduction <add>, %75, %cst_36 [2] : vector<2x128x32xf32> to vector<2x128xf32>
    %77 = vector.shape_cast %76 : vector<2x128xf32> to vector<2x128x1xf32>
    %cst_37 = arith.constant 3.200000e+01 : f32
    %78 = vector.broadcast %cst_37 : f32 to vector<2x128x1xf32>
    %79 = arith.divf %77, %78 : vector<2x128x1xf32>
    %80 = vector.broadcast %72 : vector<2x128x1xf32> to vector<2x128x32xf32>
    %81 = arith.subf %66, %80 : vector<2x128x32xf32>
    %cst_38 = arith.constant 9.99999974E-6 : f32
    %82 = vector.broadcast %cst_38 : f32 to vector<2x128x1xf32>
    %83 = arith.addf %79, %82 : vector<2x128x1xf32>
    %84 = math.rsqrt %83 : vector<2x128x1xf32>
    %85 = vector.broadcast %84 : vector<2x128x1xf32> to vector<2x128x32xf32>
    %86 = arith.mulf %81, %85 : vector<2x128x32xf32>
    %87 = vector.shape_cast %67 : vector<1x32xf32> to vector<1x1x32xf32>
    %88 = vector.broadcast %87 : vector<1x1x32xf32> to vector<2x128x32xf32>
    %89 = arith.mulf %86, %88 : vector<2x128x32xf32>
    %90 = vector.shape_cast %68 : vector<1x32xf32> to vector<1x1x32xf32>
    %91 = vector.broadcast %90 : vector<1x1x32xf32> to vector<2x128x32xf32>
    %92 = arith.addf %89, %91 : vector<2x128x32xf32>
    %c0_39 = arith.constant 0 : index
    %c0_40 = arith.constant 0 : index
    %93 = vector.load %arg10[%c0_39, %c0_40] : memref<1x32xf32, #tpu.memory_space<vmem>>, vector<1x32xf32>
    %94 = vector.shape_cast %93 : vector<1x32xf32> to vector<1x1x32xf32>
    %95 = vector.broadcast %94 : vector<1x1x32xf32> to vector<2x128x32xf32>
    %96 = arith.mulf %92, %95 : vector<2x128x32xf32>
    %cst_41 = arith.constant dense<0.000000e+00> : vector<2x128xf32>
    %97 = vector.multi_reduction <add>, %96, %cst_41 [2] : vector<2x128x32xf32> to vector<2x128xf32>
    %c0_42 = arith.constant 0 : index
    %c0_43 = arith.constant 0 : index
    %98 = memref.load %arg11[%c0_42, %c0_43] : memref<1x1xf32, #tpu.memory_space<smem>>
    %99 = vector.broadcast %98 : f32 to vector<2x128xf32>
    %100 = arith.addf %97, %99 : vector<2x128xf32>
    %c0_44 = arith.constant 0 : index
    %c0_45 = arith.constant 0 : index
    %101 = vector.load %arg12[%c0_44, %c0_45] : memref<2x128xf32, #tpu.memory_space<vmem>>, vector<2x128xf32>
    %cst_46 = arith.constant 5.000000e-01 : f32
    %102 = vector.broadcast %cst_46 : f32 to vector<2x128xf32>
    %103 = arith.cmpf ogt, %101, %102 : vector<2x128xf32>
    %cst_47 = arith.constant 0.000000e+00 : f32
    %104 = vector.broadcast %cst_47 : f32 to vector<2x128xf32>
    %105 = arith.select %103, %104, %100 : vector<2x128xi1>, vector<2x128xf32>
    %c0_48 = arith.constant 0 : index
    %c0_49 = arith.constant 0 : index
    %106 = vector.load %arg13[%c0_48, %c0_49] : memref<2x128xf32, #tpu.memory_space<vmem>>, vector<2x128xf32>
    tpu.vector_store %arg13[%c0_48, %c0_49], %105 {strides = array<i32>} : memref<2x128xf32, #tpu.memory_space<vmem>>, vector<2x128xf32>,
    return
  }
  func.func @transform_0(%arg0: i32) -> (i32, i32, i32, i32) {
    %c0_i32 = arith.constant 0 : i32
    %c0_i32_0 = arith.constant 0 : i32
    %c0_i32_1 = arith.constant 0 : i32
    %c0_i32_2 = arith.constant 0 : i32
    return %arg0, %c0_i32, %c0_i32_0, %c0_i32_1 : i32, i32, i32, i32
  }
  func.func @transform_1(%arg0: i32) -> (i32, i32) {
    %c0_i32 = arith.constant 0 : i32
    %c0_i32_0 = arith.constant 0 : i32
    %c0_i32_1 = arith.constant 0 : i32
    return %c0_i32, %c0_i32_0 : i32, i32
  }
  func.func @transform_2(%arg0: i32) -> (i32, i32) {
    %c0_i32 = arith.constant 0 : i32
    %c0_i32_0 = arith.constant 0 : i32
    %c0_i32_1 = arith.constant 0 : i32
    return %c0_i32, %c0_i32_0 : i32, i32
  }
  func.func @transform_3(%arg0: i32) -> (i32, i32) {
    %c0_i32 = arith.constant 0 : i32
    %c0_i32_0 = arith.constant 0 : i32
    %c0_i32_1 = arith.constant 0 : i32
    return %c0_i32, %c0_i32_0 : i32, i32
  }
  func.func @transform_4(%arg0: i32) -> (i32, i32) {
    %c0_i32 = arith.constant 0 : i32
    %c0_i32_0 = arith.constant 0 : i32
    %c0_i32_1 = arith.constant 0 : i32
    return %c0_i32, %c0_i32_0 : i32, i32
  }
  func.func @transform_5(%arg0: i32) -> (i32, i32) {
    %c0_i32 = arith.constant 0 : i32
    %c0_i32_0 = arith.constant 0 : i32
    %c0_i32_1 = arith.constant 0 : i32
    return %c0_i32, %c0_i32_0 : i32, i32
  }
  func.func @transform_6(%arg0: i32) -> (i32, i32) {
    %c0_i32 = arith.constant 0 : i32
    %c0_i32_0 = arith.constant 0 : i32
    %c0_i32_1 = arith.constant 0 : i32
    return %c0_i32, %c0_i32_0 : i32, i32
  }
  func.func @transform_7(%arg0: i32) -> (i32, i32) {
    %c0_i32 = arith.constant 0 : i32
    %c0_i32_0 = arith.constant 0 : i32
    %c0_i32_1 = arith.constant 0 : i32
    return %c0_i32, %c0_i32_0 : i32, i32
  }
  func.func @transform_8(%arg0: i32) -> (i32, i32) {
    %c0_i32 = arith.constant 0 : i32
    %c0_i32_0 = arith.constant 0 : i32
    %c0_i32_1 = arith.constant 0 : i32
    return %c0_i32, %c0_i32_0 : i32, i32
  }
  func.func @transform_9(%arg0: i32) -> (i32, i32) {
    %c0_i32 = arith.constant 0 : i32
    %c0_i32_0 = arith.constant 0 : i32
    %c0_i32_1 = arith.constant 0 : i32
    return %c0_i32, %c0_i32_0 : i32, i32
  }
  func.func @transform_10(%arg0: i32) -> (i32, i32) {
    %c0_i32 = arith.constant 0 : i32
    %c0_i32_0 = arith.constant 0 : i32
    %c0_i32_1 = arith.constant 0 : i32
    return %c0_i32, %c0_i32_0 : i32, i32
  }
  func.func @transform_11(%arg0: i32) -> (i32, i32) {
    %c0_i32 = arith.constant 0 : i32
    %c0_i32_0 = arith.constant 0 : i32
    return %c0_i32, %arg0 : i32, i32
  }
  func.func @transform_12(%arg0: i32) -> (i32, i32) {
    %c0_i32 = arith.constant 0 : i32
    %c0_i32_0 = arith.constant 0 : i32
    return %c0_i32, %arg0 : i32, i32
  }
}

</mosaic_0001>

<llo_original>
// kernel: style_predictor.1
$region0: #{style_predictor.1}
  #allocation0 [shape = 'u32[]', space=smem, size = 0x4, offset = 0x4, fixed_abs, tag = 'smem constant byte address 0x4 - core index']
  #allocation1 [shape = 'u32[144,128]{1,0:T(1,128)}', space=vmem, size = 0x12000, scoped, tag = 'internal scratch']
  #allocation2 [shape = 'f32[1,1]{1,0:T(1,128)S(6)}', space=smem, size = 0x200, scoped, tag = 'scoped memory for style_predictor.1']
  %s0 = inlined_call_operand.vmem [shape: f32[1,2,132,32], index: 0, kind: input, shape index: {}]
  %s1 = inlined_call_operand.vmem [shape: bf16[96,32], index: 1, kind: input, shape index: {}]
  %s2 = inlined_call_operand.vmem [shape: f32[1,32], index: 2, kind: input, shape index: {}]
  %s3 = inlined_call_operand.vmem [shape: f32[1,32], index: 3, kind: input, shape index: {}]
  %s4 = inlined_call_operand.vmem [shape: f32[1,32], index: 4, kind: input, shape index: {}]
  %s5 = inlined_call_operand.vmem [shape: bf16[96,32], index: 5, kind: input, shape index: {}]
  %s6 = inlined_call_operand.vmem [shape: f32[1,32], index: 6, kind: input, shape index: {}]
  %s7 = inlined_call_operand.vmem [shape: f32[1,32], index: 7, kind: input, shape index: {}]
  %s8 = inlined_call_operand.vmem [shape: f32[1,32], index: 8, kind: input, shape index: {}]
  %s9 = inlined_call_operand.vmem [shape: f32[1,32], index: 9, kind: input, shape index: {}]
  %s10 = inlined_call_operand.<no memory space> [shape: f32[1,1], index: 10, kind: input, shape index: {}]
  %s11 = inlined_call_operand.vmem [shape: f32[2,128], index: 11, kind: input, shape index: {}]
  %s12 = inlined_call_operand.hbm [shape: f32[2,128], index: 12, kind: output, shape index: {}]
  %s13 = sld [smem:[#allocation0]]
  $region58: #{style_predictor.1} parent=0
    _
  %s15 = ssub.s32 1, %s13
  %s16 = scalar_select 0, %s15, %s13
  %17 = sst [smem:[#allocation2]] %s10
  $region1: #{style_predictor.1} parent=0
    #allocation3 [shape = 'u8[1024]{0}', space=vmem, size = 0x400, scoped, tag = 'output window, operand 0, single buffered']
    #allocation4 [shape = 's32[1]{0}', space=sflag, size = 0x4, scoped, tag = 'scoped memory for style_predictor.1']
    %18 = vsyncpa [#allocation4], 0
    // Predicated region
    $region2: #{style_predictor.1} parent=1 // pred_check
      _
    $region3: #{style_predictor.1} parent=1 // pred_check_branch
      %20 = sbr.rel (0) target = $region5
    $region4: #{style_predictor.1} parent=1 // pred_region
      _
    $region5: #{style_predictor.1} parent=1 // pred_fallthru
      _
    // Predicated region
    $region6: #{style_predictor.1} parent=1 // pred_check
      _
    $region7: #{style_predictor.1} parent=1 // pred_check_branch
      %22 = sbr.rel (0) target = $region9
    $region8: #{style_predictor.1} parent=1 // pred_region
      _
    $region9: #{style_predictor.1} parent=1 // pred_fallthru
      _
    // Predicated region
    $region10: #{style_predictor.1} parent=1 // pred_check
      _
    $region11: #{style_predictor.1} parent=1 // pred_check_branch
      %24 = sbr.rel (0) target = $region13
    $region12: #{style_predictor.1} parent=1 // pred_region
      _
    $region13: #{style_predictor.1} parent=1 // pred_fallthru
      _
    // Predicated region
    $region14: #{style_predictor.1} parent=1 // pred_check
      _
    $region15: #{style_predictor.1} parent=1 // pred_check_branch
      %26 = sbr.rel (0) target = $region17
    $region16: #{style_predictor.1} parent=1 // pred_region
      _
    $region17: #{style_predictor.1} parent=1 // pred_fallthru
      _
    // Predicated region
    $region18: #{style_predictor.1} parent=1 // pred_check
      _
    $region19: #{style_predictor.1} parent=1 // pred_check_branch
      %28 = sbr.rel (0) target = $region21
    $region20: #{style_predictor.1} parent=1 // pred_region
      _
    $region21: #{style_predictor.1} parent=1 // pred_fallthru
      _
    // Predicated region
    $region22: #{style_predictor.1} parent=1 // pred_check
      _
    $region23: #{style_predictor.1} parent=1 // pred_check_branch
      %30 = sbr.rel (0) target = $region25
    $region24: #{style_predictor.1} parent=1 // pred_region
      _
    $region25: #{style_predictor.1} parent=1 // pred_fallthru
      _
    // Predicated region
    $region26: #{style_predictor.1} parent=1 // pred_check
      _
    $region27: #{style_predictor.1} parent=1 // pred_check_branch
      %32 = sbr.rel (0) target = $region29
    $region28: #{style_predictor.1} parent=1 // pred_region
      _
    $region29: #{style_predictor.1} parent=1 // pred_fallthru
      _
    // Predicated region
    $region30: #{style_predictor.1} parent=1 // pred_check
      _
    $region31: #{style_predictor.1} parent=1 // pred_check_branch
      %34 = sbr.rel (0) target = $region33
    $region32: #{style_predictor.1} parent=1 // pred_region
      _
    $region33: #{style_predictor.1} parent=1 // pred_fallthru
      _
    // Predicated region
    $region34: #{style_predictor.1} parent=1 // pred_check
      _
    $region35: #{style_predictor.1} parent=1 // pred_check_branch
      %36 = sbr.rel (0) target = $region37
    $region36: #{style_predictor.1} parent=1 // pred_region
      _
    $region37: #{style_predictor.1} parent=1 // pred_fallthru
      _
    // Predicated region
    $region38: #{style_predictor.1} parent=1 // pred_check
      _
    $region39: #{style_predictor.1} parent=1 // pred_check_branch
      %38 = sbr.rel (0) target = $region41
    $region40: #{style_predictor.1} parent=1 // pred_region
      _
    $region41: #{style_predictor.1} parent=1 // pred_fallthru
      _
    // Predicated region
    $region42: #{style_predictor.1} parent=1 // pred_check
      _
    $region43: #{style_predictor.1} parent=1 // pred_check_branch
      %40 = sbr.rel (0) target = $region45
    $region44: #{style_predictor.1} parent=1 // pred_region
      _
    $region45: #{style_predictor.1} parent=1 // pred_fallthru
      _
    // Predicated region
    $region46: #{style_predictor.1} parent=1 // pred_check
      _
    $region47: #{style_predictor.1} parent=1 // pred_check_branch
      %42 = sbr.rel (0) target = $region49
    $region48: #{style_predictor.1} parent=1 // pred_region
      _
    $region49: #{style_predictor.1} parent=1 // pred_fallthru
      _
    %v44 = vld [vmem:[%s0] sm:$0xff]
    %v45 = vld [vmem:[%s0 + $0x8] sm:$0xff]
    %v46 = vld [vmem:[%s0 + $0x10] sm:$0xff]
    %v47 = vld [vmem:[%s0 + $0x18] sm:$0xff]
    %v48 = vld [vmem:[%s0 + $0x20] sm:$0xff]
    %v49 = vld [vmem:[%s0 + $0x28] sm:$0xff]
    %v50 = vld [vmem:[%s0 + $0x30] sm:$0xff]
    %v51 = vld [vmem:[%s0 + $0x38] sm:$0xff]
    %v52 = vld [vmem:[%s0 + $0x40] sm:$0xff]
    %v53 = vld [vmem:[%s0 + $0x48] sm:$0xff]
    %v54 = vld [vmem:[%s0 + $0x50] sm:$0xff]
    %v55 = vld [vmem:[%s0 + $0x58] sm:$0xff]
    %v56 = vld [vmem:[%s0 + $0x60] sm:$0xff]
    %v57 = vld [vmem:[%s0 + $0x68] sm:$0xff]
    %v58 = vld [vmem:[%s0 + $0x70] sm:$0xff]
    %v59 = vld [vmem:[%s0 + $0x78] sm:$0xff]
    %v60 = vld [vmem:[%s0 + $0x80] sm:$0x3]
    %v61 = vld [vmem:[%s0 + $0x88] sm:$0xff]
    %v62 = vld [vmem:[%s0 + $0x90] sm:$0xff]
    %v63 = vld [vmem:[%s0 + $0x98] sm:$0xff]
    %v64 = vld [vmem:[%s0 + $0xa0] sm:$0xff]
    %v65 = vld [vmem:[%s0 + $0xa8] sm:$0xff]
    %v66 = vld [vmem:[%s0 + $0xb0] sm:$0xff]
    %v67 = vld [vmem:[%s0 + $0xb8] sm:$0xff]
    %v68 = vld [vmem:[%s0 + $0xc0] sm:$0xff]
    %v69 = vld [vmem:[%s0 + $0xc8] sm:$0xff]
    %v70 = vld [vmem:[%s0 + $0xd0] sm:$0xff]
    %v71 = vld [vmem:[%s0 + $0xd8] sm:$0xff]
    %v72 = vld [vmem:[%s0 + $0xe0] sm:$0xff]
    %v73 = vld [vmem:[%s0 + $0xe8] sm:$0xff]
    %v74 = vld [vmem:[%s0 + $0xf0] sm:$0xff]
    %v75 = vld [vmem:[%s0 + $0xf8] sm:$0xff]
    %v76 = vld [vmem:[%s0 + $0x100] sm:$0xff]
    %v77 = vld [vmem:[%s0 + $0x108] sm:$0x3]
    %v78 = vld [vmem:[%s0 + $0x1] sm:$0xff]
    %v79 = vld [vmem:[%s0 + $0x9] sm:$0xff]
    %v80 = vld [vmem:[%s0 + $0x11] sm:$0xff]
    %v81 = vld [vmem:[%s0 + $0x19] sm:$0xff]
    %v82 = vld [vmem:[%s0 + $0x21] sm:$0xff]
    %v83 = vld [vmem:[%s0 + $0x29] sm:$0xff]
    %v84 = vld [vmem:[%s0 + $0x31] sm:$0xff]
    %v85 = vld [vmem:[%s0 + $0x39] sm:$0xff]
    %v86 = vld [vmem:[%s0 + $0x41] sm:$0xff]
    %v87 = vld [vmem:[%s0 + $0x49] sm:$0xff]
    %v88 = vld [vmem:[%s0 + $0x51] sm:$0xff]
    %v89 = vld [vmem:[%s0 + $0x59] sm:$0xff]
    %v90 = vld [vmem:[%s0 + $0x61] sm:$0xff]
    %v91 = vld [vmem:[%s0 + $0x69] sm:$0xff]
    %v92 = vld [vmem:[%s0 + $0x71] sm:$0xff]
    %v93 = vld [vmem:[%s0 + $0x79] sm:$0xff]
    %v94 = vld [vmem:[%s0 + $0x81] sm:$0x3]
    %v95 = vld [vmem:[%s0 + $0x89] sm:$0xff]
    %v96 = vld [vmem:[%s0 + $0x91] sm:$0xff]
    %v97 = vld [vmem:[%s0 + $0x99] sm:$0xff]
    %v98 = vld [vmem:[%s0 + $0xa1] sm:$0xff]
    %v99 = vld [vmem:[%s0 + $0xa9] sm:$0xff]
    %v100 = vld [vmem:[%s0 + $0xb1] sm:$0xff]
    %v101 = vld [vmem:[%s0 + $0xb9] sm:$0xff]
    %v102 = vld [vmem:[%s0 + $0xc1] sm:$0xff]
    %v103 = vld [vmem:[%s0 + $0xc9] sm:$0xff]
    %v104 = vld [vmem:[%s0 + $0xd1] sm:$0xff]
    %v105 = vld [vmem:[%s0 + $0xd9] sm:$0xff]
    %v106 = vld [vmem:[%s0 + $0xe1] sm:$0xff]
    %v107 = vld [vmem:[%s0 + $0xe9] sm:$0xff]
    %v108 = vld [vmem:[%s0 + $0xf1] sm:$0xff]
    %v109 = vld [vmem:[%s0 + $0xf9] sm:$0xff]
    %v110 = vld [vmem:[%s0 + $0x101] sm:$0xff]
    %v111 = vld [vmem:[%s0 + $0x109] sm:$0x3]
    %v112 = vld [vmem:[%s0 + $0x2] sm:$0xff]
    %v113 = vld [vmem:[%s0 + $0xa] sm:$0xff]
    %v114 = vld [vmem:[%s0 + $0x12] sm:$0xff]
    %v115 = vld [vmem:[%s0 + $0x1a] sm:$0xff]
    %v116 = vld [vmem:[%s0 + $0x22] sm:$0xff]
    %v117 = vld [vmem:[%s0 + $0x2a] sm:$0xff]
    %v118 = vld [vmem:[%s0 + $0x32] sm:$0xff]
    %v119 = vld [vmem:[%s0 + $0x3a] sm:$0xff]
    %v120 = vld [vmem:[%s0 + $0x42] sm:$0xff]
    %v121 = vld [vmem:[%s0 + $0x4a] sm:$0xff]
    %v122 = vld [vmem:[%s0 + $0x52] sm:$0xff]
    %v123 = vld [vmem:[%s0 + $0x5a] sm:$0xff]
    %v124 = vld [vmem:[%s0 + $0x62] sm:$0xff]
    %v125 = vld [vmem:[%s0 + $0x6a] sm:$0xff]
    %v126 = vld [vmem:[%s0 + $0x72] sm:$0xff]
    %v127 = vld [vmem:[%s0 + $0x7a] sm:$0xff]
    %v128 = vld [vmem:[%s0 + $0x82] sm:$0x3]
    %v129 = vld [vmem:[%s0 + $0x8a] sm:$0xff]
    %v130 = vld [vmem:[%s0 + $0x92] sm:$0xff]
    %v131 = vld [vmem:[%s0 + $0x9a] sm:$0xff]
    %v132 = vld [vmem:[%s0 + $0xa2] sm:$0xff]
    %v133 = vld [vmem:[%s0 + $0xaa] sm:$0xff]
    %v134 = vld [vmem:[%s0 + $0xb2] sm:$0xff]
    %v135 = vld [vmem:[%s0 + $0xba] sm:$0xff]
    %v136 = vld [vmem:[%s0 + $0xc2] sm:$0xff]
    %v137 = vld [vmem:[%s0 + $0xca] sm:$0xff]
    %v138 = vld [vmem:[%s0 + $0xd2] sm:$0xff]
    %v139 = vld [vmem:[%s0 + $0xda] sm:$0xff]
    %v140 = vld [vmem:[%s0 + $0xe2] sm:$0xff]
    %v141 = vld [vmem:[%s0 + $0xea] sm:$0xff]
    %v142 = vld [vmem:[%s0 + $0xf2] sm:$0xff]
    %v143 = vld [vmem:[%s0 + $0xfa] sm:$0xff]
    %v144 = vld [vmem:[%s0 + $0x102] sm:$0xff]
    %v145 = vld [vmem:[%s0 + $0x10a] sm:$0x3]
    %180 = vrot.lane.b32.xlu0 %v78, 32
    %v181 = vpop.permute.xlu0 %180
    %182 = vrot.lane.b32.xlu0 %v79, 32
    %v183 = vpop.permute.xlu0 %182
    %184 = vrot.lane.b32.xlu0 %v80, 32
    %v185 = vpop.permute.xlu0 %184
    %186 = vrot.lane.b32.xlu0 %v81, 32
    %v187 = vpop.permute.xlu0 %186
    %188 = vrot.lane.b32.xlu0 %v82, 32
    %v189 = vpop.permute.xlu0 %188
    %190 = vrot.lane.b32.xlu0 %v83, 32
    %v191 = vpop.permute.xlu0 %190
    %192 = vrot.lane.b32.xlu0 %v84, 32
    %v193 = vpop.permute.xlu0 %192
    %194 = vrot.lane.b32.xlu0 %v85, 32
    %v195 = vpop.permute.xlu0 %194
    %196 = vrot.lane.b32.xlu0 %v86, 32
    %v197 = vpop.permute.xlu0 %196
    %198 = vrot.lane.b32.xlu0 %v87, 32
    %v199 = vpop.permute.xlu0 %198
    %200 = vrot.lane.b32.xlu0 %v88, 32
    %v201 = vpop.permute.xlu0 %200
    %202 = vrot.lane.b32.xlu0 %v89, 32
    %v203 = vpop.permute.xlu0 %202
    %204 = vrot.lane.b32.xlu0 %v90, 32
    %v205 = vpop.permute.xlu0 %204
    %206 = vrot.lane.b32.xlu0 %v91, 32
    %v207 = vpop.permute.xlu0 %206
    %208 = vrot.lane.b32.xlu0 %v92, 32
    %v209 = vpop.permute.xlu0 %208
    %210 = vrot.lane.b32.xlu0 %v93, 32
    %v211 = vpop.permute.xlu0 %210
    %212 = vrot.lane.b32.xlu0 %v94, 32
    %v213 = vpop.permute.xlu0 %212
    %214 = vrot.lane.b32.xlu0 %v95, 32
    %v215 = vpop.permute.xlu0 %214
    %216 = vrot.lane.b32.xlu0 %v96, 32
    %v217 = vpop.permute.xlu0 %216
    %218 = vrot.lane.b32.xlu0 %v97, 32
    %v219 = vpop.permute.xlu0 %218
    %220 = vrot.lane.b32.xlu0 %v98, 32
    %v221 = vpop.permute.xlu0 %220
    %222 = vrot.lane.b32.xlu0 %v99, 32
    %v223 = vpop.permute.xlu0 %222
    %224 = vrot.lane.b32.xlu0 %v100, 32
    %v225 = vpop.permute.xlu0 %224
    %226 = vrot.lane.b32.xlu0 %v101, 32
    %v227 = vpop.permute.xlu0 %226
    %228 = vrot.lane.b32.xlu0 %v102, 32
    %v229 = vpop.permute.xlu0 %228
    %230 = vrot.lane.b32.xlu0 %v103, 32
    %v231 = vpop.permute.xlu0 %230
    %232 = vrot.lane.b32.xlu0 %v104, 32
    %v233 = vpop.permute.xlu0 %232
    %234 = vrot.lane.b32.xlu0 %v105, 32
    %v235 = vpop.permute.xlu0 %234
    %236 = vrot.lane.b32.xlu0 %v106, 32
    %v237 = vpop.permute.xlu0 %236
    %238 = vrot.lane.b32.xlu0 %v107, 32
    %v239 = vpop.permute.xlu0 %238
    %240 = vrot.lane.b32.xlu0 %v108, 32
    %v241 = vpop.permute.xlu0 %240
    %242 = vrot.lane.b32.xlu0 %v109, 32
    %v243 = vpop.permute.xlu0 %242
    %244 = vrot.lane.b32.xlu0 %v110, 32
    %v245 = vpop.permute.xlu0 %244
    %246 = vrot.lane.b32.xlu0 %v111, 32
    %v247 = vpop.permute.xlu0 %246
    %316 = vrot.lane.b32.xlu0 %v112, 64
    %v317 = vpop.permute.xlu0 %316
    %318 = vrot.lane.b32.xlu0 %v113, 64
    %v319 = vpop.permute.xlu0 %318
    %320 = vrot.lane.b32.xlu0 %v114, 64
    %v321 = vpop.permute.xlu0 %320
    %322 = vrot.lane.b32.xlu0 %v115, 64
    %v323 = vpop.permute.xlu0 %322
    %324 = vrot.lane.b32.xlu0 %v116, 64
    %v325 = vpop.permute.xlu0 %324
    %326 = vrot.lane.b32.xlu0 %v117, 64
    %v327 = vpop.permute.xlu0 %326
    %328 = vrot.lane.b32.xlu0 %v118, 64
    %v329 = vpop.permute.xlu0 %328
    %330 = vrot.lane.b32.xlu0 %v119, 64
    %v331 = vpop.permute.xlu0 %330
    %332 = vrot.lane.b32.xlu0 %v120, 64
    %v333 = vpop.permute.xlu0 %332
    %334 = vrot.lane.b32.xlu0 %v121, 64
    %v335 = vpop.permute.xlu0 %334
    %336 = vrot.lane.b32.xlu0 %v122, 64
    %v337 = vpop.permute.xlu0 %336
    %338 = vrot.lane.b32.xlu0 %v123, 64
    %v339 = vpop.permute.xlu0 %338
    %340 = vrot.lane.b32.xlu0 %v124, 64
    %v341 = vpop.permute.xlu0 %340
    %342 = vrot.lane.b32.xlu0 %v125, 64
    %v343 = vpop.permute.xlu0 %342
    %344 = vrot.lane.b32.xlu0 %v126, 64
    %v345 = vpop.permute.xlu0 %344
    %346 = vrot.lane.b32.xlu0 %v127, 64
    %v347 = vpop.permute.xlu0 %346
    %348 = vrot.lane.b32.xlu0 %v128, 64
    %v349 = vpop.permute.xlu0 %348
    %350 = vrot.lane.b32.xlu0 %v129, 64
    %v351 = vpop.permute.xlu0 %350
    %352 = vrot.lane.b32.xlu0 %v130, 64
    %v353 = vpop.permute.xlu0 %352
    %354 = vrot.lane.b32.xlu0 %v131, 64
    %v355 = vpop.permute.xlu0 %354
    %356 = vrot.lane.b32.xlu0 %v132, 64
    %v357 = vpop.permute.xlu0 %356
    %358 = vrot.lane.b32.xlu0 %v133, 64
    %v359 = vpop.permute.xlu0 %358
    %360 = vrot.lane.b32.xlu0 %v134, 64
    %v361 = vpop.permute.xlu0 %360
    %362 = vrot.lane.b32.xlu0 %v135, 64
    %v363 = vpop.permute.xlu0 %362
    %364 = vrot.lane.b32.xlu0 %v136, 64
    %v365 = vpop.permute.xlu0 %364
    %366 = vrot.lane.b32.xlu0 %v137, 64
    %v367 = vpop.permute.xlu0 %366
    %368 = vrot.lane.b32.xlu0 %v138, 64
    %v369 = vpop.permute.xlu0 %368
    %370 = vrot.lane.b32.xlu0 %v139, 64
    %v371 = vpop.permute.xlu0 %370
    %372 = vrot.lane.b32.xlu0 %v140, 64
    %v373 = vpop.permute.xlu0 %372
    %374 = vrot.lane.b32.xlu0 %v141, 64
    %v375 = vpop.permute.xlu0 %374
    %376 = vrot.lane.b32.xlu0 %v142, 64
    %v377 = vpop.permute.xlu0 %376
    %378 = vrot.lane.b32.xlu0 %v143, 64
    %v379 = vpop.permute.xlu0 %378
    %380 = vrot.lane.b32.xlu0 %v144, 64
    %v381 = vpop.permute.xlu0 %380
    %382 = vrot.lane.b32.xlu0 %v145, 64
    %v383 = vpop.permute.xlu0 %382
    %vm418 = vcmask 261120
    %v419 = vsel %vm418, %v44, %v181
    %v420 = vsel %vm418, %v45, %v183
    %v421 = vsel %vm418, %v46, %v185
    %v422 = vsel %vm418, %v47, %v187
    %v423 = vsel %vm418, %v48, %v189
    %v424 = vsel %vm418, %v49, %v191
    %v425 = vsel %vm418, %v50, %v193
    %v426 = vsel %vm418, %v51, %v195
    %v427 = vsel %vm418, %v52, %v197
    %v428 = vsel %vm418, %v53, %v199
    %v429 = vsel %vm418, %v54, %v201
    %v430 = vsel %vm418, %v55, %v203
    %v431 = vsel %vm418, %v56, %v205
    %v432 = vsel %vm418, %v57, %v207
    %v433 = vsel %vm418, %v58, %v209
    %v434 = vsel %vm418, %v59, %v211
    %v435 = vsel %vm418, %v60, %v213
    %v436 = vsel %vm418, %v61, %v215
    %v437 = vsel %vm418, %v62, %v217
    %v438 = vsel %vm418, %v63, %v219
    %v439 = vsel %vm418, %v64, %v221
    %v440 = vsel %vm418, %v65, %v223
    %v441 = vsel %vm418, %v66, %v225
    %v442 = vsel %vm418, %v67, %v227
    %v443 = vsel %vm418, %v68, %v229
    %v444 = vsel %vm418, %v69, %v231
    %v445 = vsel %vm418, %v70, %v233
    %v446 = vsel %vm418, %v71, %v235
    %v447 = vsel %vm418, %v72, %v237
    %v448 = vsel %vm418, %v73, %v239
    %v449 = vsel %vm418, %v74, %v241
    %v450 = vsel %vm418, %v75, %v243
    %v451 = vsel %vm418, %v76, %v245
    %v452 = vsel %vm418, %v77, %v247
    %vm453 = vcmask 523264
    %v454 = vsel %vm453, %v419, %v317
    %v455 = vsel %vm453, %v420, %v319
    %v456 = vsel %vm453, %v421, %v321
    %v457 = vsel %vm453, %v422, %v323
    %v458 = vsel %vm453, %v423, %v325
    %v459 = vsel %vm453, %v424, %v327
    %v460 = vsel %vm453, %v425, %v329
    %v461 = vsel %vm453, %v426, %v331
    %v462 = vsel %vm453, %v427, %v333
    %v463 = vsel %vm453, %v428, %v335
    %v464 = vsel %vm453, %v429, %v337
    %v465 = vsel %vm453, %v430, %v339
    %v466 = vsel %vm453, %v431, %v341
    %v467 = vsel %vm453, %v432, %v343
    %v468 = vsel %vm453, %v433, %v345
    %v469 = vsel %vm453, %v434, %v347
    %v470 = vsel %vm453, %v435, %v349
    %v471 = vsel %vm453, %v436, %v351
    %v472 = vsel %vm453, %v437, %v353
    %v473 = vsel %vm453, %v438, %v355
    %v474 = vsel %vm453, %v439, %v357
    %v475 = vsel %vm453, %v440, %v359
    %v476 = vsel %vm453, %v441, %v361
    %v477 = vsel %vm453, %v442, %v363
    %v478 = vsel %vm453, %v443, %v365
    %v479 = vsel %vm453, %v444, %v367
    %v480 = vsel %vm453, %v445, %v369
    %v481 = vsel %vm453, %v446, %v371
    %v482 = vsel %vm453, %v447, %v373
    %v483 = vsel %vm453, %v448, %v375
    %v484 = vsel %vm453, %v449, %v377
    %v485 = vsel %vm453, %v450, %v379
    %v486 = vsel %vm453, %v451, %v381
    %v487 = vsel %vm453, %v452, %v383
    %v488 = vpack.c.bf16 %v455, %v454
    %v489 = vpack.c.bf16 %v457, %v456
    %v490 = vpack.c.bf16 %v459, %v458
    %v491 = vpack.c.bf16 %v461, %v460
    %v492 = vpack.c.bf16 %v463, %v462
    %v493 = vpack.c.bf16 %v465, %v464
    %v494 = vpack.c.bf16 %v467, %v466
    %v495 = vpack.c.bf16 %v469, %v468
    %v496 = vpack.c.bf16 %v470, %v470
    %v497 = vpack.c.bf16 %v472, %v471
    %v498 = vpack.c.bf16 %v474, %v473
    %v499 = vpack.c.bf16 %v476, %v475
    %v500 = vpack.c.bf16 %v478, %v477
    %v501 = vpack.c.bf16 %v480, %v479
    %v502 = vpack.c.bf16 %v482, %v481
    %v503 = vpack.c.bf16 %v484, %v483
    %v504 = vpack.c.bf16 %v486, %v485
    %v505 = vpack.c.bf16 %v487, %v487
    %v506 = vld [vmem:[%s1] sm:$0xf]
    %v507 = vld [vmem:[%s1 + $0x4] sm:$0xf]
    %v508 = vld [vmem:[%s1 + $0x8] sm:$0xf]
    %v509 = vld [vmem:[%s1 + $0xc] sm:$0xf]
    %v510 = vld [vmem:[%s1 + $0x10] sm:$0xf]
    %v511 = vld [vmem:[%s1 + $0x14] sm:$0xf]
    %v512 = vld [vmem:[%s1 + $0x18] sm:$0xf]
    %v513 = vld [vmem:[%s1 + $0x1c] sm:$0xf]
    %v514 = vld [vmem:[%s1 + $0x20] sm:$0xf]
    %v515 = vld [vmem:[%s1 + $0x24] sm:$0xf]
    %v516 = vld [vmem:[%s1 + $0x28] sm:$0xf]
    %v517 = vld [vmem:[%s1 + $0x2c] sm:$0xf]
    %v518 = vld [vmem:[%s2] sm:$0x1]
    %v520 = vlaneseq
    %v521 = vshrl.u32 %v520, 7
    %v522 = vsub.s32 0, %v521
    %v523 = vrot.slane %v518, %v522
    %v542 = vcombine.high %v488, %v488
    %v544 = vunpack.c.l.s4 1966171168
    %v545 = vunpack.c.0.s8 %v544
    %v546 = vlaneseq
    %v547 = vshrl.u32 %v546, 7
    %v548 = vsub.s32 %v545, %v547
    %v549 = vrot.slane %v488, %v548
    %v551 = vunpack.c.l.s4 1966171168
    %v552 = vunpack.c.0.s8 %v551
    %v553 = vlaneseq
    %v554 = vshrl.u32 %v553, 7
    %v555 = vsub.s32 %v552, %v554
    %v556 = vrot.slane %v542, %v555
    %v557 = vcombine.high %v549, %v549
    %v558 = vcombine.high %v556, %v556
    %v560 = vunpack.c.l.s4 1966171168
    %v561 = vunpack.c.0.s8 %v560
    %v562 = vlaneseq
    %v563 = vshrl.u32 %v562, 7
    %v564 = vsub.s32 %v561, %v563
    %v565 = vrot.slane %v549, %v564
    %v567 = vunpack.c.l.s4 1966171168
    %v568 = vunpack.c.0.s8 %v567
    %v569 = vlaneseq
    %v570 = vshrl.u32 %v569, 7
    %v571 = vsub.s32 %v568, %v570
    %v572 = vrot.slane %v556, %v571
    %v574 = vunpack.c.l.s4 1966171168
    %v575 = vunpack.c.0.s8 %v574
    %v576 = vlaneseq
    %v577 = vshrl.u32 %v576, 7
    %v578 = vsub.s32 %v575, %v577
    %v579 = vrot.slane %v557, %v578
    %v581 = vunpack.c.l.s4 1966171168
    %v582 = vunpack.c.0.s8 %v581
    %v583 = vlaneseq
    %v584 = vshrl.u32 %v583, 7
    %v585 = vsub.s32 %v582, %v584
    %v586 = vrot.slane %v558, %v585
    %v587 = vcombine.high %v565, %v565
    %v588 = vcombine.high %v572, %v572
    %v589 = vcombine.high %v579, %v579
    %v590 = vcombine.high %v586, %v586
    %v591 = vcombine.high %v489, %v489
    %v593 = vunpack.c.l.s4 1966171168
    %v594 = vunpack.c.0.s8 %v593
    %v595 = vlaneseq
    %v596 = vshrl.u32 %v595, 7
    %v597 = vsub.s32 %v594, %v596
    %v598 = vrot.slane %v489, %v597
    %v600 = vunpack.c.l.s4 1966171168
    %v601 = vunpack.c.0.s8 %v600
    %v602 = vlaneseq
    %v603 = vshrl.u32 %v602, 7
    %v604 = vsub.s32 %v601, %v603
    %v605 = vrot.slane %v591, %v604
    %v606 = vcombine.high %v598, %v598
    %v607 = vcombine.high %v605, %v605
    %v609 = vunpack.c.l.s4 1966171168
    %v610 = vunpack.c.0.s8 %v609
    %v611 = vlaneseq
    %v612 = vshrl.u32 %v611, 7
    %v613 = vsub.s32 %v610, %v612
    %v614 = vrot.slane %v598, %v613
    %v616 = vunpack.c.l.s4 1966171168
    %v617 = vunpack.c.0.s8 %v616
    %v618 = vlaneseq
    %v619 = vshrl.u32 %v618, 7
    %v620 = vsub.s32 %v617, %v619
    %v621 = vrot.slane %v605, %v620
    %v623 = vunpack.c.l.s4 1966171168
    %v624 = vunpack.c.0.s8 %v623
    %v625 = vlaneseq
    %v626 = vshrl.u32 %v625, 7
    %v627 = vsub.s32 %v624, %v626
    %v628 = vrot.slane %v606, %v627
    %v630 = vunpack.c.l.s4 1966171168
    %v631 = vunpack.c.0.s8 %v630
    %v632 = vlaneseq
    %v633 = vshrl.u32 %v632, 7
    %v634 = vsub.s32 %v631, %v633
    %v635 = vrot.slane %v607, %v634
    %v636 = vcombine.high %v614, %v614
    %v637 = vcombine.high %v621, %v621
    %v638 = vcombine.high %v628, %v628
    %v639 = vcombine.high %v635, %v635
    %v640 = vcombine.high %v490, %v490
    %v642 = vunpack.c.l.s4 1966171168
    %v643 = vunpack.c.0.s8 %v642
    %v644 = vlaneseq
    %v645 = vshrl.u32 %v644, 7
    %v646 = vsub.s32 %v643, %v645
    %v647 = vrot.slane %v490, %v646
    %v649 = vunpack.c.l.s4 1966171168
    %v650 = vunpack.c.0.s8 %v649
    %v651 = vlaneseq
    %v652 = vshrl.u32 %v651, 7
    %v653 = vsub.s32 %v650, %v652
    %v654 = vrot.slane %v640, %v653
    %v655 = vcombine.high %v647, %v647
    %v656 = vcombine.high %v654, %v654
    %v658 = vunpack.c.l.s4 1966171168
    %v659 = vunpack.c.0.s8 %v658
    %v660 = vlaneseq
    %v661 = vshrl.u32 %v660, 7
    %v662 = vsub.s32 %v659, %v661
    %v663 = vrot.slane %v647, %v662
    %v665 = vunpack.c.l.s4 1966171168
    %v666 = vunpack.c.0.s8 %v665
    %v667 = vlaneseq
    %v668 = vshrl.u32 %v667, 7
    %v669 = vsub.s32 %v666, %v668
    %v670 = vrot.slane %v654, %v669
    %v672 = vunpack.c.l.s4 1966171168
    %v673 = vunpack.c.0.s8 %v672
    %v674 = vlaneseq
    %v675 = vshrl.u32 %v674, 7
    %v676 = vsub.s32 %v673, %v675
    %v677 = vrot.slane %v655, %v676
    %v679 = vunpack.c.l.s4 1966171168
    %v680 = vunpack.c.0.s8 %v679
    %v681 = vlaneseq
    %v682 = vshrl.u32 %v681, 7
    %v683 = vsub.s32 %v680, %v682
    %v684 = vrot.slane %v656, %v683
    %v685 = vcombine.high %v663, %v663
    %v686 = vcombine.high %v670, %v670
    %v687 = vcombine.high %v677, %v677
    %v688 = vcombine.high %v684, %v684
    %v689 = vcombine.high %v491, %v491
    %v691 = vunpack.c.l.s4 1966171168
    %v692 = vunpack.c.0.s8 %v691
    %v693 = vlaneseq
    %v694 = vshrl.u32 %v693, 7
    %v695 = vsub.s32 %v692, %v694
    %v696 = vrot.slane %v491, %v695
    %v698 = vunpack.c.l.s4 1966171168
    %v699 = vunpack.c.0.s8 %v698
    %v700 = vlaneseq
    %v701 = vshrl.u32 %v700, 7
    %v702 = vsub.s32 %v699, %v701
    %v703 = vrot.slane %v689, %v702
    %v704 = vcombine.high %v696, %v696
    %v705 = vcombine.high %v703, %v703
    %v707 = vunpack.c.l.s4 1966171168
    %v708 = vunpack.c.0.s8 %v707
    %v709 = vlaneseq
    %v710 = vshrl.u32 %v709, 7
    %v711 = vsub.s32 %v708, %v710
    %v712 = vrot.slane %v696, %v711
    %v714 = vunpack.c.l.s4 1966171168
    %v715 = vunpack.c.0.s8 %v714
    %v716 = vlaneseq
    %v717 = vshrl.u32 %v716, 7
    %v718 = vsub.s32 %v715, %v717
    %v719 = vrot.slane %v703, %v718
    %v721 = vunpack.c.l.s4 1966171168
    %v722 = vunpack.c.0.s8 %v721
    %v723 = vlaneseq
    %v724 = vshrl.u32 %v723, 7
    %v725 = vsub.s32 %v722, %v724
    %v726 = vrot.slane %v704, %v725
    %v728 = vunpack.c.l.s4 1966171168
    %v729 = vunpack.c.0.s8 %v728
    %v730 = vlaneseq
    %v731 = vshrl.u32 %v730, 7
    %v732 = vsub.s32 %v729, %v731
    %v733 = vrot.slane %v705, %v732
    %v734 = vcombine.high %v712, %v712
    %v735 = vcombine.high %v719, %v719
    %v736 = vcombine.high %v726, %v726
    %v737 = vcombine.high %v733, %v733
    %v738 = vcombine.high %v492, %v492
    %v740 = vunpack.c.l.s4 1966171168
    %v741 = vunpack.c.0.s8 %v740
    %v742 = vlaneseq
    %v743 = vshrl.u32 %v742, 7
    %v744 = vsub.s32 %v741, %v743
    %v745 = vrot.slane %v492, %v744
    %v747 = vunpack.c.l.s4 1966171168
    %v748 = vunpack.c.0.s8 %v747
    %v749 = vlaneseq
    %v750 = vshrl.u32 %v749, 7
    %v751 = vsub.s32 %v748, %v750
    %v752 = vrot.slane %v738, %v751
    %v753 = vcombine.high %v745, %v745
    %v754 = vcombine.high %v752, %v752
    %v756 = vunpack.c.l.s4 1966171168
    %v757 = vunpack.c.0.s8 %v756
    %v758 = vlaneseq
    %v759 = vshrl.u32 %v758, 7
    %v760 = vsub.s32 %v757, %v759
    %v761 = vrot.slane %v745, %v760
    %v763 = vunpack.c.l.s4 1966171168
    %v764 = vunpack.c.0.s8 %v763
    %v765 = vlaneseq
    %v766 = vshrl.u32 %v765, 7
    %v767 = vsub.s32 %v764, %v766
    %v768 = vrot.slane %v752, %v767
    %v770 = vunpack.c.l.s4 1966171168
    %v771 = vunpack.c.0.s8 %v770
    %v772 = vlaneseq
    %v773 = vshrl.u32 %v772, 7
    %v774 = vsub.s32 %v771, %v773
    %v775 = vrot.slane %v753, %v774
    %v777 = vunpack.c.l.s4 1966171168
    %v778 = vunpack.c.0.s8 %v777
    %v779 = vlaneseq
    %v780 = vshrl.u32 %v779, 7
    %v781 = vsub.s32 %v778, %v780
    %v782 = vrot.slane %v754, %v781
    %v783 = vcombine.high %v761, %v761
    %v784 = vcombine.high %v768, %v768
    %v785 = vcombine.high %v775, %v775
    %v786 = vcombine.high %v782, %v782
    %v787 = vcombine.high %v493, %v493
    %v789 = vunpack.c.l.s4 1966171168
    %v790 = vunpack.c.0.s8 %v789
    %v791 = vlaneseq
    %v792 = vshrl.u32 %v791, 7
    %v793 = vsub.s32 %v790, %v792
    %v794 = vrot.slane %v493, %v793
    %v796 = vunpack.c.l.s4 1966171168
    %v797 = vunpack.c.0.s8 %v796
    %v798 = vlaneseq
    %v799 = vshrl.u32 %v798, 7
    %v800 = vsub.s32 %v797, %v799
    %v801 = vrot.slane %v787, %v800
    %v802 = vcombine.high %v794, %v794
    %v803 = vcombine.high %v801, %v801
    %v805 = vunpack.c.l.s4 1966171168
    %v806 = vunpack.c.0.s8 %v805
    %v807 = vlaneseq
    %v808 = vshrl.u32 %v807, 7
    %v809 = vsub.s32 %v806, %v808
    %v810 = vrot.slane %v794, %v809
    %v812 = vunpack.c.l.s4 1966171168
    %v813 = vunpack.c.0.s8 %v812
    %v814 = vlaneseq
    %v815 = vshrl.u32 %v814, 7
    %v816 = vsub.s32 %v813, %v815
    %v817 = vrot.slane %v801, %v816
    %v819 = vunpack.c.l.s4 1966171168
    %v820 = vunpack.c.0.s8 %v819
    %v821 = vlaneseq
    %v822 = vshrl.u32 %v821, 7
    %v823 = vsub.s32 %v820, %v822
    %v824 = vrot.slane %v802, %v823
    %v826 = vunpack.c.l.s4 1966171168
    %v827 = vunpack.c.0.s8 %v826
    %v828 = vlaneseq
    %v829 = vshrl.u32 %v828, 7
    %v830 = vsub.s32 %v827, %v829
    %v831 = vrot.slane %v803, %v830
    %v832 = vcombine.high %v810, %v810
    %v833 = vcombine.high %v817, %v817
    %v834 = vcombine.high %v824, %v824
    %v835 = vcombine.high %v831, %v831
    %v836 = vcombine.high %v494, %v494
    %v838 = vunpack.c.l.s4 1966171168
    %v839 = vunpack.c.0.s8 %v838
    %v840 = vlaneseq
    %v841 = vshrl.u32 %v840, 7
    %v842 = vsub.s32 %v839, %v841
    %v843 = vrot.slane %v494, %v842
    %v845 = vunpack.c.l.s4 1966171168
    %v846 = vunpack.c.0.s8 %v845
    %v847 = vlaneseq
    %v848 = vshrl.u32 %v847, 7
    %v849 = vsub.s32 %v846, %v848
    %v850 = vrot.slane %v836, %v849
    %v851 = vcombine.high %v843, %v843
    %v852 = vcombine.high %v850, %v850
    %v854 = vunpack.c.l.s4 1966171168
    %v855 = vunpack.c.0.s8 %v854
    %v856 = vlaneseq
    %v857 = vshrl.u32 %v856, 7
    %v858 = vsub.s32 %v855, %v857
    %v859 = vrot.slane %v843, %v858
    %v861 = vunpack.c.l.s4 1966171168
    %v862 = vunpack.c.0.s8 %v861
    %v863 = vlaneseq
    %v864 = vshrl.u32 %v863, 7
    %v865 = vsub.s32 %v862, %v864
    %v866 = vrot.slane %v850, %v865
    %v868 = vunpack.c.l.s4 1966171168
    %v869 = vunpack.c.0.s8 %v868
    %v870 = vlaneseq
    %v871 = vshrl.u32 %v870, 7
    %v872 = vsub.s32 %v869, %v871
    %v873 = vrot.slane %v851, %v872
    %v875 = vunpack.c.l.s4 1966171168
    %v876 = vunpack.c.0.s8 %v875
    %v877 = vlaneseq
    %v878 = vshrl.u32 %v877, 7
    %v879 = vsub.s32 %v876, %v878
    %v880 = vrot.slane %v852, %v879
    %v881 = vcombine.high %v859, %v859
    %v882 = vcombine.high %v866, %v866
    %v883 = vcombine.high %v873, %v873
    %v884 = vcombine.high %v880, %v880
    %v885 = vcombine.high %v495, %v495
    %v887 = vunpack.c.l.s4 1966171168
    %v888 = vunpack.c.0.s8 %v887
    %v889 = vlaneseq
    %v890 = vshrl.u32 %v889, 7
    %v891 = vsub.s32 %v888, %v890
    %v892 = vrot.slane %v495, %v891
    %v894 = vunpack.c.l.s4 1966171168
    %v895 = vunpack.c.0.s8 %v894
    %v896 = vlaneseq
    %v897 = vshrl.u32 %v896, 7
    %v898 = vsub.s32 %v895, %v897
    %v899 = vrot.slane %v885, %v898
    %v900 = vcombine.high %v892, %v892
    %v901 = vcombine.high %v899, %v899
    %v903 = vunpack.c.l.s4 1966171168
    %v904 = vunpack.c.0.s8 %v903
    %v905 = vlaneseq
    %v906 = vshrl.u32 %v905, 7
    %v907 = vsub.s32 %v904, %v906
    %v908 = vrot.slane %v892, %v907
    %v910 = vunpack.c.l.s4 1966171168
    %v911 = vunpack.c.0.s8 %v910
    %v912 = vlaneseq
    %v913 = vshrl.u32 %v912, 7
    %v914 = vsub.s32 %v911, %v913
    %v915 = vrot.slane %v899, %v914
    %v917 = vunpack.c.l.s4 1966171168
    %v918 = vunpack.c.0.s8 %v917
    %v919 = vlaneseq
    %v920 = vshrl.u32 %v919, 7
    %v921 = vsub.s32 %v918, %v920
    %v922 = vrot.slane %v900, %v921
    %v924 = vunpack.c.l.s4 1966171168
    %v925 = vunpack.c.0.s8 %v924
    %v926 = vlaneseq
    %v927 = vshrl.u32 %v926, 7
    %v928 = vsub.s32 %v925, %v927
    %v929 = vrot.slane %v901, %v928
    %v930 = vcombine.high %v908, %v908
    %v931 = vcombine.high %v915, %v915
    %v932 = vcombine.high %v922, %v922
    %v933 = vcombine.high %v929, %v929
    %v935 = vunpack.c.l.s4 1966171168
    %v936 = vunpack.c.0.s8 %v935
    %v937 = vlaneseq
    %v938 = vshrl.u32 %v937, 7
    %v939 = vsub.s32 %v936, %v938
    %v940 = vrot.slane %v496, %v939
    %v942 = vunpack.c.l.s4 1966171168
    %v943 = vunpack.c.0.s8 %v942
    %v944 = vlaneseq
    %v945 = vshrl.u32 %v944, 7
    %v946 = vsub.s32 %v943, %v945
    %v947 = vrot.slane %v940, %v946
    %v948 = vcombine.high %v497, %v497
    %v950 = vunpack.c.l.s4 1966171168
    %v951 = vunpack.c.0.s8 %v950
    %v952 = vlaneseq
    %v953 = vshrl.u32 %v952, 7
    %v954 = vsub.s32 %v951, %v953
    %v955 = vrot.slane %v497, %v954
    %v957 = vunpack.c.l.s4 1966171168
    %v958 = vunpack.c.0.s8 %v957
    %v959 = vlaneseq
    %v960 = vshrl.u32 %v959, 7
    %v961 = vsub.s32 %v958, %v960
    %v962 = vrot.slane %v948, %v961
    %v963 = vcombine.high %v955, %v955
    %v964 = vcombine.high %v962, %v962
    %v966 = vunpack.c.l.s4 1966171168
    %v967 = vunpack.c.0.s8 %v966
    %v968 = vlaneseq
    %v969 = vshrl.u32 %v968, 7
    %v970 = vsub.s32 %v967, %v969
    %v971 = vrot.slane %v955, %v970
    %v973 = vunpack.c.l.s4 1966171168
    %v974 = vunpack.c.0.s8 %v973
    %v975 = vlaneseq
    %v976 = vshrl.u32 %v975, 7
    %v977 = vsub.s32 %v974, %v976
    %v978 = vrot.slane %v962, %v977
    %v980 = vunpack.c.l.s4 1966171168
    %v981 = vunpack.c.0.s8 %v980
    %v982 = vlaneseq
    %v983 = vshrl.u32 %v982, 7
    %v984 = vsub.s32 %v981, %v983
    %v985 = vrot.slane %v963, %v984
    %v987 = vunpack.c.l.s4 1966171168
    %v988 = vunpack.c.0.s8 %v987
    %v989 = vlaneseq
    %v990 = vshrl.u32 %v989, 7
    %v991 = vsub.s32 %v988, %v990
    %v992 = vrot.slane %v964, %v991
    %v993 = vcombine.high %v971, %v971
    %v994 = vcombine.high %v978, %v978
    %v995 = vcombine.high %v985, %v985
    %v996 = vcombine.high %v992, %v992
    %v997 = vcombine.high %v498, %v498
    %v999 = vunpack.c.l.s4 1966171168
    %v1000 = vunpack.c.0.s8 %v999
    %v1001 = vlaneseq
    %v1002 = vshrl.u32 %v1001, 7
    %v1003 = vsub.s32 %v1000, %v1002
    %v1004 = vrot.slane %v498, %v1003
    %v1006 = vunpack.c.l.s4 1966171168
    %v1007 = vunpack.c.0.s8 %v1006
    %v1008 = vlaneseq
    %v1009 = vshrl.u32 %v1008, 7
    %v1010 = vsub.s32 %v1007, %v1009
    %v1011 = vrot.slane %v997, %v1010
    %v1012 = vcombine.high %v1004, %v1004
    %v1013 = vcombine.high %v1011, %v1011
    %v1015 = vunpack.c.l.s4 1966171168
    %v1016 = vunpack.c.0.s8 %v1015
    %v1017 = vlaneseq
    %v1018 = vshrl.u32 %v1017, 7
    %v1019 = vsub.s32 %v1016, %v1018
    %v1020 = vrot.slane %v1004, %v1019
    %v1022 = vunpack.c.l.s4 1966171168
    %v1023 = vunpack.c.0.s8 %v1022
    %v1024 = vlaneseq
    %v1025 = vshrl.u32 %v1024, 7
    %v1026 = vsub.s32 %v1023, %v1025
    %v1027 = vrot.slane %v1011, %v1026
    %v1029 = vunpack.c.l.s4 1966171168
    %v1030 = vunpack.c.0.s8 %v1029
    %v1031 = vlaneseq
    %v1032 = vshrl.u32 %v1031, 7
    %v1033 = vsub.s32 %v1030, %v1032
    %v1034 = vrot.slane %v1012, %v1033
    %v1036 = vunpack.c.l.s4 1966171168
    %v1037 = vunpack.c.0.s8 %v1036
    %v1038 = vlaneseq
    %v1039 = vshrl.u32 %v1038, 7
    %v1040 = vsub.s32 %v1037, %v1039
    %v1041 = vrot.slane %v1013, %v1040
    %v1042 = vcombine.high %v1020, %v1020
    %v1043 = vcombine.high %v1027, %v1027
    %v1044 = vcombine.high %v1034, %v1034
    %v1045 = vcombine.high %v1041, %v1041
    %v1046 = vcombine.high %v499, %v499
    %v1048 = vunpack.c.l.s4 1966171168
    %v1049 = vunpack.c.0.s8 %v1048
    %v1050 = vlaneseq
    %v1051 = vshrl.u32 %v1050, 7
    %v1052 = vsub.s32 %v1049, %v1051
    %v1053 = vrot.slane %v499, %v1052
    %v1055 = vunpack.c.l.s4 1966171168
    %v1056 = vunpack.c.0.s8 %v1055
    %v1057 = vlaneseq
    %v1058 = vshrl.u32 %v1057, 7
    %v1059 = vsub.s32 %v1056, %v1058
    %v1060 = vrot.slane %v1046, %v1059
    %v1061 = vcombine.high %v1053, %v1053
    %v1062 = vcombine.high %v1060, %v1060
    %v1064 = vunpack.c.l.s4 1966171168
    %v1065 = vunpack.c.0.s8 %v1064
    %v1066 = vlaneseq
    %v1067 = vshrl.u32 %v1066, 7
    %v1068 = vsub.s32 %v1065, %v1067
    %v1069 = vrot.slane %v1053, %v1068
    %v1071 = vunpack.c.l.s4 1966171168
    %v1072 = vunpack.c.0.s8 %v1071
    %v1073 = vlaneseq
    %v1074 = vshrl.u32 %v1073, 7
    %v1075 = vsub.s32 %v1072, %v1074
    %v1076 = vrot.slane %v1060, %v1075
    %v1078 = vunpack.c.l.s4 1966171168
    %v1079 = vunpack.c.0.s8 %v1078
    %v1080 = vlaneseq
    %v1081 = vshrl.u32 %v1080, 7
    %v1082 = vsub.s32 %v1079, %v1081
    %v1083 = vrot.slane %v1061, %v1082
    %v1085 = vunpack.c.l.s4 1966171168
    %v1086 = vunpack.c.0.s8 %v1085
    %v1087 = vlaneseq
    %v1088 = vshrl.u32 %v1087, 7
    %v1089 = vsub.s32 %v1086, %v1088
    %v1090 = vrot.slane %v1062, %v1089
    %v1091 = vcombine.high %v1069, %v1069
    %v1092 = vcombine.high %v1076, %v1076
    %v1093 = vcombine.high %v1083, %v1083
    %v1094 = vcombine.high %v1090, %v1090
    %v1095 = vcombine.high %v500, %v500
    %v1097 = vunpack.c.l.s4 1966171168
    %v1098 = vunpack.c.0.s8 %v1097
    %v1099 = vlaneseq
    %v1100 = vshrl.u32 %v1099, 7
    %v1101 = vsub.s32 %v1098, %v1100
    %v1102 = vrot.slane %v500, %v1101
    %v1104 = vunpack.c.l.s4 1966171168
    %v1105 = vunpack.c.0.s8 %v1104
    %v1106 = vlaneseq
    %v1107 = vshrl.u32 %v1106, 7
    %v1108 = vsub.s32 %v1105, %v1107
    %v1109 = vrot.slane %v1095, %v1108
    %v1110 = vcombine.high %v1102, %v1102
    %v1111 = vcombine.high %v1109, %v1109
    %v1113 = vunpack.c.l.s4 1966171168
    %v1114 = vunpack.c.0.s8 %v1113
    %v1115 = vlaneseq
    %v1116 = vshrl.u32 %v1115, 7
    %v1117 = vsub.s32 %v1114, %v1116
    %v1118 = vrot.slane %v1102, %v1117
    %v1120 = vunpack.c.l.s4 1966171168
    %v1121 = vunpack.c.0.s8 %v1120
    %v1122 = vlaneseq
    %v1123 = vshrl.u32 %v1122, 7
    %v1124 = vsub.s32 %v1121, %v1123
    %v1125 = vrot.slane %v1109, %v1124
    %v1127 = vunpack.c.l.s4 1966171168
    %v1128 = vunpack.c.0.s8 %v1127
    %v1129 = vlaneseq
    %v1130 = vshrl.u32 %v1129, 7
    %v1131 = vsub.s32 %v1128, %v1130
    %v1132 = vrot.slane %v1110, %v1131
    %v1134 = vunpack.c.l.s4 1966171168
    %v1135 = vunpack.c.0.s8 %v1134
    %v1136 = vlaneseq
    %v1137 = vshrl.u32 %v1136, 7
    %v1138 = vsub.s32 %v1135, %v1137
    %v1139 = vrot.slane %v1111, %v1138
    %v1140 = vcombine.high %v1118, %v1118
    %v1141 = vcombine.high %v1125, %v1125
    %v1142 = vcombine.high %v1132, %v1132
    %v1143 = vcombine.high %v1139, %v1139
    %v1144 = vcombine.high %v501, %v501
    %v1146 = vunpack.c.l.s4 1966171168
    %v1147 = vunpack.c.0.s8 %v1146
    %v1148 = vlaneseq
    %v1149 = vshrl.u32 %v1148, 7
    %v1150 = vsub.s32 %v1147, %v1149
    %v1151 = vrot.slane %v501, %v1150
    %v1153 = vunpack.c.l.s4 1966171168
    %v1154 = vunpack.c.0.s8 %v1153
    %v1155 = vlaneseq
    %v1156 = vshrl.u32 %v1155, 7
    %v1157 = vsub.s32 %v1154, %v1156
    %v1158 = vrot.slane %v1144, %v1157
    %v1159 = vcombine.high %v1151, %v1151
    %v1160 = vcombine.high %v1158, %v1158
    %v1162 = vunpack.c.l.s4 1966171168
    %v1163 = vunpack.c.0.s8 %v1162
    %v1164 = vlaneseq
    %v1165 = vshrl.u32 %v1164, 7
    %v1166 = vsub.s32 %v1163, %v1165
    %v1167 = vrot.slane %v1151, %v1166
    %v1169 = vunpack.c.l.s4 1966171168
    %v1170 = vunpack.c.0.s8 %v1169
    %v1171 = vlaneseq
    %v1172 = vshrl.u32 %v1171, 7
    %v1173 = vsub.s32 %v1170, %v1172
    %v1174 = vrot.slane %v1158, %v1173
    %v1176 = vunpack.c.l.s4 1966171168
    %v1177 = vunpack.c.0.s8 %v1176
    %v1178 = vlaneseq
    %v1179 = vshrl.u32 %v1178, 7
    %v1180 = vsub.s32 %v1177, %v1179
    %v1181 = vrot.slane %v1159, %v1180
    %v1183 = vunpack.c.l.s4 1966171168
    %v1184 = vunpack.c.0.s8 %v1183
    %v1185 = vlaneseq
    %v1186 = vshrl.u32 %v1185, 7
    %v1187 = vsub.s32 %v1184, %v1186
    %v1188 = vrot.slane %v1160, %v1187
    %v1189 = vcombine.high %v1167, %v1167
    %v1190 = vcombine.high %v1174, %v1174
    %v1191 = vcombine.high %v1181, %v1181
    %v1192 = vcombine.high %v1188, %v1188
    %v1193 = vcombine.high %v502, %v502
    %v1195 = vunpack.c.l.s4 1966171168
    %v1196 = vunpack.c.0.s8 %v1195
    %v1197 = vlaneseq
    %v1198 = vshrl.u32 %v1197, 7
    %v1199 = vsub.s32 %v1196, %v1198
    %v1200 = vrot.slane %v502, %v1199
    %v1202 = vunpack.c.l.s4 1966171168
    %v1203 = vunpack.c.0.s8 %v1202
    %v1204 = vlaneseq
    %v1205 = vshrl.u32 %v1204, 7
    %v1206 = vsub.s32 %v1203, %v1205
    %v1207 = vrot.slane %v1193, %v1206
    %v1208 = vcombine.high %v1200, %v1200
    %v1209 = vcombine.high %v1207, %v1207
    %v1211 = vunpack.c.l.s4 1966171168
    %v1212 = vunpack.c.0.s8 %v1211
    %v1213 = vlaneseq
    %v1214 = vshrl.u32 %v1213, 7
    %v1215 = vsub.s32 %v1212, %v1214
    %v1216 = vrot.slane %v1200, %v1215
    %v1218 = vunpack.c.l.s4 1966171168
    %v1219 = vunpack.c.0.s8 %v1218
    %v1220 = vlaneseq
    %v1221 = vshrl.u32 %v1220, 7
    %v1222 = vsub.s32 %v1219, %v1221
    %v1223 = vrot.slane %v1207, %v1222
    %v1225 = vunpack.c.l.s4 1966171168
    %v1226 = vunpack.c.0.s8 %v1225
    %v1227 = vlaneseq
    %v1228 = vshrl.u32 %v1227, 7
    %v1229 = vsub.s32 %v1226, %v1228
    %v1230 = vrot.slane %v1208, %v1229
    %v1232 = vunpack.c.l.s4 1966171168
    %v1233 = vunpack.c.0.s8 %v1232
    %v1234 = vlaneseq
    %v1235 = vshrl.u32 %v1234, 7
    %v1236 = vsub.s32 %v1233, %v1235
    %v1237 = vrot.slane %v1209, %v1236
    %v1238 = vcombine.high %v1216, %v1216
    %v1239 = vcombine.high %v1223, %v1223
    %v1240 = vcombine.high %v1230, %v1230
    %v1241 = vcombine.high %v1237, %v1237
    %v1242 = vcombine.high %v503, %v503
    %v1244 = vunpack.c.l.s4 1966171168
    %v1245 = vunpack.c.0.s8 %v1244
    %v1246 = vlaneseq
    %v1247 = vshrl.u32 %v1246, 7
    %v1248 = vsub.s32 %v1245, %v1247
    %v1249 = vrot.slane %v503, %v1248
    %v1251 = vunpack.c.l.s4 1966171168
    %v1252 = vunpack.c.0.s8 %v1251
    %v1253 = vlaneseq
    %v1254 = vshrl.u32 %v1253, 7
    %v1255 = vsub.s32 %v1252, %v1254
    %v1256 = vrot.slane %v1242, %v1255
    %v1257 = vcombine.high %v1249, %v1249
    %v1258 = vcombine.high %v1256, %v1256
    %v1260 = vunpack.c.l.s4 1966171168
    %v1261 = vunpack.c.0.s8 %v1260
    %v1262 = vlaneseq
    %v1263 = vshrl.u32 %v1262, 7
    %v1264 = vsub.s32 %v1261, %v1263
    %v1265 = vrot.slane %v1249, %v1264
    %v1267 = vunpack.c.l.s4 1966171168
    %v1268 = vunpack.c.0.s8 %v1267
    %v1269 = vlaneseq
    %v1270 = vshrl.u32 %v1269, 7
    %v1271 = vsub.s32 %v1268, %v1270
    %v1272 = vrot.slane %v1256, %v1271
    %v1274 = vunpack.c.l.s4 1966171168
    %v1275 = vunpack.c.0.s8 %v1274
    %v1276 = vlaneseq
    %v1277 = vshrl.u32 %v1276, 7
    %v1278 = vsub.s32 %v1275, %v1277
    %v1279 = vrot.slane %v1257, %v1278
    %v1281 = vunpack.c.l.s4 1966171168
    %v1282 = vunpack.c.0.s8 %v1281
    %v1283 = vlaneseq
    %v1284 = vshrl.u32 %v1283, 7
    %v1285 = vsub.s32 %v1282, %v1284
    %v1286 = vrot.slane %v1258, %v1285
    %v1287 = vcombine.high %v1265, %v1265
    %v1288 = vcombine.high %v1272, %v1272
    %v1289 = vcombine.high %v1279, %v1279
    %v1290 = vcombine.high %v1286, %v1286
    %v1291 = vcombine.high %v504, %v504
    %v1293 = vunpack.c.l.s4 1966171168
    %v1294 = vunpack.c.0.s8 %v1293
    %v1295 = vlaneseq
    %v1296 = vshrl.u32 %v1295, 7
    %v1297 = vsub.s32 %v1294, %v1296
    %v1298 = vrot.slane %v504, %v1297
    %v1300 = vunpack.c.l.s4 1966171168
    %v1301 = vunpack.c.0.s8 %v1300
    %v1302 = vlaneseq
    %v1303 = vshrl.u32 %v1302, 7
    %v1304 = vsub.s32 %v1301, %v1303
    %v1305 = vrot.slane %v1291, %v1304
    %v1306 = vcombine.high %v1298, %v1298
    %v1307 = vcombine.high %v1305, %v1305
    %v1309 = vunpack.c.l.s4 1966171168
    %v1310 = vunpack.c.0.s8 %v1309
    %v1311 = vlaneseq
    %v1312 = vshrl.u32 %v1311, 7
    %v1313 = vsub.s32 %v1310, %v1312
    %v1314 = vrot.slane %v1298, %v1313
    %v1316 = vunpack.c.l.s4 1966171168
    %v1317 = vunpack.c.0.s8 %v1316
    %v1318 = vlaneseq
    %v1319 = vshrl.u32 %v1318, 7
    %v1320 = vsub.s32 %v1317, %v1319
    %v1321 = vrot.slane %v1305, %v1320
    %v1323 = vunpack.c.l.s4 1966171168
    %v1324 = vunpack.c.0.s8 %v1323
    %v1325 = vlaneseq
    %v1326 = vshrl.u32 %v1325, 7
    %v1327 = vsub.s32 %v1324, %v1326
    %v1328 = vrot.slane %v1306, %v1327
    %v1330 = vunpack.c.l.s4 1966171168
    %v1331 = vunpack.c.0.s8 %v1330
    %v1332 = vlaneseq
    %v1333 = vshrl.u32 %v1332, 7
    %v1334 = vsub.s32 %v1331, %v1333
    %v1335 = vrot.slane %v1307, %v1334
    %v1336 = vcombine.high %v1314, %v1314
    %v1337 = vcombine.high %v1321, %v1321
    %v1338 = vcombine.high %v1328, %v1328
    %v1339 = vcombine.high %v1335, %v1335
    %v1341 = vunpack.c.l.s4 1966171168
    %v1342 = vunpack.c.0.s8 %v1341
    %v1343 = vlaneseq
    %v1344 = vshrl.u32 %v1343, 7
    %v1345 = vsub.s32 %v1342, %v1344
    %v1346 = vrot.slane %v505, %v1345
    %v1348 = vunpack.c.l.s4 1966171168
    %v1349 = vunpack.c.0.s8 %v1348
    %v1350 = vlaneseq
    %v1351 = vshrl.u32 %v1350, 7
    %v1352 = vsub.s32 %v1349, %v1351
    %v1353 = vrot.slane %v1346, %v1352
    %v1354 = vcombine.high %v523, %v523
    %v1356 = vunpack.c.l.s4 1983009808
    %v1357 = vunpack.c.0.s8 %v1356
    %v1358 = vlaneseq
    %v1359 = vshrl.u32 %v1358, 7
    %v1360 = vsub.s32 %v1357, %v1359
    %v1361 = vrot.slane %v523, %v1360
    %v1363 = vunpack.c.l.s4 1983009808
    %v1364 = vunpack.c.0.s8 %v1363
    %v1365 = vlaneseq
    %v1366 = vshrl.u32 %v1365, 7
    %v1367 = vsub.s32 %v1364, %v1366
    %v1368 = vrot.slane %v1354, %v1367
    %v1369 = vcombine.high %v1361, %v1361
    %v1370 = vcombine.high %v1368, %v1368
    %v1371 = vcombine.low %v565, %v579
    %v1372 = vcombine.low %v587, %v589
    %v1373 = vcombine.low %v572, %v586
    %v1374 = vcombine.low %v588, %v590
    %v1376 = vunpack.c.l.s4 1966171168
    %v1377 = vunpack.c.0.s8 %v1376
    %v1378 = vlaneseq
    %v1379 = vshrl.u32 %v1378, 7
    %v1380 = vsub.s32 %v1377, %v1379
    %v1381 = vrot.slane %v1371, %v1380
    %v1383 = vunpack.c.l.s4 1966171168
    %v1384 = vunpack.c.0.s8 %v1383
    %v1385 = vlaneseq
    %v1386 = vshrl.u32 %v1385, 7
    %v1387 = vsub.s32 %v1384, %v1386
    %v1388 = vrot.slane %v1372, %v1387
    %v1390 = vunpack.c.l.s4 1966171168
    %v1391 = vunpack.c.0.s8 %v1390
    %v1392 = vlaneseq
    %v1393 = vshrl.u32 %v1392, 7
    %v1394 = vsub.s32 %v1391, %v1393
    %v1395 = vrot.slane %v1373, %v1394
    %v1397 = vunpack.c.l.s4 1966171168
    %v1398 = vunpack.c.0.s8 %v1397
    %v1399 = vlaneseq
    %v1400 = vshrl.u32 %v1399, 7
    %v1401 = vsub.s32 %v1398, %v1400
    %v1402 = vrot.slane %v1374, %v1401
    %v1403 = vcombine.low %v1381, %v1388
    %v1404 = vcombine.low %v1395, %v1402
    %v1406 = vunpack.c.l.s4 1966171168
    %v1407 = vunpack.c.0.s8 %v1406
    %v1408 = vlaneseq
    %v1409 = vshrl.u32 %v1408, 7
    %v1410 = vsub.s32 %v1407, %v1409
    %v1411 = vrot.slane %v1403, %v1410
    %v1413 = vunpack.c.l.s4 1966171168
    %v1414 = vunpack.c.0.s8 %v1413
    %v1415 = vlaneseq
    %v1416 = vshrl.u32 %v1415, 7
    %v1417 = vsub.s32 %v1414, %v1416
    %v1418 = vrot.slane %v1404, %v1417
    %v1419 = vcombine.low %v1411, %v1418
    %v1420 = vcombine.low %v614, %v628
    %v1421 = vcombine.low %v636, %v638
    %v1422 = vcombine.low %v621, %v635
    %v1423 = vcombine.low %v637, %v639
    %v1425 = vunpack.c.l.s4 1966171168
    %v1426 = vunpack.c.0.s8 %v1425
    %v1427 = vlaneseq
    %v1428 = vshrl.u32 %v1427, 7
    %v1429 = vsub.s32 %v1426, %v1428
    %v1430 = vrot.slane %v1420, %v1429
    %v1432 = vunpack.c.l.s4 1966171168
    %v1433 = vunpack.c.0.s8 %v1432
    %v1434 = vlaneseq
    %v1435 = vshrl.u32 %v1434, 7
    %v1436 = vsub.s32 %v1433, %v1435
    %v1437 = vrot.slane %v1421, %v1436
    %v1439 = vunpack.c.l.s4 1966171168
    %v1440 = vunpack.c.0.s8 %v1439
    %v1441 = vlaneseq
    %v1442 = vshrl.u32 %v1441, 7
    %v1443 = vsub.s32 %v1440, %v1442
    %v1444 = vrot.slane %v1422, %v1443
    %v1446 = vunpack.c.l.s4 1966171168
    %v1447 = vunpack.c.0.s8 %v1446
    %v1448 = vlaneseq
    %v1449 = vshrl.u32 %v1448, 7
    %v1450 = vsub.s32 %v1447, %v1449
    %v1451 = vrot.slane %v1423, %v1450
    %v1452 = vcombine.low %v1430, %v1437
    %v1453 = vcombine.low %v1444, %v1451
    %v1455 = vunpack.c.l.s4 1966171168
    %v1456 = vunpack.c.0.s8 %v1455
    %v1457 = vlaneseq
    %v1458 = vshrl.u32 %v1457, 7
    %v1459 = vsub.s32 %v1456, %v1458
    %v1460 = vrot.slane %v1452, %v1459
    %v1462 = vunpack.c.l.s4 1966171168
    %v1463 = vunpack.c.0.s8 %v1462
    %v1464 = vlaneseq
    %v1465 = vshrl.u32 %v1464, 7
    %v1466 = vsub.s32 %v1463, %v1465
    %v1467 = vrot.slane %v1453, %v1466
    %v1468 = vcombine.low %v1460, %v1467
    %v1469 = vcombine.low %v663, %v677
    %v1470 = vcombine.low %v685, %v687
    %v1471 = vcombine.low %v670, %v684
    %v1472 = vcombine.low %v686, %v688
    %v1474 = vunpack.c.l.s4 1966171168
    %v1475 = vunpack.c.0.s8 %v1474
    %v1476 = vlaneseq
    %v1477 = vshrl.u32 %v1476, 7
    %v1478 = vsub.s32 %v1475, %v1477
    %v1479 = vrot.slane %v1469, %v1478
    %v1481 = vunpack.c.l.s4 1966171168
    %v1482 = vunpack.c.0.s8 %v1481
    %v1483 = vlaneseq
    %v1484 = vshrl.u32 %v1483, 7
    %v1485 = vsub.s32 %v1482, %v1484
    %v1486 = vrot.slane %v1470, %v1485
    %v1488 = vunpack.c.l.s4 1966171168
    %v1489 = vunpack.c.0.s8 %v1488
    %v1490 = vlaneseq
    %v1491 = vshrl.u32 %v1490, 7
    %v1492 = vsub.s32 %v1489, %v1491
    %v1493 = vrot.slane %v1471, %v1492
    %v1495 = vunpack.c.l.s4 1966171168
    %v1496 = vunpack.c.0.s8 %v1495
    %v1497 = vlaneseq
    %v1498 = vshrl.u32 %v1497, 7
    %v1499 = vsub.s32 %v1496, %v1498
    %v1500 = vrot.slane %v1472, %v1499
    %v1501 = vcombine.low %v1479, %v1486
    %v1502 = vcombine.low %v1493, %v1500
    %v1504 = vunpack.c.l.s4 1966171168
    %v1505 = vunpack.c.0.s8 %v1504
    %v1506 = vlaneseq
    %v1507 = vshrl.u32 %v1506, 7
    %v1508 = vsub.s32 %v1505, %v1507
    %v1509 = vrot.slane %v1501, %v1508
    %v1511 = vunpack.c.l.s4 1966171168
    %v1512 = vunpack.c.0.s8 %v1511
    %v1513 = vlaneseq
    %v1514 = vshrl.u32 %v1513, 7
    %v1515 = vsub.s32 %v1512, %v1514
    %v1516 = vrot.slane %v1502, %v1515
    %v1517 = vcombine.low %v1509, %v1516
    %v1518 = vcombine.low %v712, %v726
    %v1519 = vcombine.low %v734, %v736
    %v1520 = vcombine.low %v719, %v733
    %v1521 = vcombine.low %v735, %v737
    %v1523 = vunpack.c.l.s4 1966171168
    %v1524 = vunpack.c.0.s8 %v1523
    %v1525 = vlaneseq
    %v1526 = vshrl.u32 %v1525, 7
    %v1527 = vsub.s32 %v1524, %v1526
    %v1528 = vrot.slane %v1518, %v1527
    %v1530 = vunpack.c.l.s4 1966171168
    %v1531 = vunpack.c.0.s8 %v1530
    %v1532 = vlaneseq
    %v1533 = vshrl.u32 %v1532, 7
    %v1534 = vsub.s32 %v1531, %v1533
    %v1535 = vrot.slane %v1519, %v1534
    %v1537 = vunpack.c.l.s4 1966171168
    %v1538 = vunpack.c.0.s8 %v1537
    %v1539 = vlaneseq
    %v1540 = vshrl.u32 %v1539, 7
    %v1541 = vsub.s32 %v1538, %v1540
    %v1542 = vrot.slane %v1520, %v1541
    %v1544 = vunpack.c.l.s4 1966171168
    %v1545 = vunpack.c.0.s8 %v1544
    %v1546 = vlaneseq
    %v1547 = vshrl.u32 %v1546, 7
    %v1548 = vsub.s32 %v1545, %v1547
    %v1549 = vrot.slane %v1521, %v1548
    %v1550 = vcombine.low %v1528, %v1535
    %v1551 = vcombine.low %v1542, %v1549
    %v1553 = vunpack.c.l.s4 1966171168
    %v1554 = vunpack.c.0.s8 %v1553
    %v1555 = vlaneseq
    %v1556 = vshrl.u32 %v1555, 7
    %v1557 = vsub.s32 %v1554, %v1556
    %v1558 = vrot.slane %v1550, %v1557
    %v1560 = vunpack.c.l.s4 1966171168
    %v1561 = vunpack.c.0.s8 %v1560
    %v1562 = vlaneseq
    %v1563 = vshrl.u32 %v1562, 7
    %v1564 = vsub.s32 %v1561, %v1563
    %v1565 = vrot.slane %v1551, %v1564
    %v1566 = vcombine.low %v1558, %v1565
    %v1567 = vcombine.low %v761, %v775
    %v1568 = vcombine.low %v783, %v785
    %v1569 = vcombine.low %v768, %v782
    %v1570 = vcombine.low %v784, %v786
    %v1572 = vunpack.c.l.s4 1966171168
    %v1573 = vunpack.c.0.s8 %v1572
    %v1574 = vlaneseq
    %v1575 = vshrl.u32 %v1574, 7
    %v1576 = vsub.s32 %v1573, %v1575
    %v1577 = vrot.slane %v1567, %v1576
    %v1579 = vunpack.c.l.s4 1966171168
    %v1580 = vunpack.c.0.s8 %v1579
    %v1581 = vlaneseq
    %v1582 = vshrl.u32 %v1581, 7
    %v1583 = vsub.s32 %v1580, %v1582
    %v1584 = vrot.slane %v1568, %v1583
    %v1586 = vunpack.c.l.s4 1966171168
    %v1587 = vunpack.c.0.s8 %v1586
    %v1588 = vlaneseq
    %v1589 = vshrl.u32 %v1588, 7
    %v1590 = vsub.s32 %v1587, %v1589
    %v1591 = vrot.slane %v1569, %v1590
    %v1593 = vunpack.c.l.s4 1966171168
    %v1594 = vunpack.c.0.s8 %v1593
    %v1595 = vlaneseq
    %v1596 = vshrl.u32 %v1595, 7
    %v1597 = vsub.s32 %v1594, %v1596
    %v1598 = vrot.slane %v1570, %v1597
    %v1599 = vcombine.low %v1577, %v1584
    %v1600 = vcombine.low %v1591, %v1598
    %v1602 = vunpack.c.l.s4 1966171168
    %v1603 = vunpack.c.0.s8 %v1602
    %v1604 = vlaneseq
    %v1605 = vshrl.u32 %v1604, 7
    %v1606 = vsub.s32 %v1603, %v1605
    %v1607 = vrot.slane %v1599, %v1606
    %v1609 = vunpack.c.l.s4 1966171168
    %v1610 = vunpack.c.0.s8 %v1609
    %v1611 = vlaneseq
    %v1612 = vshrl.u32 %v1611, 7
    %v1613 = vsub.s32 %v1610, %v1612
    %v1614 = vrot.slane %v1600, %v1613
    %v1615 = vcombine.low %v1607, %v1614
    %v1616 = vcombine.low %v810, %v824
    %v1617 = vcombine.low %v832, %v834
    %v1618 = vcombine.low %v817, %v831
    %v1619 = vcombine.low %v833, %v835
    %v1621 = vunpack.c.l.s4 1966171168
    %v1622 = vunpack.c.0.s8 %v1621
    %v1623 = vlaneseq
    %v1624 = vshrl.u32 %v1623, 7
    %v1625 = vsub.s32 %v1622, %v1624
    %v1626 = vrot.slane %v1616, %v1625
    %v1628 = vunpack.c.l.s4 1966171168
    %v1629 = vunpack.c.0.s8 %v1628
    %v1630 = vlaneseq
    %v1631 = vshrl.u32 %v1630, 7
    %v1632 = vsub.s32 %v1629, %v1631
    %v1633 = vrot.slane %v1617, %v1632
    %v1635 = vunpack.c.l.s4 1966171168
    %v1636 = vunpack.c.0.s8 %v1635
    %v1637 = vlaneseq
    %v1638 = vshrl.u32 %v1637, 7
    %v1639 = vsub.s32 %v1636, %v1638
    %v1640 = vrot.slane %v1618, %v1639
    %v1642 = vunpack.c.l.s4 1966171168
    %v1643 = vunpack.c.0.s8 %v1642
    %v1644 = vlaneseq
    %v1645 = vshrl.u32 %v1644, 7
    %v1646 = vsub.s32 %v1643, %v1645
    %v1647 = vrot.slane %v1619, %v1646
    %v1648 = vcombine.low %v1626, %v1633
    %v1649 = vcombine.low %v1640, %v1647
    %v1651 = vunpack.c.l.s4 1966171168
    %v1652 = vunpack.c.0.s8 %v1651
    %v1653 = vlaneseq
    %v1654 = vshrl.u32 %v1653, 7
    %v1655 = vsub.s32 %v1652, %v1654
    %v1656 = vrot.slane %v1648, %v1655
    %v1658 = vunpack.c.l.s4 1966171168
    %v1659 = vunpack.c.0.s8 %v1658
    %v1660 = vlaneseq
    %v1661 = vshrl.u32 %v1660, 7
    %v1662 = vsub.s32 %v1659, %v1661
    %v1663 = vrot.slane %v1649, %v1662
    %v1664 = vcombine.low %v1656, %v1663
    %v1665 = vcombine.low %v859, %v873
    %v1666 = vcombine.low %v881, %v883
    %v1667 = vcombine.low %v866, %v880
    %v1668 = vcombine.low %v882, %v884
    %v1670 = vunpack.c.l.s4 1966171168
    %v1671 = vunpack.c.0.s8 %v1670
    %v1672 = vlaneseq
    %v1673 = vshrl.u32 %v1672, 7
    %v1674 = vsub.s32 %v1671, %v1673
    %v1675 = vrot.slane %v1665, %v1674
    %v1677 = vunpack.c.l.s4 1966171168
    %v1678 = vunpack.c.0.s8 %v1677
    %v1679 = vlaneseq
    %v1680 = vshrl.u32 %v1679, 7
    %v1681 = vsub.s32 %v1678, %v1680
    %v1682 = vrot.slane %v1666, %v1681
    %v1684 = vunpack.c.l.s4 1966171168
    %v1685 = vunpack.c.0.s8 %v1684
    %v1686 = vlaneseq
    %v1687 = vshrl.u32 %v1686, 7
    %v1688 = vsub.s32 %v1685, %v1687
    %v1689 = vrot.slane %v1667, %v1688
    %v1691 = vunpack.c.l.s4 1966171168
    %v1692 = vunpack.c.0.s8 %v1691
    %v1693 = vlaneseq
    %v1694 = vshrl.u32 %v1693, 7
    %v1695 = vsub.s32 %v1692, %v1694
    %v1696 = vrot.slane %v1668, %v1695
    %v1697 = vcombine.low %v1675, %v1682
    %v1698 = vcombine.low %v1689, %v1696
    %v1700 = vunpack.c.l.s4 1966171168
    %v1701 = vunpack.c.0.s8 %v1700
    %v1702 = vlaneseq
    %v1703 = vshrl.u32 %v1702, 7
    %v1704 = vsub.s32 %v1701, %v1703
    %v1705 = vrot.slane %v1697, %v1704
    %v1707 = vunpack.c.l.s4 1966171168
    %v1708 = vunpack.c.0.s8 %v1707
    %v1709 = vlaneseq
    %v1710 = vshrl.u32 %v1709, 7
    %v1711 = vsub.s32 %v1708, %v1710
    %v1712 = vrot.slane %v1698, %v1711
    %v1713 = vcombine.low %v1705, %v1712
    %v1714 = vcombine.low %v908, %v922
    %v1715 = vcombine.low %v930, %v932
    %v1716 = vcombine.low %v915, %v929
    %v1717 = vcombine.low %v931, %v933
    %v1719 = vunpack.c.l.s4 1966171168
    %v1720 = vunpack.c.0.s8 %v1719
    %v1721 = vlaneseq
    %v1722 = vshrl.u32 %v1721, 7
    %v1723 = vsub.s32 %v1720, %v1722
    %v1724 = vrot.slane %v1714, %v1723
    %v1726 = vunpack.c.l.s4 1966171168
    %v1727 = vunpack.c.0.s8 %v1726
    %v1728 = vlaneseq
    %v1729 = vshrl.u32 %v1728, 7
    %v1730 = vsub.s32 %v1727, %v1729
    %v1731 = vrot.slane %v1715, %v1730
    %v1733 = vunpack.c.l.s4 1966171168
    %v1734 = vunpack.c.0.s8 %v1733
    %v1735 = vlaneseq
    %v1736 = vshrl.u32 %v1735, 7
    %v1737 = vsub.s32 %v1734, %v1736
    %v1738 = vrot.slane %v1716, %v1737
    %v1740 = vunpack.c.l.s4 1966171168
    %v1741 = vunpack.c.0.s8 %v1740
    %v1742 = vlaneseq
    %v1743 = vshrl.u32 %v1742, 7
    %v1744 = vsub.s32 %v1741, %v1743
    %v1745 = vrot.slane %v1717, %v1744
    %v1746 = vcombine.low %v1724, %v1731
    %v1747 = vcombine.low %v1738, %v1745
    %v1749 = vunpack.c.l.s4 1966171168
    %v1750 = vunpack.c.0.s8 %v1749
    %v1751 = vlaneseq
    %v1752 = vshrl.u32 %v1751, 7
    %v1753 = vsub.s32 %v1750, %v1752
    %v1754 = vrot.slane %v1746, %v1753
    %v1756 = vunpack.c.l.s4 1966171168
    %v1757 = vunpack.c.0.s8 %v1756
    %v1758 = vlaneseq
    %v1759 = vshrl.u32 %v1758, 7
    %v1760 = vsub.s32 %v1757, %v1759
    %v1761 = vrot.slane %v1747, %v1760
    %v1762 = vcombine.low %v1754, %v1761
    %v1763 = vcombine.low %v947, %v971
    %v1764 = vcombine.low %v985, %v993
    %v1765 = vcombine.low %v995, %v978
    %v1766 = vcombine.low %v992, %v994
    %v1768 = vunpack.c.l.s4 1966171168
    %v1769 = vunpack.c.0.s8 %v1768
    %v1770 = vlaneseq
    %v1771 = vshrl.u32 %v1770, 7
    %v1772 = vsub.s32 %v1769, %v1771
    %v1773 = vrot.slane %v1763, %v1772
    %v1775 = vunpack.c.l.s4 1966171168
    %v1776 = vunpack.c.0.s8 %v1775
    %v1777 = vlaneseq
    %v1778 = vshrl.u32 %v1777, 7
    %v1779 = vsub.s32 %v1776, %v1778
    %v1780 = vrot.slane %v1764, %v1779
    %v1782 = vunpack.c.l.s4 1966171168
    %v1783 = vunpack.c.0.s8 %v1782
    %v1784 = vlaneseq
    %v1785 = vshrl.u32 %v1784, 7
    %v1786 = vsub.s32 %v1783, %v1785
    %v1787 = vrot.slane %v1765, %v1786
    %v1789 = vunpack.c.l.s4 1966171168
    %v1790 = vunpack.c.0.s8 %v1789
    %v1791 = vlaneseq
    %v1792 = vshrl.u32 %v1791, 7
    %v1793 = vsub.s32 %v1790, %v1792
    %v1794 = vrot.slane %v1766, %v1793
    %v1795 = vcombine.low %v1773, %v1780
    %v1796 = vcombine.low %v1787, %v1794
    %v1798 = vunpack.c.l.s4 1966171168
    %v1799 = vunpack.c.0.s8 %v1798
    %v1800 = vlaneseq
    %v1801 = vshrl.u32 %v1800, 7
    %v1802 = vsub.s32 %v1799, %v1801
    %v1803 = vrot.slane %v1795, %v1802
    %v1805 = vunpack.c.l.s4 1966171168
    %v1806 = vunpack.c.0.s8 %v1805
    %v1807 = vlaneseq
    %v1808 = vshrl.u32 %v1807, 7
    %v1809 = vsub.s32 %v1806, %v1808
    %v1810 = vrot.slane %v1796, %v1809
    %v1811 = vcombine.low %v1803, %v1810
    %v1812 = vcombine.low %v996, %v1020
    %v1813 = vcombine.low %v1034, %v1042
    %v1814 = vcombine.low %v1044, %v1027
    %v1815 = vcombine.low %v1041, %v1043
    %v1817 = vunpack.c.l.s4 1966171168
    %v1818 = vunpack.c.0.s8 %v1817
    %v1819 = vlaneseq
    %v1820 = vshrl.u32 %v1819, 7
    %v1821 = vsub.s32 %v1818, %v1820
    %v1822 = vrot.slane %v1812, %v1821
    %v1824 = vunpack.c.l.s4 1966171168
    %v1825 = vunpack.c.0.s8 %v1824
    %v1826 = vlaneseq
    %v1827 = vshrl.u32 %v1826, 7
    %v1828 = vsub.s32 %v1825, %v1827
    %v1829 = vrot.slane %v1813, %v1828
    %v1831 = vunpack.c.l.s4 1966171168
    %v1832 = vunpack.c.0.s8 %v1831
    %v1833 = vlaneseq
    %v1834 = vshrl.u32 %v1833, 7
    %v1835 = vsub.s32 %v1832, %v1834
    %v1836 = vrot.slane %v1814, %v1835
    %v1838 = vunpack.c.l.s4 1966171168
    %v1839 = vunpack.c.0.s8 %v1838
    %v1840 = vlaneseq
    %v1841 = vshrl.u32 %v1840, 7
    %v1842 = vsub.s32 %v1839, %v1841
    %v1843 = vrot.slane %v1815, %v1842
    %v1844 = vcombine.low %v1822, %v1829
    %v1845 = vcombine.low %v1836, %v1843
    %v1847 = vunpack.c.l.s4 1966171168
    %v1848 = vunpack.c.0.s8 %v1847
    %v1849 = vlaneseq
    %v1850 = vshrl.u32 %v1849, 7
    %v1851 = vsub.s32 %v1848, %v1850
    %v1852 = vrot.slane %v1844, %v1851
    %v1854 = vunpack.c.l.s4 1966171168
    %v1855 = vunpack.c.0.s8 %v1854
    %v1856 = vlaneseq
    %v1857 = vshrl.u32 %v1856, 7
    %v1858 = vsub.s32 %v1855, %v1857
    %v1859 = vrot.slane %v1845, %v1858
    %v1860 = vcombine.low %v1852, %v1859
    %v1861 = vcombine.low %v1045, %v1069
    %v1862 = vcombine.low %v1083, %v1091
    %v1863 = vcombine.low %v1093, %v1076
    %v1864 = vcombine.low %v1090, %v1092
    %v1866 = vunpack.c.l.s4 1966171168
    %v1867 = vunpack.c.0.s8 %v1866
    %v1868 = vlaneseq
    %v1869 = vshrl.u32 %v1868, 7
    %v1870 = vsub.s32 %v1867, %v1869
    %v1871 = vrot.slane %v1861, %v1870
    %v1873 = vunpack.c.l.s4 1966171168
    %v1874 = vunpack.c.0.s8 %v1873
    %v1875 = vlaneseq
    %v1876 = vshrl.u32 %v1875, 7
    %v1877 = vsub.s32 %v1874, %v1876
    %v1878 = vrot.slane %v1862, %v1877
    %v1880 = vunpack.c.l.s4 1966171168
    %v1881 = vunpack.c.0.s8 %v1880
    %v1882 = vlaneseq
    %v1883 = vshrl.u32 %v1882, 7
    %v1884 = vsub.s32 %v1881, %v1883
    %v1885 = vrot.slane %v1863, %v1884
    %v1887 = vunpack.c.l.s4 1966171168
    %v1888 = vunpack.c.0.s8 %v1887
    %v1889 = vlaneseq
    %v1890 = vshrl.u32 %v1889, 7
    %v1891 = vsub.s32 %v1888, %v1890
    %v1892 = vrot.slane %v1864, %v1891
    %v1893 = vcombine.low %v1871, %v1878
    %v1894 = vcombine.low %v1885, %v1892
    %v1896 = vunpack.c.l.s4 1966171168
    %v1897 = vunpack.c.0.s8 %v1896
    %v1898 = vlaneseq
    %v1899 = vshrl.u32 %v1898, 7
    %v1900 = vsub.s32 %v1897, %v1899
    %v1901 = vrot.slane %v1893, %v1900
    %v1903 = vunpack.c.l.s4 1966171168
    %v1904 = vunpack.c.0.s8 %v1903
    %v1905 = vlaneseq
    %v1906 = vshrl.u32 %v1905, 7
    %v1907 = vsub.s32 %v1904, %v1906
    %v1908 = vrot.slane %v1894, %v1907
    %v1909 = vcombine.low %v1901, %v1908
    %v1910 = vcombine.low %v1094, %v1118
    %v1911 = vcombine.low %v1132, %v1140
    %v1912 = vcombine.low %v1142, %v1125
    %v1913 = vcombine.low %v1139, %v1141
    %v1915 = vunpack.c.l.s4 1966171168
    %v1916 = vunpack.c.0.s8 %v1915
    %v1917 = vlaneseq
    %v1918 = vshrl.u32 %v1917, 7
    %v1919 = vsub.s32 %v1916, %v1918
    %v1920 = vrot.slane %v1910, %v1919
    %v1922 = vunpack.c.l.s4 1966171168
    %v1923 = vunpack.c.0.s8 %v1922
    %v1924 = vlaneseq
    %v1925 = vshrl.u32 %v1924, 7
    %v1926 = vsub.s32 %v1923, %v1925
    %v1927 = vrot.slane %v1911, %v1926
    %v1929 = vunpack.c.l.s4 1966171168
    %v1930 = vunpack.c.0.s8 %v1929
    %v1931 = vlaneseq
    %v1932 = vshrl.u32 %v1931, 7
    %v1933 = vsub.s32 %v1930, %v1932
    %v1934 = vrot.slane %v1912, %v1933
    %v1936 = vunpack.c.l.s4 1966171168
    %v1937 = vunpack.c.0.s8 %v1936
    %v1938 = vlaneseq
    %v1939 = vshrl.u32 %v1938, 7
    %v1940 = vsub.s32 %v1937, %v1939
    %v1941 = vrot.slane %v1913, %v1940
    %v1942 = vcombine.low %v1920, %v1927
    %v1943 = vcombine.low %v1934, %v1941
    %v1945 = vunpack.c.l.s4 1966171168
    %v1946 = vunpack.c.0.s8 %v1945
    %v1947 = vlaneseq
    %v1948 = vshrl.u32 %v1947, 7
    %v1949 = vsub.s32 %v1946, %v1948
    %v1950 = vrot.slane %v1942, %v1949
    %v1952 = vunpack.c.l.s4 1966171168
    %v1953 = vunpack.c.0.s8 %v1952
    %v1954 = vlaneseq
    %v1955 = vshrl.u32 %v1954, 7
    %v1956 = vsub.s32 %v1953, %v1955
    %v1957 = vrot.slane %v1943, %v1956
    %v1958 = vcombine.low %v1950, %v1957
    %v1959 = vcombine.low %v1143, %v1167
    %v1960 = vcombine.low %v1181, %v1189
    %v1961 = vcombine.low %v1191, %v1174
    %v1962 = vcombine.low %v1188, %v1190
    %v1964 = vunpack.c.l.s4 1966171168
    %v1965 = vunpack.c.0.s8 %v1964
    %v1966 = vlaneseq
    %v1967 = vshrl.u32 %v1966, 7
    %v1968 = vsub.s32 %v1965, %v1967
    %v1969 = vrot.slane %v1959, %v1968
    %v1971 = vunpack.c.l.s4 1966171168
    %v1972 = vunpack.c.0.s8 %v1971
    %v1973 = vlaneseq
    %v1974 = vshrl.u32 %v1973, 7
    %v1975 = vsub.s32 %v1972, %v1974
    %v1976 = vrot.slane %v1960, %v1975
    %v1978 = vunpack.c.l.s4 1966171168
    %v1979 = vunpack.c.0.s8 %v1978
    %v1980 = vlaneseq
    %v1981 = vshrl.u32 %v1980, 7
    %v1982 = vsub.s32 %v1979, %v1981
    %v1983 = vrot.slane %v1961, %v1982
    %v1985 = vunpack.c.l.s4 1966171168
    %v1986 = vunpack.c.0.s8 %v1985
    %v1987 = vlaneseq
    %v1988 = vshrl.u32 %v1987, 7
    %v1989 = vsub.s32 %v1986, %v1988
    %v1990 = vrot.slane %v1962, %v1989
    %v1991 = vcombine.low %v1969, %v1976
    %v1992 = vcombine.low %v1983, %v1990
    %v1994 = vunpack.c.l.s4 1966171168
    %v1995 = vunpack.c.0.s8 %v1994
    %v1996 = vlaneseq
    %v1997 = vshrl.u32 %v1996, 7
    %v1998 = vsub.s32 %v1995, %v1997
    %v1999 = vrot.slane %v1991, %v1998
    %v2001 = vunpack.c.l.s4 1966171168
    %v2002 = vunpack.c.0.s8 %v2001
    %v2003 = vlaneseq
    %v2004 = vshrl.u32 %v2003, 7
    %v2005 = vsub.s32 %v2002, %v2004
    %v2006 = vrot.slane %v1992, %v2005
    %v2007 = vcombine.low %v1999, %v2006
    %v2008 = vcombine.low %v1192, %v1216
    %v2009 = vcombine.low %v1230, %v1238
    %v2010 = vcombine.low %v1240, %v1223
    %v2011 = vcombine.low %v1237, %v1239
    %v2013 = vunpack.c.l.s4 1966171168
    %v2014 = vunpack.c.0.s8 %v2013
    %v2015 = vlaneseq
    %v2016 = vshrl.u32 %v2015, 7
    %v2017 = vsub.s32 %v2014, %v2016
    %v2018 = vrot.slane %v2008, %v2017
    %v2020 = vunpack.c.l.s4 1966171168
    %v2021 = vunpack.c.0.s8 %v2020
    %v2022 = vlaneseq
    %v2023 = vshrl.u32 %v2022, 7
    %v2024 = vsub.s32 %v2021, %v2023
    %v2025 = vrot.slane %v2009, %v2024
    %v2027 = vunpack.c.l.s4 1966171168
    %v2028 = vunpack.c.0.s8 %v2027
    %v2029 = vlaneseq
    %v2030 = vshrl.u32 %v2029, 7
    %v2031 = vsub.s32 %v2028, %v2030
    %v2032 = vrot.slane %v2010, %v2031
    %v2034 = vunpack.c.l.s4 1966171168
    %v2035 = vunpack.c.0.s8 %v2034
    %v2036 = vlaneseq
    %v2037 = vshrl.u32 %v2036, 7
    %v2038 = vsub.s32 %v2035, %v2037
    %v2039 = vrot.slane %v2011, %v2038
    %v2040 = vcombine.low %v2018, %v2025
    %v2041 = vcombine.low %v2032, %v2039
    %v2043 = vunpack.c.l.s4 1966171168
    %v2044 = vunpack.c.0.s8 %v2043
    %v2045 = vlaneseq
    %v2046 = vshrl.u32 %v2045, 7
    %v2047 = vsub.s32 %v2044, %v2046
    %v2048 = vrot.slane %v2040, %v2047
    %v2050 = vunpack.c.l.s4 1966171168
    %v2051 = vunpack.c.0.s8 %v2050
    %v2052 = vlaneseq
    %v2053 = vshrl.u32 %v2052, 7
    %v2054 = vsub.s32 %v2051, %v2053
    %v2055 = vrot.slane %v2041, %v2054
    %v2056 = vcombine.low %v2048, %v2055
    %v2057 = vcombine.low %v1241, %v1265
    %v2058 = vcombine.low %v1279, %v1287
    %v2059 = vcombine.low %v1289, %v1272
    %v2060 = vcombine.low %v1286, %v1288
    %v2062 = vunpack.c.l.s4 1966171168
    %v2063 = vunpack.c.0.s8 %v2062
    %v2064 = vlaneseq
    %v2065 = vshrl.u32 %v2064, 7
    %v2066 = vsub.s32 %v2063, %v2065
    %v2067 = vrot.slane %v2057, %v2066
    %v2069 = vunpack.c.l.s4 1966171168
    %v2070 = vunpack.c.0.s8 %v2069
    %v2071 = vlaneseq
    %v2072 = vshrl.u32 %v2071, 7
    %v2073 = vsub.s32 %v2070, %v2072
    %v2074 = vrot.slane %v2058, %v2073
    %v2076 = vunpack.c.l.s4 1966171168
    %v2077 = vunpack.c.0.s8 %v2076
    %v2078 = vlaneseq
    %v2079 = vshrl.u32 %v2078, 7
    %v2080 = vsub.s32 %v2077, %v2079
    %v2081 = vrot.slane %v2059, %v2080
    %v2083 = vunpack.c.l.s4 1966171168
    %v2084 = vunpack.c.0.s8 %v2083
    %v2085 = vlaneseq
    %v2086 = vshrl.u32 %v2085, 7
    %v2087 = vsub.s32 %v2084, %v2086
    %v2088 = vrot.slane %v2060, %v2087
    %v2089 = vcombine.low %v2067, %v2074
    %v2090 = vcombine.low %v2081, %v2088
    %v2092 = vunpack.c.l.s4 1966171168
    %v2093 = vunpack.c.0.s8 %v2092
    %v2094 = vlaneseq
    %v2095 = vshrl.u32 %v2094, 7
    %v2096 = vsub.s32 %v2093, %v2095
    %v2097 = vrot.slane %v2089, %v2096
    %v2099 = vunpack.c.l.s4 1966171168
    %v2100 = vunpack.c.0.s8 %v2099
    %v2101 = vlaneseq
    %v2102 = vshrl.u32 %v2101, 7
    %v2103 = vsub.s32 %v2100, %v2102
    %v2104 = vrot.slane %v2090, %v2103
    %v2105 = vcombine.low %v2097, %v2104
    %v2106 = vcombine.low %v1290, %v1314
    %v2107 = vcombine.low %v1328, %v1336
    %v2108 = vcombine.low %v1338, %v1321
    %v2109 = vcombine.low %v1335, %v1337
    %v2111 = vunpack.c.l.s4 1966171168
    %v2112 = vunpack.c.0.s8 %v2111
    %v2113 = vlaneseq
    %v2114 = vshrl.u32 %v2113, 7
    %v2115 = vsub.s32 %v2112, %v2114
    %v2116 = vrot.slane %v2106, %v2115
    %v2118 = vunpack.c.l.s4 1966171168
    %v2119 = vunpack.c.0.s8 %v2118
    %v2120 = vlaneseq
    %v2121 = vshrl.u32 %v2120, 7
    %v2122 = vsub.s32 %v2119, %v2121
    %v2123 = vrot.slane %v2107, %v2122
    %v2125 = vunpack.c.l.s4 1966171168
    %v2126 = vunpack.c.0.s8 %v2125
    %v2127 = vlaneseq
    %v2128 = vshrl.u32 %v2127, 7
    %v2129 = vsub.s32 %v2126, %v2128
    %v2130 = vrot.slane %v2108, %v2129
    %v2132 = vunpack.c.l.s4 1966171168
    %v2133 = vunpack.c.0.s8 %v2132
    %v2134 = vlaneseq
    %v2135 = vshrl.u32 %v2134, 7
    %v2136 = vsub.s32 %v2133, %v2135
    %v2137 = vrot.slane %v2109, %v2136
    %v2138 = vcombine.low %v2116, %v2123
    %v2139 = vcombine.low %v2130, %v2137
    %v2141 = vunpack.c.l.s4 1966171168
    %v2142 = vunpack.c.0.s8 %v2141
    %v2143 = vlaneseq
    %v2144 = vshrl.u32 %v2143, 7
    %v2145 = vsub.s32 %v2142, %v2144
    %v2146 = vrot.slane %v2138, %v2145
    %v2148 = vunpack.c.l.s4 1966171168
    %v2149 = vunpack.c.0.s8 %v2148
    %v2150 = vlaneseq
    %v2151 = vshrl.u32 %v2150, 7
    %v2152 = vsub.s32 %v2149, %v2151
    %v2153 = vrot.slane %v2139, %v2152
    %v2154 = vcombine.low %v2146, %v2153
    %v2155 = vcombine.low %v1339, %v1353
    %v2157 = vunpack.c.l.s4 1966171168
    %v2158 = vunpack.c.0.s8 %v2157
    %v2159 = vlaneseq
    %v2160 = vshrl.u32 %v2159, 7
    %v2161 = vsub.s32 %v2158, %v2160
    %v2162 = vrot.slane %v2155, %v2161
    %v2164 = vunpack.c.l.s4 1966171168
    %v2165 = vunpack.c.0.s8 %v2164
    %v2166 = vlaneseq
    %v2167 = vshrl.u32 %v2166, 7
    %v2168 = vsub.s32 %v2165, %v2167
    %v2169 = vrot.slane %v2162, %v2168
    %v2182 = vunpack.c.l.b16 %v506
    %v2183 = vunpack.c.l.b16 %v507
    %v2184 = vunpack.c.l.b16 %v508
    %v2185 = vunpack.c.l.b16 %v509
    %v2186 = vunpack.c.l.b16 %v510
    %v2187 = vunpack.c.l.b16 %v511
    %v2188 = vunpack.c.l.b16 %v512
    %v2189 = vunpack.c.l.b16 %v513
    %v2190 = vunpack.c.l.b16 %v514
    %v2191 = vunpack.c.l.b16 %v515
    %v2192 = vunpack.c.l.b16 %v516
    %v2193 = vunpack.c.l.b16 %v517
    %v2194 = vpack.c.b16 %v2183, %v2182
    %v2195 = vpack.c.b16 %v2185, %v2184
    %v2196 = vpack.c.b16 %v2187, %v2186
    %v2197 = vpack.c.b16 %v2189, %v2188
    %v2198 = vpack.c.b16 %v2191, %v2190
    %v2199 = vpack.c.b16 %v2193, %v2192
    %v2206 = vcombine.low %v1361, %v1369
    %v2207 = vcombine.low %v1368, %v1370
    %v2209 = vunpack.c.l.s4 1983009808
    %v2210 = vunpack.c.0.s8 %v2209
    %v2211 = vlaneseq
    %v2212 = vshrl.u32 %v2211, 7
    %v2213 = vsub.s32 %v2210, %v2212
    %v2214 = vrot.slane %v2206, %v2213
    %v2216 = vunpack.c.l.s4 1983009808
    %v2217 = vunpack.c.0.s8 %v2216
    %v2218 = vlaneseq
    %v2219 = vshrl.u32 %v2218, 7
    %v2220 = vsub.s32 %v2217, %v2219
    %v2221 = vrot.slane %v2207, %v2220
    %v2222 = vcombine.low %v2214, %v2221
    %v2223 = vcombine.low %v1361, %v1361
    %v2224 = vcombine.low %v1369, %v1368
    %v2226 = vunpack.c.l.s4 1983009808
    %v2227 = vunpack.c.0.s8 %v2226
    %v2228 = vlaneseq
    %v2229 = vshrl.u32 %v2228, 7
    %v2230 = vsub.s32 %v2227, %v2229
    %v2231 = vrot.slane %v2223, %v2230
    %v2233 = vunpack.c.l.s4 1983009808
    %v2234 = vunpack.c.0.s8 %v2233
    %v2235 = vlaneseq
    %v2236 = vshrl.u32 %v2235, 7
    %v2237 = vsub.s32 %v2234, %v2236
    %v2238 = vrot.slane %v2224, %v2237
    %v2239 = vcombine.low %v2231, %v2238
    %v2240 = vcombine.low %v1370, %v1361
    %v2242 = vunpack.c.l.s4 1983009808
    %v2243 = vunpack.c.0.s8 %v2242
    %v2244 = vlaneseq
    %v2245 = vshrl.u32 %v2244, 7
    %v2246 = vsub.s32 %v2243, %v2245
    %v2247 = vrot.slane %v2240, %v2246
    %v2248 = vcombine.low %v2247, %v2238
    %vm2253 = vcmask 785408
    %v2255 = vsel %vm2253, %v1419, 0
    %v2258 = vsel %vm2253, %v1468, 0
    %v2261 = vsel %vm2253, %v1517, 0
    %v2264 = vsel %vm2253, %v1566, 0
    %v2267 = vsel %vm2253, %v1615, 0
    %v2270 = vsel %vm2253, %v1664, 0
    %v2273 = vsel %vm2253, %v1713, 0
    %v2276 = vsel %vm2253, %v1762, 0
    %v2279 = vsel %vm2253, %v1811, 0
    %v2282 = vsel %vm2253, %v1860, 0
    %v2285 = vsel %vm2253, %v1909, 0
    %v2288 = vsel %vm2253, %v1958, 0
    %v2291 = vsel %vm2253, %v2007, 0
    %v2294 = vsel %vm2253, %v2056, 0
    %v2297 = vsel %vm2253, %v2105, 0
    %v2300 = vsel %vm2253, %v2154, 0
    %v2303 = vsel %vm2253, %v2169, 0
    %2305 = vmatprep.subr.bf16.mxu0 0
    %2306 = vmatpush1.bf16.msra.mxu0 %v2194
    %2307 = vmatprep.subr.bf16.mxu0 0
    %2308 = vmatpush1.bf16.msra.mxu0 %v2195
    %2309 = vmatprep.subr.bf16.mxu0 0
    %2310 = vmatpush1.bf16.msra.mxu0 %v2196
    %2311 = vmatprep.subr.bf16.mxu0 0
    %2312 = vmatpush1.bf16.msra.mxu0 %v2197
    %2313 = vmatprep.subr.bf16.mxu0 0
    %2314 = vmatpush1.bf16.msra.mxu0 %v2198
    %2315 = vmatprep.subr.bf16.mxu0 0
    %2316 = vmatpush1.bf16.msra.mxu0 %v2199
    %2317 = vmatprep.subr.bf16.mxu0 0
    %2318 = vmatpush1.bf16.msra.mxu0 0
    %2319 = vmatprep.subr.bf16.mxu0 0
    %2320 = vmatpush1.bf16.msra.mxu0 0
    %2321 = vmatprep.subr.bf16.mxu0 0
    %2322 = vmatpush1.bf16.msra.mxu0 0
    %2323 = vmatprep.subr.bf16.mxu0 0
    %2324 = vmatpush1.bf16.msra.mxu0 0
    %2325 = vmatprep.subr.bf16.mxu0 0
    %2326 = vmatpush1.bf16.msra.mxu0 0
    %2327 = vmatprep.subr.bf16.mxu0 0
    %2328 = vmatpush1.bf16.msra.mxu0 0
    %2329 = vmatprep.subr.bf16.mxu0 0
    %2330 = vmatpush1.bf16.msra.mxu0 0
    %2331 = vmatprep.subr.bf16.mxu0 0
    %2332 = vmatpush1.bf16.msra.mxu0 0
    %2333 = vmatprep.subr.bf16.mxu0 0
    %2334 = vmatpush1.bf16.msra.mxu0 0
    %2335 = vmatprep.subr.bf16.mxu0 0
    %2336 = vmatpush1.bf16.msra.mxu0 0
    %2337 = vmatprep.mubr.bf16.mxu0 0
    %2338 = vmatmul.mubr.bf16.gmra.mrb[0].mxu0 %v2255
    %v2339 = vpop.f32.mrb[0].mxu0
    %v2340 = vadd.f32 %v2222, %v2339
    %v2341 = vpop.f32.mrb[0].mxu0
    %v2342 = vpop.f32.mrb[0].mxu0
    %v2343 = vadd.f32 %v2222, %v2342
    %v2344 = vpop.f32.mrb[0].mxu0
    %2345 = vmatprep.mubr.bf16.mxu0 0
    %2346 = vmatmul.mubr.bf16.gmra.mrb[0].mxu0 %v2258
    %v2347 = vpop.f32.mrb[0].mxu0
    %v2348 = vadd.f32 %v2222, %v2347
    %v2349 = vpop.f32.mrb[0].mxu0
    %v2350 = vpop.f32.mrb[0].mxu0
    %v2351 = vadd.f32 %v2222, %v2350
    %v2352 = vpop.f32.mrb[0].mxu0
    %2353 = vmatprep.mubr.bf16.mxu0 0
    %2354 = vmatmul.mubr.bf16.gmra.mrb[0].mxu0 %v2261
    %v2355 = vpop.f32.mrb[0].mxu0
    %v2356 = vadd.f32 %v2222, %v2355
    %v2357 = vpop.f32.mrb[0].mxu0
    %v2358 = vpop.f32.mrb[0].mxu0
    %v2359 = vadd.f32 %v2222, %v2358
    %v2360 = vpop.f32.mrb[0].mxu0
    %2361 = vmatprep.mubr.bf16.mxu0 0
    %2362 = vmatmul.mubr.bf16.gmra.mrb[0].mxu0 %v2264
    %v2363 = vpop.f32.mrb[0].mxu0
    %v2364 = vadd.f32 %v2222, %v2363
    %v2365 = vpop.f32.mrb[0].mxu0
    %v2366 = vpop.f32.mrb[0].mxu0
    %v2367 = vadd.f32 %v2222, %v2366
    %v2368 = vpop.f32.mrb[0].mxu0
    %2369 = vmatprep.mubr.bf16.mxu0 0
    %2370 = vmatmul.mubr.bf16.gmra.mrb[0].mxu0 %v2267
    %v2371 = vpop.f32.mrb[0].mxu0
    %v2372 = vadd.f32 %v2222, %v2371
    %v2373 = vpop.f32.mrb[0].mxu0
    %v2374 = vpop.f32.mrb[0].mxu0
    %v2375 = vadd.f32 %v2222, %v2374
    %v2376 = vpop.f32.mrb[0].mxu0
    %2377 = vmatprep.mubr.bf16.mxu0 0
    %2378 = vmatmul.mubr.bf16.gmra.mrb[0].mxu0 %v2270
    %v2379 = vpop.f32.mrb[0].mxu0
    %v2380 = vadd.f32 %v2222, %v2379
    %v2381 = vpop.f32.mrb[0].mxu0
    %v2382 = vpop.f32.mrb[0].mxu0
    %v2383 = vadd.f32 %v2222, %v2382
    %v2384 = vpop.f32.mrb[0].mxu0
    %2385 = vmatprep.mubr.bf16.mxu0 0
    %2386 = vmatmul.mubr.bf16.gmra.mrb[0].mxu0 %v2273
    %v2387 = vpop.f32.mrb[0].mxu0
    %v2388 = vadd.f32 %v2222, %v2387
    %v2389 = vpop.f32.mrb[0].mxu0
    %v2390 = vpop.f32.mrb[0].mxu0
    %v2391 = vadd.f32 %v2222, %v2390
    %v2392 = vpop.f32.mrb[0].mxu0
    %2393 = vmatprep.mubr.bf16.mxu0 0
    %2394 = vmatmul.mubr.bf16.gmra.mrb[0].mxu0 %v2276
    %v2395 = vpop.f32.mrb[0].mxu0
    %v2396 = vadd.f32 %v2222, %v2395
    %v2397 = vpop.f32.mrb[0].mxu0
    %v2398 = vpop.f32.mrb[0].mxu0
    %v2399 = vadd.f32 %v2222, %v2398
    %v2400 = vpop.f32.mrb[0].mxu0
    %2401 = vmatprep.mubr.bf16.mxu0 0
    %2402 = vmatmul.mubr.bf16.gmra.mrb[0].mxu0 %v2279
    %v2403 = vpop.f32.mrb[0].mxu0
    %v2404 = vadd.f32 %v2239, %v2403
    %v2405 = vpop.f32.mrb[0].mxu0
    %v2406 = vpop.f32.mrb[0].mxu0
    %v2407 = vadd.f32 %v2248, %v2406
    %v2408 = vpop.f32.mrb[0].mxu0
    %2409 = vmatprep.mubr.bf16.mxu0 0
    %2410 = vmatmul.mubr.bf16.gmra.mrb[0].mxu0 %v2282
    %v2411 = vpop.f32.mrb[0].mxu0
    %v2412 = vadd.f32 %v2248, %v2411
    %v2413 = vpop.f32.mrb[0].mxu0
    %v2414 = vpop.f32.mrb[0].mxu0
    %v2415 = vadd.f32 %v2248, %v2414
    %v2416 = vpop.f32.mrb[0].mxu0
    %2417 = vmatprep.mubr.bf16.mxu0 0
    %2418 = vmatmul.mubr.bf16.gmra.mrb[0].mxu0 %v2285
    %v2419 = vpop.f32.mrb[0].mxu0
    %v2420 = vadd.f32 %v2248, %v2419
    %v2421 = vpop.f32.mrb[0].mxu0
    %v2422 = vpop.f32.mrb[0].mxu0
    %v2423 = vadd.f32 %v2248, %v2422
    %v2424 = vpop.f32.mrb[0].mxu0
    %2425 = vmatprep.mubr.bf16.mxu0 0
    %2426 = vmatmul.mubr.bf16.gmra.mrb[0].mxu0 %v2288
    %v2427 = vpop.f32.mrb[0].mxu0
    %v2428 = vadd.f32 %v2248, %v2427
    %v2429 = vpop.f32.mrb[0].mxu0
    %v2430 = vpop.f32.mrb[0].mxu0
    %v2431 = vadd.f32 %v2248, %v2430
    %v2432 = vpop.f32.mrb[0].mxu0
    %2433 = vmatprep.mubr.bf16.mxu0 0
    %2434 = vmatmul.mubr.bf16.gmra.mrb[0].mxu0 %v2291
    %v2435 = vpop.f32.mrb[0].mxu0
    %v2436 = vadd.f32 %v2248, %v2435
    %v2437 = vpop.f32.mrb[0].mxu0
    %v2438 = vpop.f32.mrb[0].mxu0
    %v2439 = vadd.f32 %v2248, %v2438
    %v2440 = vpop.f32.mrb[0].mxu0
    %2441 = vmatprep.mubr.bf16.mxu0 0
    %2442 = vmatmul.mubr.bf16.gmra.mrb[0].mxu0 %v2294
    %v2443 = vpop.f32.mrb[0].mxu0
    %v2444 = vadd.f32 %v2248, %v2443
    %v2445 = vpop.f32.mrb[0].mxu0
    %v2446 = vpop.f32.mrb[0].mxu0
    %v2447 = vadd.f32 %v2248, %v2446
    %v2448 = vpop.f32.mrb[0].mxu0
    %2449 = vmatprep.mubr.bf16.mxu0 0
    %2450 = vmatmul.mubr.bf16.gmra.mrb[0].mxu0 %v2297
    %v2451 = vpop.f32.mrb[0].mxu0
    %v2452 = vadd.f32 %v2248, %v2451
    %v2453 = vpop.f32.mrb[0].mxu0
    %v2454 = vpop.f32.mrb[0].mxu0
    %v2455 = vadd.f32 %v2248, %v2454
    %v2456 = vpop.f32.mrb[0].mxu0
    %2457 = vmatprep.mubr.bf16.mxu0 0
    %2458 = vmatmul.mubr.bf16.gmra.mrb[0].mxu0 %v2300
    %v2459 = vpop.f32.mrb[0].mxu0
    %v2460 = vadd.f32 %v2248, %v2459
    %v2461 = vpop.f32.mrb[0].mxu0
    %v2462 = vpop.f32.mrb[0].mxu0
    %v2463 = vadd.f32 %v2248, %v2462
    %v2464 = vpop.f32.mrb[0].mxu0
    %2465 = vmatprep.mubr.bf16.mxu0 0
    %2466 = vmatmul.mubr.bf16.gmra.mrb[0].mxu0 %v2303
    %v2467 = vpop.f32.mrb[0].mxu0
    %v2468 = vadd.f32 %v2247, %v2467
    %v2469 = vpop.f32.mrb[0].mxu0
    %v2470 = vpop.f32.mrb[0].mxu0
    %v2471 = vpop.f32.mrb[0].mxu0
    %2472 = vdwg.mxu0
    %v2506 = vcombine.high %v2340, %v2340
    %v2508 = vunpack.c.l.s4 1983009808
    %v2509 = vunpack.c.0.s8 %v2508
    %v2510 = vlaneseq
    %v2511 = vshrl.u32 %v2510, 7
    %v2512 = vsub.s32 %v2509, %v2511
    %v2513 = vrot.slane %v2340, %v2512
    %v2515 = vunpack.c.l.s4 1983009808
    %v2516 = vunpack.c.0.s8 %v2515
    %v2517 = vlaneseq
    %v2518 = vshrl.u32 %v2517, 7
    %v2519 = vsub.s32 %v2516, %v2518
    %v2520 = vrot.slane %v2506, %v2519
    %v2521 = vcombine.high %v2513, %v2513
    %v2522 = vcombine.high %v2520, %v2520
    %v2523 = vcombine.high %v2343, %v2343
    %v2525 = vunpack.c.l.s4 1983009808
    %v2526 = vunpack.c.0.s8 %v2525
    %v2527 = vlaneseq
    %v2528 = vshrl.u32 %v2527, 7
    %v2529 = vsub.s32 %v2526, %v2528
    %v2530 = vrot.slane %v2343, %v2529
    %v2532 = vunpack.c.l.s4 1983009808
    %v2533 = vunpack.c.0.s8 %v2532
    %v2534 = vlaneseq
    %v2535 = vshrl.u32 %v2534, 7
    %v2536 = vsub.s32 %v2533, %v2535
    %v2537 = vrot.slane %v2523, %v2536
    %v2538 = vcombine.high %v2530, %v2530
    %v2539 = vcombine.high %v2537, %v2537
    %v2540 = vcombine.high %v2348, %v2348
    %v2542 = vunpack.c.l.s4 1983009808
    %v2543 = vunpack.c.0.s8 %v2542
    %v2544 = vlaneseq
    %v2545 = vshrl.u32 %v2544, 7
    %v2546 = vsub.s32 %v2543, %v2545
    %v2547 = vrot.slane %v2348, %v2546
    %v2549 = vunpack.c.l.s4 1983009808
    %v2550 = vunpack.c.0.s8 %v2549
    %v2551 = vlaneseq
    %v2552 = vshrl.u32 %v2551, 7
    %v2553 = vsub.s32 %v2550, %v2552
    %v2554 = vrot.slane %v2540, %v2553
    %v2555 = vcombine.high %v2547, %v2547
    %v2556 = vcombine.high %v2554, %v2554
    %v2557 = vcombine.high %v2351, %v2351
    %v2559 = vunpack.c.l.s4 1983009808
    %v2560 = vunpack.c.0.s8 %v2559
    %v2561 = vlaneseq
    %v2562 = vshrl.u32 %v2561, 7
    %v2563 = vsub.s32 %v2560, %v2562
    %v2564 = vrot.slane %v2351, %v2563
    %v2566 = vunpack.c.l.s4 1983009808
    %v2567 = vunpack.c.0.s8 %v2566
    %v2568 = vlaneseq
    %v2569 = vshrl.u32 %v2568, 7
    %v2570 = vsub.s32 %v2567, %v2569
    %v2571 = vrot.slane %v2557, %v2570
    %v2572 = vcombine.high %v2564, %v2564
    %v2573 = vcombine.high %v2571, %v2571
    %v2574 = vcombine.high %v2356, %v2356
    %v2576 = vunpack.c.l.s4 1983009808
    %v2577 = vunpack.c.0.s8 %v2576
    %v2578 = vlaneseq
    %v2579 = vshrl.u32 %v2578, 7
    %v2580 = vsub.s32 %v2577, %v2579
    %v2581 = vrot.slane %v2356, %v2580
    %v2583 = vunpack.c.l.s4 1983009808
    %v2584 = vunpack.c.0.s8 %v2583
    %v2585 = vlaneseq
    %v2586 = vshrl.u32 %v2585, 7
    %v2587 = vsub.s32 %v2584, %v2586
    %v2588 = vrot.slane %v2574, %v2587
    %v2589 = vcombine.high %v2581, %v2581
    %v2590 = vcombine.high %v2588, %v2588
    %v2591 = vcombine.high %v2359, %v2359
    %v2593 = vunpack.c.l.s4 1983009808
    %v2594 = vunpack.c.0.s8 %v2593
    %v2595 = vlaneseq
    %v2596 = vshrl.u32 %v2595, 7
    %v2597 = vsub.s32 %v2594, %v2596
    %v2598 = vrot.slane %v2359, %v2597
    %v2600 = vunpack.c.l.s4 1983009808
    %v2601 = vunpack.c.0.s8 %v2600
    %v2602 = vlaneseq
    %v2603 = vshrl.u32 %v2602, 7
    %v2604 = vsub.s32 %v2601, %v2603
    %v2605 = vrot.slane %v2591, %v2604
    %v2606 = vcombine.high %v2598, %v2598
    %v2607 = vcombine.high %v2605, %v2605
    %v2608 = vcombine.high %v2364, %v2364
    %v2610 = vunpack.c.l.s4 1983009808
    %v2611 = vunpack.c.0.s8 %v2610
    %v2612 = vlaneseq
    %v2613 = vshrl.u32 %v2612, 7
    %v2614 = vsub.s32 %v2611, %v2613
    %v2615 = vrot.slane %v2364, %v2614
    %v2617 = vunpack.c.l.s4 1983009808
    %v2618 = vunpack.c.0.s8 %v2617
    %v2619 = vlaneseq
    %v2620 = vshrl.u32 %v2619, 7
    %v2621 = vsub.s32 %v2618, %v2620
    %v2622 = vrot.slane %v2608, %v2621
    %v2623 = vcombine.high %v2615, %v2615
    %v2624 = vcombine.high %v2622, %v2622
    %v2625 = vcombine.high %v2367, %v2367
    %v2627 = vunpack.c.l.s4 1983009808
    %v2628 = vunpack.c.0.s8 %v2627
    %v2629 = vlaneseq
    %v2630 = vshrl.u32 %v2629, 7
    %v2631 = vsub.s32 %v2628, %v2630
    %v2632 = vrot.slane %v2367, %v2631
    %v2634 = vunpack.c.l.s4 1983009808
    %v2635 = vunpack.c.0.s8 %v2634
    %v2636 = vlaneseq
    %v2637 = vshrl.u32 %v2636, 7
    %v2638 = vsub.s32 %v2635, %v2637
    %v2639 = vrot.slane %v2625, %v2638
    %v2640 = vcombine.high %v2632, %v2632
    %v2641 = vcombine.high %v2639, %v2639
    %v2642 = vcombine.high %v2372, %v2372
    %v2644 = vunpack.c.l.s4 1983009808
    %v2645 = vunpack.c.0.s8 %v2644
    %v2646 = vlaneseq
    %v2647 = vshrl.u32 %v2646, 7
    %v2648 = vsub.s32 %v2645, %v2647
    %v2649 = vrot.slane %v2372, %v2648
    %v2651 = vunpack.c.l.s4 1983009808
    %v2652 = vunpack.c.0.s8 %v2651
    %v2653 = vlaneseq
    %v2654 = vshrl.u32 %v2653, 7
    %v2655 = vsub.s32 %v2652, %v2654
    %v2656 = vrot.slane %v2642, %v2655
    %v2657 = vcombine.high %v2649, %v2649
    %v2658 = vcombine.high %v2656, %v2656
    %v2659 = vcombine.high %v2375, %v2375
    %v2661 = vunpack.c.l.s4 1983009808
    %v2662 = vunpack.c.0.s8 %v2661
    %v2663 = vlaneseq
    %v2664 = vshrl.u32 %v2663, 7
    %v2665 = vsub.s32 %v2662, %v2664
    %v2666 = vrot.slane %v2375, %v2665
    %v2668 = vunpack.c.l.s4 1983009808
    %v2669 = vunpack.c.0.s8 %v2668
    %v2670 = vlaneseq
    %v2671 = vshrl.u32 %v2670, 7
    %v2672 = vsub.s32 %v2669, %v2671
    %v2673 = vrot.slane %v2659, %v2672
    %v2674 = vcombine.high %v2666, %v2666
    %v2675 = vcombine.high %v2673, %v2673
    %v2676 = vcombine.high %v2380, %v2380
    %v2678 = vunpack.c.l.s4 1983009808
    %v2679 = vunpack.c.0.s8 %v2678
    %v2680 = vlaneseq
    %v2681 = vshrl.u32 %v2680, 7
    %v2682 = vsub.s32 %v2679, %v2681
    %v2683 = vrot.slane %v2380, %v2682
    %v2685 = vunpack.c.l.s4 1983009808
    %v2686 = vunpack.c.0.s8 %v2685
    %v2687 = vlaneseq
    %v2688 = vshrl.u32 %v2687, 7
    %v2689 = vsub.s32 %v2686, %v2688
    %v2690 = vrot.slane %v2676, %v2689
    %v2691 = vcombine.high %v2683, %v2683
    %v2692 = vcombine.high %v2690, %v2690
    %v2693 = vcombine.high %v2383, %v2383
    %v2695 = vunpack.c.l.s4 1983009808
    %v2696 = vunpack.c.0.s8 %v2695
    %v2697 = vlaneseq
    %v2698 = vshrl.u32 %v2697, 7
    %v2699 = vsub.s32 %v2696, %v2698
    %v2700 = vrot.slane %v2383, %v2699
    %v2702 = vunpack.c.l.s4 1983009808
    %v2703 = vunpack.c.0.s8 %v2702
    %v2704 = vlaneseq
    %v2705 = vshrl.u32 %v2704, 7
    %v2706 = vsub.s32 %v2703, %v2705
    %v2707 = vrot.slane %v2693, %v2706
    %v2708 = vcombine.high %v2700, %v2700
    %v2709 = vcombine.high %v2707, %v2707
    %v2710 = vcombine.high %v2388, %v2388
    %v2712 = vunpack.c.l.s4 1983009808
    %v2713 = vunpack.c.0.s8 %v2712
    %v2714 = vlaneseq
    %v2715 = vshrl.u32 %v2714, 7
    %v2716 = vsub.s32 %v2713, %v2715
    %v2717 = vrot.slane %v2388, %v2716
    %v2719 = vunpack.c.l.s4 1983009808
    %v2720 = vunpack.c.0.s8 %v2719
    %v2721 = vlaneseq
    %v2722 = vshrl.u32 %v2721, 7
    %v2723 = vsub.s32 %v2720, %v2722
    %v2724 = vrot.slane %v2710, %v2723
    %v2725 = vcombine.high %v2717, %v2717
    %v2726 = vcombine.high %v2724, %v2724
    %v2727 = vcombine.high %v2391, %v2391
    %v2729 = vunpack.c.l.s4 1983009808
    %v2730 = vunpack.c.0.s8 %v2729
    %v2731 = vlaneseq
    %v2732 = vshrl.u32 %v2731, 7
    %v2733 = vsub.s32 %v2730, %v2732
    %v2734 = vrot.slane %v2391, %v2733
    %v2736 = vunpack.c.l.s4 1983009808
    %v2737 = vunpack.c.0.s8 %v2736
    %v2738 = vlaneseq
    %v2739 = vshrl.u32 %v2738, 7
    %v2740 = vsub.s32 %v2737, %v2739
    %v2741 = vrot.slane %v2727, %v2740
    %v2742 = vcombine.high %v2734, %v2734
    %v2743 = vcombine.high %v2741, %v2741
    %v2744 = vcombine.high %v2396, %v2396
    %v2746 = vunpack.c.l.s4 1983009808
    %v2747 = vunpack.c.0.s8 %v2746
    %v2748 = vlaneseq
    %v2749 = vshrl.u32 %v2748, 7
    %v2750 = vsub.s32 %v2747, %v2749
    %v2751 = vrot.slane %v2396, %v2750
    %v2753 = vunpack.c.l.s4 1983009808
    %v2754 = vunpack.c.0.s8 %v2753
    %v2755 = vlaneseq
    %v2756 = vshrl.u32 %v2755, 7
    %v2757 = vsub.s32 %v2754, %v2756
    %v2758 = vrot.slane %v2744, %v2757
    %v2759 = vcombine.high %v2751, %v2751
    %v2760 = vcombine.high %v2758, %v2758
    %v2761 = vcombine.high %v2399, %v2399
    %v2763 = vunpack.c.l.s4 1983009808
    %v2764 = vunpack.c.0.s8 %v2763
    %v2765 = vlaneseq
    %v2766 = vshrl.u32 %v2765, 7
    %v2767 = vsub.s32 %v2764, %v2766
    %v2768 = vrot.slane %v2399, %v2767
    %v2770 = vunpack.c.l.s4 1983009808
    %v2771 = vunpack.c.0.s8 %v2770
    %v2772 = vlaneseq
    %v2773 = vshrl.u32 %v2772, 7
    %v2774 = vsub.s32 %v2771, %v2773
    %v2775 = vrot.slane %v2761, %v2774
    %v2776 = vcombine.high %v2768, %v2768
    %v2777 = vcombine.high %v2775, %v2775
    %v2778 = vcombine.high %v2404, %v2404
    %v2780 = vunpack.c.l.s4 1983009808
    %v2781 = vunpack.c.0.s8 %v2780
    %v2782 = vlaneseq
    %v2783 = vshrl.u32 %v2782, 7
    %v2784 = vsub.s32 %v2781, %v2783
    %v2785 = vrot.slane %v2404, %v2784
    %v2787 = vunpack.c.l.s4 1983009808
    %v2788 = vunpack.c.0.s8 %v2787
    %v2789 = vlaneseq
    %v2790 = vshrl.u32 %v2789, 7
    %v2791 = vsub.s32 %v2788, %v2790
    %v2792 = vrot.slane %v2778, %v2791
    %v2793 = vcombine.high %v2785, %v2785
    %v2794 = vcombine.high %v2792, %v2792
    %v2795 = vcombine.high %v2407, %v2407
    %v2797 = vunpack.c.l.s4 1983009808
    %v2798 = vunpack.c.0.s8 %v2797
    %v2799 = vlaneseq
    %v2800 = vshrl.u32 %v2799, 7
    %v2801 = vsub.s32 %v2798, %v2800
    %v2802 = vrot.slane %v2407, %v2801
    %v2804 = vunpack.c.l.s4 1983009808
    %v2805 = vunpack.c.0.s8 %v2804
    %v2806 = vlaneseq
    %v2807 = vshrl.u32 %v2806, 7
    %v2808 = vsub.s32 %v2805, %v2807
    %v2809 = vrot.slane %v2795, %v2808
    %v2810 = vcombine.high %v2802, %v2802
    %v2811 = vcombine.high %v2809, %v2809
    %v2812 = vcombine.high %v2412, %v2412
    %v2814 = vunpack.c.l.s4 1983009808
    %v2815 = vunpack.c.0.s8 %v2814
    %v2816 = vlaneseq
    %v2817 = vshrl.u32 %v2816, 7
    %v2818 = vsub.s32 %v2815, %v2817
    %v2819 = vrot.slane %v2412, %v2818
    %v2821 = vunpack.c.l.s4 1983009808
    %v2822 = vunpack.c.0.s8 %v2821
    %v2823 = vlaneseq
    %v2824 = vshrl.u32 %v2823, 7
    %v2825 = vsub.s32 %v2822, %v2824
    %v2826 = vrot.slane %v2812, %v2825
    %v2827 = vcombine.high %v2819, %v2819
    %v2828 = vcombine.high %v2826, %v2826
    %v2829 = vcombine.high %v2415, %v2415
    %v2831 = vunpack.c.l.s4 1983009808
    %v2832 = vunpack.c.0.s8 %v2831
    %v2833 = vlaneseq
    %v2834 = vshrl.u32 %v2833, 7
    %v2835 = vsub.s32 %v2832, %v2834
    %v2836 = vrot.slane %v2415, %v2835
    %v2838 = vunpack.c.l.s4 1983009808
    %v2839 = vunpack.c.0.s8 %v2838
    %v2840 = vlaneseq
    %v2841 = vshrl.u32 %v2840, 7
    %v2842 = vsub.s32 %v2839, %v2841
    %v2843 = vrot.slane %v2829, %v2842
    %v2844 = vcombine.high %v2836, %v2836
    %v2845 = vcombine.high %v2843, %v2843
    %v2846 = vcombine.high %v2420, %v2420
    %v2848 = vunpack.c.l.s4 1983009808
    %v2849 = vunpack.c.0.s8 %v2848
    %v2850 = vlaneseq
    %v2851 = vshrl.u32 %v2850, 7
    %v2852 = vsub.s32 %v2849, %v2851
    %v2853 = vrot.slane %v2420, %v2852
    %v2855 = vunpack.c.l.s4 1983009808
    %v2856 = vunpack.c.0.s8 %v2855
    %v2857 = vlaneseq
    %v2858 = vshrl.u32 %v2857, 7
    %v2859 = vsub.s32 %v2856, %v2858
    %v2860 = vrot.slane %v2846, %v2859
    %v2861 = vcombine.high %v2853, %v2853
    %v2862 = vcombine.high %v2860, %v2860
    %v2863 = vcombine.high %v2423, %v2423
    %v2865 = vunpack.c.l.s4 1983009808
    %v2866 = vunpack.c.0.s8 %v2865
    %v2867 = vlaneseq
    %v2868 = vshrl.u32 %v2867, 7
    %v2869 = vsub.s32 %v2866, %v2868
    %v2870 = vrot.slane %v2423, %v2869
    %v2872 = vunpack.c.l.s4 1983009808
    %v2873 = vunpack.c.0.s8 %v2872
    %v2874 = vlaneseq
    %v2875 = vshrl.u32 %v2874, 7
    %v2876 = vsub.s32 %v2873, %v2875
    %v2877 = vrot.slane %v2863, %v2876
    %v2878 = vcombine.high %v2870, %v2870
    %v2879 = vcombine.high %v2877, %v2877
    %v2880 = vcombine.high %v2428, %v2428
    %v2882 = vunpack.c.l.s4 1983009808
    %v2883 = vunpack.c.0.s8 %v2882
    %v2884 = vlaneseq
    %v2885 = vshrl.u32 %v2884, 7
    %v2886 = vsub.s32 %v2883, %v2885
    %v2887 = vrot.slane %v2428, %v2886
    %v2889 = vunpack.c.l.s4 1983009808
    %v2890 = vunpack.c.0.s8 %v2889
    %v2891 = vlaneseq
    %v2892 = vshrl.u32 %v2891, 7
    %v2893 = vsub.s32 %v2890, %v2892
    %v2894 = vrot.slane %v2880, %v2893
    %v2895 = vcombine.high %v2887, %v2887
    %v2896 = vcombine.high %v2894, %v2894
    %v2897 = vcombine.high %v2431, %v2431
    %v2899 = vunpack.c.l.s4 1983009808
    %v2900 = vunpack.c.0.s8 %v2899
    %v2901 = vlaneseq
    %v2902 = vshrl.u32 %v2901, 7
    %v2903 = vsub.s32 %v2900, %v2902
    %v2904 = vrot.slane %v2431, %v2903
    %v2906 = vunpack.c.l.s4 1983009808
    %v2907 = vunpack.c.0.s8 %v2906
    %v2908 = vlaneseq
    %v2909 = vshrl.u32 %v2908, 7
    %v2910 = vsub.s32 %v2907, %v2909
    %v2911 = vrot.slane %v2897, %v2910
    %v2912 = vcombine.high %v2904, %v2904
    %v2913 = vcombine.high %v2911, %v2911
    %v2914 = vcombine.high %v2436, %v2436
    %v2916 = vunpack.c.l.s4 1983009808
    %v2917 = vunpack.c.0.s8 %v2916
    %v2918 = vlaneseq
    %v2919 = vshrl.u32 %v2918, 7
    %v2920 = vsub.s32 %v2917, %v2919
    %v2921 = vrot.slane %v2436, %v2920
    %v2923 = vunpack.c.l.s4 1983009808
    %v2924 = vunpack.c.0.s8 %v2923
    %v2925 = vlaneseq
    %v2926 = vshrl.u32 %v2925, 7
    %v2927 = vsub.s32 %v2924, %v2926
    %v2928 = vrot.slane %v2914, %v2927
    %v2929 = vcombine.high %v2921, %v2921
    %v2930 = vcombine.high %v2928, %v2928
    %v2931 = vcombine.high %v2439, %v2439
    %v2933 = vunpack.c.l.s4 1983009808
    %v2934 = vunpack.c.0.s8 %v2933
    %v2935 = vlaneseq
    %v2936 = vshrl.u32 %v2935, 7
    %v2937 = vsub.s32 %v2934, %v2936
    %v2938 = vrot.slane %v2439, %v2937
    %v2940 = vunpack.c.l.s4 1983009808
    %v2941 = vunpack.c.0.s8 %v2940
    %v2942 = vlaneseq
    %v2943 = vshrl.u32 %v2942, 7
    %v2944 = vsub.s32 %v2941, %v2943
    %v2945 = vrot.slane %v2931, %v2944
    %v2946 = vcombine.high %v2938, %v2938
    %v2947 = vcombine.high %v2945, %v2945
    %v2948 = vcombine.high %v2444, %v2444
    %v2950 = vunpack.c.l.s4 1983009808
    %v2951 = vunpack.c.0.s8 %v2950
    %v2952 = vlaneseq
    %v2953 = vshrl.u32 %v2952, 7
    %v2954 = vsub.s32 %v2951, %v2953
    %v2955 = vrot.slane %v2444, %v2954
    %v2957 = vunpack.c.l.s4 1983009808
    %v2958 = vunpack.c.0.s8 %v2957
    %v2959 = vlaneseq
    %v2960 = vshrl.u32 %v2959, 7
    %v2961 = vsub.s32 %v2958, %v2960
    %v2962 = vrot.slane %v2948, %v2961
    %v2963 = vcombine.high %v2955, %v2955
    %v2964 = vcombine.high %v2962, %v2962
    %v2965 = vcombine.high %v2447, %v2447
    %v2967 = vunpack.c.l.s4 1983009808
    %v2968 = vunpack.c.0.s8 %v2967
    %v2969 = vlaneseq
    %v2970 = vshrl.u32 %v2969, 7
    %v2971 = vsub.s32 %v2968, %v2970
    %v2972 = vrot.slane %v2447, %v2971
    %v2974 = vunpack.c.l.s4 1983009808
    %v2975 = vunpack.c.0.s8 %v2974
    %v2976 = vlaneseq
    %v2977 = vshrl.u32 %v2976, 7
    %v2978 = vsub.s32 %v2975, %v2977
    %v2979 = vrot.slane %v2965, %v2978
    %v2980 = vcombine.high %v2972, %v2972
    %v2981 = vcombine.high %v2979, %v2979
    %v2982 = vcombine.high %v2452, %v2452
    %v2984 = vunpack.c.l.s4 1983009808
    %v2985 = vunpack.c.0.s8 %v2984
    %v2986 = vlaneseq
    %v2987 = vshrl.u32 %v2986, 7
    %v2988 = vsub.s32 %v2985, %v2987
    %v2989 = vrot.slane %v2452, %v2988
    %v2991 = vunpack.c.l.s4 1983009808
    %v2992 = vunpack.c.0.s8 %v2991
    %v2993 = vlaneseq
    %v2994 = vshrl.u32 %v2993, 7
    %v2995 = vsub.s32 %v2992, %v2994
    %v2996 = vrot.slane %v2982, %v2995
    %v2997 = vcombine.high %v2989, %v2989
    %v2998 = vcombine.high %v2996, %v2996
    %v2999 = vcombine.high %v2455, %v2455
    %v3001 = vunpack.c.l.s4 1983009808
    %v3002 = vunpack.c.0.s8 %v3001
    %v3003 = vlaneseq
    %v3004 = vshrl.u32 %v3003, 7
    %v3005 = vsub.s32 %v3002, %v3004
    %v3006 = vrot.slane %v2455, %v3005
    %v3008 = vunpack.c.l.s4 1983009808
    %v3009 = vunpack.c.0.s8 %v3008
    %v3010 = vlaneseq
    %v3011 = vshrl.u32 %v3010, 7
    %v3012 = vsub.s32 %v3009, %v3011
    %v3013 = vrot.slane %v2999, %v3012
    %v3014 = vcombine.high %v3006, %v3006
    %v3015 = vcombine.high %v3013, %v3013
    %v3016 = vcombine.high %v2460, %v2460
    %v3018 = vunpack.c.l.s4 1983009808
    %v3019 = vunpack.c.0.s8 %v3018
    %v3020 = vlaneseq
    %v3021 = vshrl.u32 %v3020, 7
    %v3022 = vsub.s32 %v3019, %v3021
    %v3023 = vrot.slane %v2460, %v3022
    %v3025 = vunpack.c.l.s4 1983009808
    %v3026 = vunpack.c.0.s8 %v3025
    %v3027 = vlaneseq
    %v3028 = vshrl.u32 %v3027, 7
    %v3029 = vsub.s32 %v3026, %v3028
    %v3030 = vrot.slane %v3016, %v3029
    %v3031 = vcombine.high %v3023, %v3023
    %v3032 = vcombine.high %v3030, %v3030
    %v3033 = vcombine.high %v2463, %v2463
    %v3035 = vunpack.c.l.s4 1983009808
    %v3036 = vunpack.c.0.s8 %v3035
    %v3037 = vlaneseq
    %v3038 = vshrl.u32 %v3037, 7
    %v3039 = vsub.s32 %v3036, %v3038
    %v3040 = vrot.slane %v2463, %v3039
    %v3042 = vunpack.c.l.s4 1983009808
    %v3043 = vunpack.c.0.s8 %v3042
    %v3044 = vlaneseq
    %v3045 = vshrl.u32 %v3044, 7
    %v3046 = vsub.s32 %v3043, %v3045
    %v3047 = vrot.slane %v3033, %v3046
    %v3048 = vcombine.high %v3040, %v3040
    %v3049 = vcombine.high %v3047, %v3047
    %v3051 = vunpack.c.l.s4 1983009808
    %v3052 = vunpack.c.0.s8 %v3051
    %v3053 = vlaneseq
    %v3054 = vshrl.u32 %v3053, 7
    %v3055 = vsub.s32 %v3052, %v3054
    %v3056 = vrot.slane %v2468, %v3055
    %v3057 = vcombine.high %v3056, %v3056
    %v3188 = vmax.f32 %v2513, 0.0
    %v3189 = vmax.f32 %v2521, 0.0
    %v3190 = vmax.f32 %v2520, 0.0
    %v3191 = vmax.f32 %v2522, 0.0
    %v3192 = vmax.f32 %v2530, 0.0
    %v3193 = vmax.f32 %v2538, 0.0
    %v3194 = vmax.f32 %v2537, 0.0
    %v3195 = vmax.f32 %v2539, 0.0
    %v3196 = vmax.f32 %v2547, 0.0
    %v3197 = vmax.f32 %v2555, 0.0
    %v3198 = vmax.f32 %v2554, 0.0
    %v3199 = vmax.f32 %v2556, 0.0
    %v3200 = vmax.f32 %v2564, 0.0
    %v3201 = vmax.f32 %v2572, 0.0
    %v3202 = vmax.f32 %v2571, 0.0
    %v3203 = vmax.f32 %v2573, 0.0
    %v3204 = vmax.f32 %v2581, 0.0
    %v3205 = vmax.f32 %v2589, 0.0
    %v3206 = vmax.f32 %v2588, 0.0
    %v3207 = vmax.f32 %v2590, 0.0
    %v3208 = vmax.f32 %v2598, 0.0
    %v3209 = vmax.f32 %v2606, 0.0
    %v3210 = vmax.f32 %v2605, 0.0
    %v3211 = vmax.f32 %v2607, 0.0
    %v3212 = vmax.f32 %v2615, 0.0
    %v3213 = vmax.f32 %v2623, 0.0
    %v3214 = vmax.f32 %v2622, 0.0
    %v3215 = vmax.f32 %v2624, 0.0
    %v3216 = vmax.f32 %v2632, 0.0
    %v3217 = vmax.f32 %v2640, 0.0
    %v3218 = vmax.f32 %v2639, 0.0
    %v3219 = vmax.f32 %v2641, 0.0
    %v3220 = vmax.f32 %v2649, 0.0
    %v3221 = vmax.f32 %v2657, 0.0
    %v3222 = vmax.f32 %v2656, 0.0
    %v3223 = vmax.f32 %v2658, 0.0
    %v3224 = vmax.f32 %v2666, 0.0
    %v3225 = vmax.f32 %v2674, 0.0
    %v3226 = vmax.f32 %v2673, 0.0
    %v3227 = vmax.f32 %v2675, 0.0
    %v3228 = vmax.f32 %v2683, 0.0
    %v3229 = vmax.f32 %v2691, 0.0
    %v3230 = vmax.f32 %v2690, 0.0
    %v3231 = vmax.f32 %v2692, 0.0
    %v3232 = vmax.f32 %v2700, 0.0
    %v3233 = vmax.f32 %v2708, 0.0
    %v3234 = vmax.f32 %v2707, 0.0
    %v3235 = vmax.f32 %v2709, 0.0
    %v3236 = vmax.f32 %v2717, 0.0
    %v3237 = vmax.f32 %v2725, 0.0
    %v3238 = vmax.f32 %v2724, 0.0
    %v3239 = vmax.f32 %v2726, 0.0
    %v3240 = vmax.f32 %v2734, 0.0
    %v3241 = vmax.f32 %v2742, 0.0
    %v3242 = vmax.f32 %v2741, 0.0
    %v3243 = vmax.f32 %v2743, 0.0
    %v3244 = vmax.f32 %v2751, 0.0
    %v3245 = vmax.f32 %v2759, 0.0
    %v3246 = vmax.f32 %v2758, 0.0
    %v3247 = vmax.f32 %v2760, 0.0
    %v3248 = vmax.f32 %v2768, 0.0
    %v3249 = vmax.f32 %v2776, 0.0
    %v3250 = vmax.f32 %v2775, 0.0
    %v3251 = vmax.f32 %v2777, 0.0
    %v3252 = vmax.f32 %v2785, 0.0
    %v3253 = vmax.f32 %v2793, 0.0
    %v3254 = vmax.f32 %v2792, 0.0
    %v3255 = vmax.f32 %v2794, 0.0
    %v3256 = vmax.f32 %v2802, 0.0
    %v3257 = vmax.f32 %v2810, 0.0
    %v3258 = vmax.f32 %v2809, 0.0
    %v3259 = vmax.f32 %v2811, 0.0
    %v3260 = vmax.f32 %v2819, 0.0
    %v3261 = vmax.f32 %v2827, 0.0
    %v3262 = vmax.f32 %v2826, 0.0
    %v3263 = vmax.f32 %v2828, 0.0
    %v3264 = vmax.f32 %v2836, 0.0
    %v3265 = vmax.f32 %v2844, 0.0
    %v3266 = vmax.f32 %v2843, 0.0
    %v3267 = vmax.f32 %v2845, 0.0
    %v3268 = vmax.f32 %v2853, 0.0
    %v3269 = vmax.f32 %v2861, 0.0
    %v3270 = vmax.f32 %v2860, 0.0
    %v3271 = vmax.f32 %v2862, 0.0
    %v3272 = vmax.f32 %v2870, 0.0
    %v3273 = vmax.f32 %v2878, 0.0
    %v3274 = vmax.f32 %v2877, 0.0
    %v3275 = vmax.f32 %v2879, 0.0
    %v3276 = vmax.f32 %v2887, 0.0
    %v3277 = vmax.f32 %v2895, 0.0
    %v3278 = vmax.f32 %v2894, 0.0
    %v3279 = vmax.f32 %v2896, 0.0
    %v3280 = vmax.f32 %v2904, 0.0
    %v3281 = vmax.f32 %v2912, 0.0
    %v3282 = vmax.f32 %v2911, 0.0
    %v3283 = vmax.f32 %v2913, 0.0
    %v3284 = vmax.f32 %v2921, 0.0
    %v3285 = vmax.f32 %v2929, 0.0
    %v3286 = vmax.f32 %v2928, 0.0
    %v3287 = vmax.f32 %v2930, 0.0
    %v3288 = vmax.f32 %v2938, 0.0
    %v3289 = vmax.f32 %v2946, 0.0
    %v3290 = vmax.f32 %v2945, 0.0
    %v3291 = vmax.f32 %v2947, 0.0
    %v3292 = vmax.f32 %v2955, 0.0
    %v3293 = vmax.f32 %v2963, 0.0
    %v3294 = vmax.f32 %v2962, 0.0
    %v3295 = vmax.f32 %v2964, 0.0
    %v3296 = vmax.f32 %v2972, 0.0
    %v3297 = vmax.f32 %v2980, 0.0
    %v3298 = vmax.f32 %v2979, 0.0
    %v3299 = vmax.f32 %v2981, 0.0
    %v3300 = vmax.f32 %v2989, 0.0
    %v3301 = vmax.f32 %v2997, 0.0
    %v3302 = vmax.f32 %v2996, 0.0
    %v3303 = vmax.f32 %v2998, 0.0
    %v3304 = vmax.f32 %v3006, 0.0
    %v3305 = vmax.f32 %v3014, 0.0
    %v3306 = vmax.f32 %v3013, 0.0
    %v3307 = vmax.f32 %v3015, 0.0
    %v3308 = vmax.f32 %v3023, 0.0
    %v3309 = vmax.f32 %v3031, 0.0
    %v3310 = vmax.f32 %v3030, 0.0
    %v3311 = vmax.f32 %v3032, 0.0
    %v3312 = vmax.f32 %v3040, 0.0
    %v3313 = vmax.f32 %v3048, 0.0
    %v3314 = vmax.f32 %v3047, 0.0
    %v3315 = vmax.f32 %v3049, 0.0
    %v3316 = vmax.f32 %v3056, 0.0
    %v3317 = vmax.f32 %v3057, 0.0
    %v3318 = vld [vmem:[%s3] sm:$0x1]
    %v3319 = vld [vmem:[%s4] sm:$0x1]
    %v3450 = vcombine.low %v3188, %v3189
    %v3451 = vcombine.low %v3190, %v3191
    %v3453 = vunpack.c.l.s4 1983009808
    %v3454 = vunpack.c.0.s8 %v3453
    %v3455 = vlaneseq
    %v3456 = vshrl.u32 %v3455, 7
    %v3457 = vsub.s32 %v3454, %v3456
    %v3458 = vrot.slane %v3450, %v3457
    %v3460 = vunpack.c.l.s4 1983009808
    %v3461 = vunpack.c.0.s8 %v3460
    %v3462 = vlaneseq
    %v3463 = vshrl.u32 %v3462, 7
    %v3464 = vsub.s32 %v3461, %v3463
    %v3465 = vrot.slane %v3451, %v3464
    %v3466 = vcombine.low %v3458, %v3465
    %v3467 = vcombine.low %v3192, %v3193
    %v3468 = vcombine.low %v3194, %v3195
    %v3470 = vunpack.c.l.s4 1983009808
    %v3471 = vunpack.c.0.s8 %v3470
    %v3472 = vlaneseq
    %v3473 = vshrl.u32 %v3472, 7
    %v3474 = vsub.s32 %v3471, %v3473
    %v3475 = vrot.slane %v3467, %v3474
    %v3477 = vunpack.c.l.s4 1983009808
    %v3478 = vunpack.c.0.s8 %v3477
    %v3479 = vlaneseq
    %v3480 = vshrl.u32 %v3479, 7
    %v3481 = vsub.s32 %v3478, %v3480
    %v3482 = vrot.slane %v3468, %v3481
    %v3483 = vcombine.low %v3475, %v3482
    %v3484 = vcombine.low %v3196, %v3197
    %v3485 = vcombine.low %v3198, %v3199
    %v3487 = vunpack.c.l.s4 1983009808
    %v3488 = vunpack.c.0.s8 %v3487
    %v3489 = vlaneseq
    %v3490 = vshrl.u32 %v3489, 7
    %v3491 = vsub.s32 %v3488, %v3490
    %v3492 = vrot.slane %v3484, %v3491
    %v3494 = vunpack.c.l.s4 1983009808
    %v3495 = vunpack.c.0.s8 %v3494
    %v3496 = vlaneseq
    %v3497 = vshrl.u32 %v3496, 7
    %v3498 = vsub.s32 %v3495, %v3497
    %v3499 = vrot.slane %v3485, %v3498
    %v3500 = vcombine.low %v3492, %v3499
    %v3501 = vcombine.low %v3200, %v3201
    %v3502 = vcombine.low %v3202, %v3203
    %v3504 = vunpack.c.l.s4 1983009808
    %v3505 = vunpack.c.0.s8 %v3504
    %v3506 = vlaneseq
    %v3507 = vshrl.u32 %v3506, 7
    %v3508 = vsub.s32 %v3505, %v3507
    %v3509 = vrot.slane %v3501, %v3508
    %v3511 = vunpack.c.l.s4 1983009808
    %v3512 = vunpack.c.0.s8 %v3511
    %v3513 = vlaneseq
    %v3514 = vshrl.u32 %v3513, 7
    %v3515 = vsub.s32 %v3512, %v3514
    %v3516 = vrot.slane %v3502, %v3515
    %v3517 = vcombine.low %v3509, %v3516
    %v3518 = vcombine.low %v3204, %v3205
    %v3519 = vcombine.low %v3206, %v3207
    %v3521 = vunpack.c.l.s4 1983009808
    %v3522 = vunpack.c.0.s8 %v3521
    %v3523 = vlaneseq
    %v3524 = vshrl.u32 %v3523, 7
    %v3525 = vsub.s32 %v3522, %v3524
    %v3526 = vrot.slane %v3518, %v3525
    %v3528 = vunpack.c.l.s4 1983009808
    %v3529 = vunpack.c.0.s8 %v3528
    %v3530 = vlaneseq
    %v3531 = vshrl.u32 %v3530, 7
    %v3532 = vsub.s32 %v3529, %v3531
    %v3533 = vrot.slane %v3519, %v3532
    %v3534 = vcombine.low %v3526, %v3533
    %v3535 = vcombine.low %v3208, %v3209
    %v3536 = vcombine.low %v3210, %v3211
    %v3538 = vunpack.c.l.s4 1983009808
    %v3539 = vunpack.c.0.s8 %v3538
    %v3540 = vlaneseq
    %v3541 = vshrl.u32 %v3540, 7
    %v3542 = vsub.s32 %v3539, %v3541
    %v3543 = vrot.slane %v3535, %v3542
    %v3545 = vunpack.c.l.s4 1983009808
    %v3546 = vunpack.c.0.s8 %v3545
    %v3547 = vlaneseq
    %v3548 = vshrl.u32 %v3547, 7
    %v3549 = vsub.s32 %v3546, %v3548
    %v3550 = vrot.slane %v3536, %v3549
    %v3551 = vcombine.low %v3543, %v3550
    %v3552 = vcombine.low %v3212, %v3213
    %v3553 = vcombine.low %v3214, %v3215
    %v3555 = vunpack.c.l.s4 1983009808
    %v3556 = vunpack.c.0.s8 %v3555
    %v3557 = vlaneseq
    %v3558 = vshrl.u32 %v3557, 7
    %v3559 = vsub.s32 %v3556, %v3558
    %v3560 = vrot.slane %v3552, %v3559
    %v3562 = vunpack.c.l.s4 1983009808
    %v3563 = vunpack.c.0.s8 %v3562
    %v3564 = vlaneseq
    %v3565 = vshrl.u32 %v3564, 7
    %v3566 = vsub.s32 %v3563, %v3565
    %v3567 = vrot.slane %v3553, %v3566
    %v3568 = vcombine.low %v3560, %v3567
    %v3569 = vcombine.low %v3216, %v3217
    %v3570 = vcombine.low %v3218, %v3219
    %v3572 = vunpack.c.l.s4 1983009808
    %v3573 = vunpack.c.0.s8 %v3572
    %v3574 = vlaneseq
    %v3575 = vshrl.u32 %v3574, 7
    %v3576 = vsub.s32 %v3573, %v3575
    %v3577 = vrot.slane %v3569, %v3576
    %v3579 = vunpack.c.l.s4 1983009808
    %v3580 = vunpack.c.0.s8 %v3579
    %v3581 = vlaneseq
    %v3582 = vshrl.u32 %v3581, 7
    %v3583 = vsub.s32 %v3580, %v3582
    %v3584 = vrot.slane %v3570, %v3583
    %v3585 = vcombine.low %v3577, %v3584
    %v3586 = vcombine.low %v3220, %v3221
    %v3587 = vcombine.low %v3222, %v3223
    %v3589 = vunpack.c.l.s4 1983009808
    %v3590 = vunpack.c.0.s8 %v3589
    %v3591 = vlaneseq
    %v3592 = vshrl.u32 %v3591, 7
    %v3593 = vsub.s32 %v3590, %v3592
    %v3594 = vrot.slane %v3586, %v3593
    %v3596 = vunpack.c.l.s4 1983009808
    %v3597 = vunpack.c.0.s8 %v3596
    %v3598 = vlaneseq
    %v3599 = vshrl.u32 %v3598, 7
    %v3600 = vsub.s32 %v3597, %v3599
    %v3601 = vrot.slane %v3587, %v3600
    %v3602 = vcombine.low %v3594, %v3601
    %v3603 = vcombine.low %v3224, %v3225
    %v3604 = vcombine.low %v3226, %v3227
    %v3606 = vunpack.c.l.s4 1983009808
    %v3607 = vunpack.c.0.s8 %v3606
    %v3608 = vlaneseq
    %v3609 = vshrl.u32 %v3608, 7
    %v3610 = vsub.s32 %v3607, %v3609
    %v3611 = vrot.slane %v3603, %v3610
    %v3613 = vunpack.c.l.s4 1983009808
    %v3614 = vunpack.c.0.s8 %v3613
    %v3615 = vlaneseq
    %v3616 = vshrl.u32 %v3615, 7
    %v3617 = vsub.s32 %v3614, %v3616
    %v3618 = vrot.slane %v3604, %v3617
    %v3619 = vcombine.low %v3611, %v3618
    %v3620 = vcombine.low %v3228, %v3229
    %v3621 = vcombine.low %v3230, %v3231
    %v3623 = vunpack.c.l.s4 1983009808
    %v3624 = vunpack.c.0.s8 %v3623
    %v3625 = vlaneseq
    %v3626 = vshrl.u32 %v3625, 7
    %v3627 = vsub.s32 %v3624, %v3626
    %v3628 = vrot.slane %v3620, %v3627
    %v3630 = vunpack.c.l.s4 1983009808
    %v3631 = vunpack.c.0.s8 %v3630
    %v3632 = vlaneseq
    %v3633 = vshrl.u32 %v3632, 7
    %v3634 = vsub.s32 %v3631, %v3633
    %v3635 = vrot.slane %v3621, %v3634
    %v3636 = vcombine.low %v3628, %v3635
    %v3637 = vcombine.low %v3232, %v3233
    %v3638 = vcombine.low %v3234, %v3235
    %v3640 = vunpack.c.l.s4 1983009808
    %v3641 = vunpack.c.0.s8 %v3640
    %v3642 = vlaneseq
    %v3643 = vshrl.u32 %v3642, 7
    %v3644 = vsub.s32 %v3641, %v3643
    %v3645 = vrot.slane %v3637, %v3644
    %v3647 = vunpack.c.l.s4 1983009808
    %v3648 = vunpack.c.0.s8 %v3647
    %v3649 = vlaneseq
    %v3650 = vshrl.u32 %v3649, 7
    %v3651 = vsub.s32 %v3648, %v3650
    %v3652 = vrot.slane %v3638, %v3651
    %v3653 = vcombine.low %v3645, %v3652
    %v3654 = vcombine.low %v3236, %v3237
    %v3655 = vcombine.low %v3238, %v3239
    %v3657 = vunpack.c.l.s4 1983009808
    %v3658 = vunpack.c.0.s8 %v3657
    %v3659 = vlaneseq
    %v3660 = vshrl.u32 %v3659, 7
    %v3661 = vsub.s32 %v3658, %v3660
    %v3662 = vrot.slane %v3654, %v3661
    %v3664 = vunpack.c.l.s4 1983009808
    %v3665 = vunpack.c.0.s8 %v3664
    %v3666 = vlaneseq
    %v3667 = vshrl.u32 %v3666, 7
    %v3668 = vsub.s32 %v3665, %v3667
    %v3669 = vrot.slane %v3655, %v3668
    %v3670 = vcombine.low %v3662, %v3669
    %v3671 = vcombine.low %v3240, %v3241
    %v3672 = vcombine.low %v3242, %v3243
    %v3674 = vunpack.c.l.s4 1983009808
    %v3675 = vunpack.c.0.s8 %v3674
    %v3676 = vlaneseq
    %v3677 = vshrl.u32 %v3676, 7
    %v3678 = vsub.s32 %v3675, %v3677
    %v3679 = vrot.slane %v3671, %v3678
    %v3681 = vunpack.c.l.s4 1983009808
    %v3682 = vunpack.c.0.s8 %v3681
    %v3683 = vlaneseq
    %v3684 = vshrl.u32 %v3683, 7
    %v3685 = vsub.s32 %v3682, %v3684
    %v3686 = vrot.slane %v3672, %v3685
    %v3687 = vcombine.low %v3679, %v3686
    %v3688 = vcombine.low %v3244, %v3245
    %v3689 = vcombine.low %v3246, %v3247
    %v3691 = vunpack.c.l.s4 1983009808
    %v3692 = vunpack.c.0.s8 %v3691
    %v3693 = vlaneseq
    %v3694 = vshrl.u32 %v3693, 7
    %v3695 = vsub.s32 %v3692, %v3694
    %v3696 = vrot.slane %v3688, %v3695
    %v3698 = vunpack.c.l.s4 1983009808
    %v3699 = vunpack.c.0.s8 %v3698
    %v3700 = vlaneseq
    %v3701 = vshrl.u32 %v3700, 7
    %v3702 = vsub.s32 %v3699, %v3701
    %v3703 = vrot.slane %v3689, %v3702
    %v3704 = vcombine.low %v3696, %v3703
    %v3705 = vcombine.low %v3248, %v3249
    %v3706 = vcombine.low %v3250, %v3251
    %v3708 = vunpack.c.l.s4 1983009808
    %v3709 = vunpack.c.0.s8 %v3708
    %v3710 = vlaneseq
    %v3711 = vshrl.u32 %v3710, 7
    %v3712 = vsub.s32 %v3709, %v3711
    %v3713 = vrot.slane %v3705, %v3712
    %v3715 = vunpack.c.l.s4 1983009808
    %v3716 = vunpack.c.0.s8 %v3715
    %v3717 = vlaneseq
    %v3718 = vshrl.u32 %v3717, 7
    %v3719 = vsub.s32 %v3716, %v3718
    %v3720 = vrot.slane %v3706, %v3719
    %v3721 = vcombine.low %v3713, %v3720
    %v3723 = vunpack.c.l.s4 1983009808
    %v3724 = vunpack.c.0.s8 %v3723
    %v3725 = vlaneseq
    %v3726 = vshrl.u32 %v3725, 7
    %v3727 = vsub.s32 %v3724, %v3726
    %v3728 = vrot.slane %v3252, %v3727
    %v3729 = vcombine.low %v3253, %v3254
    %v3730 = vcombine.low %v3255, %v3256
    %v3732 = vunpack.c.l.s4 1983009808
    %v3733 = vunpack.c.0.s8 %v3732
    %v3734 = vlaneseq
    %v3735 = vshrl.u32 %v3734, 7
    %v3736 = vsub.s32 %v3733, %v3735
    %v3737 = vrot.slane %v3729, %v3736
    %v3739 = vunpack.c.l.s4 1983009808
    %v3740 = vunpack.c.0.s8 %v3739
    %v3741 = vlaneseq
    %v3742 = vshrl.u32 %v3741, 7
    %v3743 = vsub.s32 %v3740, %v3742
    %v3744 = vrot.slane %v3730, %v3743
    %v3745 = vcombine.low %v3737, %v3744
    %v3746 = vcombine.low %v3257, %v3258
    %v3747 = vcombine.low %v3259, %v3260
    %v3749 = vunpack.c.l.s4 1983009808
    %v3750 = vunpack.c.0.s8 %v3749
    %v3751 = vlaneseq
    %v3752 = vshrl.u32 %v3751, 7
    %v3753 = vsub.s32 %v3750, %v3752
    %v3754 = vrot.slane %v3746, %v3753
    %v3756 = vunpack.c.l.s4 1983009808
    %v3757 = vunpack.c.0.s8 %v3756
    %v3758 = vlaneseq
    %v3759 = vshrl.u32 %v3758, 7
    %v3760 = vsub.s32 %v3757, %v3759
    %v3761 = vrot.slane %v3747, %v3760
    %v3762 = vcombine.low %v3754, %v3761
    %v3763 = vcombine.low %v3261, %v3262
    %v3764 = vcombine.low %v3263, %v3264
    %v3766 = vunpack.c.l.s4 1983009808
    %v3767 = vunpack.c.0.s8 %v3766
    %v3768 = vlaneseq
    %v3769 = vshrl.u32 %v3768, 7
    %v3770 = vsub.s32 %v3767, %v3769
    %v3771 = vrot.slane %v3763, %v3770
    %v3773 = vunpack.c.l.s4 1983009808
    %v3774 = vunpack.c.0.s8 %v3773
    %v3775 = vlaneseq
    %v3776 = vshrl.u32 %v3775, 7
    %v3777 = vsub.s32 %v3774, %v3776
    %v3778 = vrot.slane %v3764, %v3777
    %v3779 = vcombine.low %v3771, %v3778
    %v3780 = vcombine.low %v3265, %v3266
    %v3781 = vcombine.low %v3267, %v3268
    %v3783 = vunpack.c.l.s4 1983009808
    %v3784 = vunpack.c.0.s8 %v3783
    %v3785 = vlaneseq
    %v3786 = vshrl.u32 %v3785, 7
    %v3787 = vsub.s32 %v3784, %v3786
    %v3788 = vrot.slane %v3780, %v3787
    %v3790 = vunpack.c.l.s4 1983009808
    %v3791 = vunpack.c.0.s8 %v3790
    %v3792 = vlaneseq
    %v3793 = vshrl.u32 %v3792, 7
    %v3794 = vsub.s32 %v3791, %v3793
    %v3795 = vrot.slane %v3781, %v3794
    %v3796 = vcombine.low %v3788, %v3795
    %v3797 = vcombine.low %v3269, %v3270
    %v3798 = vcombine.low %v3271, %v3272
    %v3800 = vunpack.c.l.s4 1983009808
    %v3801 = vunpack.c.0.s8 %v3800
    %v3802 = vlaneseq
    %v3803 = vshrl.u32 %v3802, 7
    %v3804 = vsub.s32 %v3801, %v3803
    %v3805 = vrot.slane %v3797, %v3804
    %v3807 = vunpack.c.l.s4 1983009808
    %v3808 = vunpack.c.0.s8 %v3807
    %v3809 = vlaneseq
    %v3810 = vshrl.u32 %v3809, 7
    %v3811 = vsub.s32 %v3808, %v3810
    %v3812 = vrot.slane %v3798, %v3811
    %v3813 = vcombine.low %v3805, %v3812
    %v3814 = vcombine.low %v3273, %v3274
    %v3815 = vcombine.low %v3275, %v3276
    %v3817 = vunpack.c.l.s4 1983009808
    %v3818 = vunpack.c.0.s8 %v3817
    %v3819 = vlaneseq
    %v3820 = vshrl.u32 %v3819, 7
    %v3821 = vsub.s32 %v3818, %v3820
    %v3822 = vrot.slane %v3814, %v3821
    %v3824 = vunpack.c.l.s4 1983009808
    %v3825 = vunpack.c.0.s8 %v3824
    %v3826 = vlaneseq
    %v3827 = vshrl.u32 %v3826, 7
    %v3828 = vsub.s32 %v3825, %v3827
    %v3829 = vrot.slane %v3815, %v3828
    %v3830 = vcombine.low %v3822, %v3829
    %v3831 = vcombine.low %v3277, %v3278
    %v3832 = vcombine.low %v3279, %v3280
    %v3834 = vunpack.c.l.s4 1983009808
    %v3835 = vunpack.c.0.s8 %v3834
    %v3836 = vlaneseq
    %v3837 = vshrl.u32 %v3836, 7
    %v3838 = vsub.s32 %v3835, %v3837
    %v3839 = vrot.slane %v3831, %v3838
    %v3841 = vunpack.c.l.s4 1983009808
    %v3842 = vunpack.c.0.s8 %v3841
    %v3843 = vlaneseq
    %v3844 = vshrl.u32 %v3843, 7
    %v3845 = vsub.s32 %v3842, %v3844
    %v3846 = vrot.slane %v3832, %v3845
    %v3847 = vcombine.low %v3839, %v3846
    %v3848 = vcombine.low %v3281, %v3282
    %v3849 = vcombine.low %v3283, %v3284
    %v3851 = vunpack.c.l.s4 1983009808
    %v3852 = vunpack.c.0.s8 %v3851
    %v3853 = vlaneseq
    %v3854 = vshrl.u32 %v3853, 7
    %v3855 = vsub.s32 %v3852, %v3854
    %v3856 = vrot.slane %v3848, %v3855
    %v3858 = vunpack.c.l.s4 1983009808
    %v3859 = vunpack.c.0.s8 %v3858
    %v3860 = vlaneseq
    %v3861 = vshrl.u32 %v3860, 7
    %v3862 = vsub.s32 %v3859, %v3861
    %v3863 = vrot.slane %v3849, %v3862
    %v3864 = vcombine.low %v3856, %v3863
    %v3865 = vcombine.low %v3285, %v3286
    %v3866 = vcombine.low %v3287, %v3288
    %v3868 = vunpack.c.l.s4 1983009808
    %v3869 = vunpack.c.0.s8 %v3868
    %v3870 = vlaneseq
    %v3871 = vshrl.u32 %v3870, 7
    %v3872 = vsub.s32 %v3869, %v3871
    %v3873 = vrot.slane %v3865, %v3872
    %v3875 = vunpack.c.l.s4 1983009808
    %v3876 = vunpack.c.0.s8 %v3875
    %v3877 = vlaneseq
    %v3878 = vshrl.u32 %v3877, 7
    %v3879 = vsub.s32 %v3876, %v3878
    %v3880 = vrot.slane %v3866, %v3879
    %v3881 = vcombine.low %v3873, %v3880
    %v3882 = vcombine.low %v3289, %v3290
    %v3883 = vcombine.low %v3291, %v3292
    %v3885 = vunpack.c.l.s4 1983009808
    %v3886 = vunpack.c.0.s8 %v3885
    %v3887 = vlaneseq
    %v3888 = vshrl.u32 %v3887, 7
    %v3889 = vsub.s32 %v3886, %v3888
    %v3890 = vrot.slane %v3882, %v3889
    %v3892 = vunpack.c.l.s4 1983009808
    %v3893 = vunpack.c.0.s8 %v3892
    %v3894 = vlaneseq
    %v3895 = vshrl.u32 %v3894, 7
    %v3896 = vsub.s32 %v3893, %v3895
    %v3897 = vrot.slane %v3883, %v3896
    %v3898 = vcombine.low %v3890, %v3897
    %v3899 = vcombine.low %v3293, %v3294
    %v3900 = vcombine.low %v3295, %v3296
    %v3902 = vunpack.c.l.s4 1983009808
    %v3903 = vunpack.c.0.s8 %v3902
    %v3904 = vlaneseq
    %v3905 = vshrl.u32 %v3904, 7
    %v3906 = vsub.s32 %v3903, %v3905
    %v3907 = vrot.slane %v3899, %v3906
    %v3909 = vunpack.c.l.s4 1983009808
    %v3910 = vunpack.c.0.s8 %v3909
    %v3911 = vlaneseq
    %v3912 = vshrl.u32 %v3911, 7
    %v3913 = vsub.s32 %v3910, %v3912
    %v3914 = vrot.slane %v3900, %v3913
    %v3915 = vcombine.low %v3907, %v3914
    %v3916 = vcombine.low %v3297, %v3298
    %v3917 = vcombine.low %v3299, %v3300
    %v3919 = vunpack.c.l.s4 1983009808
    %v3920 = vunpack.c.0.s8 %v3919
    %v3921 = vlaneseq
    %v3922 = vshrl.u32 %v3921, 7
    %v3923 = vsub.s32 %v3920, %v3922
    %v3924 = vrot.slane %v3916, %v3923
    %v3926 = vunpack.c.l.s4 1983009808
    %v3927 = vunpack.c.0.s8 %v3926
    %v3928 = vlaneseq
    %v3929 = vshrl.u32 %v3928, 7
    %v3930 = vsub.s32 %v3927, %v3929
    %v3931 = vrot.slane %v3917, %v3930
    %v3932 = vcombine.low %v3924, %v3931
    %v3933 = vcombine.low %v3301, %v3302
    %v3934 = vcombine.low %v3303, %v3304
    %v3936 = vunpack.c.l.s4 1983009808
    %v3937 = vunpack.c.0.s8 %v3936
    %v3938 = vlaneseq
    %v3939 = vshrl.u32 %v3938, 7
    %v3940 = vsub.s32 %v3937, %v3939
    %v3941 = vrot.slane %v3933, %v3940
    %v3943 = vunpack.c.l.s4 1983009808
    %v3944 = vunpack.c.0.s8 %v3943
    %v3945 = vlaneseq
    %v3946 = vshrl.u32 %v3945, 7
    %v3947 = vsub.s32 %v3944, %v3946
    %v3948 = vrot.slane %v3934, %v3947
    %v3949 = vcombine.low %v3941, %v3948
    %v3950 = vcombine.low %v3305, %v3306
    %v3951 = vcombine.low %v3307, %v3308
    %v3953 = vunpack.c.l.s4 1983009808
    %v3954 = vunpack.c.0.s8 %v3953
    %v3955 = vlaneseq
    %v3956 = vshrl.u32 %v3955, 7
    %v3957 = vsub.s32 %v3954, %v3956
    %v3958 = vrot.slane %v3950, %v3957
    %v3960 = vunpack.c.l.s4 1983009808
    %v3961 = vunpack.c.0.s8 %v3960
    %v3962 = vlaneseq
    %v3963 = vshrl.u32 %v3962, 7
    %v3964 = vsub.s32 %v3961, %v3963
    %v3965 = vrot.slane %v3951, %v3964
    %v3966 = vcombine.low %v3958, %v3965
    %v3967 = vcombine.low %v3309, %v3310
    %v3968 = vcombine.low %v3311, %v3312
    %v3970 = vunpack.c.l.s4 1983009808
    %v3971 = vunpack.c.0.s8 %v3970
    %v3972 = vlaneseq
    %v3973 = vshrl.u32 %v3972, 7
    %v3974 = vsub.s32 %v3971, %v3973
    %v3975 = vrot.slane %v3967, %v3974
    %v3977 = vunpack.c.l.s4 1983009808
    %v3978 = vunpack.c.0.s8 %v3977
    %v3979 = vlaneseq
    %v3980 = vshrl.u32 %v3979, 7
    %v3981 = vsub.s32 %v3978, %v3980
    %v3982 = vrot.slane %v3968, %v3981
    %v3983 = vcombine.low %v3975, %v3982
    %v3984 = vcombine.low %v3313, %v3314
    %v3985 = vcombine.low %v3315, %v3316
    %v3987 = vunpack.c.l.s4 1983009808
    %v3988 = vunpack.c.0.s8 %v3987
    %v3989 = vlaneseq
    %v3990 = vshrl.u32 %v3989, 7
    %v3991 = vsub.s32 %v3988, %v3990
    %v3992 = vrot.slane %v3984, %v3991
    %v3994 = vunpack.c.l.s4 1983009808
    %v3995 = vunpack.c.0.s8 %v3994
    %v3996 = vlaneseq
    %v3997 = vshrl.u32 %v3996, 7
    %v3998 = vsub.s32 %v3995, %v3997
    %v3999 = vrot.slane %v3985, %v3998
    %v4000 = vcombine.low %v3992, %v3999
    %v4002 = vunpack.c.l.s4 1983009808
    %v4003 = vunpack.c.0.s8 %v4002
    %v4004 = vlaneseq
    %v4005 = vshrl.u32 %v4004, 7
    %v4006 = vsub.s32 %v4003, %v4005
    %v4007 = vrot.slane %v3317, %v4006
    %v4042 = vsel %vm418, %v3466, 0.0
    %4043 = vadd.xlane.f32.xlu0 %v4042
    %v4044 = vpop.xlane.xlu0 %4043
    %v4045 = vsel %vm418, %v3483, 0.0
    %4046 = vadd.xlane.f32.xlu0 %v4045
    %v4047 = vpop.xlane.xlu0 %4046
    %v4048 = vsel %vm418, %v3500, 0.0
    %4049 = vadd.xlane.f32.xlu0 %v4048
    %v4050 = vpop.xlane.xlu0 %4049
    %v4051 = vsel %vm418, %v3517, 0.0
    %4052 = vadd.xlane.f32.xlu0 %v4051
    %v4053 = vpop.xlane.xlu0 %4052
    %v4054 = vsel %vm418, %v3534, 0.0
    %4055 = vadd.xlane.f32.xlu0 %v4054
    %v4056 = vpop.xlane.xlu0 %4055
    %v4057 = vsel %vm418, %v3551, 0.0
    %4058 = vadd.xlane.f32.xlu0 %v4057
    %v4059 = vpop.xlane.xlu0 %4058
    %v4060 = vsel %vm418, %v3568, 0.0
    %4061 = vadd.xlane.f32.xlu0 %v4060
    %v4062 = vpop.xlane.xlu0 %4061
    %v4063 = vsel %vm418, %v3585, 0.0
    %4064 = vadd.xlane.f32.xlu0 %v4063
    %v4065 = vpop.xlane.xlu0 %4064
    %v4066 = vsel %vm418, %v3602, 0.0
    %4067 = vadd.xlane.f32.xlu0 %v4066
    %v4068 = vpop.xlane.xlu0 %4067
    %v4069 = vsel %vm418, %v3619, 0.0
    %4070 = vadd.xlane.f32.xlu0 %v4069
    %v4071 = vpop.xlane.xlu0 %4070
    %v4072 = vsel %vm418, %v3636, 0.0
    %4073 = vadd.xlane.f32.xlu0 %v4072
    %v4074 = vpop.xlane.xlu0 %4073
    %v4075 = vsel %vm418, %v3653, 0.0
    %4076 = vadd.xlane.f32.xlu0 %v4075
    %v4077 = vpop.xlane.xlu0 %4076
    %v4078 = vsel %vm418, %v3670, 0.0
    %4079 = vadd.xlane.f32.xlu0 %v4078
    %v4080 = vpop.xlane.xlu0 %4079
    %v4081 = vsel %vm418, %v3687, 0.0
    %4082 = vadd.xlane.f32.xlu0 %v4081
    %v4083 = vpop.xlane.xlu0 %4082
    %v4084 = vsel %vm418, %v3704, 0.0
    %4085 = vadd.xlane.f32.xlu0 %v4084
    %v4086 = vpop.xlane.xlu0 %4085
    %v4087 = vsel %vm418, %v3721, 0.0
    %4088 = vadd.xlane.f32.xlu0 %v4087
    %v4089 = vpop.xlane.xlu0 %4088
    %vm4090 = vcmask 254976
    %v4091 = vsel %vm4090, %v3728, 0.0
    %4092 = vadd.xlane.f32.xlu0 %v4091
    %v4093 = vpop.xlane.xlu0 %4092
    %v4094 = vsel %vm418, %v3745, 0.0
    %4095 = vadd.xlane.f32.xlu0 %v4094
    %v4096 = vpop.xlane.xlu0 %4095
    %v4097 = vsel %vm418, %v3762, 0.0
    %4098 = vadd.xlane.f32.xlu0 %v4097
    %v4099 = vpop.xlane.xlu0 %4098
    %v4100 = vsel %vm418, %v3779, 0.0
    %4101 = vadd.xlane.f32.xlu0 %v4100
    %v4102 = vpop.xlane.xlu0 %4101
    %v4103 = vsel %vm418, %v3796, 0.0
    %4104 = vadd.xlane.f32.xlu0 %v4103
    %v4105 = vpop.xlane.xlu0 %4104
    %v4106 = vsel %vm418, %v3813, 0.0
    %4107 = vadd.xlane.f32.xlu0 %v4106
    %v4108 = vpop.xlane.xlu0 %4107
    %v4109 = vsel %vm418, %v3830, 0.0
    %4110 = vadd.xlane.f32.xlu0 %v4109
    %v4111 = vpop.xlane.xlu0 %4110
    %v4112 = vsel %vm418, %v3847, 0.0
    %4113 = vadd.xlane.f32.xlu0 %v4112
    %v4114 = vpop.xlane.xlu0 %4113
    %v4115 = vsel %vm418, %v3864, 0.0
    %4116 = vadd.xlane.f32.xlu0 %v4115
    %v4117 = vpop.xlane.xlu0 %4116
    %v4118 = vsel %vm418, %v3881, 0.0
    %4119 = vadd.xlane.f32.xlu0 %v4118
    %v4120 = vpop.xlane.xlu0 %4119
    %v4121 = vsel %vm418, %v3898, 0.0
    %4122 = vadd.xlane.f32.xlu0 %v4121
    %v4123 = vpop.xlane.xlu0 %4122
    %v4124 = vsel %vm418, %v3915, 0.0
    %4125 = vadd.xlane.f32.xlu0 %v4124
    %v4126 = vpop.xlane.xlu0 %4125
    %v4127 = vsel %vm418, %v3932, 0.0
    %4128 = vadd.xlane.f32.xlu0 %v4127
    %v4129 = vpop.xlane.xlu0 %4128
    %v4130 = vsel %vm418, %v3949, 0.0
    %4131 = vadd.xlane.f32.xlu0 %v4130
    %v4132 = vpop.xlane.xlu0 %4131
    %v4133 = vsel %vm418, %v3966, 0.0
    %4134 = vadd.xlane.f32.xlu0 %v4133
    %v4135 = vpop.xlane.xlu0 %4134
    %v4136 = vsel %vm418, %v3983, 0.0
    %4137 = vadd.xlane.f32.xlu0 %v4136
    %v4138 = vpop.xlane.xlu0 %4137
    %v4139 = vsel %vm418, %v4000, 0.0
    %4140 = vadd.xlane.f32.xlu0 %v4139
    %v4141 = vpop.xlane.xlu0 %4140
    %v4142 = vsel %vm4090, %v4007, 0.0
    %4143 = vadd.xlane.f32.xlu0 %v4142
    %v4144 = vpop.xlane.xlu0 %4143
    %v4145 = vrcp.pop 32.0
    %v4146 = vmul.f32 %v4044, %v4145
    %v4147 = vmul.f32 %v4047, %v4145
    %v4148 = vmul.f32 %v4050, %v4145
    %v4149 = vmul.f32 %v4053, %v4145
    %v4150 = vmul.f32 %v4056, %v4145
    %v4151 = vmul.f32 %v4059, %v4145
    %v4152 = vmul.f32 %v4062, %v4145
    %v4153 = vmul.f32 %v4065, %v4145
    %v4154 = vmul.f32 %v4068, %v4145
    %v4155 = vmul.f32 %v4071, %v4145
    %v4156 = vmul.f32 %v4074, %v4145
    %v4157 = vmul.f32 %v4077, %v4145
    %v4158 = vmul.f32 %v4080, %v4145
    %v4159 = vmul.f32 %v4083, %v4145
    %v4160 = vmul.f32 %v4086, %v4145
    %v4161 = vmul.f32 %v4089, %v4145
    %v4162 = vmul.f32 %v4093, %v4145
    %v4163 = vmul.f32 %v4096, %v4145
    %v4164 = vmul.f32 %v4099, %v4145
    %v4165 = vmul.f32 %v4102, %v4145
    %v4166 = vmul.f32 %v4105, %v4145
    %v4167 = vmul.f32 %v4108, %v4145
    %v4168 = vmul.f32 %v4111, %v4145
    %v4169 = vmul.f32 %v4114, %v4145
    %v4170 = vmul.f32 %v4117, %v4145
    %v4171 = vmul.f32 %v4120, %v4145
    %v4172 = vmul.f32 %v4123, %v4145
    %v4173 = vmul.f32 %v4126, %v4145
    %v4174 = vmul.f32 %v4129, %v4145
    %v4175 = vmul.f32 %v4132, %v4145
    %v4176 = vmul.f32 %v4135, %v4145
    %v4177 = vmul.f32 %v4138, %v4145
    %v4178 = vmul.f32 %v4141, %v4145
    %v4179 = vmul.f32 %v4144, %v4145
    %v4215 = vunpack.c.l.s4 269488144
    %v4216 = vunpack.c.0.s8 %v4215
    %v4217 = vlaneseq
    %v4218 = vshrl.u32 %v4217, 7
    %v4219 = vsub.s32 %v4216, %v4218
    %v4220 = vrot.slane %v4146, %v4219
    %v4222 = vunpack.c.l.s4 842150450
    %v4223 = vunpack.c.0.s8 %v4222
    %v4224 = vlaneseq
    %v4225 = vshrl.u32 %v4224, 7
    %v4226 = vsub.s32 %v4223, %v4225
    %v4227 = vrot.slane %v4146, %v4226
    %v4229 = vunpack.c.l.s4 1414812756
    %v4230 = vunpack.c.0.s8 %v4229
    %v4231 = vlaneseq
    %v4232 = vshrl.u32 %v4231, 7
    %v4233 = vsub.s32 %v4230, %v4232
    %v4234 = vrot.slane %v4146, %v4233
    %v4236 = vunpack.c.l.s4 1987475062
    %v4237 = vunpack.c.0.s8 %v4236
    %v4238 = vlaneseq
    %v4239 = vshrl.u32 %v4238, 7
    %v4240 = vsub.s32 %v4237, %v4239
    %v4241 = vrot.slane %v4146, %v4240
    %v4243 = vunpack.c.l.s4 269488144
    %v4244 = vunpack.c.0.s8 %v4243
    %v4245 = vlaneseq
    %v4246 = vshrl.u32 %v4245, 7
    %v4247 = vsub.s32 %v4244, %v4246
    %v4248 = vrot.slane %v4147, %v4247
    %v4250 = vunpack.c.l.s4 842150450
    %v4251 = vunpack.c.0.s8 %v4250
    %v4252 = vlaneseq
    %v4253 = vshrl.u32 %v4252, 7
    %v4254 = vsub.s32 %v4251, %v4253
    %v4255 = vrot.slane %v4147, %v4254
    %v4257 = vunpack.c.l.s4 1414812756
    %v4258 = vunpack.c.0.s8 %v4257
    %v4259 = vlaneseq
    %v4260 = vshrl.u32 %v4259, 7
    %v4261 = vsub.s32 %v4258, %v4260
    %v4262 = vrot.slane %v4147, %v4261
    %v4264 = vunpack.c.l.s4 1987475062
    %v4265 = vunpack.c.0.s8 %v4264
    %v4266 = vlaneseq
    %v4267 = vshrl.u32 %v4266, 7
    %v4268 = vsub.s32 %v4265, %v4267
    %v4269 = vrot.slane %v4147, %v4268
    %v4271 = vunpack.c.l.s4 269488144
    %v4272 = vunpack.c.0.s8 %v4271
    %v4273 = vlaneseq
    %v4274 = vshrl.u32 %v4273, 7
    %v4275 = vsub.s32 %v4272, %v4274
    %v4276 = vrot.slane %v4148, %v4275
    %v4278 = vunpack.c.l.s4 842150450
    %v4279 = vunpack.c.0.s8 %v4278
    %v4280 = vlaneseq
    %v4281 = vshrl.u32 %v4280, 7
    %v4282 = vsub.s32 %v4279, %v4281
    %v4283 = vrot.slane %v4148, %v4282
    %v4285 = vunpack.c.l.s4 1414812756
    %v4286 = vunpack.c.0.s8 %v4285
    %v4287 = vlaneseq
    %v4288 = vshrl.u32 %v4287, 7
    %v4289 = vsub.s32 %v4286, %v4288
    %v4290 = vrot.slane %v4148, %v4289
    %v4292 = vunpack.c.l.s4 1987475062
    %v4293 = vunpack.c.0.s8 %v4292
    %v4294 = vlaneseq
    %v4295 = vshrl.u32 %v4294, 7
    %v4296 = vsub.s32 %v4293, %v4295
    %v4297 = vrot.slane %v4148, %v4296
    %v4299 = vunpack.c.l.s4 269488144
    %v4300 = vunpack.c.0.s8 %v4299
    %v4301 = vlaneseq
    %v4302 = vshrl.u32 %v4301, 7
    %v4303 = vsub.s32 %v4300, %v4302
    %v4304 = vrot.slane %v4149, %v4303
    %v4306 = vunpack.c.l.s4 842150450
    %v4307 = vunpack.c.0.s8 %v4306
    %v4308 = vlaneseq
    %v4309 = vshrl.u32 %v4308, 7
    %v4310 = vsub.s32 %v4307, %v4309
    %v4311 = vrot.slane %v4149, %v4310
    %v4313 = vunpack.c.l.s4 1414812756
    %v4314 = vunpack.c.0.s8 %v4313
    %v4315 = vlaneseq
    %v4316 = vshrl.u32 %v4315, 7
    %v4317 = vsub.s32 %v4314, %v4316
    %v4318 = vrot.slane %v4149, %v4317
    %v4320 = vunpack.c.l.s4 1987475062
    %v4321 = vunpack.c.0.s8 %v4320
    %v4322 = vlaneseq
    %v4323 = vshrl.u32 %v4322, 7
    %v4324 = vsub.s32 %v4321, %v4323
    %v4325 = vrot.slane %v4149, %v4324
    %v4327 = vunpack.c.l.s4 269488144
    %v4328 = vunpack.c.0.s8 %v4327
    %v4329 = vlaneseq
    %v4330 = vshrl.u32 %v4329, 7
    %v4331 = vsub.s32 %v4328, %v4330
    %v4332 = vrot.slane %v4150, %v4331
    %v4334 = vunpack.c.l.s4 842150450
    %v4335 = vunpack.c.0.s8 %v4334
    %v4336 = vlaneseq
    %v4337 = vshrl.u32 %v4336, 7
    %v4338 = vsub.s32 %v4335, %v4337
    %v4339 = vrot.slane %v4150, %v4338
    %v4341 = vunpack.c.l.s4 1414812756
    %v4342 = vunpack.c.0.s8 %v4341
    %v4343 = vlaneseq
    %v4344 = vshrl.u32 %v4343, 7
    %v4345 = vsub.s32 %v4342, %v4344
    %v4346 = vrot.slane %v4150, %v4345
    %v4348 = vunpack.c.l.s4 1987475062
    %v4349 = vunpack.c.0.s8 %v4348
    %v4350 = vlaneseq
    %v4351 = vshrl.u32 %v4350, 7
    %v4352 = vsub.s32 %v4349, %v4351
    %v4353 = vrot.slane %v4150, %v4352
    %v4355 = vunpack.c.l.s4 269488144
    %v4356 = vunpack.c.0.s8 %v4355
    %v4357 = vlaneseq
    %v4358 = vshrl.u32 %v4357, 7
    %v4359 = vsub.s32 %v4356, %v4358
    %v4360 = vrot.slane %v4151, %v4359
    %v4362 = vunpack.c.l.s4 842150450
    %v4363 = vunpack.c.0.s8 %v4362
    %v4364 = vlaneseq
    %v4365 = vshrl.u32 %v4364, 7
    %v4366 = vsub.s32 %v4363, %v4365
    %v4367 = vrot.slane %v4151, %v4366
    %v4369 = vunpack.c.l.s4 1414812756
    %v4370 = vunpack.c.0.s8 %v4369
    %v4371 = vlaneseq
    %v4372 = vshrl.u32 %v4371, 7
    %v4373 = vsub.s32 %v4370, %v4372
    %v4374 = vrot.slane %v4151, %v4373
    %v4376 = vunpack.c.l.s4 1987475062
    %v4377 = vunpack.c.0.s8 %v4376
    %v4378 = vlaneseq
    %v4379 = vshrl.u32 %v4378, 7
    %v4380 = vsub.s32 %v4377, %v4379
    %v4381 = vrot.slane %v4151, %v4380
    %v4383 = vunpack.c.l.s4 269488144
    %v4384 = vunpack.c.0.s8 %v4383
    %v4385 = vlaneseq
    %v4386 = vshrl.u32 %v4385, 7
    %v4387 = vsub.s32 %v4384, %v4386
    %v4388 = vrot.slane %v4152, %v4387
    %v4390 = vunpack.c.l.s4 842150450
    %v4391 = vunpack.c.0.s8 %v4390
    %v4392 = vlaneseq
    %v4393 = vshrl.u32 %v4392, 7
    %v4394 = vsub.s32 %v4391, %v4393
    %v4395 = vrot.slane %v4152, %v4394
    %v4397 = vunpack.c.l.s4 1414812756
    %v4398 = vunpack.c.0.s8 %v4397
    %v4399 = vlaneseq
    %v4400 = vshrl.u32 %v4399, 7
    %v4401 = vsub.s32 %v4398, %v4400
    %v4402 = vrot.slane %v4152, %v4401
    %v4404 = vunpack.c.l.s4 1987475062
    %v4405 = vunpack.c.0.s8 %v4404
    %v4406 = vlaneseq
    %v4407 = vshrl.u32 %v4406, 7
    %v4408 = vsub.s32 %v4405, %v4407
    %v4409 = vrot.slane %v4152, %v4408
    %v4411 = vunpack.c.l.s4 269488144
    %v4412 = vunpack.c.0.s8 %v4411
    %v4413 = vlaneseq
    %v4414 = vshrl.u32 %v4413, 7
    %v4415 = vsub.s32 %v4412, %v4414
    %v4416 = vrot.slane %v4153, %v4415
    %v4418 = vunpack.c.l.s4 842150450
    %v4419 = vunpack.c.0.s8 %v4418
    %v4420 = vlaneseq
    %v4421 = vshrl.u32 %v4420, 7
    %v4422 = vsub.s32 %v4419, %v4421
    %v4423 = vrot.slane %v4153, %v4422
    %v4425 = vunpack.c.l.s4 1414812756
    %v4426 = vunpack.c.0.s8 %v4425
    %v4427 = vlaneseq
    %v4428 = vshrl.u32 %v4427, 7
    %v4429 = vsub.s32 %v4426, %v4428
    %v4430 = vrot.slane %v4153, %v4429
    %v4432 = vunpack.c.l.s4 1987475062
    %v4433 = vunpack.c.0.s8 %v4432
    %v4434 = vlaneseq
    %v4435 = vshrl.u32 %v4434, 7
    %v4436 = vsub.s32 %v4433, %v4435
    %v4437 = vrot.slane %v4153, %v4436
    %v4439 = vunpack.c.l.s4 269488144
    %v4440 = vunpack.c.0.s8 %v4439
    %v4441 = vlaneseq
    %v4442 = vshrl.u32 %v4441, 7
    %v4443 = vsub.s32 %v4440, %v4442
    %v4444 = vrot.slane %v4154, %v4443
    %v4446 = vunpack.c.l.s4 842150450
    %v4447 = vunpack.c.0.s8 %v4446
    %v4448 = vlaneseq
    %v4449 = vshrl.u32 %v4448, 7
    %v4450 = vsub.s32 %v4447, %v4449
    %v4451 = vrot.slane %v4154, %v4450
    %v4453 = vunpack.c.l.s4 1414812756
    %v4454 = vunpack.c.0.s8 %v4453
    %v4455 = vlaneseq
    %v4456 = vshrl.u32 %v4455, 7
    %v4457 = vsub.s32 %v4454, %v4456
    %v4458 = vrot.slane %v4154, %v4457
    %v4460 = vunpack.c.l.s4 1987475062
    %v4461 = vunpack.c.0.s8 %v4460
    %v4462 = vlaneseq
    %v4463 = vshrl.u32 %v4462, 7
    %v4464 = vsub.s32 %v4461, %v4463
    %v4465 = vrot.slane %v4154, %v4464
    %v4467 = vunpack.c.l.s4 269488144
    %v4468 = vunpack.c.0.s8 %v4467
    %v4469 = vlaneseq
    %v4470 = vshrl.u32 %v4469, 7
    %v4471 = vsub.s32 %v4468, %v4470
    %v4472 = vrot.slane %v4155, %v4471
    %v4474 = vunpack.c.l.s4 842150450
    %v4475 = vunpack.c.0.s8 %v4474
    %v4476 = vlaneseq
    %v4477 = vshrl.u32 %v4476, 7
    %v4478 = vsub.s32 %v4475, %v4477
    %v4479 = vrot.slane %v4155, %v4478
    %v4481 = vunpack.c.l.s4 1414812756
    %v4482 = vunpack.c.0.s8 %v4481
    %v4483 = vlaneseq
    %v4484 = vshrl.u32 %v4483, 7
    %v4485 = vsub.s32 %v4482, %v4484
    %v4486 = vrot.slane %v4155, %v4485
    %v4488 = vunpack.c.l.s4 1987475062
    %v4489 = vunpack.c.0.s8 %v4488
    %v4490 = vlaneseq
    %v4491 = vshrl.u32 %v4490, 7
    %v4492 = vsub.s32 %v4489, %v4491
    %v4493 = vrot.slane %v4155, %v4492
    %v4495 = vunpack.c.l.s4 269488144
    %v4496 = vunpack.c.0.s8 %v4495
    %v4497 = vlaneseq
    %v4498 = vshrl.u32 %v4497, 7
    %v4499 = vsub.s32 %v4496, %v4498
    %v4500 = vrot.slane %v4156, %v4499
    %v4502 = vunpack.c.l.s4 842150450
    %v4503 = vunpack.c.0.s8 %v4502
    %v4504 = vlaneseq
    %v4505 = vshrl.u32 %v4504, 7
    %v4506 = vsub.s32 %v4503, %v4505
    %v4507 = vrot.slane %v4156, %v4506
    %v4509 = vunpack.c.l.s4 1414812756
    %v4510 = vunpack.c.0.s8 %v4509
    %v4511 = vlaneseq
    %v4512 = vshrl.u32 %v4511, 7
    %v4513 = vsub.s32 %v4510, %v4512
    %v4514 = vrot.slane %v4156, %v4513
    %v4516 = vunpack.c.l.s4 1987475062
    %v4517 = vunpack.c.0.s8 %v4516
    %v4518 = vlaneseq
    %v4519 = vshrl.u32 %v4518, 7
    %v4520 = vsub.s32 %v4517, %v4519
    %v4521 = vrot.slane %v4156, %v4520
    %v4523 = vunpack.c.l.s4 269488144
    %v4524 = vunpack.c.0.s8 %v4523
    %v4525 = vlaneseq
    %v4526 = vshrl.u32 %v4525, 7
    %v4527 = vsub.s32 %v4524, %v4526
    %v4528 = vrot.slane %v4157, %v4527
    %v4530 = vunpack.c.l.s4 842150450
    %v4531 = vunpack.c.0.s8 %v4530
    %v4532 = vlaneseq
    %v4533 = vshrl.u32 %v4532, 7
    %v4534 = vsub.s32 %v4531, %v4533
    %v4535 = vrot.slane %v4157, %v4534
    %v4537 = vunpack.c.l.s4 1414812756
    %v4538 = vunpack.c.0.s8 %v4537
    %v4539 = vlaneseq
    %v4540 = vshrl.u32 %v4539, 7
    %v4541 = vsub.s32 %v4538, %v4540
    %v4542 = vrot.slane %v4157, %v4541
    %v4544 = vunpack.c.l.s4 1987475062
    %v4545 = vunpack.c.0.s8 %v4544
    %v4546 = vlaneseq
    %v4547 = vshrl.u32 %v4546, 7
    %v4548 = vsub.s32 %v4545, %v4547
    %v4549 = vrot.slane %v4157, %v4548
    %v4551 = vunpack.c.l.s4 269488144
    %v4552 = vunpack.c.0.s8 %v4551
    %v4553 = vlaneseq
    %v4554 = vshrl.u32 %v4553, 7
    %v4555 = vsub.s32 %v4552, %v4554
    %v4556 = vrot.slane %v4158, %v4555
    %v4558 = vunpack.c.l.s4 842150450
    %v4559 = vunpack.c.0.s8 %v4558
    %v4560 = vlaneseq
    %v4561 = vshrl.u32 %v4560, 7
    %v4562 = vsub.s32 %v4559, %v4561
    %v4563 = vrot.slane %v4158, %v4562
    %v4565 = vunpack.c.l.s4 1414812756
    %v4566 = vunpack.c.0.s8 %v4565
    %v4567 = vlaneseq
    %v4568 = vshrl.u32 %v4567, 7
    %v4569 = vsub.s32 %v4566, %v4568
    %v4570 = vrot.slane %v4158, %v4569
    %v4572 = vunpack.c.l.s4 1987475062
    %v4573 = vunpack.c.0.s8 %v4572
    %v4574 = vlaneseq
    %v4575 = vshrl.u32 %v4574, 7
    %v4576 = vsub.s32 %v4573, %v4575
    %v4577 = vrot.slane %v4158, %v4576
    %v4579 = vunpack.c.l.s4 269488144
    %v4580 = vunpack.c.0.s8 %v4579
    %v4581 = vlaneseq
    %v4582 = vshrl.u32 %v4581, 7
    %v4583 = vsub.s32 %v4580, %v4582
    %v4584 = vrot.slane %v4159, %v4583
    %v4586 = vunpack.c.l.s4 842150450
    %v4587 = vunpack.c.0.s8 %v4586
    %v4588 = vlaneseq
    %v4589 = vshrl.u32 %v4588, 7
    %v4590 = vsub.s32 %v4587, %v4589
    %v4591 = vrot.slane %v4159, %v4590
    %v4593 = vunpack.c.l.s4 1414812756
    %v4594 = vunpack.c.0.s8 %v4593
    %v4595 = vlaneseq
    %v4596 = vshrl.u32 %v4595, 7
    %v4597 = vsub.s32 %v4594, %v4596
    %v4598 = vrot.slane %v4159, %v4597
    %v4600 = vunpack.c.l.s4 1987475062
    %v4601 = vunpack.c.0.s8 %v4600
    %v4602 = vlaneseq
    %v4603 = vshrl.u32 %v4602, 7
    %v4604 = vsub.s32 %v4601, %v4603
    %v4605 = vrot.slane %v4159, %v4604
    %v4607 = vunpack.c.l.s4 269488144
    %v4608 = vunpack.c.0.s8 %v4607
    %v4609 = vlaneseq
    %v4610 = vshrl.u32 %v4609, 7
    %v4611 = vsub.s32 %v4608, %v4610
    %v4612 = vrot.slane %v4160, %v4611
    %v4614 = vunpack.c.l.s4 842150450
    %v4615 = vunpack.c.0.s8 %v4614
    %v4616 = vlaneseq
    %v4617 = vshrl.u32 %v4616, 7
    %v4618 = vsub.s32 %v4615, %v4617
    %v4619 = vrot.slane %v4160, %v4618
    %v4621 = vunpack.c.l.s4 1414812756
    %v4622 = vunpack.c.0.s8 %v4621
    %v4623 = vlaneseq
    %v4624 = vshrl.u32 %v4623, 7
    %v4625 = vsub.s32 %v4622, %v4624
    %v4626 = vrot.slane %v4160, %v4625
    %v4628 = vunpack.c.l.s4 1987475062
    %v4629 = vunpack.c.0.s8 %v4628
    %v4630 = vlaneseq
    %v4631 = vshrl.u32 %v4630, 7
    %v4632 = vsub.s32 %v4629, %v4631
    %v4633 = vrot.slane %v4160, %v4632
    %v4635 = vunpack.c.l.s4 269488144
    %v4636 = vunpack.c.0.s8 %v4635
    %v4637 = vlaneseq
    %v4638 = vshrl.u32 %v4637, 7
    %v4639 = vsub.s32 %v4636, %v4638
    %v4640 = vrot.slane %v4161, %v4639
    %v4642 = vunpack.c.l.s4 842150450
    %v4643 = vunpack.c.0.s8 %v4642
    %v4644 = vlaneseq
    %v4645 = vshrl.u32 %v4644, 7
    %v4646 = vsub.s32 %v4643, %v4645
    %v4647 = vrot.slane %v4161, %v4646
    %v4649 = vunpack.c.l.s4 1414812756
    %v4650 = vunpack.c.0.s8 %v4649
    %v4651 = vlaneseq
    %v4652 = vshrl.u32 %v4651, 7
    %v4653 = vsub.s32 %v4650, %v4652
    %v4654 = vrot.slane %v4161, %v4653
    %v4656 = vunpack.c.l.s4 1987475062
    %v4657 = vunpack.c.0.s8 %v4656
    %v4658 = vlaneseq
    %v4659 = vshrl.u32 %v4658, 7
    %v4660 = vsub.s32 %v4657, %v4659
    %v4661 = vrot.slane %v4161, %v4660
    %v4663 = vunpack.c.l.s4 269488144
    %v4664 = vunpack.c.0.s8 %v4663
    %v4665 = vlaneseq
    %v4666 = vshrl.u32 %v4665, 7
    %v4667 = vsub.s32 %v4664, %v4666
    %v4668 = vrot.slane %v4162, %v4667
    %v4670 = vunpack.c.l.s4 269488144
    %v4671 = vunpack.c.0.s8 %v4670
    %v4672 = vlaneseq
    %v4673 = vshrl.u32 %v4672, 7
    %v4674 = vsub.s32 %v4671, %v4673
    %v4675 = vrot.slane %v4163, %v4674
    %v4677 = vunpack.c.l.s4 842150450
    %v4678 = vunpack.c.0.s8 %v4677
    %v4679 = vlaneseq
    %v4680 = vshrl.u32 %v4679, 7
    %v4681 = vsub.s32 %v4678, %v4680
    %v4682 = vrot.slane %v4163, %v4681
    %v4684 = vunpack.c.l.s4 1414812756
    %v4685 = vunpack.c.0.s8 %v4684
    %v4686 = vlaneseq
    %v4687 = vshrl.u32 %v4686, 7
    %v4688 = vsub.s32 %v4685, %v4687
    %v4689 = vrot.slane %v4163, %v4688
    %v4691 = vunpack.c.l.s4 1987475062
    %v4692 = vunpack.c.0.s8 %v4691
    %v4693 = vlaneseq
    %v4694 = vshrl.u32 %v4693, 7
    %v4695 = vsub.s32 %v4692, %v4694
    %v4696 = vrot.slane %v4163, %v4695
    %v4698 = vunpack.c.l.s4 269488144
    %v4699 = vunpack.c.0.s8 %v4698
    %v4700 = vlaneseq
    %v4701 = vshrl.u32 %v4700, 7
    %v4702 = vsub.s32 %v4699, %v4701
    %v4703 = vrot.slane %v4164, %v4702
    %v4705 = vunpack.c.l.s4 842150450
    %v4706 = vunpack.c.0.s8 %v4705
    %v4707 = vlaneseq
    %v4708 = vshrl.u32 %v4707, 7
    %v4709 = vsub.s32 %v4706, %v4708
    %v4710 = vrot.slane %v4164, %v4709
    %v4712 = vunpack.c.l.s4 1414812756
    %v4713 = vunpack.c.0.s8 %v4712
    %v4714 = vlaneseq
    %v4715 = vshrl.u32 %v4714, 7
    %v4716 = vsub.s32 %v4713, %v4715
    %v4717 = vrot.slane %v4164, %v4716
    %v4719 = vunpack.c.l.s4 1987475062
    %v4720 = vunpack.c.0.s8 %v4719
    %v4721 = vlaneseq
    %v4722 = vshrl.u32 %v4721, 7
    %v4723 = vsub.s32 %v4720, %v4722
    %v4724 = vrot.slane %v4164, %v4723
    %v4726 = vunpack.c.l.s4 269488144
    %v4727 = vunpack.c.0.s8 %v4726
    %v4728 = vlaneseq
    %v4729 = vshrl.u32 %v4728, 7
    %v4730 = vsub.s32 %v4727, %v4729
    %v4731 = vrot.slane %v4165, %v4730
    %v4733 = vunpack.c.l.s4 842150450
    %v4734 = vunpack.c.0.s8 %v4733
    %v4735 = vlaneseq
    %v4736 = vshrl.u32 %v4735, 7
    %v4737 = vsub.s32 %v4734, %v4736
    %v4738 = vrot.slane %v4165, %v4737
    %v4740 = vunpack.c.l.s4 1414812756
    %v4741 = vunpack.c.0.s8 %v4740
    %v4742 = vlaneseq
    %v4743 = vshrl.u32 %v4742, 7
    %v4744 = vsub.s32 %v4741, %v4743
    %v4745 = vrot.slane %v4165, %v4744
    %v4747 = vunpack.c.l.s4 1987475062
    %v4748 = vunpack.c.0.s8 %v4747
    %v4749 = vlaneseq
    %v4750 = vshrl.u32 %v4749, 7
    %v4751 = vsub.s32 %v4748, %v4750
    %v4752 = vrot.slane %v4165, %v4751
    %v4754 = vunpack.c.l.s4 269488144
    %v4755 = vunpack.c.0.s8 %v4754
    %v4756 = vlaneseq
    %v4757 = vshrl.u32 %v4756, 7
    %v4758 = vsub.s32 %v4755, %v4757
    %v4759 = vrot.slane %v4166, %v4758
    %v4761 = vunpack.c.l.s4 842150450
    %v4762 = vunpack.c.0.s8 %v4761
    %v4763 = vlaneseq
    %v4764 = vshrl.u32 %v4763, 7
    %v4765 = vsub.s32 %v4762, %v4764
    %v4766 = vrot.slane %v4166, %v4765
    %v4768 = vunpack.c.l.s4 1414812756
    %v4769 = vunpack.c.0.s8 %v4768
    %v4770 = vlaneseq
    %v4771 = vshrl.u32 %v4770, 7
    %v4772 = vsub.s32 %v4769, %v4771
    %v4773 = vrot.slane %v4166, %v4772
    %v4775 = vunpack.c.l.s4 1987475062
    %v4776 = vunpack.c.0.s8 %v4775
    %v4777 = vlaneseq
    %v4778 = vshrl.u32 %v4777, 7
    %v4779 = vsub.s32 %v4776, %v4778
    %v4780 = vrot.slane %v4166, %v4779
    %v4782 = vunpack.c.l.s4 269488144
    %v4783 = vunpack.c.0.s8 %v4782
    %v4784 = vlaneseq
    %v4785 = vshrl.u32 %v4784, 7
    %v4786 = vsub.s32 %v4783, %v4785
    %v4787 = vrot.slane %v4167, %v4786
    %v4789 = vunpack.c.l.s4 842150450
    %v4790 = vunpack.c.0.s8 %v4789
    %v4791 = vlaneseq
    %v4792 = vshrl.u32 %v4791, 7
    %v4793 = vsub.s32 %v4790, %v4792
    %v4794 = vrot.slane %v4167, %v4793
    %v4796 = vunpack.c.l.s4 1414812756
    %v4797 = vunpack.c.0.s8 %v4796
    %v4798 = vlaneseq
    %v4799 = vshrl.u32 %v4798, 7
    %v4800 = vsub.s32 %v4797, %v4799
    %v4801 = vrot.slane %v4167, %v4800
    %v4803 = vunpack.c.l.s4 1987475062
    %v4804 = vunpack.c.0.s8 %v4803
    %v4805 = vlaneseq
    %v4806 = vshrl.u32 %v4805, 7
    %v4807 = vsub.s32 %v4804, %v4806
    %v4808 = vrot.slane %v4167, %v4807
    %v4810 = vunpack.c.l.s4 269488144
    %v4811 = vunpack.c.0.s8 %v4810
    %v4812 = vlaneseq
    %v4813 = vshrl.u32 %v4812, 7
    %v4814 = vsub.s32 %v4811, %v4813
    %v4815 = vrot.slane %v4168, %v4814
    %v4817 = vunpack.c.l.s4 842150450
    %v4818 = vunpack.c.0.s8 %v4817
    %v4819 = vlaneseq
    %v4820 = vshrl.u32 %v4819, 7
    %v4821 = vsub.s32 %v4818, %v4820
    %v4822 = vrot.slane %v4168, %v4821
    %v4824 = vunpack.c.l.s4 1414812756
    %v4825 = vunpack.c.0.s8 %v4824
    %v4826 = vlaneseq
    %v4827 = vshrl.u32 %v4826, 7
    %v4828 = vsub.s32 %v4825, %v4827
    %v4829 = vrot.slane %v4168, %v4828
    %v4831 = vunpack.c.l.s4 1987475062
    %v4832 = vunpack.c.0.s8 %v4831
    %v4833 = vlaneseq
    %v4834 = vshrl.u32 %v4833, 7
    %v4835 = vsub.s32 %v4832, %v4834
    %v4836 = vrot.slane %v4168, %v4835
    %v4838 = vunpack.c.l.s4 269488144
    %v4839 = vunpack.c.0.s8 %v4838
    %v4840 = vlaneseq
    %v4841 = vshrl.u32 %v4840, 7
    %v4842 = vsub.s32 %v4839, %v4841
    %v4843 = vrot.slane %v4169, %v4842
    %v4845 = vunpack.c.l.s4 842150450
    %v4846 = vunpack.c.0.s8 %v4845
    %v4847 = vlaneseq
    %v4848 = vshrl.u32 %v4847, 7
    %v4849 = vsub.s32 %v4846, %v4848
    %v4850 = vrot.slane %v4169, %v4849
    %v4852 = vunpack.c.l.s4 1414812756
    %v4853 = vunpack.c.0.s8 %v4852
    %v4854 = vlaneseq
    %v4855 = vshrl.u32 %v4854, 7
    %v4856 = vsub.s32 %v4853, %v4855
    %v4857 = vrot.slane %v4169, %v4856
    %v4859 = vunpack.c.l.s4 1987475062
    %v4860 = vunpack.c.0.s8 %v4859
    %v4861 = vlaneseq
    %v4862 = vshrl.u32 %v4861, 7
    %v4863 = vsub.s32 %v4860, %v4862
    %v4864 = vrot.slane %v4169, %v4863
    %v4866 = vunpack.c.l.s4 269488144
    %v4867 = vunpack.c.0.s8 %v4866
    %v4868 = vlaneseq
    %v4869 = vshrl.u32 %v4868, 7
    %v4870 = vsub.s32 %v4867, %v4869
    %v4871 = vrot.slane %v4170, %v4870
    %v4873 = vunpack.c.l.s4 842150450
    %v4874 = vunpack.c.0.s8 %v4873
    %v4875 = vlaneseq
    %v4876 = vshrl.u32 %v4875, 7
    %v4877 = vsub.s32 %v4874, %v4876
    %v4878 = vrot.slane %v4170, %v4877
    %v4880 = vunpack.c.l.s4 1414812756
    %v4881 = vunpack.c.0.s8 %v4880
    %v4882 = vlaneseq
    %v4883 = vshrl.u32 %v4882, 7
    %v4884 = vsub.s32 %v4881, %v4883
    %v4885 = vrot.slane %v4170, %v4884
    %v4887 = vunpack.c.l.s4 1987475062
    %v4888 = vunpack.c.0.s8 %v4887
    %v4889 = vlaneseq
    %v4890 = vshrl.u32 %v4889, 7
    %v4891 = vsub.s32 %v4888, %v4890
    %v4892 = vrot.slane %v4170, %v4891
    %v4894 = vunpack.c.l.s4 269488144
    %v4895 = vunpack.c.0.s8 %v4894
    %v4896 = vlaneseq
    %v4897 = vshrl.u32 %v4896, 7
    %v4898 = vsub.s32 %v4895, %v4897
    %v4899 = vrot.slane %v4171, %v4898
    %v4901 = vunpack.c.l.s4 842150450
    %v4902 = vunpack.c.0.s8 %v4901
    %v4903 = vlaneseq
    %v4904 = vshrl.u32 %v4903, 7
    %v4905 = vsub.s32 %v4902, %v4904
    %v4906 = vrot.slane %v4171, %v4905
    %v4908 = vunpack.c.l.s4 1414812756
    %v4909 = vunpack.c.0.s8 %v4908
    %v4910 = vlaneseq
    %v4911 = vshrl.u32 %v4910, 7
    %v4912 = vsub.s32 %v4909, %v4911
    %v4913 = vrot.slane %v4171, %v4912
    %v4915 = vunpack.c.l.s4 1987475062
    %v4916 = vunpack.c.0.s8 %v4915
    %v4917 = vlaneseq
    %v4918 = vshrl.u32 %v4917, 7
    %v4919 = vsub.s32 %v4916, %v4918
    %v4920 = vrot.slane %v4171, %v4919
    %v4922 = vunpack.c.l.s4 269488144
    %v4923 = vunpack.c.0.s8 %v4922
    %v4924 = vlaneseq
    %v4925 = vshrl.u32 %v4924, 7
    %v4926 = vsub.s32 %v4923, %v4925
    %v4927 = vrot.slane %v4172, %v4926
    %v4929 = vunpack.c.l.s4 842150450
    %v4930 = vunpack.c.0.s8 %v4929
    %v4931 = vlaneseq
    %v4932 = vshrl.u32 %v4931, 7
    %v4933 = vsub.s32 %v4930, %v4932
    %v4934 = vrot.slane %v4172, %v4933
    %v4936 = vunpack.c.l.s4 1414812756
    %v4937 = vunpack.c.0.s8 %v4936
    %v4938 = vlaneseq
    %v4939 = vshrl.u32 %v4938, 7
    %v4940 = vsub.s32 %v4937, %v4939
    %v4941 = vrot.slane %v4172, %v4940
    %v4943 = vunpack.c.l.s4 1987475062
    %v4944 = vunpack.c.0.s8 %v4943
    %v4945 = vlaneseq
    %v4946 = vshrl.u32 %v4945, 7
    %v4947 = vsub.s32 %v4944, %v4946
    %v4948 = vrot.slane %v4172, %v4947
    %v4950 = vunpack.c.l.s4 269488144
    %v4951 = vunpack.c.0.s8 %v4950
    %v4952 = vlaneseq
    %v4953 = vshrl.u32 %v4952, 7
    %v4954 = vsub.s32 %v4951, %v4953
    %v4955 = vrot.slane %v4173, %v4954
    %v4957 = vunpack.c.l.s4 842150450
    %v4958 = vunpack.c.0.s8 %v4957
    %v4959 = vlaneseq
    %v4960 = vshrl.u32 %v4959, 7
    %v4961 = vsub.s32 %v4958, %v4960
    %v4962 = vrot.slane %v4173, %v4961
    %v4964 = vunpack.c.l.s4 1414812756
    %v4965 = vunpack.c.0.s8 %v4964
    %v4966 = vlaneseq
    %v4967 = vshrl.u32 %v4966, 7
    %v4968 = vsub.s32 %v4965, %v4967
    %v4969 = vrot.slane %v4173, %v4968
    %v4971 = vunpack.c.l.s4 1987475062
    %v4972 = vunpack.c.0.s8 %v4971
    %v4973 = vlaneseq
    %v4974 = vshrl.u32 %v4973, 7
    %v4975 = vsub.s32 %v4972, %v4974
    %v4976 = vrot.slane %v4173, %v4975
    %v4978 = vunpack.c.l.s4 269488144
    %v4979 = vunpack.c.0.s8 %v4978
    %v4980 = vlaneseq
    %v4981 = vshrl.u32 %v4980, 7
    %v4982 = vsub.s32 %v4979, %v4981
    %v4983 = vrot.slane %v4174, %v4982
    %v4985 = vunpack.c.l.s4 842150450
    %v4986 = vunpack.c.0.s8 %v4985
    %v4987 = vlaneseq
    %v4988 = vshrl.u32 %v4987, 7
    %v4989 = vsub.s32 %v4986, %v4988
    %v4990 = vrot.slane %v4174, %v4989
    %v4992 = vunpack.c.l.s4 1414812756
    %v4993 = vunpack.c.0.s8 %v4992
    %v4994 = vlaneseq
    %v4995 = vshrl.u32 %v4994, 7
    %v4996 = vsub.s32 %v4993, %v4995
    %v4997 = vrot.slane %v4174, %v4996
    %v4999 = vunpack.c.l.s4 1987475062
    %v5000 = vunpack.c.0.s8 %v4999
    %v5001 = vlaneseq
    %v5002 = vshrl.u32 %v5001, 7
    %v5003 = vsub.s32 %v5000, %v5002
    %v5004 = vrot.slane %v4174, %v5003
    %v5006 = vunpack.c.l.s4 269488144
    %v5007 = vunpack.c.0.s8 %v5006
    %v5008 = vlaneseq
    %v5009 = vshrl.u32 %v5008, 7
    %v5010 = vsub.s32 %v5007, %v5009
    %v5011 = vrot.slane %v4175, %v5010
    %v5013 = vunpack.c.l.s4 842150450
    %v5014 = vunpack.c.0.s8 %v5013
    %v5015 = vlaneseq
    %v5016 = vshrl.u32 %v5015, 7
    %v5017 = vsub.s32 %v5014, %v5016
    %v5018 = vrot.slane %v4175, %v5017
    %v5020 = vunpack.c.l.s4 1414812756
    %v5021 = vunpack.c.0.s8 %v5020
    %v5022 = vlaneseq
    %v5023 = vshrl.u32 %v5022, 7
    %v5024 = vsub.s32 %v5021, %v5023
    %v5025 = vrot.slane %v4175, %v5024
    %v5027 = vunpack.c.l.s4 1987475062
    %v5028 = vunpack.c.0.s8 %v5027
    %v5029 = vlaneseq
    %v5030 = vshrl.u32 %v5029, 7
    %v5031 = vsub.s32 %v5028, %v5030
    %v5032 = vrot.slane %v4175, %v5031
    %v5034 = vunpack.c.l.s4 269488144
    %v5035 = vunpack.c.0.s8 %v5034
    %v5036 = vlaneseq
    %v5037 = vshrl.u32 %v5036, 7
    %v5038 = vsub.s32 %v5035, %v5037
    %v5039 = vrot.slane %v4176, %v5038
    %v5041 = vunpack.c.l.s4 842150450
    %v5042 = vunpack.c.0.s8 %v5041
    %v5043 = vlaneseq
    %v5044 = vshrl.u32 %v5043, 7
    %v5045 = vsub.s32 %v5042, %v5044
    %v5046 = vrot.slane %v4176, %v5045
    %v5048 = vunpack.c.l.s4 1414812756
    %v5049 = vunpack.c.0.s8 %v5048
    %v5050 = vlaneseq
    %v5051 = vshrl.u32 %v5050, 7
    %v5052 = vsub.s32 %v5049, %v5051
    %v5053 = vrot.slane %v4176, %v5052
    %v5055 = vunpack.c.l.s4 1987475062
    %v5056 = vunpack.c.0.s8 %v5055
    %v5057 = vlaneseq
    %v5058 = vshrl.u32 %v5057, 7
    %v5059 = vsub.s32 %v5056, %v5058
    %v5060 = vrot.slane %v4176, %v5059
    %v5062 = vunpack.c.l.s4 269488144
    %v5063 = vunpack.c.0.s8 %v5062
    %v5064 = vlaneseq
    %v5065 = vshrl.u32 %v5064, 7
    %v5066 = vsub.s32 %v5063, %v5065
    %v5067 = vrot.slane %v4177, %v5066
    %v5069 = vunpack.c.l.s4 842150450
    %v5070 = vunpack.c.0.s8 %v5069
    %v5071 = vlaneseq
    %v5072 = vshrl.u32 %v5071, 7
    %v5073 = vsub.s32 %v5070, %v5072
    %v5074 = vrot.slane %v4177, %v5073
    %v5076 = vunpack.c.l.s4 1414812756
    %v5077 = vunpack.c.0.s8 %v5076
    %v5078 = vlaneseq
    %v5079 = vshrl.u32 %v5078, 7
    %v5080 = vsub.s32 %v5077, %v5079
    %v5081 = vrot.slane %v4177, %v5080
    %v5083 = vunpack.c.l.s4 1987475062
    %v5084 = vunpack.c.0.s8 %v5083
    %v5085 = vlaneseq
    %v5086 = vshrl.u32 %v5085, 7
    %v5087 = vsub.s32 %v5084, %v5086
    %v5088 = vrot.slane %v4177, %v5087
    %v5090 = vunpack.c.l.s4 269488144
    %v5091 = vunpack.c.0.s8 %v5090
    %v5092 = vlaneseq
    %v5093 = vshrl.u32 %v5092, 7
    %v5094 = vsub.s32 %v5091, %v5093
    %v5095 = vrot.slane %v4178, %v5094
    %v5097 = vunpack.c.l.s4 842150450
    %v5098 = vunpack.c.0.s8 %v5097
    %v5099 = vlaneseq
    %v5100 = vshrl.u32 %v5099, 7
    %v5101 = vsub.s32 %v5098, %v5100
    %v5102 = vrot.slane %v4178, %v5101
    %v5104 = vunpack.c.l.s4 1414812756
    %v5105 = vunpack.c.0.s8 %v5104
    %v5106 = vlaneseq
    %v5107 = vshrl.u32 %v5106, 7
    %v5108 = vsub.s32 %v5105, %v5107
    %v5109 = vrot.slane %v4178, %v5108
    %v5111 = vunpack.c.l.s4 1987475062
    %v5112 = vunpack.c.0.s8 %v5111
    %v5113 = vlaneseq
    %v5114 = vshrl.u32 %v5113, 7
    %v5115 = vsub.s32 %v5112, %v5114
    %v5116 = vrot.slane %v4178, %v5115
    %v5118 = vunpack.c.l.s4 269488144
    %v5119 = vunpack.c.0.s8 %v5118
    %v5120 = vlaneseq
    %v5121 = vshrl.u32 %v5120, 7
    %v5122 = vsub.s32 %v5119, %v5121
    %v5123 = vrot.slane %v4179, %v5122
    %v5254 = vsub.f32 %v3188, %v4220
    %v5255 = vsub.f32 %v3189, %v4227
    %v5256 = vsub.f32 %v3190, %v4234
    %v5257 = vsub.f32 %v3191, %v4241
    %v5258 = vsub.f32 %v3192, %v4248
    %v5259 = vsub.f32 %v3193, %v4255
    %v5260 = vsub.f32 %v3194, %v4262
    %v5261 = vsub.f32 %v3195, %v4269
    %v5262 = vsub.f32 %v3196, %v4276
    %v5263 = vsub.f32 %v3197, %v4283
    %v5264 = vsub.f32 %v3198, %v4290
    %v5265 = vsub.f32 %v3199, %v4297
    %v5266 = vsub.f32 %v3200, %v4304
    %v5267 = vsub.f32 %v3201, %v4311
    %v5268 = vsub.f32 %v3202, %v4318
    %v5269 = vsub.f32 %v3203, %v4325
    %v5270 = vsub.f32 %v3204, %v4332
    %v5271 = vsub.f32 %v3205, %v4339
    %v5272 = vsub.f32 %v3206, %v4346
    %v5273 = vsub.f32 %v3207, %v4353
    %v5274 = vsub.f32 %v3208, %v4360
    %v5275 = vsub.f32 %v3209, %v4367
    %v5276 = vsub.f32 %v3210, %v4374
    %v5277 = vsub.f32 %v3211, %v4381
    %v5278 = vsub.f32 %v3212, %v4388
    %v5279 = vsub.f32 %v3213, %v4395
    %v5280 = vsub.f32 %v3214, %v4402
    %v5281 = vsub.f32 %v3215, %v4409
    %v5282 = vsub.f32 %v3216, %v4416
    %v5283 = vsub.f32 %v3217, %v4423
    %v5284 = vsub.f32 %v3218, %v4430
    %v5285 = vsub.f32 %v3219, %v4437
    %v5286 = vsub.f32 %v3220, %v4444
    %v5287 = vsub.f32 %v3221, %v4451
    %v5288 = vsub.f32 %v3222, %v4458
    %v5289 = vsub.f32 %v3223, %v4465
    %v5290 = vsub.f32 %v3224, %v4472
    %v5291 = vsub.f32 %v3225, %v4479
    %v5292 = vsub.f32 %v3226, %v4486
    %v5293 = vsub.f32 %v3227, %v4493
    %v5294 = vsub.f32 %v3228, %v4500
    %v5295 = vsub.f32 %v3229, %v4507
    %v5296 = vsub.f32 %v3230, %v4514
    %v5297 = vsub.f32 %v3231, %v4521
    %v5298 = vsub.f32 %v3232, %v4528
    %v5299 = vsub.f32 %v3233, %v4535
    %v5300 = vsub.f32 %v3234, %v4542
    %v5301 = vsub.f32 %v3235, %v4549
    %v5302 = vsub.f32 %v3236, %v4556
    %v5303 = vsub.f32 %v3237, %v4563
    %v5304 = vsub.f32 %v3238, %v4570
    %v5305 = vsub.f32 %v3239, %v4577
    %v5306 = vsub.f32 %v3240, %v4584
    %v5307 = vsub.f32 %v3241, %v4591
    %v5308 = vsub.f32 %v3242, %v4598
    %v5309 = vsub.f32 %v3243, %v4605
    %v5310 = vsub.f32 %v3244, %v4612
    %v5311 = vsub.f32 %v3245, %v4619
    %v5312 = vsub.f32 %v3246, %v4626
    %v5313 = vsub.f32 %v3247, %v4633
    %v5314 = vsub.f32 %v3248, %v4640
    %v5315 = vsub.f32 %v3249, %v4647
    %v5316 = vsub.f32 %v3250, %v4654
    %v5317 = vsub.f32 %v3251, %v4661
    %v5318 = vsub.f32 %v3252, %v4668
    %v5319 = vsub.f32 %v3253, %v4675
    %v5320 = vsub.f32 %v3254, %v4682
    %v5321 = vsub.f32 %v3255, %v4689
    %v5322 = vsub.f32 %v3256, %v4696
    %v5323 = vsub.f32 %v3257, %v4703
    %v5324 = vsub.f32 %v3258, %v4710
    %v5325 = vsub.f32 %v3259, %v4717
    %v5326 = vsub.f32 %v3260, %v4724
    %v5327 = vsub.f32 %v3261, %v4731
    %v5328 = vsub.f32 %v3262, %v4738
    %v5329 = vsub.f32 %v3263, %v4745
    %v5330 = vsub.f32 %v3264, %v4752
    %v5331 = vsub.f32 %v3265, %v4759
    %v5332 = vsub.f32 %v3266, %v4766
    %v5333 = vsub.f32 %v3267, %v4773
    %v5334 = vsub.f32 %v3268, %v4780
    %v5335 = vsub.f32 %v3269, %v4787
    %v5336 = vsub.f32 %v3270, %v4794
    %v5337 = vsub.f32 %v3271, %v4801
    %v5338 = vsub.f32 %v3272, %v4808
    %v5339 = vsub.f32 %v3273, %v4815
    %v5340 = vsub.f32 %v3274, %v4822
    %v5341 = vsub.f32 %v3275, %v4829
    %v5342 = vsub.f32 %v3276, %v4836
    %v5343 = vsub.f32 %v3277, %v4843
    %v5344 = vsub.f32 %v3278, %v4850
    %v5345 = vsub.f32 %v3279, %v4857
    %v5346 = vsub.f32 %v3280, %v4864
    %v5347 = vsub.f32 %v3281, %v4871
    %v5348 = vsub.f32 %v3282, %v4878
    %v5349 = vsub.f32 %v3283, %v4885
    %v5350 = vsub.f32 %v3284, %v4892
    %v5351 = vsub.f32 %v3285, %v4899
    %v5352 = vsub.f32 %v3286, %v4906
    %v5353 = vsub.f32 %v3287, %v4913
    %v5354 = vsub.f32 %v3288, %v4920
    %v5355 = vsub.f32 %v3289, %v4927
    %v5356 = vsub.f32 %v3290, %v4934
    %v5357 = vsub.f32 %v3291, %v4941
    %v5358 = vsub.f32 %v3292, %v4948
    %v5359 = vsub.f32 %v3293, %v4955
    %v5360 = vsub.f32 %v3294, %v4962
    %v5361 = vsub.f32 %v3295, %v4969
    %v5362 = vsub.f32 %v3296, %v4976
    %v5363 = vsub.f32 %v3297, %v4983
    %v5364 = vsub.f32 %v3298, %v4990
    %v5365 = vsub.f32 %v3299, %v4997
    %v5366 = vsub.f32 %v3300, %v5004
    %v5367 = vsub.f32 %v3301, %v5011
    %v5368 = vsub.f32 %v3302, %v5018
    %v5369 = vsub.f32 %v3303, %v5025
    %v5370 = vsub.f32 %v3304, %v5032
    %v5371 = vsub.f32 %v3305, %v5039
    %v5372 = vsub.f32 %v3306, %v5046
    %v5373 = vsub.f32 %v3307, %v5053
    %v5374 = vsub.f32 %v3308, %v5060
    %v5375 = vsub.f32 %v3309, %v5067
    %v5376 = vsub.f32 %v3310, %v5074
    %v5377 = vsub.f32 %v3311, %v5081
    %v5378 = vsub.f32 %v3312, %v5088
    %v5379 = vsub.f32 %v3313, %v5095
    %v5380 = vsub.f32 %v3314, %v5102
    %v5381 = vsub.f32 %v3315, %v5109
    %v5382 = vsub.f32 %v3316, %v5116
    %v5383 = vsub.f32 %v3317, %v5123
    %v5384 = vmul.f32 %v5254, %v5254
    %v5385 = vmul.f32 %v5255, %v5255
    %v5386 = vmul.f32 %v5256, %v5256
    %v5387 = vmul.f32 %v5257, %v5257
    %v5388 = vmul.f32 %v5258, %v5258
    %v5389 = vmul.f32 %v5259, %v5259
    %v5390 = vmul.f32 %v5260, %v5260
    %v5391 = vmul.f32 %v5261, %v5261
    %v5392 = vmul.f32 %v5262, %v5262
    %v5393 = vmul.f32 %v5263, %v5263
    %v5394 = vmul.f32 %v5264, %v5264
    %v5395 = vmul.f32 %v5265, %v5265
    %v5396 = vmul.f32 %v5266, %v5266
    %v5397 = vmul.f32 %v5267, %v5267
    %v5398 = vmul.f32 %v5268, %v5268
    %v5399 = vmul.f32 %v5269, %v5269
    %v5400 = vmul.f32 %v5270, %v5270
    %v5401 = vmul.f32 %v5271, %v5271
    %v5402 = vmul.f32 %v5272, %v5272
    %v5403 = vmul.f32 %v5273, %v5273
    %v5404 = vmul.f32 %v5274, %v5274
    %v5405 = vmul.f32 %v5275, %v5275
    %v5406 = vmul.f32 %v5276, %v5276
    %v5407 = vmul.f32 %v5277, %v5277
    %v5408 = vmul.f32 %v5278, %v5278
    %v5409 = vmul.f32 %v5279, %v5279
    %v5410 = vmul.f32 %v5280, %v5280
    %v5411 = vmul.f32 %v5281, %v5281
    %v5412 = vmul.f32 %v5282, %v5282
    %v5413 = vmul.f32 %v5283, %v5283
    %v5414 = vmul.f32 %v5284, %v5284
    %v5415 = vmul.f32 %v5285, %v5285
    %v5416 = vmul.f32 %v5286, %v5286
    %v5417 = vmul.f32 %v5287, %v5287
    %v5418 = vmul.f32 %v5288, %v5288
    %v5419 = vmul.f32 %v5289, %v5289
    %v5420 = vmul.f32 %v5290, %v5290
    %v5421 = vmul.f32 %v5291, %v5291
    %v5422 = vmul.f32 %v5292, %v5292
    %v5423 = vmul.f32 %v5293, %v5293
    %v5424 = vmul.f32 %v5294, %v5294
    %v5425 = vmul.f32 %v5295, %v5295
    %v5426 = vmul.f32 %v5296, %v5296
    %v5427 = vmul.f32 %v5297, %v5297
    %v5428 = vmul.f32 %v5298, %v5298
    %v5429 = vmul.f32 %v5299, %v5299
    %v5430 = vmul.f32 %v5300, %v5300
    %v5431 = vmul.f32 %v5301, %v5301
    %v5432 = vmul.f32 %v5302, %v5302
    %v5433 = vmul.f32 %v5303, %v5303
    %v5434 = vmul.f32 %v5304, %v5304
    %v5435 = vmul.f32 %v5305, %v5305
    %v5436 = vmul.f32 %v5306, %v5306
    %v5437 = vmul.f32 %v5307, %v5307
    %v5438 = vmul.f32 %v5308, %v5308
    %v5439 = vmul.f32 %v5309, %v5309
    %v5440 = vmul.f32 %v5310, %v5310
    %v5441 = vmul.f32 %v5311, %v5311
    %v5442 = vmul.f32 %v5312, %v5312
    %v5443 = vmul.f32 %v5313, %v5313
    %v5444 = vmul.f32 %v5314, %v5314
    %v5445 = vmul.f32 %v5315, %v5315
    %v5446 = vmul.f32 %v5316, %v5316
    %v5447 = vmul.f32 %v5317, %v5317
    %v5448 = vmul.f32 %v5318, %v5318
    %v5449 = vmul.f32 %v5319, %v5319
    %v5450 = vmul.f32 %v5320, %v5320
    %v5451 = vmul.f32 %v5321, %v5321
    %v5452 = vmul.f32 %v5322, %v5322
    %v5453 = vmul.f32 %v5323, %v5323
    %v5454 = vmul.f32 %v5324, %v5324
    %v5455 = vmul.f32 %v5325, %v5325
    %v5456 = vmul.f32 %v5326, %v5326
    %v5457 = vmul.f32 %v5327, %v5327
    %v5458 = vmul.f32 %v5328, %v5328
    %v5459 = vmul.f32 %v5329, %v5329
    %v5460 = vmul.f32 %v5330, %v5330
    %v5461 = vmul.f32 %v5331, %v5331
    %v5462 = vmul.f32 %v5332, %v5332
    %v5463 = vmul.f32 %v5333, %v5333
    %v5464 = vmul.f32 %v5334, %v5334
    %v5465 = vmul.f32 %v5335, %v5335
    %v5466 = vmul.f32 %v5336, %v5336
    %v5467 = vmul.f32 %v5337, %v5337
    %v5468 = vmul.f32 %v5338, %v5338
    %v5469 = vmul.f32 %v5339, %v5339
    %v5470 = vmul.f32 %v5340, %v5340
    %v5471 = vmul.f32 %v5341, %v5341
    %v5472 = vmul.f32 %v5342, %v5342
    %v5473 = vmul.f32 %v5343, %v5343
    %v5474 = vmul.f32 %v5344, %v5344
    %v5475 = vmul.f32 %v5345, %v5345
    %v5476 = vmul.f32 %v5346, %v5346
    %v5477 = vmul.f32 %v5347, %v5347
    %v5478 = vmul.f32 %v5348, %v5348
    %v5479 = vmul.f32 %v5349, %v5349
    %v5480 = vmul.f32 %v5350, %v5350
    %v5481 = vmul.f32 %v5351, %v5351
    %v5482 = vmul.f32 %v5352, %v5352
    %v5483 = vmul.f32 %v5353, %v5353
    %v5484 = vmul.f32 %v5354, %v5354
    %v5485 = vmul.f32 %v5355, %v5355
    %v5486 = vmul.f32 %v5356, %v5356
    %v5487 = vmul.f32 %v5357, %v5357
    %v5488 = vmul.f32 %v5358, %v5358
    %v5489 = vmul.f32 %v5359, %v5359
    %v5490 = vmul.f32 %v5360, %v5360
    %v5491 = vmul.f32 %v5361, %v5361
    %v5492 = vmul.f32 %v5362, %v5362
    %v5493 = vmul.f32 %v5363, %v5363
    %v5494 = vmul.f32 %v5364, %v5364
    %v5495 = vmul.f32 %v5365, %v5365
    %v5496 = vmul.f32 %v5366, %v5366
    %v5497 = vmul.f32 %v5367, %v5367
    %v5498 = vmul.f32 %v5368, %v5368
    %v5499 = vmul.f32 %v5369, %v5369
    %v5500 = vmul.f32 %v5370, %v5370
    %v5501 = vmul.f32 %v5371, %v5371
    %v5502 = vmul.f32 %v5372, %v5372
    %v5503 = vmul.f32 %v5373, %v5373
    %v5504 = vmul.f32 %v5374, %v5374
    %v5505 = vmul.f32 %v5375, %v5375
    %v5506 = vmul.f32 %v5376, %v5376
    %v5507 = vmul.f32 %v5377, %v5377
    %v5508 = vmul.f32 %v5378, %v5378
    %v5509 = vmul.f32 %v5379, %v5379
    %v5510 = vmul.f32 %v5380, %v5380
    %v5511 = vmul.f32 %v5381, %v5381
    %v5512 = vmul.f32 %v5382, %v5382
    %v5513 = vmul.f32 %v5383, %v5383
    %v5644 = vcombine.low %v5384, %v5385
    %v5645 = vcombine.low %v5386, %v5387
    %v5647 = vunpack.c.l.s4 1983009808
    %v5648 = vunpack.c.0.s8 %v5647
    %v5649 = vlaneseq
    %v5650 = vshrl.u32 %v5649, 7
    %v5651 = vsub.s32 %v5648, %v5650
    %v5652 = vrot.slane %v5644, %v5651
    %v5654 = vunpack.c.l.s4 1983009808
    %v5655 = vunpack.c.0.s8 %v5654
    %v5656 = vlaneseq
    %v5657 = vshrl.u32 %v5656, 7
    %v5658 = vsub.s32 %v5655, %v5657
    %v5659 = vrot.slane %v5645, %v5658
    %v5660 = vcombine.low %v5652, %v5659
    %v5661 = vcombine.low %v5388, %v5389
    %v5662 = vcombine.low %v5390, %v5391
    %v5664 = vunpack.c.l.s4 1983009808
    %v5665 = vunpack.c.0.s8 %v5664
    %v5666 = vlaneseq
    %v5667 = vshrl.u32 %v5666, 7
    %v5668 = vsub.s32 %v5665, %v5667
    %v5669 = vrot.slane %v5661, %v5668
    %v5671 = vunpack.c.l.s4 1983009808
    %v5672 = vunpack.c.0.s8 %v5671
    %v5673 = vlaneseq
    %v5674 = vshrl.u32 %v5673, 7
    %v5675 = vsub.s32 %v5672, %v5674
    %v5676 = vrot.slane %v5662, %v5675
    %v5677 = vcombine.low %v5669, %v5676
    %v5678 = vcombine.low %v5392, %v5393
    %v5679 = vcombine.low %v5394, %v5395
    %v5681 = vunpack.c.l.s4 1983009808
    %v5682 = vunpack.c.0.s8 %v5681
    %v5683 = vlaneseq
    %v5684 = vshrl.u32 %v5683, 7
    %v5685 = vsub.s32 %v5682, %v5684
    %v5686 = vrot.slane %v5678, %v5685
    %v5688 = vunpack.c.l.s4 1983009808
    %v5689 = vunpack.c.0.s8 %v5688
    %v5690 = vlaneseq
    %v5691 = vshrl.u32 %v5690, 7
    %v5692 = vsub.s32 %v5689, %v5691
    %v5693 = vrot.slane %v5679, %v5692
    %v5694 = vcombine.low %v5686, %v5693
    %v5695 = vcombine.low %v5396, %v5397
    %v5696 = vcombine.low %v5398, %v5399
    %v5698 = vunpack.c.l.s4 1983009808
    %v5699 = vunpack.c.0.s8 %v5698
    %v5700 = vlaneseq
    %v5701 = vshrl.u32 %v5700, 7
    %v5702 = vsub.s32 %v5699, %v5701
    %v5703 = vrot.slane %v5695, %v5702
    %v5705 = vunpack.c.l.s4 1983009808
    %v5706 = vunpack.c.0.s8 %v5705
    %v5707 = vlaneseq
    %v5708 = vshrl.u32 %v5707, 7
    %v5709 = vsub.s32 %v5706, %v5708
    %v5710 = vrot.slane %v5696, %v5709
    %v5711 = vcombine.low %v5703, %v5710
    %v5712 = vcombine.low %v5400, %v5401
    %v5713 = vcombine.low %v5402, %v5403
    %v5715 = vunpack.c.l.s4 1983009808
    %v5716 = vunpack.c.0.s8 %v5715
    %v5717 = vlaneseq
    %v5718 = vshrl.u32 %v5717, 7
    %v5719 = vsub.s32 %v5716, %v5718
    %v5720 = vrot.slane %v5712, %v5719
    %v5722 = vunpack.c.l.s4 1983009808
    %v5723 = vunpack.c.0.s8 %v5722
    %v5724 = vlaneseq
    %v5725 = vshrl.u32 %v5724, 7
    %v5726 = vsub.s32 %v5723, %v5725
    %v5727 = vrot.slane %v5713, %v5726
    %v5728 = vcombine.low %v5720, %v5727
    %v5729 = vcombine.low %v5404, %v5405
    %v5730 = vcombine.low %v5406, %v5407
    %v5732 = vunpack.c.l.s4 1983009808
    %v5733 = vunpack.c.0.s8 %v5732
    %v5734 = vlaneseq
    %v5735 = vshrl.u32 %v5734, 7
    %v5736 = vsub.s32 %v5733, %v5735
    %v5737 = vrot.slane %v5729, %v5736
    %v5739 = vunpack.c.l.s4 1983009808
    %v5740 = vunpack.c.0.s8 %v5739
    %v5741 = vlaneseq
    %v5742 = vshrl.u32 %v5741, 7
    %v5743 = vsub.s32 %v5740, %v5742
    %v5744 = vrot.slane %v5730, %v5743
    %v5745 = vcombine.low %v5737, %v5744
    %v5746 = vcombine.low %v5408, %v5409
    %v5747 = vcombine.low %v5410, %v5411
    %v5749 = vunpack.c.l.s4 1983009808
    %v5750 = vunpack.c.0.s8 %v5749
    %v5751 = vlaneseq
    %v5752 = vshrl.u32 %v5751, 7
    %v5753 = vsub.s32 %v5750, %v5752
    %v5754 = vrot.slane %v5746, %v5753
    %v5756 = vunpack.c.l.s4 1983009808
    %v5757 = vunpack.c.0.s8 %v5756
    %v5758 = vlaneseq
    %v5759 = vshrl.u32 %v5758, 7
    %v5760 = vsub.s32 %v5757, %v5759
    %v5761 = vrot.slane %v5747, %v5760
    %v5762 = vcombine.low %v5754, %v5761
    %v5763 = vcombine.low %v5412, %v5413
    %v5764 = vcombine.low %v5414, %v5415
    %v5766 = vunpack.c.l.s4 1983009808
    %v5767 = vunpack.c.0.s8 %v5766
    %v5768 = vlaneseq
    %v5769 = vshrl.u32 %v5768, 7
    %v5770 = vsub.s32 %v5767, %v5769
    %v5771 = vrot.slane %v5763, %v5770
    %v5773 = vunpack.c.l.s4 1983009808
    %v5774 = vunpack.c.0.s8 %v5773
    %v5775 = vlaneseq
    %v5776 = vshrl.u32 %v5775, 7
    %v5777 = vsub.s32 %v5774, %v5776
    %v5778 = vrot.slane %v5764, %v5777
    %v5779 = vcombine.low %v5771, %v5778
    %v5780 = vcombine.low %v5416, %v5417
    %v5781 = vcombine.low %v5418, %v5419
    %v5783 = vunpack.c.l.s4 1983009808
    %v5784 = vunpack.c.0.s8 %v5783
    %v5785 = vlaneseq
    %v5786 = vshrl.u32 %v5785, 7
    %v5787 = vsub.s32 %v5784, %v5786
    %v5788 = vrot.slane %v5780, %v5787
    %v5790 = vunpack.c.l.s4 1983009808
    %v5791 = vunpack.c.0.s8 %v5790
    %v5792 = vlaneseq
    %v5793 = vshrl.u32 %v5792, 7
    %v5794 = vsub.s32 %v5791, %v5793
    %v5795 = vrot.slane %v5781, %v5794
    %v5796 = vcombine.low %v5788, %v5795
    %v5797 = vcombine.low %v5420, %v5421
    %v5798 = vcombine.low %v5422, %v5423
    %v5800 = vunpack.c.l.s4 1983009808
    %v5801 = vunpack.c.0.s8 %v5800
    %v5802 = vlaneseq
    %v5803 = vshrl.u32 %v5802, 7
    %v5804 = vsub.s32 %v5801, %v5803
    %v5805 = vrot.slane %v5797, %v5804
    %v5807 = vunpack.c.l.s4 1983009808
    %v5808 = vunpack.c.0.s8 %v5807
    %v5809 = vlaneseq
    %v5810 = vshrl.u32 %v5809, 7
    %v5811 = vsub.s32 %v5808, %v5810
    %v5812 = vrot.slane %v5798, %v5811
    %v5813 = vcombine.low %v5805, %v5812
    %v5814 = vcombine.low %v5424, %v5425
    %v5815 = vcombine.low %v5426, %v5427
    %v5817 = vunpack.c.l.s4 1983009808
    %v5818 = vunpack.c.0.s8 %v5817
    %v5819 = vlaneseq
    %v5820 = vshrl.u32 %v5819, 7
    %v5821 = vsub.s32 %v5818, %v5820
    %v5822 = vrot.slane %v5814, %v5821
    %v5824 = vunpack.c.l.s4 1983009808
    %v5825 = vunpack.c.0.s8 %v5824
    %v5826 = vlaneseq
    %v5827 = vshrl.u32 %v5826, 7
    %v5828 = vsub.s32 %v5825, %v5827
    %v5829 = vrot.slane %v5815, %v5828
    %v5830 = vcombine.low %v5822, %v5829
    %v5831 = vcombine.low %v5428, %v5429
    %v5832 = vcombine.low %v5430, %v5431
    %v5834 = vunpack.c.l.s4 1983009808
    %v5835 = vunpack.c.0.s8 %v5834
    %v5836 = vlaneseq
    %v5837 = vshrl.u32 %v5836, 7
    %v5838 = vsub.s32 %v5835, %v5837
    %v5839 = vrot.slane %v5831, %v5838
    %v5841 = vunpack.c.l.s4 1983009808
    %v5842 = vunpack.c.0.s8 %v5841
    %v5843 = vlaneseq
    %v5844 = vshrl.u32 %v5843, 7
    %v5845 = vsub.s32 %v5842, %v5844
    %v5846 = vrot.slane %v5832, %v5845
    %v5847 = vcombine.low %v5839, %v5846
    %v5848 = vcombine.low %v5432, %v5433
    %v5849 = vcombine.low %v5434, %v5435
    %v5851 = vunpack.c.l.s4 1983009808
    %v5852 = vunpack.c.0.s8 %v5851
    %v5853 = vlaneseq
    %v5854 = vshrl.u32 %v5853, 7
    %v5855 = vsub.s32 %v5852, %v5854
    %v5856 = vrot.slane %v5848, %v5855
    %v5858 = vunpack.c.l.s4 1983009808
    %v5859 = vunpack.c.0.s8 %v5858
    %v5860 = vlaneseq
    %v5861 = vshrl.u32 %v5860, 7
    %v5862 = vsub.s32 %v5859, %v5861
    %v5863 = vrot.slane %v5849, %v5862
    %v5864 = vcombine.low %v5856, %v5863
    %v5865 = vcombine.low %v5436, %v5437
    %v5866 = vcombine.low %v5438, %v5439
    %v5868 = vunpack.c.l.s4 1983009808
    %v5869 = vunpack.c.0.s8 %v5868
    %v5870 = vlaneseq
    %v5871 = vshrl.u32 %v5870, 7
    %v5872 = vsub.s32 %v5869, %v5871
    %v5873 = vrot.slane %v5865, %v5872
    %v5875 = vunpack.c.l.s4 1983009808
    %v5876 = vunpack.c.0.s8 %v5875
    %v5877 = vlaneseq
    %v5878 = vshrl.u32 %v5877, 7
    %v5879 = vsub.s32 %v5876, %v5878
    %v5880 = vrot.slane %v5866, %v5879
    %v5881 = vcombine.low %v5873, %v5880
    %v5882 = vcombine.low %v5440, %v5441
    %v5883 = vcombine.low %v5442, %v5443
    %v5885 = vunpack.c.l.s4 1983009808
    %v5886 = vunpack.c.0.s8 %v5885
    %v5887 = vlaneseq
    %v5888 = vshrl.u32 %v5887, 7
    %v5889 = vsub.s32 %v5886, %v5888
    %v5890 = vrot.slane %v5882, %v5889
    %v5892 = vunpack.c.l.s4 1983009808
    %v5893 = vunpack.c.0.s8 %v5892
    %v5894 = vlaneseq
    %v5895 = vshrl.u32 %v5894, 7
    %v5896 = vsub.s32 %v5893, %v5895
    %v5897 = vrot.slane %v5883, %v5896
    %v5898 = vcombine.low %v5890, %v5897
    %v5899 = vcombine.low %v5444, %v5445
    %v5900 = vcombine.low %v5446, %v5447
    %v5902 = vunpack.c.l.s4 1983009808
    %v5903 = vunpack.c.0.s8 %v5902
    %v5904 = vlaneseq
    %v5905 = vshrl.u32 %v5904, 7
    %v5906 = vsub.s32 %v5903, %v5905
    %v5907 = vrot.slane %v5899, %v5906
    %v5909 = vunpack.c.l.s4 1983009808
    %v5910 = vunpack.c.0.s8 %v5909
    %v5911 = vlaneseq
    %v5912 = vshrl.u32 %v5911, 7
    %v5913 = vsub.s32 %v5910, %v5912
    %v5914 = vrot.slane %v5900, %v5913
    %v5915 = vcombine.low %v5907, %v5914
    %v5917 = vunpack.c.l.s4 1983009808
    %v5918 = vunpack.c.0.s8 %v5917
    %v5919 = vlaneseq
    %v5920 = vshrl.u32 %v5919, 7
    %v5921 = vsub.s32 %v5918, %v5920
    %v5922 = vrot.slane %v5448, %v5921
    %v5923 = vcombine.low %v5449, %v5450
    %v5924 = vcombine.low %v5451, %v5452
    %v5926 = vunpack.c.l.s4 1983009808
    %v5927 = vunpack.c.0.s8 %v5926
    %v5928 = vlaneseq
    %v5929 = vshrl.u32 %v5928, 7
    %v5930 = vsub.s32 %v5927, %v5929
    %v5931 = vrot.slane %v5923, %v5930
    %v5933 = vunpack.c.l.s4 1983009808
    %v5934 = vunpack.c.0.s8 %v5933
    %v5935 = vlaneseq
    %v5936 = vshrl.u32 %v5935, 7
    %v5937 = vsub.s32 %v5934, %v5936
    %v5938 = vrot.slane %v5924, %v5937
    %v5939 = vcombine.low %v5931, %v5938
    %v5940 = vcombine.low %v5453, %v5454
    %v5941 = vcombine.low %v5455, %v5456
    %v5943 = vunpack.c.l.s4 1983009808
    %v5944 = vunpack.c.0.s8 %v5943
    %v5945 = vlaneseq
    %v5946 = vshrl.u32 %v5945, 7
    %v5947 = vsub.s32 %v5944, %v5946
    %v5948 = vrot.slane %v5940, %v5947
    %v5950 = vunpack.c.l.s4 1983009808
    %v5951 = vunpack.c.0.s8 %v5950
    %v5952 = vlaneseq
    %v5953 = vshrl.u32 %v5952, 7
    %v5954 = vsub.s32 %v5951, %v5953
    %v5955 = vrot.slane %v5941, %v5954
    %v5956 = vcombine.low %v5948, %v5955
    %v5957 = vcombine.low %v5457, %v5458
    %v5958 = vcombine.low %v5459, %v5460
    %v5960 = vunpack.c.l.s4 1983009808
    %v5961 = vunpack.c.0.s8 %v5960
    %v5962 = vlaneseq
    %v5963 = vshrl.u32 %v5962, 7
    %v5964 = vsub.s32 %v5961, %v5963
    %v5965 = vrot.slane %v5957, %v5964
    %v5967 = vunpack.c.l.s4 1983009808
    %v5968 = vunpack.c.0.s8 %v5967
    %v5969 = vlaneseq
    %v5970 = vshrl.u32 %v5969, 7
    %v5971 = vsub.s32 %v5968, %v5970
    %v5972 = vrot.slane %v5958, %v5971
    %v5973 = vcombine.low %v5965, %v5972
    %v5974 = vcombine.low %v5461, %v5462
    %v5975 = vcombine.low %v5463, %v5464
    %v5977 = vunpack.c.l.s4 1983009808
    %v5978 = vunpack.c.0.s8 %v5977
    %v5979 = vlaneseq
    %v5980 = vshrl.u32 %v5979, 7
    %v5981 = vsub.s32 %v5978, %v5980
    %v5982 = vrot.slane %v5974, %v5981
    %v5984 = vunpack.c.l.s4 1983009808
    %v5985 = vunpack.c.0.s8 %v5984
    %v5986 = vlaneseq
    %v5987 = vshrl.u32 %v5986, 7
    %v5988 = vsub.s32 %v5985, %v5987
    %v5989 = vrot.slane %v5975, %v5988
    %v5990 = vcombine.low %v5982, %v5989
    %v5991 = vcombine.low %v5465, %v5466
    %v5992 = vcombine.low %v5467, %v5468
    %v5994 = vunpack.c.l.s4 1983009808
    %v5995 = vunpack.c.0.s8 %v5994
    %v5996 = vlaneseq
    %v5997 = vshrl.u32 %v5996, 7
    %v5998 = vsub.s32 %v5995, %v5997
    %v5999 = vrot.slane %v5991, %v5998
    %v6001 = vunpack.c.l.s4 1983009808
    %v6002 = vunpack.c.0.s8 %v6001
    %v6003 = vlaneseq
    %v6004 = vshrl.u32 %v6003, 7
    %v6005 = vsub.s32 %v6002, %v6004
    %v6006 = vrot.slane %v5992, %v6005
    %v6007 = vcombine.low %v5999, %v6006
    %v6008 = vcombine.low %v5469, %v5470
    %v6009 = vcombine.low %v5471, %v5472
    %v6011 = vunpack.c.l.s4 1983009808
    %v6012 = vunpack.c.0.s8 %v6011
    %v6013 = vlaneseq
    %v6014 = vshrl.u32 %v6013, 7
    %v6015 = vsub.s32 %v6012, %v6014
    %v6016 = vrot.slane %v6008, %v6015
    %v6018 = vunpack.c.l.s4 1983009808
    %v6019 = vunpack.c.0.s8 %v6018
    %v6020 = vlaneseq
    %v6021 = vshrl.u32 %v6020, 7
    %v6022 = vsub.s32 %v6019, %v6021
    %v6023 = vrot.slane %v6009, %v6022
    %v6024 = vcombine.low %v6016, %v6023
    %v6025 = vcombine.low %v5473, %v5474
    %v6026 = vcombine.low %v5475, %v5476
    %v6028 = vunpack.c.l.s4 1983009808
    %v6029 = vunpack.c.0.s8 %v6028
    %v6030 = vlaneseq
    %v6031 = vshrl.u32 %v6030, 7
    %v6032 = vsub.s32 %v6029, %v6031
    %v6033 = vrot.slane %v6025, %v6032
    %v6035 = vunpack.c.l.s4 1983009808
    %v6036 = vunpack.c.0.s8 %v6035
    %v6037 = vlaneseq
    %v6038 = vshrl.u32 %v6037, 7
    %v6039 = vsub.s32 %v6036, %v6038
    %v6040 = vrot.slane %v6026, %v6039
    %v6041 = vcombine.low %v6033, %v6040
    %v6042 = vcombine.low %v5477, %v5478
    %v6043 = vcombine.low %v5479, %v5480
    %v6045 = vunpack.c.l.s4 1983009808
    %v6046 = vunpack.c.0.s8 %v6045
    %v6047 = vlaneseq
    %v6048 = vshrl.u32 %v6047, 7
    %v6049 = vsub.s32 %v6046, %v6048
    %v6050 = vrot.slane %v6042, %v6049
    %v6052 = vunpack.c.l.s4 1983009808
    %v6053 = vunpack.c.0.s8 %v6052
    %v6054 = vlaneseq
    %v6055 = vshrl.u32 %v6054, 7
    %v6056 = vsub.s32 %v6053, %v6055
    %v6057 = vrot.slane %v6043, %v6056
    %v6058 = vcombine.low %v6050, %v6057
    %v6059 = vcombine.low %v5481, %v5482
    %v6060 = vcombine.low %v5483, %v5484
    %v6062 = vunpack.c.l.s4 1983009808
    %v6063 = vunpack.c.0.s8 %v6062
    %v6064 = vlaneseq
    %v6065 = vshrl.u32 %v6064, 7
    %v6066 = vsub.s32 %v6063, %v6065
    %v6067 = vrot.slane %v6059, %v6066
    %v6069 = vunpack.c.l.s4 1983009808
    %v6070 = vunpack.c.0.s8 %v6069
    %v6071 = vlaneseq
    %v6072 = vshrl.u32 %v6071, 7
    %v6073 = vsub.s32 %v6070, %v6072
    %v6074 = vrot.slane %v6060, %v6073
    %v6075 = vcombine.low %v6067, %v6074
    %v6076 = vcombine.low %v5485, %v5486
    %v6077 = vcombine.low %v5487, %v5488
    %v6079 = vunpack.c.l.s4 1983009808
    %v6080 = vunpack.c.0.s8 %v6079
    %v6081 = vlaneseq
    %v6082 = vshrl.u32 %v6081, 7
    %v6083 = vsub.s32 %v6080, %v6082
    %v6084 = vrot.slane %v6076, %v6083
    %v6086 = vunpack.c.l.s4 1983009808
    %v6087 = vunpack.c.0.s8 %v6086
    %v6088 = vlaneseq
    %v6089 = vshrl.u32 %v6088, 7
    %v6090 = vsub.s32 %v6087, %v6089
    %v6091 = vrot.slane %v6077, %v6090
    %v6092 = vcombine.low %v6084, %v6091
    %v6093 = vcombine.low %v5489, %v5490
    %v6094 = vcombine.low %v5491, %v5492
    %v6096 = vunpack.c.l.s4 1983009808
    %v6097 = vunpack.c.0.s8 %v6096
    %v6098 = vlaneseq
    %v6099 = vshrl.u32 %v6098, 7
    %v6100 = vsub.s32 %v6097, %v6099
    %v6101 = vrot.slane %v6093, %v6100
    %v6103 = vunpack.c.l.s4 1983009808
    %v6104 = vunpack.c.0.s8 %v6103
    %v6105 = vlaneseq
    %v6106 = vshrl.u32 %v6105, 7
    %v6107 = vsub.s32 %v6104, %v6106
    %v6108 = vrot.slane %v6094, %v6107
    %v6109 = vcombine.low %v6101, %v6108
    %v6110 = vcombine.low %v5493, %v5494
    %v6111 = vcombine.low %v5495, %v5496
    %v6113 = vunpack.c.l.s4 1983009808
    %v6114 = vunpack.c.0.s8 %v6113
    %v6115 = vlaneseq
    %v6116 = vshrl.u32 %v6115, 7
    %v6117 = vsub.s32 %v6114, %v6116
    %v6118 = vrot.slane %v6110, %v6117
    %v6120 = vunpack.c.l.s4 1983009808
    %v6121 = vunpack.c.0.s8 %v6120
    %v6122 = vlaneseq
    %v6123 = vshrl.u32 %v6122, 7
    %v6124 = vsub.s32 %v6121, %v6123
    %v6125 = vrot.slane %v6111, %v6124
    %v6126 = vcombine.low %v6118, %v6125
    %v6127 = vcombine.low %v5497, %v5498
    %v6128 = vcombine.low %v5499, %v5500
    %v6130 = vunpack.c.l.s4 1983009808
    %v6131 = vunpack.c.0.s8 %v6130
    %v6132 = vlaneseq
    %v6133 = vshrl.u32 %v6132, 7
    %v6134 = vsub.s32 %v6131, %v6133
    %v6135 = vrot.slane %v6127, %v6134
    %v6137 = vunpack.c.l.s4 1983009808
    %v6138 = vunpack.c.0.s8 %v6137
    %v6139 = vlaneseq
    %v6140 = vshrl.u32 %v6139, 7
    %v6141 = vsub.s32 %v6138, %v6140
    %v6142 = vrot.slane %v6128, %v6141
    %v6143 = vcombine.low %v6135, %v6142
    %v6144 = vcombine.low %v5501, %v5502
    %v6145 = vcombine.low %v5503, %v5504
    %v6147 = vunpack.c.l.s4 1983009808
    %v6148 = vunpack.c.0.s8 %v6147
    %v6149 = vlaneseq
    %v6150 = vshrl.u32 %v6149, 7
    %v6151 = vsub.s32 %v6148, %v6150
    %v6152 = vrot.slane %v6144, %v6151
    %v6154 = vunpack.c.l.s4 1983009808
    %v6155 = vunpack.c.0.s8 %v6154
    %v6156 = vlaneseq
    %v6157 = vshrl.u32 %v6156, 7
    %v6158 = vsub.s32 %v6155, %v6157
    %v6159 = vrot.slane %v6145, %v6158
    %v6160 = vcombine.low %v6152, %v6159
    %v6161 = vcombine.low %v5505, %v5506
    %v6162 = vcombine.low %v5507, %v5508
    %v6164 = vunpack.c.l.s4 1983009808
    %v6165 = vunpack.c.0.s8 %v6164
    %v6166 = vlaneseq
    %v6167 = vshrl.u32 %v6166, 7
    %v6168 = vsub.s32 %v6165, %v6167
    %v6169 = vrot.slane %v6161, %v6168
    %v6171 = vunpack.c.l.s4 1983009808
    %v6172 = vunpack.c.0.s8 %v6171
    %v6173 = vlaneseq
    %v6174 = vshrl.u32 %v6173, 7
    %v6175 = vsub.s32 %v6172, %v6174
    %v6176 = vrot.slane %v6162, %v6175
    %v6177 = vcombine.low %v6169, %v6176
    %v6178 = vcombine.low %v5509, %v5510
    %v6179 = vcombine.low %v5511, %v5512
    %v6181 = vunpack.c.l.s4 1983009808
    %v6182 = vunpack.c.0.s8 %v6181
    %v6183 = vlaneseq
    %v6184 = vshrl.u32 %v6183, 7
    %v6185 = vsub.s32 %v6182, %v6184
    %v6186 = vrot.slane %v6178, %v6185
    %v6188 = vunpack.c.l.s4 1983009808
    %v6189 = vunpack.c.0.s8 %v6188
    %v6190 = vlaneseq
    %v6191 = vshrl.u32 %v6190, 7
    %v6192 = vsub.s32 %v6189, %v6191
    %v6193 = vrot.slane %v6179, %v6192
    %v6194 = vcombine.low %v6186, %v6193
    %v6196 = vunpack.c.l.s4 1983009808
    %v6197 = vunpack.c.0.s8 %v6196
    %v6198 = vlaneseq
    %v6199 = vshrl.u32 %v6198, 7
    %v6200 = vsub.s32 %v6197, %v6199
    %v6201 = vrot.slane %v5513, %v6200
    %v6236 = vsel %vm418, %v5660, 0.0
    %6237 = vadd.xlane.f32.xlu0 %v6236
    %v6238 = vpop.xlane.xlu0 %6237
    %v6239 = vsel %vm418, %v5677, 0.0
    %6240 = vadd.xlane.f32.xlu0 %v6239
    %v6241 = vpop.xlane.xlu0 %6240
    %v6242 = vsel %vm418, %v5694, 0.0
    %6243 = vadd.xlane.f32.xlu0 %v6242
    %v6244 = vpop.xlane.xlu0 %6243
    %v6245 = vsel %vm418, %v5711, 0.0
    %6246 = vadd.xlane.f32.xlu0 %v6245
    %v6247 = vpop.xlane.xlu0 %6246
    %v6248 = vsel %vm418, %v5728, 0.0
    %6249 = vadd.xlane.f32.xlu0 %v6248
    %v6250 = vpop.xlane.xlu0 %6249
    %v6251 = vsel %vm418, %v5745, 0.0
    %6252 = vadd.xlane.f32.xlu0 %v6251
    %v6253 = vpop.xlane.xlu0 %6252
    %v6254 = vsel %vm418, %v5762, 0.0
    %6255 = vadd.xlane.f32.xlu0 %v6254
    %v6256 = vpop.xlane.xlu0 %6255
    %v6257 = vsel %vm418, %v5779, 0.0
    %6258 = vadd.xlane.f32.xlu0 %v6257
    %v6259 = vpop.xlane.xlu0 %6258
    %v6260 = vsel %vm418, %v5796, 0.0
    %6261 = vadd.xlane.f32.xlu0 %v6260
    %v6262 = vpop.xlane.xlu0 %6261
    %v6263 = vsel %vm418, %v5813, 0.0
    %6264 = vadd.xlane.f32.xlu0 %v6263
    %v6265 = vpop.xlane.xlu0 %6264
    %v6266 = vsel %vm418, %v5830, 0.0
    %6267 = vadd.xlane.f32.xlu0 %v6266
    %v6268 = vpop.xlane.xlu0 %6267
    %v6269 = vsel %vm418, %v5847, 0.0
    %6270 = vadd.xlane.f32.xlu0 %v6269
    %v6271 = vpop.xlane.xlu0 %6270
    %v6272 = vsel %vm418, %v5864, 0.0
    %6273 = vadd.xlane.f32.xlu0 %v6272
    %v6274 = vpop.xlane.xlu0 %6273
    %v6275 = vsel %vm418, %v5881, 0.0
    %6276 = vadd.xlane.f32.xlu0 %v6275
    %v6277 = vpop.xlane.xlu0 %6276
    %v6278 = vsel %vm418, %v5898, 0.0
    %6279 = vadd.xlane.f32.xlu0 %v6278
    %v6280 = vpop.xlane.xlu0 %6279
    %v6281 = vsel %vm418, %v5915, 0.0
    %6282 = vadd.xlane.f32.xlu0 %v6281
    %v6283 = vpop.xlane.xlu0 %6282
    %v6284 = vsel %vm4090, %v5922, 0.0
    %6285 = vadd.xlane.f32.xlu0 %v6284
    %v6286 = vpop.xlane.xlu0 %6285
    %v6287 = vsel %vm418, %v5939, 0.0
    %6288 = vadd.xlane.f32.xlu0 %v6287
    %v6289 = vpop.xlane.xlu0 %6288
    %v6290 = vsel %vm418, %v5956, 0.0
    %6291 = vadd.xlane.f32.xlu0 %v6290
    %v6292 = vpop.xlane.xlu0 %6291
    %v6293 = vsel %vm418, %v5973, 0.0
    %6294 = vadd.xlane.f32.xlu0 %v6293
    %v6295 = vpop.xlane.xlu0 %6294
    %v6296 = vsel %vm418, %v5990, 0.0
    %6297 = vadd.xlane.f32.xlu0 %v6296
    %v6298 = vpop.xlane.xlu0 %6297
    %v6299 = vsel %vm418, %v6007, 0.0
    %6300 = vadd.xlane.f32.xlu0 %v6299
    %v6301 = vpop.xlane.xlu0 %6300
    %v6302 = vsel %vm418, %v6024, 0.0
    %6303 = vadd.xlane.f32.xlu0 %v6302
    %v6304 = vpop.xlane.xlu0 %6303
    %v6305 = vsel %vm418, %v6041, 0.0
    %6306 = vadd.xlane.f32.xlu0 %v6305
    %v6307 = vpop.xlane.xlu0 %6306
    %v6308 = vsel %vm418, %v6058, 0.0
    %6309 = vadd.xlane.f32.xlu0 %v6308
    %v6310 = vpop.xlane.xlu0 %6309
    %v6311 = vsel %vm418, %v6075, 0.0
    %6312 = vadd.xlane.f32.xlu0 %v6311
    %v6313 = vpop.xlane.xlu0 %6312
    %v6314 = vsel %vm418, %v6092, 0.0
    %6315 = vadd.xlane.f32.xlu0 %v6314
    %v6316 = vpop.xlane.xlu0 %6315
    %v6317 = vsel %vm418, %v6109, 0.0
    %6318 = vadd.xlane.f32.xlu0 %v6317
    %v6319 = vpop.xlane.xlu0 %6318
    %v6320 = vsel %vm418, %v6126, 0.0
    %6321 = vadd.xlane.f32.xlu0 %v6320
    %v6322 = vpop.xlane.xlu0 %6321
    %v6323 = vsel %vm418, %v6143, 0.0
    %6324 = vadd.xlane.f32.xlu0 %v6323
    %v6325 = vpop.xlane.xlu0 %6324
    %v6326 = vsel %vm418, %v6160, 0.0
    %6327 = vadd.xlane.f32.xlu0 %v6326
    %v6328 = vpop.xlane.xlu0 %6327
    %v6329 = vsel %vm418, %v6177, 0.0
    %6330 = vadd.xlane.f32.xlu0 %v6329
    %v6331 = vpop.xlane.xlu0 %6330
    %v6332 = vsel %vm418, %v6194, 0.0
    %6333 = vadd.xlane.f32.xlu0 %v6332
    %v6334 = vpop.xlane.xlu0 %6333
    %v6335 = vsel %vm4090, %v6201, 0.0
    %6336 = vadd.xlane.f32.xlu0 %v6335
    %v6337 = vpop.xlane.xlu0 %6336
    %v6338 = vmul.f32 %v6238, %v4145
    %v6339 = vmul.f32 %v6241, %v4145
    %v6340 = vmul.f32 %v6244, %v4145
    %v6341 = vmul.f32 %v6247, %v4145
    %v6342 = vmul.f32 %v6250, %v4145
    %v6343 = vmul.f32 %v6253, %v4145
    %v6344 = vmul.f32 %v6256, %v4145
    %v6345 = vmul.f32 %v6259, %v4145
    %v6346 = vmul.f32 %v6262, %v4145
    %v6347 = vmul.f32 %v6265, %v4145
    %v6348 = vmul.f32 %v6268, %v4145
    %v6349 = vmul.f32 %v6271, %v4145
    %v6350 = vmul.f32 %v6274, %v4145
    %v6351 = vmul.f32 %v6277, %v4145
    %v6352 = vmul.f32 %v6280, %v4145
    %v6353 = vmul.f32 %v6283, %v4145
    %v6354 = vmul.f32 %v6286, %v4145
    %v6355 = vmul.f32 %v6289, %v4145
    %v6356 = vmul.f32 %v6292, %v4145
    %v6357 = vmul.f32 %v6295, %v4145
    %v6358 = vmul.f32 %v6298, %v4145
    %v6359 = vmul.f32 %v6301, %v4145
    %v6360 = vmul.f32 %v6304, %v4145
    %v6361 = vmul.f32 %v6307, %v4145
    %v6362 = vmul.f32 %v6310, %v4145
    %v6363 = vmul.f32 %v6313, %v4145
    %v6364 = vmul.f32 %v6316, %v4145
    %v6365 = vmul.f32 %v6319, %v4145
    %v6366 = vmul.f32 %v6322, %v4145
    %v6367 = vmul.f32 %v6325, %v4145
    %v6368 = vmul.f32 %v6328, %v4145
    %v6369 = vmul.f32 %v6331, %v4145
    %v6370 = vmul.f32 %v6334, %v4145
    %v6371 = vmul.f32 %v6337, %v4145
    %v6372 = vadd.f32 %v6338, 1e-05
    %v6373 = vadd.f32 %v6339, 1e-05
    %v6374 = vadd.f32 %v6340, 1e-05
    %v6375 = vadd.f32 %v6341, 1e-05
    %v6376 = vadd.f32 %v6342, 1e-05
    %v6377 = vadd.f32 %v6343, 1e-05
    %v6378 = vadd.f32 %v6344, 1e-05
    %v6379 = vadd.f32 %v6345, 1e-05
    %v6380 = vadd.f32 %v6346, 1e-05
    %v6381 = vadd.f32 %v6347, 1e-05
    %v6382 = vadd.f32 %v6348, 1e-05
    %v6383 = vadd.f32 %v6349, 1e-05
    %v6384 = vadd.f32 %v6350, 1e-05
    %v6385 = vadd.f32 %v6351, 1e-05
    %v6386 = vadd.f32 %v6352, 1e-05
    %v6387 = vadd.f32 %v6353, 1e-05
    %v6388 = vadd.f32 %v6354, 1e-05
    %v6389 = vadd.f32 %v6355, 1e-05
    %v6390 = vadd.f32 %v6356, 1e-05
    %v6391 = vadd.f32 %v6357, 1e-05
    %v6392 = vadd.f32 %v6358, 1e-05
    %v6393 = vadd.f32 %v6359, 1e-05
    %v6394 = vadd.f32 %v6360, 1e-05
    %v6395 = vadd.f32 %v6361, 1e-05
    %v6396 = vadd.f32 %v6362, 1e-05
    %v6397 = vadd.f32 %v6363, 1e-05
    %v6398 = vadd.f32 %v6364, 1e-05
    %v6399 = vadd.f32 %v6365, 1e-05
    %v6400 = vadd.f32 %v6366, 1e-05
    %v6401 = vadd.f32 %v6367, 1e-05
    %v6402 = vadd.f32 %v6368, 1e-05
    %v6403 = vadd.f32 %v6369, 1e-05
    %v6404 = vadd.f32 %v6370, 1e-05
    %v6405 = vadd.f32 %v6371, 1e-05
    %v6406 = vrsqrt.pop %v6372
    %v6407 = vrsqrt.pop %v6373
    %v6408 = vrsqrt.pop %v6374
    %v6409 = vrsqrt.pop %v6375
    %v6410 = vrsqrt.pop %v6376
    %v6411 = vrsqrt.pop %v6377
    %v6412 = vrsqrt.pop %v6378
    %v6413 = vrsqrt.pop %v6379
    %v6414 = vrsqrt.pop %v6380
    %v6415 = vrsqrt.pop %v6381
    %v6416 = vrsqrt.pop %v6382
    %v6417 = vrsqrt.pop %v6383
    %v6418 = vrsqrt.pop %v6384
    %v6419 = vrsqrt.pop %v6385
    %v6420 = vrsqrt.pop %v6386
    %v6421 = vrsqrt.pop %v6387
    %v6422 = vrsqrt.pop %v6388
    %v6423 = vrsqrt.pop %v6389
    %v6424 = vrsqrt.pop %v6390
    %v6425 = vrsqrt.pop %v6391
    %v6426 = vrsqrt.pop %v6392
    %v6427 = vrsqrt.pop %v6393
    %v6428 = vrsqrt.pop %v6394
    %v6429 = vrsqrt.pop %v6395
    %v6430 = vrsqrt.pop %v6396
    %v6431 = vrsqrt.pop %v6397
    %v6432 = vrsqrt.pop %v6398
    %v6433 = vrsqrt.pop %v6399
    %v6434 = vrsqrt.pop %v6400
    %v6435 = vrsqrt.pop %v6401
    %v6436 = vrsqrt.pop %v6402
    %v6437 = vrsqrt.pop %v6403
    %v6438 = vrsqrt.pop %v6404
    %v6439 = vrsqrt.pop %v6405
    %v6475 = vunpack.c.l.s4 269488144
    %v6476 = vunpack.c.0.s8 %v6475
    %v6477 = vlaneseq
    %v6478 = vshrl.u32 %v6477, 7
    %v6479 = vsub.s32 %v6476, %v6478
    %v6480 = vrot.slane %v6406, %v6479
    %v6482 = vunpack.c.l.s4 842150450
    %v6483 = vunpack.c.0.s8 %v6482
    %v6484 = vlaneseq
    %v6485 = vshrl.u32 %v6484, 7
    %v6486 = vsub.s32 %v6483, %v6485
    %v6487 = vrot.slane %v6406, %v6486
    %v6489 = vunpack.c.l.s4 1414812756
    %v6490 = vunpack.c.0.s8 %v6489
    %v6491 = vlaneseq
    %v6492 = vshrl.u32 %v6491, 7
    %v6493 = vsub.s32 %v6490, %v6492
    %v6494 = vrot.slane %v6406, %v6493
    %v6496 = vunpack.c.l.s4 1987475062
    %v6497 = vunpack.c.0.s8 %v6496
    %v6498 = vlaneseq
    %v6499 = vshrl.u32 %v6498, 7
    %v6500 = vsub.s32 %v6497, %v6499
    %v6501 = vrot.slane %v6406, %v6500
    %v6503 = vunpack.c.l.s4 269488144
    %v6504 = vunpack.c.0.s8 %v6503
    %v6505 = vlaneseq
    %v6506 = vshrl.u32 %v6505, 7
    %v6507 = vsub.s32 %v6504, %v6506
    %v6508 = vrot.slane %v6407, %v6507
    %v6510 = vunpack.c.l.s4 842150450
    %v6511 = vunpack.c.0.s8 %v6510
    %v6512 = vlaneseq
    %v6513 = vshrl.u32 %v6512, 7
    %v6514 = vsub.s32 %v6511, %v6513
    %v6515 = vrot.slane %v6407, %v6514
    %v6517 = vunpack.c.l.s4 1414812756
    %v6518 = vunpack.c.0.s8 %v6517
    %v6519 = vlaneseq
    %v6520 = vshrl.u32 %v6519, 7
    %v6521 = vsub.s32 %v6518, %v6520
    %v6522 = vrot.slane %v6407, %v6521
    %v6524 = vunpack.c.l.s4 1987475062
    %v6525 = vunpack.c.0.s8 %v6524
    %v6526 = vlaneseq
    %v6527 = vshrl.u32 %v6526, 7
    %v6528 = vsub.s32 %v6525, %v6527
    %v6529 = vrot.slane %v6407, %v6528
    %v6531 = vunpack.c.l.s4 269488144
    %v6532 = vunpack.c.0.s8 %v6531
    %v6533 = vlaneseq
    %v6534 = vshrl.u32 %v6533, 7
    %v6535 = vsub.s32 %v6532, %v6534
    %v6536 = vrot.slane %v6408, %v6535
    %v6538 = vunpack.c.l.s4 842150450
    %v6539 = vunpack.c.0.s8 %v6538
    %v6540 = vlaneseq
    %v6541 = vshrl.u32 %v6540, 7
    %v6542 = vsub.s32 %v6539, %v6541
    %v6543 = vrot.slane %v6408, %v6542
    %v6545 = vunpack.c.l.s4 1414812756
    %v6546 = vunpack.c.0.s8 %v6545
    %v6547 = vlaneseq
    %v6548 = vshrl.u32 %v6547, 7
    %v6549 = vsub.s32 %v6546, %v6548
    %v6550 = vrot.slane %v6408, %v6549
    %v6552 = vunpack.c.l.s4 1987475062
    %v6553 = vunpack.c.0.s8 %v6552
    %v6554 = vlaneseq
    %v6555 = vshrl.u32 %v6554, 7
    %v6556 = vsub.s32 %v6553, %v6555
    %v6557 = vrot.slane %v6408, %v6556
    %v6559 = vunpack.c.l.s4 269488144
    %v6560 = vunpack.c.0.s8 %v6559
    %v6561 = vlaneseq
    %v6562 = vshrl.u32 %v6561, 7
    %v6563 = vsub.s32 %v6560, %v6562
    %v6564 = vrot.slane %v6409, %v6563
    %v6566 = vunpack.c.l.s4 842150450
    %v6567 = vunpack.c.0.s8 %v6566
    %v6568 = vlaneseq
    %v6569 = vshrl.u32 %v6568, 7
    %v6570 = vsub.s32 %v6567, %v6569
    %v6571 = vrot.slane %v6409, %v6570
    %v6573 = vunpack.c.l.s4 1414812756
    %v6574 = vunpack.c.0.s8 %v6573
    %v6575 = vlaneseq
    %v6576 = vshrl.u32 %v6575, 7
    %v6577 = vsub.s32 %v6574, %v6576
    %v6578 = vrot.slane %v6409, %v6577
    %v6580 = vunpack.c.l.s4 1987475062
    %v6581 = vunpack.c.0.s8 %v6580
    %v6582 = vlaneseq
    %v6583 = vshrl.u32 %v6582, 7
    %v6584 = vsub.s32 %v6581, %v6583
    %v6585 = vrot.slane %v6409, %v6584
    %v6587 = vunpack.c.l.s4 269488144
    %v6588 = vunpack.c.0.s8 %v6587
    %v6589 = vlaneseq
    %v6590 = vshrl.u32 %v6589, 7
    %v6591 = vsub.s32 %v6588, %v6590
    %v6592 = vrot.slane %v6410, %v6591
    %v6594 = vunpack.c.l.s4 842150450
    %v6595 = vunpack.c.0.s8 %v6594
    %v6596 = vlaneseq
    %v6597 = vshrl.u32 %v6596, 7
    %v6598 = vsub.s32 %v6595, %v6597
    %v6599 = vrot.slane %v6410, %v6598
    %v6601 = vunpack.c.l.s4 1414812756
    %v6602 = vunpack.c.0.s8 %v6601
    %v6603 = vlaneseq
    %v6604 = vshrl.u32 %v6603, 7
    %v6605 = vsub.s32 %v6602, %v6604
    %v6606 = vrot.slane %v6410, %v6605
    %v6608 = vunpack.c.l.s4 1987475062
    %v6609 = vunpack.c.0.s8 %v6608
    %v6610 = vlaneseq
    %v6611 = vshrl.u32 %v6610, 7
    %v6612 = vsub.s32 %v6609, %v6611
    %v6613 = vrot.slane %v6410, %v6612
    %v6615 = vunpack.c.l.s4 269488144
    %v6616 = vunpack.c.0.s8 %v6615
    %v6617 = vlaneseq
    %v6618 = vshrl.u32 %v6617, 7
    %v6619 = vsub.s32 %v6616, %v6618
    %v6620 = vrot.slane %v6411, %v6619
    %v6622 = vunpack.c.l.s4 842150450
    %v6623 = vunpack.c.0.s8 %v6622
    %v6624 = vlaneseq
    %v6625 = vshrl.u32 %v6624, 7
    %v6626 = vsub.s32 %v6623, %v6625
    %v6627 = vrot.slane %v6411, %v6626
    %v6629 = vunpack.c.l.s4 1414812756
    %v6630 = vunpack.c.0.s8 %v6629
    %v6631 = vlaneseq
    %v6632 = vshrl.u32 %v6631, 7
    %v6633 = vsub.s32 %v6630, %v6632
    %v6634 = vrot.slane %v6411, %v6633
    %v6636 = vunpack.c.l.s4 1987475062
    %v6637 = vunpack.c.0.s8 %v6636
    %v6638 = vlaneseq
    %v6639 = vshrl.u32 %v6638, 7
    %v6640 = vsub.s32 %v6637, %v6639
    %v6641 = vrot.slane %v6411, %v6640
    %v6643 = vunpack.c.l.s4 269488144
    %v6644 = vunpack.c.0.s8 %v6643
    %v6645 = vlaneseq
    %v6646 = vshrl.u32 %v6645, 7
    %v6647 = vsub.s32 %v6644, %v6646
    %v6648 = vrot.slane %v6412, %v6647
    %v6650 = vunpack.c.l.s4 842150450
    %v6651 = vunpack.c.0.s8 %v6650
    %v6652 = vlaneseq
    %v6653 = vshrl.u32 %v6652, 7
    %v6654 = vsub.s32 %v6651, %v6653
    %v6655 = vrot.slane %v6412, %v6654
    %v6657 = vunpack.c.l.s4 1414812756
    %v6658 = vunpack.c.0.s8 %v6657
    %v6659 = vlaneseq
    %v6660 = vshrl.u32 %v6659, 7
    %v6661 = vsub.s32 %v6658, %v6660
    %v6662 = vrot.slane %v6412, %v6661
    %v6664 = vunpack.c.l.s4 1987475062
    %v6665 = vunpack.c.0.s8 %v6664
    %v6666 = vlaneseq
    %v6667 = vshrl.u32 %v6666, 7
    %v6668 = vsub.s32 %v6665, %v6667
    %v6669 = vrot.slane %v6412, %v6668
    %v6671 = vunpack.c.l.s4 269488144
    %v6672 = vunpack.c.0.s8 %v6671
    %v6673 = vlaneseq
    %v6674 = vshrl.u32 %v6673, 7
    %v6675 = vsub.s32 %v6672, %v6674
    %v6676 = vrot.slane %v6413, %v6675
    %v6678 = vunpack.c.l.s4 842150450
    %v6679 = vunpack.c.0.s8 %v6678
    %v6680 = vlaneseq
    %v6681 = vshrl.u32 %v6680, 7
    %v6682 = vsub.s32 %v6679, %v6681
    %v6683 = vrot.slane %v6413, %v6682
    %v6685 = vunpack.c.l.s4 1414812756
    %v6686 = vunpack.c.0.s8 %v6685
    %v6687 = vlaneseq
    %v6688 = vshrl.u32 %v6687, 7
    %v6689 = vsub.s32 %v6686, %v6688
    %v6690 = vrot.slane %v6413, %v6689
    %v6692 = vunpack.c.l.s4 1987475062
    %v6693 = vunpack.c.0.s8 %v6692
    %v6694 = vlaneseq
    %v6695 = vshrl.u32 %v6694, 7
    %v6696 = vsub.s32 %v6693, %v6695
    %v6697 = vrot.slane %v6413, %v6696
    %v6699 = vunpack.c.l.s4 269488144
    %v6700 = vunpack.c.0.s8 %v6699
    %v6701 = vlaneseq
    %v6702 = vshrl.u32 %v6701, 7
    %v6703 = vsub.s32 %v6700, %v6702
    %v6704 = vrot.slane %v6414, %v6703
    %v6706 = vunpack.c.l.s4 842150450
    %v6707 = vunpack.c.0.s8 %v6706
    %v6708 = vlaneseq
    %v6709 = vshrl.u32 %v6708, 7
    %v6710 = vsub.s32 %v6707, %v6709
    %v6711 = vrot.slane %v6414, %v6710
    %v6713 = vunpack.c.l.s4 1414812756
    %v6714 = vunpack.c.0.s8 %v6713
    %v6715 = vlaneseq
    %v6716 = vshrl.u32 %v6715, 7
    %v6717 = vsub.s32 %v6714, %v6716
    %v6718 = vrot.slane %v6414, %v6717
    %v6720 = vunpack.c.l.s4 1987475062
    %v6721 = vunpack.c.0.s8 %v6720
    %v6722 = vlaneseq
    %v6723 = vshrl.u32 %v6722, 7
    %v6724 = vsub.s32 %v6721, %v6723
    %v6725 = vrot.slane %v6414, %v6724
    %v6727 = vunpack.c.l.s4 269488144
    %v6728 = vunpack.c.0.s8 %v6727
    %v6729 = vlaneseq
    %v6730 = vshrl.u32 %v6729, 7
    %v6731 = vsub.s32 %v6728, %v6730
    %v6732 = vrot.slane %v6415, %v6731
    %v6734 = vunpack.c.l.s4 842150450
    %v6735 = vunpack.c.0.s8 %v6734
    %v6736 = vlaneseq
    %v6737 = vshrl.u32 %v6736, 7
    %v6738 = vsub.s32 %v6735, %v6737
    %v6739 = vrot.slane %v6415, %v6738
    %v6741 = vunpack.c.l.s4 1414812756
    %v6742 = vunpack.c.0.s8 %v6741
    %v6743 = vlaneseq
    %v6744 = vshrl.u32 %v6743, 7
    %v6745 = vsub.s32 %v6742, %v6744
    %v6746 = vrot.slane %v6415, %v6745
    %v6748 = vunpack.c.l.s4 1987475062
    %v6749 = vunpack.c.0.s8 %v6748
    %v6750 = vlaneseq
    %v6751 = vshrl.u32 %v6750, 7
    %v6752 = vsub.s32 %v6749, %v6751
    %v6753 = vrot.slane %v6415, %v6752
    %v6755 = vunpack.c.l.s4 269488144
    %v6756 = vunpack.c.0.s8 %v6755
    %v6757 = vlaneseq
    %v6758 = vshrl.u32 %v6757, 7
    %v6759 = vsub.s32 %v6756, %v6758
    %v6760 = vrot.slane %v6416, %v6759
    %v6762 = vunpack.c.l.s4 842150450
    %v6763 = vunpack.c.0.s8 %v6762
    %v6764 = vlaneseq
    %v6765 = vshrl.u32 %v6764, 7
    %v6766 = vsub.s32 %v6763, %v6765
    %v6767 = vrot.slane %v6416, %v6766
    %v6769 = vunpack.c.l.s4 1414812756
    %v6770 = vunpack.c.0.s8 %v6769
    %v6771 = vlaneseq
    %v6772 = vshrl.u32 %v6771, 7
    %v6773 = vsub.s32 %v6770, %v6772
    %v6774 = vrot.slane %v6416, %v6773
    %v6776 = vunpack.c.l.s4 1987475062
    %v6777 = vunpack.c.0.s8 %v6776
    %v6778 = vlaneseq
    %v6779 = vshrl.u32 %v6778, 7
    %v6780 = vsub.s32 %v6777, %v6779
    %v6781 = vrot.slane %v6416, %v6780
    %v6783 = vunpack.c.l.s4 269488144
    %v6784 = vunpack.c.0.s8 %v6783
    %v6785 = vlaneseq
    %v6786 = vshrl.u32 %v6785, 7
    %v6787 = vsub.s32 %v6784, %v6786
    %v6788 = vrot.slane %v6417, %v6787
    %v6790 = vunpack.c.l.s4 842150450
    %v6791 = vunpack.c.0.s8 %v6790
    %v6792 = vlaneseq
    %v6793 = vshrl.u32 %v6792, 7
    %v6794 = vsub.s32 %v6791, %v6793
    %v6795 = vrot.slane %v6417, %v6794
    %v6797 = vunpack.c.l.s4 1414812756
    %v6798 = vunpack.c.0.s8 %v6797
    %v6799 = vlaneseq
    %v6800 = vshrl.u32 %v6799, 7
    %v6801 = vsub.s32 %v6798, %v6800
    %v6802 = vrot.slane %v6417, %v6801
    %v6804 = vunpack.c.l.s4 1987475062
    %v6805 = vunpack.c.0.s8 %v6804
    %v6806 = vlaneseq
    %v6807 = vshrl.u32 %v6806, 7
    %v6808 = vsub.s32 %v6805, %v6807
    %v6809 = vrot.slane %v6417, %v6808
    %v6811 = vunpack.c.l.s4 269488144
    %v6812 = vunpack.c.0.s8 %v6811
    %v6813 = vlaneseq
    %v6814 = vshrl.u32 %v6813, 7
    %v6815 = vsub.s32 %v6812, %v6814
    %v6816 = vrot.slane %v6418, %v6815
    %v6818 = vunpack.c.l.s4 842150450
    %v6819 = vunpack.c.0.s8 %v6818
    %v6820 = vlaneseq
    %v6821 = vshrl.u32 %v6820, 7
    %v6822 = vsub.s32 %v6819, %v6821
    %v6823 = vrot.slane %v6418, %v6822
    %v6825 = vunpack.c.l.s4 1414812756
    %v6826 = vunpack.c.0.s8 %v6825
    %v6827 = vlaneseq
    %v6828 = vshrl.u32 %v6827, 7
    %v6829 = vsub.s32 %v6826, %v6828
    %v6830 = vrot.slane %v6418, %v6829
    %v6832 = vunpack.c.l.s4 1987475062
    %v6833 = vunpack.c.0.s8 %v6832
    %v6834 = vlaneseq
    %v6835 = vshrl.u32 %v6834, 7
    %v6836 = vsub.s32 %v6833, %v6835
    %v6837 = vrot.slane %v6418, %v6836
    %v6839 = vunpack.c.l.s4 269488144
    %v6840 = vunpack.c.0.s8 %v6839
    %v6841 = vlaneseq
    %v6842 = vshrl.u32 %v6841, 7
    %v6843 = vsub.s32 %v6840, %v6842
    %v6844 = vrot.slane %v6419, %v6843
    %v6846 = vunpack.c.l.s4 842150450
    %v6847 = vunpack.c.0.s8 %v6846
    %v6848 = vlaneseq
    %v6849 = vshrl.u32 %v6848, 7
    %v6850 = vsub.s32 %v6847, %v6849
    %v6851 = vrot.slane %v6419, %v6850
    %v6853 = vunpack.c.l.s4 1414812756
    %v6854 = vunpack.c.0.s8 %v6853
    %v6855 = vlaneseq
    %v6856 = vshrl.u32 %v6855, 7
    %v6857 = vsub.s32 %v6854, %v6856
    %v6858 = vrot.slane %v6419, %v6857
    %v6860 = vunpack.c.l.s4 1987475062
    %v6861 = vunpack.c.0.s8 %v6860
    %v6862 = vlaneseq
    %v6863 = vshrl.u32 %v6862, 7
    %v6864 = vsub.s32 %v6861, %v6863
    %v6865 = vrot.slane %v6419, %v6864
    %v6867 = vunpack.c.l.s4 269488144
    %v6868 = vunpack.c.0.s8 %v6867
    %v6869 = vlaneseq
    %v6870 = vshrl.u32 %v6869, 7
    %v6871 = vsub.s32 %v6868, %v6870
    %v6872 = vrot.slane %v6420, %v6871
    %v6874 = vunpack.c.l.s4 842150450
    %v6875 = vunpack.c.0.s8 %v6874
    %v6876 = vlaneseq
    %v6877 = vshrl.u32 %v6876, 7
    %v6878 = vsub.s32 %v6875, %v6877
    %v6879 = vrot.slane %v6420, %v6878
    %v6881 = vunpack.c.l.s4 1414812756
    %v6882 = vunpack.c.0.s8 %v6881
    %v6883 = vlaneseq
    %v6884 = vshrl.u32 %v6883, 7
    %v6885 = vsub.s32 %v6882, %v6884
    %v6886 = vrot.slane %v6420, %v6885
    %v6888 = vunpack.c.l.s4 1987475062
    %v6889 = vunpack.c.0.s8 %v6888
    %v6890 = vlaneseq
    %v6891 = vshrl.u32 %v6890, 7
    %v6892 = vsub.s32 %v6889, %v6891
    %v6893 = vrot.slane %v6420, %v6892
    %v6895 = vunpack.c.l.s4 269488144
    %v6896 = vunpack.c.0.s8 %v6895
    %v6897 = vlaneseq
    %v6898 = vshrl.u32 %v6897, 7
    %v6899 = vsub.s32 %v6896, %v6898
    %v6900 = vrot.slane %v6421, %v6899
    %v6902 = vunpack.c.l.s4 842150450
    %v6903 = vunpack.c.0.s8 %v6902
    %v6904 = vlaneseq
    %v6905 = vshrl.u32 %v6904, 7
    %v6906 = vsub.s32 %v6903, %v6905
    %v6907 = vrot.slane %v6421, %v6906
    %v6909 = vunpack.c.l.s4 1414812756
    %v6910 = vunpack.c.0.s8 %v6909
    %v6911 = vlaneseq
    %v6912 = vshrl.u32 %v6911, 7
    %v6913 = vsub.s32 %v6910, %v6912
    %v6914 = vrot.slane %v6421, %v6913
    %v6916 = vunpack.c.l.s4 1987475062
    %v6917 = vunpack.c.0.s8 %v6916
    %v6918 = vlaneseq
    %v6919 = vshrl.u32 %v6918, 7
    %v6920 = vsub.s32 %v6917, %v6919
    %v6921 = vrot.slane %v6421, %v6920
    %v6923 = vunpack.c.l.s4 269488144
    %v6924 = vunpack.c.0.s8 %v6923
    %v6925 = vlaneseq
    %v6926 = vshrl.u32 %v6925, 7
    %v6927 = vsub.s32 %v6924, %v6926
    %v6928 = vrot.slane %v6422, %v6927
    %v6930 = vunpack.c.l.s4 269488144
    %v6931 = vunpack.c.0.s8 %v6930
    %v6932 = vlaneseq
    %v6933 = vshrl.u32 %v6932, 7
    %v6934 = vsub.s32 %v6931, %v6933
    %v6935 = vrot.slane %v6423, %v6934
    %v6937 = vunpack.c.l.s4 842150450
    %v6938 = vunpack.c.0.s8 %v6937
    %v6939 = vlaneseq
    %v6940 = vshrl.u32 %v6939, 7
    %v6941 = vsub.s32 %v6938, %v6940
    %v6942 = vrot.slane %v6423, %v6941
    %v6944 = vunpack.c.l.s4 1414812756
    %v6945 = vunpack.c.0.s8 %v6944
    %v6946 = vlaneseq
    %v6947 = vshrl.u32 %v6946, 7
    %v6948 = vsub.s32 %v6945, %v6947
    %v6949 = vrot.slane %v6423, %v6948
    %v6951 = vunpack.c.l.s4 1987475062
    %v6952 = vunpack.c.0.s8 %v6951
    %v6953 = vlaneseq
    %v6954 = vshrl.u32 %v6953, 7
    %v6955 = vsub.s32 %v6952, %v6954
    %v6956 = vrot.slane %v6423, %v6955
    %v6958 = vunpack.c.l.s4 269488144
    %v6959 = vunpack.c.0.s8 %v6958
    %v6960 = vlaneseq
    %v6961 = vshrl.u32 %v6960, 7
    %v6962 = vsub.s32 %v6959, %v6961
    %v6963 = vrot.slane %v6424, %v6962
    %v6965 = vunpack.c.l.s4 842150450
    %v6966 = vunpack.c.0.s8 %v6965
    %v6967 = vlaneseq
    %v6968 = vshrl.u32 %v6967, 7
    %v6969 = vsub.s32 %v6966, %v6968
    %v6970 = vrot.slane %v6424, %v6969
    %v6972 = vunpack.c.l.s4 1414812756
    %v6973 = vunpack.c.0.s8 %v6972
    %v6974 = vlaneseq
    %v6975 = vshrl.u32 %v6974, 7
    %v6976 = vsub.s32 %v6973, %v6975
    %v6977 = vrot.slane %v6424, %v6976
    %v6979 = vunpack.c.l.s4 1987475062
    %v6980 = vunpack.c.0.s8 %v6979
    %v6981 = vlaneseq
    %v6982 = vshrl.u32 %v6981, 7
    %v6983 = vsub.s32 %v6980, %v6982
    %v6984 = vrot.slane %v6424, %v6983
    %v6986 = vunpack.c.l.s4 269488144
    %v6987 = vunpack.c.0.s8 %v6986
    %v6988 = vlaneseq
    %v6989 = vshrl.u32 %v6988, 7
    %v6990 = vsub.s32 %v6987, %v6989
    %v6991 = vrot.slane %v6425, %v6990
    %v6993 = vunpack.c.l.s4 842150450
    %v6994 = vunpack.c.0.s8 %v6993
    %v6995 = vlaneseq
    %v6996 = vshrl.u32 %v6995, 7
    %v6997 = vsub.s32 %v6994, %v6996
    %v6998 = vrot.slane %v6425, %v6997
    %v7000 = vunpack.c.l.s4 1414812756
    %v7001 = vunpack.c.0.s8 %v7000
    %v7002 = vlaneseq
    %v7003 = vshrl.u32 %v7002, 7
    %v7004 = vsub.s32 %v7001, %v7003
    %v7005 = vrot.slane %v6425, %v7004
    %v7007 = vunpack.c.l.s4 1987475062
    %v7008 = vunpack.c.0.s8 %v7007
    %v7009 = vlaneseq
    %v7010 = vshrl.u32 %v7009, 7
    %v7011 = vsub.s32 %v7008, %v7010
    %v7012 = vrot.slane %v6425, %v7011
    %v7014 = vunpack.c.l.s4 269488144
    %v7015 = vunpack.c.0.s8 %v7014
    %v7016 = vlaneseq
    %v7017 = vshrl.u32 %v7016, 7
    %v7018 = vsub.s32 %v7015, %v7017
    %v7019 = vrot.slane %v6426, %v7018
    %v7021 = vunpack.c.l.s4 842150450
    %v7022 = vunpack.c.0.s8 %v7021
    %v7023 = vlaneseq
    %v7024 = vshrl.u32 %v7023, 7
    %v7025 = vsub.s32 %v7022, %v7024
    %v7026 = vrot.slane %v6426, %v7025
    %v7028 = vunpack.c.l.s4 1414812756
    %v7029 = vunpack.c.0.s8 %v7028
    %v7030 = vlaneseq
    %v7031 = vshrl.u32 %v7030, 7
    %v7032 = vsub.s32 %v7029, %v7031
    %v7033 = vrot.slane %v6426, %v7032
    %v7035 = vunpack.c.l.s4 1987475062
    %v7036 = vunpack.c.0.s8 %v7035
    %v7037 = vlaneseq
    %v7038 = vshrl.u32 %v7037, 7
    %v7039 = vsub.s32 %v7036, %v7038
    %v7040 = vrot.slane %v6426, %v7039
    %v7042 = vunpack.c.l.s4 269488144
    %v7043 = vunpack.c.0.s8 %v7042
    %v7044 = vlaneseq
    %v7045 = vshrl.u32 %v7044, 7
    %v7046 = vsub.s32 %v7043, %v7045
    %v7047 = vrot.slane %v6427, %v7046
    %v7049 = vunpack.c.l.s4 842150450
    %v7050 = vunpack.c.0.s8 %v7049
    %v7051 = vlaneseq
    %v7052 = vshrl.u32 %v7051, 7
    %v7053 = vsub.s32 %v7050, %v7052
    %v7054 = vrot.slane %v6427, %v7053
    %v7056 = vunpack.c.l.s4 1414812756
    %v7057 = vunpack.c.0.s8 %v7056
    %v7058 = vlaneseq
    %v7059 = vshrl.u32 %v7058, 7
    %v7060 = vsub.s32 %v7057, %v7059
    %v7061 = vrot.slane %v6427, %v7060
    %v7063 = vunpack.c.l.s4 1987475062
    %v7064 = vunpack.c.0.s8 %v7063
    %v7065 = vlaneseq
    %v7066 = vshrl.u32 %v7065, 7
    %v7067 = vsub.s32 %v7064, %v7066
    %v7068 = vrot.slane %v6427, %v7067
    %v7070 = vunpack.c.l.s4 269488144
    %v7071 = vunpack.c.0.s8 %v7070
    %v7072 = vlaneseq
    %v7073 = vshrl.u32 %v7072, 7
    %v7074 = vsub.s32 %v7071, %v7073
    %v7075 = vrot.slane %v6428, %v7074
    %v7077 = vunpack.c.l.s4 842150450
    %v7078 = vunpack.c.0.s8 %v7077
    %v7079 = vlaneseq
    %v7080 = vshrl.u32 %v7079, 7
    %v7081 = vsub.s32 %v7078, %v7080
    %v7082 = vrot.slane %v6428, %v7081
    %v7084 = vunpack.c.l.s4 1414812756
    %v7085 = vunpack.c.0.s8 %v7084
    %v7086 = vlaneseq
    %v7087 = vshrl.u32 %v7086, 7
    %v7088 = vsub.s32 %v7085, %v7087
    %v7089 = vrot.slane %v6428, %v7088
    %v7091 = vunpack.c.l.s4 1987475062
    %v7092 = vunpack.c.0.s8 %v7091
    %v7093 = vlaneseq
    %v7094 = vshrl.u32 %v7093, 7
    %v7095 = vsub.s32 %v7092, %v7094
    %v7096 = vrot.slane %v6428, %v7095
    %v7098 = vunpack.c.l.s4 269488144
    %v7099 = vunpack.c.0.s8 %v7098
    %v7100 = vlaneseq
    %v7101 = vshrl.u32 %v7100, 7
    %v7102 = vsub.s32 %v7099, %v7101
    %v7103 = vrot.slane %v6429, %v7102
    %v7105 = vunpack.c.l.s4 842150450
    %v7106 = vunpack.c.0.s8 %v7105
    %v7107 = vlaneseq
    %v7108 = vshrl.u32 %v7107, 7
    %v7109 = vsub.s32 %v7106, %v7108
    %v7110 = vrot.slane %v6429, %v7109
    %v7112 = vunpack.c.l.s4 1414812756
    %v7113 = vunpack.c.0.s8 %v7112
    %v7114 = vlaneseq
    %v7115 = vshrl.u32 %v7114, 7
    %v7116 = vsub.s32 %v7113, %v7115
    %v7117 = vrot.slane %v6429, %v7116
    %v7119 = vunpack.c.l.s4 1987475062
    %v7120 = vunpack.c.0.s8 %v7119
    %v7121 = vlaneseq
    %v7122 = vshrl.u32 %v7121, 7
    %v7123 = vsub.s32 %v7120, %v7122
    %v7124 = vrot.slane %v6429, %v7123
    %v7126 = vunpack.c.l.s4 269488144
    %v7127 = vunpack.c.0.s8 %v7126
    %v7128 = vlaneseq
    %v7129 = vshrl.u32 %v7128, 7
    %v7130 = vsub.s32 %v7127, %v7129
    %v7131 = vrot.slane %v6430, %v7130
    %v7133 = vunpack.c.l.s4 842150450
    %v7134 = vunpack.c.0.s8 %v7133
    %v7135 = vlaneseq
    %v7136 = vshrl.u32 %v7135, 7
    %v7137 = vsub.s32 %v7134, %v7136
    %v7138 = vrot.slane %v6430, %v7137
    %v7140 = vunpack.c.l.s4 1414812756
    %v7141 = vunpack.c.0.s8 %v7140
    %v7142 = vlaneseq
    %v7143 = vshrl.u32 %v7142, 7
    %v7144 = vsub.s32 %v7141, %v7143
    %v7145 = vrot.slane %v6430, %v7144
    %v7147 = vunpack.c.l.s4 1987475062
    %v7148 = vunpack.c.0.s8 %v7147
    %v7149 = vlaneseq
    %v7150 = vshrl.u32 %v7149, 7
    %v7151 = vsub.s32 %v7148, %v7150
    %v7152 = vrot.slane %v6430, %v7151
    %v7154 = vunpack.c.l.s4 269488144
    %v7155 = vunpack.c.0.s8 %v7154
    %v7156 = vlaneseq
    %v7157 = vshrl.u32 %v7156, 7
    %v7158 = vsub.s32 %v7155, %v7157
    %v7159 = vrot.slane %v6431, %v7158
    %v7161 = vunpack.c.l.s4 842150450
    %v7162 = vunpack.c.0.s8 %v7161
    %v7163 = vlaneseq
    %v7164 = vshrl.u32 %v7163, 7
    %v7165 = vsub.s32 %v7162, %v7164
    %v7166 = vrot.slane %v6431, %v7165
    %v7168 = vunpack.c.l.s4 1414812756
    %v7169 = vunpack.c.0.s8 %v7168
    %v7170 = vlaneseq
    %v7171 = vshrl.u32 %v7170, 7
    %v7172 = vsub.s32 %v7169, %v7171
    %v7173 = vrot.slane %v6431, %v7172
    %v7175 = vunpack.c.l.s4 1987475062
    %v7176 = vunpack.c.0.s8 %v7175
    %v7177 = vlaneseq
    %v7178 = vshrl.u32 %v7177, 7
    %v7179 = vsub.s32 %v7176, %v7178
    %v7180 = vrot.slane %v6431, %v7179
    %v7182 = vunpack.c.l.s4 269488144
    %v7183 = vunpack.c.0.s8 %v7182
    %v7184 = vlaneseq
    %v7185 = vshrl.u32 %v7184, 7
    %v7186 = vsub.s32 %v7183, %v7185
    %v7187 = vrot.slane %v6432, %v7186
    %v7189 = vunpack.c.l.s4 842150450
    %v7190 = vunpack.c.0.s8 %v7189
    %v7191 = vlaneseq
    %v7192 = vshrl.u32 %v7191, 7
    %v7193 = vsub.s32 %v7190, %v7192
    %v7194 = vrot.slane %v6432, %v7193
    %v7196 = vunpack.c.l.s4 1414812756
    %v7197 = vunpack.c.0.s8 %v7196
    %v7198 = vlaneseq
    %v7199 = vshrl.u32 %v7198, 7
    %v7200 = vsub.s32 %v7197, %v7199
    %v7201 = vrot.slane %v6432, %v7200
    %v7203 = vunpack.c.l.s4 1987475062
    %v7204 = vunpack.c.0.s8 %v7203
    %v7205 = vlaneseq
    %v7206 = vshrl.u32 %v7205, 7
    %v7207 = vsub.s32 %v7204, %v7206
    %v7208 = vrot.slane %v6432, %v7207
    %v7210 = vunpack.c.l.s4 269488144
    %v7211 = vunpack.c.0.s8 %v7210
    %v7212 = vlaneseq
    %v7213 = vshrl.u32 %v7212, 7
    %v7214 = vsub.s32 %v7211, %v7213
    %v7215 = vrot.slane %v6433, %v7214
    %v7217 = vunpack.c.l.s4 842150450
    %v7218 = vunpack.c.0.s8 %v7217
    %v7219 = vlaneseq
    %v7220 = vshrl.u32 %v7219, 7
    %v7221 = vsub.s32 %v7218, %v7220
    %v7222 = vrot.slane %v6433, %v7221
    %v7224 = vunpack.c.l.s4 1414812756
    %v7225 = vunpack.c.0.s8 %v7224
    %v7226 = vlaneseq
    %v7227 = vshrl.u32 %v7226, 7
    %v7228 = vsub.s32 %v7225, %v7227
    %v7229 = vrot.slane %v6433, %v7228
    %v7231 = vunpack.c.l.s4 1987475062
    %v7232 = vunpack.c.0.s8 %v7231
    %v7233 = vlaneseq
    %v7234 = vshrl.u32 %v7233, 7
    %v7235 = vsub.s32 %v7232, %v7234
    %v7236 = vrot.slane %v6433, %v7235
    %v7238 = vunpack.c.l.s4 269488144
    %v7239 = vunpack.c.0.s8 %v7238
    %v7240 = vlaneseq
    %v7241 = vshrl.u32 %v7240, 7
    %v7242 = vsub.s32 %v7239, %v7241
    %v7243 = vrot.slane %v6434, %v7242
    %v7245 = vunpack.c.l.s4 842150450
    %v7246 = vunpack.c.0.s8 %v7245
    %v7247 = vlaneseq
    %v7248 = vshrl.u32 %v7247, 7
    %v7249 = vsub.s32 %v7246, %v7248
    %v7250 = vrot.slane %v6434, %v7249
    %v7252 = vunpack.c.l.s4 1414812756
    %v7253 = vunpack.c.0.s8 %v7252
    %v7254 = vlaneseq
    %v7255 = vshrl.u32 %v7254, 7
    %v7256 = vsub.s32 %v7253, %v7255
    %v7257 = vrot.slane %v6434, %v7256
    %v7259 = vunpack.c.l.s4 1987475062
    %v7260 = vunpack.c.0.s8 %v7259
    %v7261 = vlaneseq
    %v7262 = vshrl.u32 %v7261, 7
    %v7263 = vsub.s32 %v7260, %v7262
    %v7264 = vrot.slane %v6434, %v7263
    %v7266 = vunpack.c.l.s4 269488144
    %v7267 = vunpack.c.0.s8 %v7266
    %v7268 = vlaneseq
    %v7269 = vshrl.u32 %v7268, 7
    %v7270 = vsub.s32 %v7267, %v7269
    %v7271 = vrot.slane %v6435, %v7270
    %v7273 = vunpack.c.l.s4 842150450
    %v7274 = vunpack.c.0.s8 %v7273
    %v7275 = vlaneseq
    %v7276 = vshrl.u32 %v7275, 7
    %v7277 = vsub.s32 %v7274, %v7276
    %v7278 = vrot.slane %v6435, %v7277
    %v7280 = vunpack.c.l.s4 1414812756
    %v7281 = vunpack.c.0.s8 %v7280
    %v7282 = vlaneseq
    %v7283 = vshrl.u32 %v7282, 7
    %v7284 = vsub.s32 %v7281, %v7283
    %v7285 = vrot.slane %v6435, %v7284
    %v7287 = vunpack.c.l.s4 1987475062
    %v7288 = vunpack.c.0.s8 %v7287
    %v7289 = vlaneseq
    %v7290 = vshrl.u32 %v7289, 7
    %v7291 = vsub.s32 %v7288, %v7290
    %v7292 = vrot.slane %v6435, %v7291
    %v7294 = vunpack.c.l.s4 269488144
    %v7295 = vunpack.c.0.s8 %v7294
    %v7296 = vlaneseq
    %v7297 = vshrl.u32 %v7296, 7
    %v7298 = vsub.s32 %v7295, %v7297
    %v7299 = vrot.slane %v6436, %v7298
    %v7301 = vunpack.c.l.s4 842150450
    %v7302 = vunpack.c.0.s8 %v7301
    %v7303 = vlaneseq
    %v7304 = vshrl.u32 %v7303, 7
    %v7305 = vsub.s32 %v7302, %v7304
    %v7306 = vrot.slane %v6436, %v7305
    %v7308 = vunpack.c.l.s4 1414812756
    %v7309 = vunpack.c.0.s8 %v7308
    %v7310 = vlaneseq
    %v7311 = vshrl.u32 %v7310, 7
    %v7312 = vsub.s32 %v7309, %v7311
    %v7313 = vrot.slane %v6436, %v7312
    %v7315 = vunpack.c.l.s4 1987475062
    %v7316 = vunpack.c.0.s8 %v7315
    %v7317 = vlaneseq
    %v7318 = vshrl.u32 %v7317, 7
    %v7319 = vsub.s32 %v7316, %v7318
    %v7320 = vrot.slane %v6436, %v7319
    %v7322 = vunpack.c.l.s4 269488144
    %v7323 = vunpack.c.0.s8 %v7322
    %v7324 = vlaneseq
    %v7325 = vshrl.u32 %v7324, 7
    %v7326 = vsub.s32 %v7323, %v7325
    %v7327 = vrot.slane %v6437, %v7326
    %v7329 = vunpack.c.l.s4 842150450
    %v7330 = vunpack.c.0.s8 %v7329
    %v7331 = vlaneseq
    %v7332 = vshrl.u32 %v7331, 7
    %v7333 = vsub.s32 %v7330, %v7332
    %v7334 = vrot.slane %v6437, %v7333
    %v7336 = vunpack.c.l.s4 1414812756
    %v7337 = vunpack.c.0.s8 %v7336
    %v7338 = vlaneseq
    %v7339 = vshrl.u32 %v7338, 7
    %v7340 = vsub.s32 %v7337, %v7339
    %v7341 = vrot.slane %v6437, %v7340
    %v7343 = vunpack.c.l.s4 1987475062
    %v7344 = vunpack.c.0.s8 %v7343
    %v7345 = vlaneseq
    %v7346 = vshrl.u32 %v7345, 7
    %v7347 = vsub.s32 %v7344, %v7346
    %v7348 = vrot.slane %v6437, %v7347
    %v7350 = vunpack.c.l.s4 269488144
    %v7351 = vunpack.c.0.s8 %v7350
    %v7352 = vlaneseq
    %v7353 = vshrl.u32 %v7352, 7
    %v7354 = vsub.s32 %v7351, %v7353
    %v7355 = vrot.slane %v6438, %v7354
    %v7357 = vunpack.c.l.s4 842150450
    %v7358 = vunpack.c.0.s8 %v7357
    %v7359 = vlaneseq
    %v7360 = vshrl.u32 %v7359, 7
    %v7361 = vsub.s32 %v7358, %v7360
    %v7362 = vrot.slane %v6438, %v7361
    %v7364 = vunpack.c.l.s4 1414812756
    %v7365 = vunpack.c.0.s8 %v7364
    %v7366 = vlaneseq
    %v7367 = vshrl.u32 %v7366, 7
    %v7368 = vsub.s32 %v7365, %v7367
    %v7369 = vrot.slane %v6438, %v7368
    %v7371 = vunpack.c.l.s4 1987475062
    %v7372 = vunpack.c.0.s8 %v7371
    %v7373 = vlaneseq
    %v7374 = vshrl.u32 %v7373, 7
    %v7375 = vsub.s32 %v7372, %v7374
    %v7376 = vrot.slane %v6438, %v7375
    %v7378 = vunpack.c.l.s4 269488144
    %v7379 = vunpack.c.0.s8 %v7378
    %v7380 = vlaneseq
    %v7381 = vshrl.u32 %v7380, 7
    %v7382 = vsub.s32 %v7379, %v7381
    %v7383 = vrot.slane %v6439, %v7382
    %v7514 = vmul.f32 %v5254, %v6480
    %v7515 = vmul.f32 %v5255, %v6487
    %v7516 = vmul.f32 %v5256, %v6494
    %v7517 = vmul.f32 %v5257, %v6501
    %v7518 = vmul.f32 %v5258, %v6508
    %v7519 = vmul.f32 %v5259, %v6515
    %v7520 = vmul.f32 %v5260, %v6522
    %v7521 = vmul.f32 %v5261, %v6529
    %v7522 = vmul.f32 %v5262, %v6536
    %v7523 = vmul.f32 %v5263, %v6543
    %v7524 = vmul.f32 %v5264, %v6550
    %v7525 = vmul.f32 %v5265, %v6557
    %v7526 = vmul.f32 %v5266, %v6564
    %v7527 = vmul.f32 %v5267, %v6571
    %v7528 = vmul.f32 %v5268, %v6578
    %v7529 = vmul.f32 %v5269, %v6585
    %v7530 = vmul.f32 %v5270, %v6592
    %v7531 = vmul.f32 %v5271, %v6599
    %v7532 = vmul.f32 %v5272, %v6606
    %v7533 = vmul.f32 %v5273, %v6613
    %v7534 = vmul.f32 %v5274, %v6620
    %v7535 = vmul.f32 %v5275, %v6627
    %v7536 = vmul.f32 %v5276, %v6634
    %v7537 = vmul.f32 %v5277, %v6641
    %v7538 = vmul.f32 %v5278, %v6648
    %v7539 = vmul.f32 %v5279, %v6655
    %v7540 = vmul.f32 %v5280, %v6662
    %v7541 = vmul.f32 %v5281, %v6669
    %v7542 = vmul.f32 %v5282, %v6676
    %v7543 = vmul.f32 %v5283, %v6683
    %v7544 = vmul.f32 %v5284, %v6690
    %v7545 = vmul.f32 %v5285, %v6697
    %v7546 = vmul.f32 %v5286, %v6704
    %v7547 = vmul.f32 %v5287, %v6711
    %v7548 = vmul.f32 %v5288, %v6718
    %v7549 = vmul.f32 %v5289, %v6725
    %v7550 = vmul.f32 %v5290, %v6732
    %v7551 = vmul.f32 %v5291, %v6739
    %v7552 = vmul.f32 %v5292, %v6746
    %v7553 = vmul.f32 %v5293, %v6753
    %v7554 = vmul.f32 %v5294, %v6760
    %v7555 = vmul.f32 %v5295, %v6767
    %v7556 = vmul.f32 %v5296, %v6774
    %v7557 = vmul.f32 %v5297, %v6781
    %v7558 = vmul.f32 %v5298, %v6788
    %v7559 = vmul.f32 %v5299, %v6795
    %v7560 = vmul.f32 %v5300, %v6802
    %v7561 = vmul.f32 %v5301, %v6809
    %v7562 = vmul.f32 %v5302, %v6816
    %v7563 = vmul.f32 %v5303, %v6823
    %v7564 = vmul.f32 %v5304, %v6830
    %v7565 = vmul.f32 %v5305, %v6837
    %v7566 = vmul.f32 %v5306, %v6844
    %v7567 = vmul.f32 %v5307, %v6851
    %v7568 = vmul.f32 %v5308, %v6858
    %v7569 = vmul.f32 %v5309, %v6865
    %v7570 = vmul.f32 %v5310, %v6872
    %v7571 = vmul.f32 %v5311, %v6879
    %v7572 = vmul.f32 %v5312, %v6886
    %v7573 = vmul.f32 %v5313, %v6893
    %v7574 = vmul.f32 %v5314, %v6900
    %v7575 = vmul.f32 %v5315, %v6907
    %v7576 = vmul.f32 %v5316, %v6914
    %v7577 = vmul.f32 %v5317, %v6921
    %v7578 = vmul.f32 %v5318, %v6928
    %v7579 = vmul.f32 %v5319, %v6935
    %v7580 = vmul.f32 %v5320, %v6942
    %v7581 = vmul.f32 %v5321, %v6949
    %v7582 = vmul.f32 %v5322, %v6956
    %v7583 = vmul.f32 %v5323, %v6963
    %v7584 = vmul.f32 %v5324, %v6970
    %v7585 = vmul.f32 %v5325, %v6977
    %v7586 = vmul.f32 %v5326, %v6984
    %v7587 = vmul.f32 %v5327, %v6991
    %v7588 = vmul.f32 %v5328, %v6998
    %v7589 = vmul.f32 %v5329, %v7005
    %v7590 = vmul.f32 %v5330, %v7012
    %v7591 = vmul.f32 %v5331, %v7019
    %v7592 = vmul.f32 %v5332, %v7026
    %v7593 = vmul.f32 %v5333, %v7033
    %v7594 = vmul.f32 %v5334, %v7040
    %v7595 = vmul.f32 %v5335, %v7047
    %v7596 = vmul.f32 %v5336, %v7054
    %v7597 = vmul.f32 %v5337, %v7061
    %v7598 = vmul.f32 %v5338, %v7068
    %v7599 = vmul.f32 %v5339, %v7075
    %v7600 = vmul.f32 %v5340, %v7082
    %v7601 = vmul.f32 %v5341, %v7089
    %v7602 = vmul.f32 %v5342, %v7096
    %v7603 = vmul.f32 %v5343, %v7103
    %v7604 = vmul.f32 %v5344, %v7110
    %v7605 = vmul.f32 %v5345, %v7117
    %v7606 = vmul.f32 %v5346, %v7124
    %v7607 = vmul.f32 %v5347, %v7131
    %v7608 = vmul.f32 %v5348, %v7138
    %v7609 = vmul.f32 %v5349, %v7145
    %v7610 = vmul.f32 %v5350, %v7152
    %v7611 = vmul.f32 %v5351, %v7159
    %v7612 = vmul.f32 %v5352, %v7166
    %v7613 = vmul.f32 %v5353, %v7173
    %v7614 = vmul.f32 %v5354, %v7180
    %v7615 = vmul.f32 %v5355, %v7187
    %v7616 = vmul.f32 %v5356, %v7194
    %v7617 = vmul.f32 %v5357, %v7201
    %v7618 = vmul.f32 %v5358, %v7208
    %v7619 = vmul.f32 %v5359, %v7215
    %v7620 = vmul.f32 %v5360, %v7222
    %v7621 = vmul.f32 %v5361, %v7229
    %v7622 = vmul.f32 %v5362, %v7236
    %v7623 = vmul.f32 %v5363, %v7243
    %v7624 = vmul.f32 %v5364, %v7250
    %v7625 = vmul.f32 %v5365, %v7257
    %v7626 = vmul.f32 %v5366, %v7264
    %v7627 = vmul.f32 %v5367, %v7271
    %v7628 = vmul.f32 %v5368, %v7278
    %v7629 = vmul.f32 %v5369, %v7285
    %v7630 = vmul.f32 %v5370, %v7292
    %v7631 = vmul.f32 %v5371, %v7299
    %v7632 = vmul.f32 %v5372, %v7306
    %v7633 = vmul.f32 %v5373, %v7313
    %v7634 = vmul.f32 %v5374, %v7320
    %v7635 = vmul.f32 %v5375, %v7327
    %v7636 = vmul.f32 %v5376, %v7334
    %v7637 = vmul.f32 %v5377, %v7341
    %v7638 = vmul.f32 %v5378, %v7348
    %v7639 = vmul.f32 %v5379, %v7355
    %v7640 = vmul.f32 %v5380, %v7362
    %v7641 = vmul.f32 %v5381, %v7369
    %v7642 = vmul.f32 %v5382, %v7376
    %v7643 = vmul.f32 %v5383, %v7383
    %v7645 = vlaneseq
    %v7646 = vshrl.u32 %v7645, 7
    %v7647 = vsub.s32 0, %v7646
    %v7648 = vrot.slane %v3318, %v7647
    %v7649 = vcombine.high %v7648, %v7648
    %v7651 = vunpack.c.l.s4 1983009808
    %v7652 = vunpack.c.0.s8 %v7651
    %v7653 = vlaneseq
    %v7654 = vshrl.u32 %v7653, 7
    %v7655 = vsub.s32 %v7652, %v7654
    %v7656 = vrot.slane %v7648, %v7655
    %v7658 = vunpack.c.l.s4 1983009808
    %v7659 = vunpack.c.0.s8 %v7658
    %v7660 = vlaneseq
    %v7661 = vshrl.u32 %v7660, 7
    %v7662 = vsub.s32 %v7659, %v7661
    %v7663 = vrot.slane %v7649, %v7662
    %v7664 = vcombine.high %v7656, %v7656
    %v7665 = vcombine.high %v7663, %v7663
    %v7670 = vmul.f32 %v7514, %v7656
    %v7671 = vmul.f32 %v7515, %v7664
    %v7672 = vmul.f32 %v7516, %v7663
    %v7673 = vmul.f32 %v7517, %v7665
    %v7674 = vmul.f32 %v7518, %v7656
    %v7675 = vmul.f32 %v7519, %v7664
    %v7676 = vmul.f32 %v7520, %v7663
    %v7677 = vmul.f32 %v7521, %v7665
    %v7678 = vmul.f32 %v7522, %v7656
    %v7679 = vmul.f32 %v7523, %v7664
    %v7680 = vmul.f32 %v7524, %v7663
    %v7681 = vmul.f32 %v7525, %v7665
    %v7682 = vmul.f32 %v7526, %v7656
    %v7683 = vmul.f32 %v7527, %v7664
    %v7684 = vmul.f32 %v7528, %v7663
    %v7685 = vmul.f32 %v7529, %v7665
    %v7686 = vmul.f32 %v7530, %v7656
    %v7687 = vmul.f32 %v7531, %v7664
    %v7688 = vmul.f32 %v7532, %v7663
    %v7689 = vmul.f32 %v7533, %v7665
    %v7690 = vmul.f32 %v7534, %v7656
    %v7691 = vmul.f32 %v7535, %v7664
    %v7692 = vmul.f32 %v7536, %v7663
    %v7693 = vmul.f32 %v7537, %v7665
    %v7694 = vmul.f32 %v7538, %v7656
    %v7695 = vmul.f32 %v7539, %v7664
    %v7696 = vmul.f32 %v7540, %v7663
    %v7697 = vmul.f32 %v7541, %v7665
    %v7698 = vmul.f32 %v7542, %v7656
    %v7699 = vmul.f32 %v7543, %v7664
    %v7700 = vmul.f32 %v7544, %v7663
    %v7701 = vmul.f32 %v7545, %v7665
    %v7702 = vmul.f32 %v7546, %v7656
    %v7703 = vmul.f32 %v7547, %v7664
    %v7704 = vmul.f32 %v7548, %v7663
    %v7705 = vmul.f32 %v7549, %v7665
    %v7706 = vmul.f32 %v7550, %v7656
    %v7707 = vmul.f32 %v7551, %v7664
    %v7708 = vmul.f32 %v7552, %v7663
    %v7709 = vmul.f32 %v7553, %v7665
    %v7710 = vmul.f32 %v7554, %v7656
    %v7711 = vmul.f32 %v7555, %v7664
    %v7712 = vmul.f32 %v7556, %v7663
    %v7713 = vmul.f32 %v7557, %v7665
    %v7714 = vmul.f32 %v7558, %v7656
    %v7715 = vmul.f32 %v7559, %v7664
    %v7716 = vmul.f32 %v7560, %v7663
    %v7717 = vmul.f32 %v7561, %v7665
    %v7718 = vmul.f32 %v7562, %v7656
    %v7719 = vmul.f32 %v7563, %v7664
    %v7720 = vmul.f32 %v7564, %v7663
    %v7721 = vmul.f32 %v7565, %v7665
    %v7722 = vmul.f32 %v7566, %v7656
    %v7723 = vmul.f32 %v7567, %v7664
    %v7724 = vmul.f32 %v7568, %v7663
    %v7725 = vmul.f32 %v7569, %v7665
    %v7726 = vmul.f32 %v7570, %v7656
    %v7727 = vmul.f32 %v7571, %v7664
    %v7728 = vmul.f32 %v7572, %v7663
    %v7729 = vmul.f32 %v7573, %v7665
    %v7730 = vmul.f32 %v7574, %v7656
    %v7731 = vmul.f32 %v7575, %v7664
    %v7732 = vmul.f32 %v7576, %v7663
    %v7733 = vmul.f32 %v7577, %v7665
    %v7734 = vmul.f32 %v7578, %v7656
    %v7735 = vmul.f32 %v7579, %v7656
    %v7736 = vmul.f32 %v7580, %v7664
    %v7737 = vmul.f32 %v7581, %v7663
    %v7738 = vmul.f32 %v7582, %v7665
    %v7739 = vmul.f32 %v7583, %v7656
    %v7740 = vmul.f32 %v7584, %v7664
    %v7741 = vmul.f32 %v7585, %v7663
    %v7742 = vmul.f32 %v7586, %v7665
    %v7743 = vmul.f32 %v7587, %v7656
    %v7744 = vmul.f32 %v7588, %v7664
    %v7745 = vmul.f32 %v7589, %v7663
    %v7746 = vmul.f32 %v7590, %v7665
    %v7747 = vmul.f32 %v7591, %v7656
    %v7748 = vmul.f32 %v7592, %v7664
    %v7749 = vmul.f32 %v7593, %v7663
    %v7750 = vmul.f32 %v7594, %v7665
    %v7751 = vmul.f32 %v7595, %v7656
    %v7752 = vmul.f32 %v7596, %v7664
    %v7753 = vmul.f32 %v7597, %v7663
    %v7754 = vmul.f32 %v7598, %v7665
    %v7755 = vmul.f32 %v7599, %v7656
    %v7756 = vmul.f32 %v7600, %v7664
    %v7757 = vmul.f32 %v7601, %v7663
    %v7758 = vmul.f32 %v7602, %v7665
    %v7759 = vmul.f32 %v7603, %v7656
    %v7760 = vmul.f32 %v7604, %v7664
    %v7761 = vmul.f32 %v7605, %v7663
    %v7762 = vmul.f32 %v7606, %v7665
    %v7763 = vmul.f32 %v7607, %v7656
    %v7764 = vmul.f32 %v7608, %v7664
    %v7765 = vmul.f32 %v7609, %v7663
    %v7766 = vmul.f32 %v7610, %v7665
    %v7767 = vmul.f32 %v7611, %v7656
    %v7768 = vmul.f32 %v7612, %v7664
    %v7769 = vmul.f32 %v7613, %v7663
    %v7770 = vmul.f32 %v7614, %v7665
    %v7771 = vmul.f32 %v7615, %v7656
    %v7772 = vmul.f32 %v7616, %v7664
    %v7773 = vmul.f32 %v7617, %v7663
    %v7774 = vmul.f32 %v7618, %v7665
    %v7775 = vmul.f32 %v7619, %v7656
    %v7776 = vmul.f32 %v7620, %v7664
    %v7777 = vmul.f32 %v7621, %v7663
    %v7778 = vmul.f32 %v7622, %v7665
    %v7779 = vmul.f32 %v7623, %v7656
    %v7780 = vmul.f32 %v7624, %v7664
    %v7781 = vmul.f32 %v7625, %v7663
    %v7782 = vmul.f32 %v7626, %v7665
    %v7783 = vmul.f32 %v7627, %v7656
    %v7784 = vmul.f32 %v7628, %v7664
    %v7785 = vmul.f32 %v7629, %v7663
    %v7786 = vmul.f32 %v7630, %v7665
    %v7787 = vmul.f32 %v7631, %v7656
    %v7788 = vmul.f32 %v7632, %v7664
    %v7789 = vmul.f32 %v7633, %v7663
    %v7790 = vmul.f32 %v7634, %v7665
    %v7791 = vmul.f32 %v7635, %v7656
    %v7792 = vmul.f32 %v7636, %v7664
    %v7793 = vmul.f32 %v7637, %v7663
    %v7794 = vmul.f32 %v7638, %v7665
    %v7795 = vmul.f32 %v7639, %v7656
    %v7796 = vmul.f32 %v7640, %v7664
    %v7797 = vmul.f32 %v7641, %v7663
    %v7798 = vmul.f32 %v7642, %v7665
    %v7799 = vmul.f32 %v7643, %v7656
    %v7801 = vlaneseq
    %v7802 = vshrl.u32 %v7801, 7
    %v7803 = vsub.s32 0, %v7802
    %v7804 = vrot.slane %v3319, %v7803
    %v7805 = vcombine.high %v7804, %v7804
    %v7807 = vunpack.c.l.s4 1983009808
    %v7808 = vunpack.c.0.s8 %v7807
    %v7809 = vlaneseq
    %v7810 = vshrl.u32 %v7809, 7
    %v7811 = vsub.s32 %v7808, %v7810
    %v7812 = vrot.slane %v7804, %v7811
    %v7814 = vunpack.c.l.s4 1983009808
    %v7815 = vunpack.c.0.s8 %v7814
    %v7816 = vlaneseq
    %v7817 = vshrl.u32 %v7816, 7
    %v7818 = vsub.s32 %v7815, %v7817
    %v7819 = vrot.slane %v7805, %v7818
    %v7820 = vcombine.high %v7812, %v7812
    %v7821 = vcombine.high %v7819, %v7819
    %v7826 = vadd.f32 %v7670, %v7812
    %v7827 = vadd.f32 %v7671, %v7820
    %v7828 = vadd.f32 %v7672, %v7819
    %v7829 = vadd.f32 %v7673, %v7821
    %v7830 = vadd.f32 %v7674, %v7812
    %v7831 = vadd.f32 %v7675, %v7820
    %v7832 = vadd.f32 %v7676, %v7819
    %v7833 = vadd.f32 %v7677, %v7821
    %v7834 = vadd.f32 %v7678, %v7812
    %v7835 = vadd.f32 %v7679, %v7820
    %v7836 = vadd.f32 %v7680, %v7819
    %v7837 = vadd.f32 %v7681, %v7821
    %v7838 = vadd.f32 %v7682, %v7812
    %v7839 = vadd.f32 %v7683, %v7820
    %v7840 = vadd.f32 %v7684, %v7819
    %v7841 = vadd.f32 %v7685, %v7821
    %v7842 = vadd.f32 %v7686, %v7812
    %v7843 = vadd.f32 %v7687, %v7820
    %v7844 = vadd.f32 %v7688, %v7819
    %v7845 = vadd.f32 %v7689, %v7821
    %v7846 = vadd.f32 %v7690, %v7812
    %v7847 = vadd.f32 %v7691, %v7820
    %v7848 = vadd.f32 %v7692, %v7819
    %v7849 = vadd.f32 %v7693, %v7821
    %v7850 = vadd.f32 %v7694, %v7812
    %v7851 = vadd.f32 %v7695, %v7820
    %v7852 = vadd.f32 %v7696, %v7819
    %v7853 = vadd.f32 %v7697, %v7821
    %v7854 = vadd.f32 %v7698, %v7812
    %v7855 = vadd.f32 %v7699, %v7820
    %v7856 = vadd.f32 %v7700, %v7819
    %v7857 = vadd.f32 %v7701, %v7821
    %v7858 = vadd.f32 %v7702, %v7812
    %v7859 = vadd.f32 %v7703, %v7820
    %v7860 = vadd.f32 %v7704, %v7819
    %v7861 = vadd.f32 %v7705, %v7821
    %v7862 = vadd.f32 %v7706, %v7812
    %v7863 = vadd.f32 %v7707, %v7820
    %v7864 = vadd.f32 %v7708, %v7819
    %v7865 = vadd.f32 %v7709, %v7821
    %v7866 = vadd.f32 %v7710, %v7812
    %v7867 = vadd.f32 %v7711, %v7820
    %v7868 = vadd.f32 %v7712, %v7819
    %v7869 = vadd.f32 %v7713, %v7821
    %v7870 = vadd.f32 %v7714, %v7812
    %v7871 = vadd.f32 %v7715, %v7820
    %v7872 = vadd.f32 %v7716, %v7819
    %v7873 = vadd.f32 %v7717, %v7821
    %v7874 = vadd.f32 %v7718, %v7812
    %v7875 = vadd.f32 %v7719, %v7820
    %v7876 = vadd.f32 %v7720, %v7819
    %v7877 = vadd.f32 %v7721, %v7821
    %v7878 = vadd.f32 %v7722, %v7812
    %v7879 = vadd.f32 %v7723, %v7820
    %v7880 = vadd.f32 %v7724, %v7819
    %v7881 = vadd.f32 %v7725, %v7821
    %v7882 = vadd.f32 %v7726, %v7812
    %v7883 = vadd.f32 %v7727, %v7820
    %v7884 = vadd.f32 %v7728, %v7819
    %v7885 = vadd.f32 %v7729, %v7821
    %v7886 = vadd.f32 %v7730, %v7812
    %v7887 = vadd.f32 %v7731, %v7820
    %v7888 = vadd.f32 %v7732, %v7819
    %v7889 = vadd.f32 %v7733, %v7821
    %v7890 = vadd.f32 %v7734, %v7812
    %v7891 = vadd.f32 %v7735, %v7812
    %v7892 = vadd.f32 %v7736, %v7820
    %v7893 = vadd.f32 %v7737, %v7819
    %v7894 = vadd.f32 %v7738, %v7821
    %v7895 = vadd.f32 %v7739, %v7812
    %v7896 = vadd.f32 %v7740, %v7820
    %v7897 = vadd.f32 %v7741, %v7819
    %v7898 = vadd.f32 %v7742, %v7821
    %v7899 = vadd.f32 %v7743, %v7812
    %v7900 = vadd.f32 %v7744, %v7820
    %v7901 = vadd.f32 %v7745, %v7819
    %v7902 = vadd.f32 %v7746, %v7821
    %v7903 = vadd.f32 %v7747, %v7812
    %v7904 = vadd.f32 %v7748, %v7820
    %v7905 = vadd.f32 %v7749, %v7819
    %v7906 = vadd.f32 %v7750, %v7821
    %v7907 = vadd.f32 %v7751, %v7812
    %v7908 = vadd.f32 %v7752, %v7820
    %v7909 = vadd.f32 %v7753, %v7819
    %v7910 = vadd.f32 %v7754, %v7821
    %v7911 = vadd.f32 %v7755, %v7812
    %v7912 = vadd.f32 %v7756, %v7820
    %v7913 = vadd.f32 %v7757, %v7819
    %v7914 = vadd.f32 %v7758, %v7821
    %v7915 = vadd.f32 %v7759, %v7812
    %v7916 = vadd.f32 %v7760, %v7820
    %v7917 = vadd.f32 %v7761, %v7819
    %v7918 = vadd.f32 %v7762, %v7821
    %v7919 = vadd.f32 %v7763, %v7812
    %v7920 = vadd.f32 %v7764, %v7820
    %v7921 = vadd.f32 %v7765, %v7819
    %v7922 = vadd.f32 %v7766, %v7821
    %v7923 = vadd.f32 %v7767, %v7812
    %v7924 = vadd.f32 %v7768, %v7820
    %v7925 = vadd.f32 %v7769, %v7819
    %v7926 = vadd.f32 %v7770, %v7821
    %v7927 = vadd.f32 %v7771, %v7812
    %v7928 = vadd.f32 %v7772, %v7820
    %v7929 = vadd.f32 %v7773, %v7819
    %v7930 = vadd.f32 %v7774, %v7821
    %v7931 = vadd.f32 %v7775, %v7812
    %v7932 = vadd.f32 %v7776, %v7820
    %v7933 = vadd.f32 %v7777, %v7819
    %v7934 = vadd.f32 %v7778, %v7821
    %v7935 = vadd.f32 %v7779, %v7812
    %v7936 = vadd.f32 %v7780, %v7820
    %v7937 = vadd.f32 %v7781, %v7819
    %v7938 = vadd.f32 %v7782, %v7821
    %v7939 = vadd.f32 %v7783, %v7812
    %v7940 = vadd.f32 %v7784, %v7820
    %v7941 = vadd.f32 %v7785, %v7819
    %v7942 = vadd.f32 %v7786, %v7821
    %v7943 = vadd.f32 %v7787, %v7812
    %v7944 = vadd.f32 %v7788, %v7820
    %v7945 = vadd.f32 %v7789, %v7819
    %v7946 = vadd.f32 %v7790, %v7821
    %v7947 = vadd.f32 %v7791, %v7812
    %v7948 = vadd.f32 %v7792, %v7820
    %v7949 = vadd.f32 %v7793, %v7819
    %v7950 = vadd.f32 %v7794, %v7821
    %v7951 = vadd.f32 %v7795, %v7812
    %v7952 = vadd.f32 %v7796, %v7820
    %v7953 = vadd.f32 %v7797, %v7819
    %v7954 = vadd.f32 %v7798, %v7821
    %v7955 = vadd.f32 %v7799, %v7812
    %s7956 = smul.u32 0, 128
    %s7957 = ssub.s32 %s7956, 1
    %v7958 = vlaneseq
    %v7959 = vshrl.u32 %v7958, 7
    %v7960 = vadd.s32 %v7959, 8
    %v7961 = vadd.s32 %v7959, 16
    %v7962 = vadd.s32 %v7959, 24
    %v7963 = vadd.s32 %v7959, 32
    %v7964 = vadd.s32 %v7959, 40
    %v7965 = vadd.s32 %v7959, 48
    %v7966 = vadd.s32 %v7959, 56
    %v7967 = vadd.s32 %v7959, 64
    %v7968 = vadd.s32 %v7959, 72
    %v7969 = vadd.s32 %v7959, 80
    %v7970 = vadd.s32 %v7959, 88
    %v7971 = vadd.s32 %v7959, 96
    %v7972 = vadd.s32 %v7959, 104
    %v7973 = vadd.s32 %v7959, 112
    %v7974 = vadd.s32 %v7959, 120
    %v7975 = vadd.s32 %v7959, 128
    %v7976 = vstv %s7957
    %v7977 = vadd.s32 %v7976, %v7959
    %v7978 = vadd.s32 %v7976, %v7960
    %v7979 = vadd.s32 %v7976, %v7961
    %v7980 = vadd.s32 %v7976, %v7962
    %v7981 = vadd.s32 %v7976, %v7963
    %v7982 = vadd.s32 %v7976, %v7964
    %v7983 = vadd.s32 %v7976, %v7965
    %v7984 = vadd.s32 %v7976, %v7966
    %v7985 = vadd.s32 %v7976, %v7967
    %v7986 = vadd.s32 %v7976, %v7968
    %v7987 = vadd.s32 %v7976, %v7969
    %v7988 = vadd.s32 %v7976, %v7970
    %v7989 = vadd.s32 %v7976, %v7971
    %v7990 = vadd.s32 %v7976, %v7972
    %v7991 = vadd.s32 %v7976, %v7973
    %v7992 = vadd.s32 %v7976, %v7974
    %v7993 = vadd.s32 %v7976, %v7975
    %vm7994 = vcmp.ge.s32.totalorder %v7977, 0
    %vm7995 = vcmp.ge.s32.totalorder %v7978, 0
    %vm7996 = vcmp.ge.s32.totalorder %v7979, 0
    %vm7997 = vcmp.ge.s32.totalorder %v7980, 0
    %vm7998 = vcmp.ge.s32.totalorder %v7981, 0
    %vm7999 = vcmp.ge.s32.totalorder %v7982, 0
    %vm8000 = vcmp.ge.s32.totalorder %v7983, 0
    %vm8001 = vcmp.ge.s32.totalorder %v7984, 0
    %vm8002 = vcmp.ge.s32.totalorder %v7985, 0
    %vm8003 = vcmp.ge.s32.totalorder %v7986, 0
    %vm8004 = vcmp.ge.s32.totalorder %v7987, 0
    %vm8005 = vcmp.ge.s32.totalorder %v7988, 0
    %vm8006 = vcmp.ge.s32.totalorder %v7989, 0
    %vm8007 = vcmp.ge.s32.totalorder %v7990, 0
    %vm8008 = vcmp.ge.s32.totalorder %v7991, 0
    %vm8009 = vcmp.ge.s32.totalorder %v7992, 0
    %vm8010 = vcmp.ge.s32.totalorder %v7993, 0
    %vm8011 = vcmp.lt.s32.totalorder %v7977, 8
    %vm8012 = vcmp.lt.s32.totalorder %v7978, 8
    %vm8013 = vcmp.lt.s32.totalorder %v7979, 8
    %vm8014 = vcmp.lt.s32.totalorder %v7980, 8
    %vm8015 = vcmp.lt.s32.totalorder %v7981, 8
    %vm8016 = vcmp.lt.s32.totalorder %v7982, 8
    %vm8017 = vcmp.lt.s32.totalorder %v7983, 8
    %vm8018 = vcmp.lt.s32.totalorder %v7984, 8
    %vm8019 = vcmp.lt.s32.totalorder %v7985, 8
    %vm8020 = vcmp.lt.s32.totalorder %v7986, 8
    %vm8021 = vcmp.lt.s32.totalorder %v7987, 8
    %vm8022 = vcmp.lt.s32.totalorder %v7988, 8
    %vm8023 = vcmp.lt.s32.totalorder %v7989, 8
    %vm8024 = vcmp.lt.s32.totalorder %v7990, 8
    %vm8025 = vcmp.lt.s32.totalorder %v7991, 8
    %vm8026 = vcmp.lt.s32.totalorder %v7992, 8
    %vm8027 = vcmp.lt.s32.totalorder %v7993, 8
    %vm8028 = vmand %vm7994, %vm8011
    %vm8029 = vmand %vm7995, %vm8012
    %vm8030 = vmand %vm7996, %vm8013
    %vm8031 = vmand %vm7997, %vm8014
    %vm8032 = vmand %vm7998, %vm8015
    %vm8033 = vmand %vm7999, %vm8016
    %vm8034 = vmand %vm8000, %vm8017
    %vm8035 = vmand %vm8001, %vm8018
    %vm8036 = vmand %vm8002, %vm8019
    %vm8037 = vmand %vm8003, %vm8020
    %vm8038 = vmand %vm8004, %vm8021
    %vm8039 = vmand %vm8005, %vm8022
    %vm8040 = vmand %vm8006, %vm8023
    %vm8041 = vmand %vm8007, %vm8024
    %vm8042 = vmand %vm8008, %vm8025
    %vm8043 = vmand %vm8009, %vm8026
    %vm8044 = vmand %vm8010, %vm8027
    %v8175 = vcombine.low %v7826, %v7827
    %v8176 = vcombine.low %v7828, %v7829
    %v8178 = vunpack.c.l.s4 1983009808
    %v8179 = vunpack.c.0.s8 %v8178
    %v8180 = vlaneseq
    %v8181 = vshrl.u32 %v8180, 7
    %v8182 = vsub.s32 %v8179, %v8181
    %v8183 = vrot.slane %v8175, %v8182
    %v8185 = vunpack.c.l.s4 1983009808
    %v8186 = vunpack.c.0.s8 %v8185
    %v8187 = vlaneseq
    %v8188 = vshrl.u32 %v8187, 7
    %v8189 = vsub.s32 %v8186, %v8188
    %v8190 = vrot.slane %v8176, %v8189
    %v8191 = vcombine.low %v8183, %v8190
    %v8192 = vcombine.low %v7830, %v7831
    %v8193 = vcombine.low %v7832, %v7833
    %v8195 = vunpack.c.l.s4 1983009808
    %v8196 = vunpack.c.0.s8 %v8195
    %v8197 = vlaneseq
    %v8198 = vshrl.u32 %v8197, 7
    %v8199 = vsub.s32 %v8196, %v8198
    %v8200 = vrot.slane %v8192, %v8199
    %v8202 = vunpack.c.l.s4 1983009808
    %v8203 = vunpack.c.0.s8 %v8202
    %v8204 = vlaneseq
    %v8205 = vshrl.u32 %v8204, 7
    %v8206 = vsub.s32 %v8203, %v8205
    %v8207 = vrot.slane %v8193, %v8206
    %v8208 = vcombine.low %v8200, %v8207
    %v8209 = vcombine.low %v7834, %v7835
    %v8210 = vcombine.low %v7836, %v7837
    %v8212 = vunpack.c.l.s4 1983009808
    %v8213 = vunpack.c.0.s8 %v8212
    %v8214 = vlaneseq
    %v8215 = vshrl.u32 %v8214, 7
    %v8216 = vsub.s32 %v8213, %v8215
    %v8217 = vrot.slane %v8209, %v8216
    %v8219 = vunpack.c.l.s4 1983009808
    %v8220 = vunpack.c.0.s8 %v8219
    %v8221 = vlaneseq
    %v8222 = vshrl.u32 %v8221, 7
    %v8223 = vsub.s32 %v8220, %v8222
    %v8224 = vrot.slane %v8210, %v8223
    %v8225 = vcombine.low %v8217, %v8224
    %v8226 = vcombine.low %v7838, %v7839
    %v8227 = vcombine.low %v7840, %v7841
    %v8229 = vunpack.c.l.s4 1983009808
    %v8230 = vunpack.c.0.s8 %v8229
    %v8231 = vlaneseq
    %v8232 = vshrl.u32 %v8231, 7
    %v8233 = vsub.s32 %v8230, %v8232
    %v8234 = vrot.slane %v8226, %v8233
    %v8236 = vunpack.c.l.s4 1983009808
    %v8237 = vunpack.c.0.s8 %v8236
    %v8238 = vlaneseq
    %v8239 = vshrl.u32 %v8238, 7
    %v8240 = vsub.s32 %v8237, %v8239
    %v8241 = vrot.slane %v8227, %v8240
    %v8242 = vcombine.low %v8234, %v8241
    %v8243 = vcombine.low %v7842, %v7843
    %v8244 = vcombine.low %v7844, %v7845
    %v8246 = vunpack.c.l.s4 1983009808
    %v8247 = vunpack.c.0.s8 %v8246
    %v8248 = vlaneseq
    %v8249 = vshrl.u32 %v8248, 7
    %v8250 = vsub.s32 %v8247, %v8249
    %v8251 = vrot.slane %v8243, %v8250
    %v8253 = vunpack.c.l.s4 1983009808
    %v8254 = vunpack.c.0.s8 %v8253
    %v8255 = vlaneseq
    %v8256 = vshrl.u32 %v8255, 7
    %v8257 = vsub.s32 %v8254, %v8256
    %v8258 = vrot.slane %v8244, %v8257
    %v8259 = vcombine.low %v8251, %v8258
    %v8260 = vcombine.low %v7846, %v7847
    %v8261 = vcombine.low %v7848, %v7849
    %v8263 = vunpack.c.l.s4 1983009808
    %v8264 = vunpack.c.0.s8 %v8263
    %v8265 = vlaneseq
    %v8266 = vshrl.u32 %v8265, 7
    %v8267 = vsub.s32 %v8264, %v8266
    %v8268 = vrot.slane %v8260, %v8267
    %v8270 = vunpack.c.l.s4 1983009808
    %v8271 = vunpack.c.0.s8 %v8270
    %v8272 = vlaneseq
    %v8273 = vshrl.u32 %v8272, 7
    %v8274 = vsub.s32 %v8271, %v8273
    %v8275 = vrot.slane %v8261, %v8274
    %v8276 = vcombine.low %v8268, %v8275
    %v8277 = vcombine.low %v7850, %v7851
    %v8278 = vcombine.low %v7852, %v7853
    %v8280 = vunpack.c.l.s4 1983009808
    %v8281 = vunpack.c.0.s8 %v8280
    %v8282 = vlaneseq
    %v8283 = vshrl.u32 %v8282, 7
    %v8284 = vsub.s32 %v8281, %v8283
    %v8285 = vrot.slane %v8277, %v8284
    %v8287 = vunpack.c.l.s4 1983009808
    %v8288 = vunpack.c.0.s8 %v8287
    %v8289 = vlaneseq
    %v8290 = vshrl.u32 %v8289, 7
    %v8291 = vsub.s32 %v8288, %v8290
    %v8292 = vrot.slane %v8278, %v8291
    %v8293 = vcombine.low %v8285, %v8292
    %v8294 = vcombine.low %v7854, %v7855
    %v8295 = vcombine.low %v7856, %v7857
    %v8297 = vunpack.c.l.s4 1983009808
    %v8298 = vunpack.c.0.s8 %v8297
    %v8299 = vlaneseq
    %v8300 = vshrl.u32 %v8299, 7
    %v8301 = vsub.s32 %v8298, %v8300
    %v8302 = vrot.slane %v8294, %v8301
    %v8304 = vunpack.c.l.s4 1983009808
    %v8305 = vunpack.c.0.s8 %v8304
    %v8306 = vlaneseq
    %v8307 = vshrl.u32 %v8306, 7
    %v8308 = vsub.s32 %v8305, %v8307
    %v8309 = vrot.slane %v8295, %v8308
    %v8310 = vcombine.low %v8302, %v8309
    %v8311 = vcombine.low %v7858, %v7859
    %v8312 = vcombine.low %v7860, %v7861
    %v8314 = vunpack.c.l.s4 1983009808
    %v8315 = vunpack.c.0.s8 %v8314
    %v8316 = vlaneseq
    %v8317 = vshrl.u32 %v8316, 7
    %v8318 = vsub.s32 %v8315, %v8317
    %v8319 = vrot.slane %v8311, %v8318
    %v8321 = vunpack.c.l.s4 1983009808
    %v8322 = vunpack.c.0.s8 %v8321
    %v8323 = vlaneseq
    %v8324 = vshrl.u32 %v8323, 7
    %v8325 = vsub.s32 %v8322, %v8324
    %v8326 = vrot.slane %v8312, %v8325
    %v8327 = vcombine.low %v8319, %v8326
    %v8328 = vcombine.low %v7862, %v7863
    %v8329 = vcombine.low %v7864, %v7865
    %v8331 = vunpack.c.l.s4 1983009808
    %v8332 = vunpack.c.0.s8 %v8331
    %v8333 = vlaneseq
    %v8334 = vshrl.u32 %v8333, 7
    %v8335 = vsub.s32 %v8332, %v8334
    %v8336 = vrot.slane %v8328, %v8335
    %v8338 = vunpack.c.l.s4 1983009808
    %v8339 = vunpack.c.0.s8 %v8338
    %v8340 = vlaneseq
    %v8341 = vshrl.u32 %v8340, 7
    %v8342 = vsub.s32 %v8339, %v8341
    %v8343 = vrot.slane %v8329, %v8342
    %v8344 = vcombine.low %v8336, %v8343
    %v8345 = vcombine.low %v7866, %v7867
    %v8346 = vcombine.low %v7868, %v7869
    %v8348 = vunpack.c.l.s4 1983009808
    %v8349 = vunpack.c.0.s8 %v8348
    %v8350 = vlaneseq
    %v8351 = vshrl.u32 %v8350, 7
    %v8352 = vsub.s32 %v8349, %v8351
    %v8353 = vrot.slane %v8345, %v8352
    %v8355 = vunpack.c.l.s4 1983009808
    %v8356 = vunpack.c.0.s8 %v8355
    %v8357 = vlaneseq
    %v8358 = vshrl.u32 %v8357, 7
    %v8359 = vsub.s32 %v8356, %v8358
    %v8360 = vrot.slane %v8346, %v8359
    %v8361 = vcombine.low %v8353, %v8360
    %v8362 = vcombine.low %v7870, %v7871
    %v8363 = vcombine.low %v7872, %v7873
    %v8365 = vunpack.c.l.s4 1983009808
    %v8366 = vunpack.c.0.s8 %v8365
    %v8367 = vlaneseq
    %v8368 = vshrl.u32 %v8367, 7
    %v8369 = vsub.s32 %v8366, %v8368
    %v8370 = vrot.slane %v8362, %v8369
    %v8372 = vunpack.c.l.s4 1983009808
    %v8373 = vunpack.c.0.s8 %v8372
    %v8374 = vlaneseq
    %v8375 = vshrl.u32 %v8374, 7
    %v8376 = vsub.s32 %v8373, %v8375
    %v8377 = vrot.slane %v8363, %v8376
    %v8378 = vcombine.low %v8370, %v8377
    %v8379 = vcombine.low %v7874, %v7875
    %v8380 = vcombine.low %v7876, %v7877
    %v8382 = vunpack.c.l.s4 1983009808
    %v8383 = vunpack.c.0.s8 %v8382
    %v8384 = vlaneseq
    %v8385 = vshrl.u32 %v8384, 7
    %v8386 = vsub.s32 %v8383, %v8385
    %v8387 = vrot.slane %v8379, %v8386
    %v8389 = vunpack.c.l.s4 1983009808
    %v8390 = vunpack.c.0.s8 %v8389
    %v8391 = vlaneseq
    %v8392 = vshrl.u32 %v8391, 7
    %v8393 = vsub.s32 %v8390, %v8392
    %v8394 = vrot.slane %v8380, %v8393
    %v8395 = vcombine.low %v8387, %v8394
    %v8396 = vcombine.low %v7878, %v7879
    %v8397 = vcombine.low %v7880, %v7881
    %v8399 = vunpack.c.l.s4 1983009808
    %v8400 = vunpack.c.0.s8 %v8399
    %v8401 = vlaneseq
    %v8402 = vshrl.u32 %v8401, 7
    %v8403 = vsub.s32 %v8400, %v8402
    %v8404 = vrot.slane %v8396, %v8403
    %v8406 = vunpack.c.l.s4 1983009808
    %v8407 = vunpack.c.0.s8 %v8406
    %v8408 = vlaneseq
    %v8409 = vshrl.u32 %v8408, 7
    %v8410 = vsub.s32 %v8407, %v8409
    %v8411 = vrot.slane %v8397, %v8410
    %v8412 = vcombine.low %v8404, %v8411
    %v8413 = vcombine.low %v7882, %v7883
    %v8414 = vcombine.low %v7884, %v7885
    %v8416 = vunpack.c.l.s4 1983009808
    %v8417 = vunpack.c.0.s8 %v8416
    %v8418 = vlaneseq
    %v8419 = vshrl.u32 %v8418, 7
    %v8420 = vsub.s32 %v8417, %v8419
    %v8421 = vrot.slane %v8413, %v8420
    %v8423 = vunpack.c.l.s4 1983009808
    %v8424 = vunpack.c.0.s8 %v8423
    %v8425 = vlaneseq
    %v8426 = vshrl.u32 %v8425, 7
    %v8427 = vsub.s32 %v8424, %v8426
    %v8428 = vrot.slane %v8414, %v8427
    %v8429 = vcombine.low %v8421, %v8428
    %v8430 = vcombine.low %v7886, %v7887
    %v8431 = vcombine.low %v7888, %v7889
    %v8433 = vunpack.c.l.s4 1983009808
    %v8434 = vunpack.c.0.s8 %v8433
    %v8435 = vlaneseq
    %v8436 = vshrl.u32 %v8435, 7
    %v8437 = vsub.s32 %v8434, %v8436
    %v8438 = vrot.slane %v8430, %v8437
    %v8440 = vunpack.c.l.s4 1983009808
    %v8441 = vunpack.c.0.s8 %v8440
    %v8442 = vlaneseq
    %v8443 = vshrl.u32 %v8442, 7
    %v8444 = vsub.s32 %v8441, %v8443
    %v8445 = vrot.slane %v8431, %v8444
    %v8446 = vcombine.low %v8438, %v8445
    %v8448 = vunpack.c.l.s4 1983009808
    %v8449 = vunpack.c.0.s8 %v8448
    %v8450 = vlaneseq
    %v8451 = vshrl.u32 %v8450, 7
    %v8452 = vsub.s32 %v8449, %v8451
    %v8453 = vrot.slane %v7890, %v8452
    %v8454 = vcombine.low %v7891, %v7892
    %v8455 = vcombine.low %v7893, %v7894
    %v8457 = vunpack.c.l.s4 1983009808
    %v8458 = vunpack.c.0.s8 %v8457
    %v8459 = vlaneseq
    %v8460 = vshrl.u32 %v8459, 7
    %v8461 = vsub.s32 %v8458, %v8460
    %v8462 = vrot.slane %v8454, %v8461
    %v8464 = vunpack.c.l.s4 1983009808
    %v8465 = vunpack.c.0.s8 %v8464
    %v8466 = vlaneseq
    %v8467 = vshrl.u32 %v8466, 7
    %v8468 = vsub.s32 %v8465, %v8467
    %v8469 = vrot.slane %v8455, %v8468
    %v8470 = vcombine.low %v8462, %v8469
    %v8471 = vcombine.low %v7895, %v7896
    %v8472 = vcombine.low %v7897, %v7898
    %v8474 = vunpack.c.l.s4 1983009808
    %v8475 = vunpack.c.0.s8 %v8474
    %v8476 = vlaneseq
    %v8477 = vshrl.u32 %v8476, 7
    %v8478 = vsub.s32 %v8475, %v8477
    %v8479 = vrot.slane %v8471, %v8478
    %v8481 = vunpack.c.l.s4 1983009808
    %v8482 = vunpack.c.0.s8 %v8481
    %v8483 = vlaneseq
    %v8484 = vshrl.u32 %v8483, 7
    %v8485 = vsub.s32 %v8482, %v8484
    %v8486 = vrot.slane %v8472, %v8485
    %v8487 = vcombine.low %v8479, %v8486
    %v8488 = vcombine.low %v7899, %v7900
    %v8489 = vcombine.low %v7901, %v7902
    %v8491 = vunpack.c.l.s4 1983009808
    %v8492 = vunpack.c.0.s8 %v8491
    %v8493 = vlaneseq
    %v8494 = vshrl.u32 %v8493, 7
    %v8495 = vsub.s32 %v8492, %v8494
    %v8496 = vrot.slane %v8488, %v8495
    %v8498 = vunpack.c.l.s4 1983009808
    %v8499 = vunpack.c.0.s8 %v8498
    %v8500 = vlaneseq
    %v8501 = vshrl.u32 %v8500, 7
    %v8502 = vsub.s32 %v8499, %v8501
    %v8503 = vrot.slane %v8489, %v8502
    %v8504 = vcombine.low %v8496, %v8503
    %v8505 = vcombine.low %v7903, %v7904
    %v8506 = vcombine.low %v7905, %v7906
    %v8508 = vunpack.c.l.s4 1983009808
    %v8509 = vunpack.c.0.s8 %v8508
    %v8510 = vlaneseq
    %v8511 = vshrl.u32 %v8510, 7
    %v8512 = vsub.s32 %v8509, %v8511
    %v8513 = vrot.slane %v8505, %v8512
    %v8515 = vunpack.c.l.s4 1983009808
    %v8516 = vunpack.c.0.s8 %v8515
    %v8517 = vlaneseq
    %v8518 = vshrl.u32 %v8517, 7
    %v8519 = vsub.s32 %v8516, %v8518
    %v8520 = vrot.slane %v8506, %v8519
    %v8521 = vcombine.low %v8513, %v8520
    %v8522 = vcombine.low %v7907, %v7908
    %v8523 = vcombine.low %v7909, %v7910
    %v8525 = vunpack.c.l.s4 1983009808
    %v8526 = vunpack.c.0.s8 %v8525
    %v8527 = vlaneseq
    %v8528 = vshrl.u32 %v8527, 7
    %v8529 = vsub.s32 %v8526, %v8528
    %v8530 = vrot.slane %v8522, %v8529
    %v8532 = vunpack.c.l.s4 1983009808
    %v8533 = vunpack.c.0.s8 %v8532
    %v8534 = vlaneseq
    %v8535 = vshrl.u32 %v8534, 7
    %v8536 = vsub.s32 %v8533, %v8535
    %v8537 = vrot.slane %v8523, %v8536
    %v8538 = vcombine.low %v8530, %v8537
    %v8539 = vcombine.low %v7911, %v7912
    %v8540 = vcombine.low %v7913, %v7914
    %v8542 = vunpack.c.l.s4 1983009808
    %v8543 = vunpack.c.0.s8 %v8542
    %v8544 = vlaneseq
    %v8545 = vshrl.u32 %v8544, 7
    %v8546 = vsub.s32 %v8543, %v8545
    %v8547 = vrot.slane %v8539, %v8546
    %v8549 = vunpack.c.l.s4 1983009808
    %v8550 = vunpack.c.0.s8 %v8549
    %v8551 = vlaneseq
    %v8552 = vshrl.u32 %v8551, 7
    %v8553 = vsub.s32 %v8550, %v8552
    %v8554 = vrot.slane %v8540, %v8553
    %v8555 = vcombine.low %v8547, %v8554
    %v8556 = vcombine.low %v7915, %v7916
    %v8557 = vcombine.low %v7917, %v7918
    %v8559 = vunpack.c.l.s4 1983009808
    %v8560 = vunpack.c.0.s8 %v8559
    %v8561 = vlaneseq
    %v8562 = vshrl.u32 %v8561, 7
    %v8563 = vsub.s32 %v8560, %v8562
    %v8564 = vrot.slane %v8556, %v8563
    %v8566 = vunpack.c.l.s4 1983009808
    %v8567 = vunpack.c.0.s8 %v8566
    %v8568 = vlaneseq
    %v8569 = vshrl.u32 %v8568, 7
    %v8570 = vsub.s32 %v8567, %v8569
    %v8571 = vrot.slane %v8557, %v8570
    %v8572 = vcombine.low %v8564, %v8571
    %v8573 = vcombine.low %v7919, %v7920
    %v8574 = vcombine.low %v7921, %v7922
    %v8576 = vunpack.c.l.s4 1983009808
    %v8577 = vunpack.c.0.s8 %v8576
    %v8578 = vlaneseq
    %v8579 = vshrl.u32 %v8578, 7
    %v8580 = vsub.s32 %v8577, %v8579
    %v8581 = vrot.slane %v8573, %v8580
    %v8583 = vunpack.c.l.s4 1983009808
    %v8584 = vunpack.c.0.s8 %v8583
    %v8585 = vlaneseq
    %v8586 = vshrl.u32 %v8585, 7
    %v8587 = vsub.s32 %v8584, %v8586
    %v8588 = vrot.slane %v8574, %v8587
    %v8589 = vcombine.low %v8581, %v8588
    %v8590 = vcombine.low %v7923, %v7924
    %v8591 = vcombine.low %v7925, %v7926
    %v8593 = vunpack.c.l.s4 1983009808
    %v8594 = vunpack.c.0.s8 %v8593
    %v8595 = vlaneseq
    %v8596 = vshrl.u32 %v8595, 7
    %v8597 = vsub.s32 %v8594, %v8596
    %v8598 = vrot.slane %v8590, %v8597
    %v8600 = vunpack.c.l.s4 1983009808
    %v8601 = vunpack.c.0.s8 %v8600
    %v8602 = vlaneseq
    %v8603 = vshrl.u32 %v8602, 7
    %v8604 = vsub.s32 %v8601, %v8603
    %v8605 = vrot.slane %v8591, %v8604
    %v8606 = vcombine.low %v8598, %v8605
    %v8607 = vcombine.low %v7927, %v7928
    %v8608 = vcombine.low %v7929, %v7930
    %v8610 = vunpack.c.l.s4 1983009808
    %v8611 = vunpack.c.0.s8 %v8610
    %v8612 = vlaneseq
    %v8613 = vshrl.u32 %v8612, 7
    %v8614 = vsub.s32 %v8611, %v8613
    %v8615 = vrot.slane %v8607, %v8614
    %v8617 = vunpack.c.l.s4 1983009808
    %v8618 = vunpack.c.0.s8 %v8617
    %v8619 = vlaneseq
    %v8620 = vshrl.u32 %v8619, 7
    %v8621 = vsub.s32 %v8618, %v8620
    %v8622 = vrot.slane %v8608, %v8621
    %v8623 = vcombine.low %v8615, %v8622
    %v8624 = vcombine.low %v7931, %v7932
    %v8625 = vcombine.low %v7933, %v7934
    %v8627 = vunpack.c.l.s4 1983009808
    %v8628 = vunpack.c.0.s8 %v8627
    %v8629 = vlaneseq
    %v8630 = vshrl.u32 %v8629, 7
    %v8631 = vsub.s32 %v8628, %v8630
    %v8632 = vrot.slane %v8624, %v8631
    %v8634 = vunpack.c.l.s4 1983009808
    %v8635 = vunpack.c.0.s8 %v8634
    %v8636 = vlaneseq
    %v8637 = vshrl.u32 %v8636, 7
    %v8638 = vsub.s32 %v8635, %v8637
    %v8639 = vrot.slane %v8625, %v8638
    %v8640 = vcombine.low %v8632, %v8639
    %v8641 = vcombine.low %v7935, %v7936
    %v8642 = vcombine.low %v7937, %v7938
    %v8644 = vunpack.c.l.s4 1983009808
    %v8645 = vunpack.c.0.s8 %v8644
    %v8646 = vlaneseq
    %v8647 = vshrl.u32 %v8646, 7
    %v8648 = vsub.s32 %v8645, %v8647
    %v8649 = vrot.slane %v8641, %v8648
    %v8651 = vunpack.c.l.s4 1983009808
    %v8652 = vunpack.c.0.s8 %v8651
    %v8653 = vlaneseq
    %v8654 = vshrl.u32 %v8653, 7
    %v8655 = vsub.s32 %v8652, %v8654
    %v8656 = vrot.slane %v8642, %v8655
    %v8657 = vcombine.low %v8649, %v8656
    %v8658 = vcombine.low %v7939, %v7940
    %v8659 = vcombine.low %v7941, %v7942
    %v8661 = vunpack.c.l.s4 1983009808
    %v8662 = vunpack.c.0.s8 %v8661
    %v8663 = vlaneseq
    %v8664 = vshrl.u32 %v8663, 7
    %v8665 = vsub.s32 %v8662, %v8664
    %v8666 = vrot.slane %v8658, %v8665
    %v8668 = vunpack.c.l.s4 1983009808
    %v8669 = vunpack.c.0.s8 %v8668
    %v8670 = vlaneseq
    %v8671 = vshrl.u32 %v8670, 7
    %v8672 = vsub.s32 %v8669, %v8671
    %v8673 = vrot.slane %v8659, %v8672
    %v8674 = vcombine.low %v8666, %v8673
    %v8675 = vcombine.low %v7943, %v7944
    %v8676 = vcombine.low %v7945, %v7946
    %v8678 = vunpack.c.l.s4 1983009808
    %v8679 = vunpack.c.0.s8 %v8678
    %v8680 = vlaneseq
    %v8681 = vshrl.u32 %v8680, 7
    %v8682 = vsub.s32 %v8679, %v8681
    %v8683 = vrot.slane %v8675, %v8682
    %v8685 = vunpack.c.l.s4 1983009808
    %v8686 = vunpack.c.0.s8 %v8685
    %v8687 = vlaneseq
    %v8688 = vshrl.u32 %v8687, 7
    %v8689 = vsub.s32 %v8686, %v8688
    %v8690 = vrot.slane %v8676, %v8689
    %v8691 = vcombine.low %v8683, %v8690
    %v8692 = vcombine.low %v7947, %v7948
    %v8693 = vcombine.low %v7949, %v7950
    %v8695 = vunpack.c.l.s4 1983009808
    %v8696 = vunpack.c.0.s8 %v8695
    %v8697 = vlaneseq
    %v8698 = vshrl.u32 %v8697, 7
    %v8699 = vsub.s32 %v8696, %v8698
    %v8700 = vrot.slane %v8692, %v8699
    %v8702 = vunpack.c.l.s4 1983009808
    %v8703 = vunpack.c.0.s8 %v8702
    %v8704 = vlaneseq
    %v8705 = vshrl.u32 %v8704, 7
    %v8706 = vsub.s32 %v8703, %v8705
    %v8707 = vrot.slane %v8693, %v8706
    %v8708 = vcombine.low %v8700, %v8707
    %v8709 = vcombine.low %v7951, %v7952
    %v8710 = vcombine.low %v7953, %v7954
    %v8712 = vunpack.c.l.s4 1983009808
    %v8713 = vunpack.c.0.s8 %v8712
    %v8714 = vlaneseq
    %v8715 = vshrl.u32 %v8714, 7
    %v8716 = vsub.s32 %v8713, %v8715
    %v8717 = vrot.slane %v8709, %v8716
    %v8719 = vunpack.c.l.s4 1983009808
    %v8720 = vunpack.c.0.s8 %v8719
    %v8721 = vlaneseq
    %v8722 = vshrl.u32 %v8721, 7
    %v8723 = vsub.s32 %v8720, %v8722
    %v8724 = vrot.slane %v8710, %v8723
    %v8725 = vcombine.low %v8717, %v8724
    %v8727 = vunpack.c.l.s4 1983009808
    %v8728 = vunpack.c.0.s8 %v8727
    %v8729 = vlaneseq
    %v8730 = vshrl.u32 %v8729, 7
    %v8731 = vsub.s32 %v8728, %v8730
    %v8732 = vrot.slane %v7955, %v8731
    %v8767 = vsel %vm8028, %v8191, 0.0
    %v8768 = vsel %vm8029, %v8208, 0.0
    %v8769 = vsel %vm8030, %v8225, 0.0
    %v8770 = vsel %vm8031, %v8242, 0.0
    %v8771 = vsel %vm8032, %v8259, 0.0
    %v8772 = vsel %vm8033, %v8276, 0.0
    %v8773 = vsel %vm8034, %v8293, 0.0
    %v8774 = vsel %vm8035, %v8310, 0.0
    %v8775 = vsel %vm8036, %v8327, 0.0
    %v8776 = vsel %vm8037, %v8344, 0.0
    %v8777 = vsel %vm8038, %v8361, 0.0
    %v8778 = vsel %vm8039, %v8378, 0.0
    %v8779 = vsel %vm8040, %v8395, 0.0
    %v8780 = vsel %vm8041, %v8412, 0.0
    %v8781 = vsel %vm8042, %v8429, 0.0
    %v8782 = vsel %vm8043, %v8446, 0.0
    %v8783 = vsel %vm8044, %v8453, 0.0
    %v8784 = vsel %vm8028, %v8470, 0.0
    %v8785 = vsel %vm8029, %v8487, 0.0
    %v8786 = vsel %vm8030, %v8504, 0.0
    %v8787 = vsel %vm8031, %v8521, 0.0
    %v8788 = vsel %vm8032, %v8538, 0.0
    %v8789 = vsel %vm8033, %v8555, 0.0
    %v8790 = vsel %vm8034, %v8572, 0.0
    %v8791 = vsel %vm8035, %v8589, 0.0
    %v8792 = vsel %vm8036, %v8606, 0.0
    %v8793 = vsel %vm8037, %v8623, 0.0
    %v8794 = vsel %vm8038, %v8640, 0.0
    %v8795 = vsel %vm8039, %v8657, 0.0
    %v8796 = vsel %vm8040, %v8674, 0.0
    %v8797 = vsel %vm8041, %v8691, 0.0
    %v8798 = vsel %vm8042, %v8708, 0.0
    %v8799 = vsel %vm8043, %v8725, 0.0
    %v8800 = vsel %vm8044, %v8732, 0.0
    %vm8835 = vcmask 1046528
    %v8836 = vrot.slane %v8767, 1
    %v8837 = vrot.slane %v8768, 1
    %v8838 = vsel %vm8835, %v8836, %v8837
    %v8839 = vrot.slane %v8769, 1
    %v8840 = vsel %vm8835, %v8837, %v8839
    %v8841 = vrot.slane %v8770, 1
    %v8842 = vsel %vm8835, %v8839, %v8841
    %v8843 = vrot.slane %v8771, 1
    %v8844 = vsel %vm8835, %v8841, %v8843
    %v8845 = vrot.slane %v8772, 1
    %v8846 = vsel %vm8835, %v8843, %v8845
    %v8847 = vrot.slane %v8773, 1
    %v8848 = vsel %vm8835, %v8845, %v8847
    %v8849 = vrot.slane %v8774, 1
    %v8850 = vsel %vm8835, %v8847, %v8849
    %v8851 = vrot.slane %v8775, 1
    %v8852 = vsel %vm8835, %v8849, %v8851
    %v8853 = vrot.slane %v8776, 1
    %v8854 = vsel %vm8835, %v8851, %v8853
    %v8855 = vrot.slane %v8777, 1
    %v8856 = vsel %vm8835, %v8853, %v8855
    %v8857 = vrot.slane %v8778, 1
    %v8858 = vsel %vm8835, %v8855, %v8857
    %v8859 = vrot.slane %v8779, 1
    %v8860 = vsel %vm8835, %v8857, %v8859
    %v8861 = vrot.slane %v8780, 1
    %v8862 = vsel %vm8835, %v8859, %v8861
    %v8863 = vrot.slane %v8781, 1
    %v8864 = vsel %vm8835, %v8861, %v8863
    %v8865 = vrot.slane %v8782, 1
    %v8866 = vsel %vm8835, %v8863, %v8865
    %v8867 = vrot.slane %v8783, 1
    %v8868 = vsel %vm8835, %v8865, %v8867
    %v8869 = vrot.slane %v8784, 1
    %v8870 = vrot.slane %v8785, 1
    %v8871 = vsel %vm8835, %v8869, %v8870
    %v8872 = vrot.slane %v8786, 1
    %v8873 = vsel %vm8835, %v8870, %v8872
    %v8874 = vrot.slane %v8787, 1
    %v8875 = vsel %vm8835, %v8872, %v8874
    %v8876 = vrot.slane %v8788, 1
    %v8877 = vsel %vm8835, %v8874, %v8876
    %v8878 = vrot.slane %v8789, 1
    %v8879 = vsel %vm8835, %v8876, %v8878
    %v8880 = vrot.slane %v8790, 1
    %v8881 = vsel %vm8835, %v8878, %v8880
    %v8882 = vrot.slane %v8791, 1
    %v8883 = vsel %vm8835, %v8880, %v8882
    %v8884 = vrot.slane %v8792, 1
    %v8885 = vsel %vm8835, %v8882, %v8884
    %v8886 = vrot.slane %v8793, 1
    %v8887 = vsel %vm8835, %v8884, %v8886
    %v8888 = vrot.slane %v8794, 1
    %v8889 = vsel %vm8835, %v8886, %v8888
    %v8890 = vrot.slane %v8795, 1
    %v8891 = vsel %vm8835, %v8888, %v8890
    %v8892 = vrot.slane %v8796, 1
    %v8893 = vsel %vm8835, %v8890, %v8892
    %v8894 = vrot.slane %v8797, 1
    %v8895 = vsel %vm8835, %v8892, %v8894
    %v8896 = vrot.slane %v8798, 1
    %v8897 = vsel %vm8835, %v8894, %v8896
    %v8898 = vrot.slane %v8799, 1
    %v8899 = vsel %vm8835, %v8896, %v8898
    %v8900 = vrot.slane %v8800, 1
    %v8901 = vsel %vm8835, %v8898, %v8900
    %8902 = vrot.lane.b32.xlu0 %v8838, 32
    %v8903 = vpop.permute.xlu0 %8902
    %8904 = vrot.lane.b32.xlu0 %v8840, 32
    %v8905 = vpop.permute.xlu0 %8904
    %8906 = vrot.lane.b32.xlu0 %v8842, 32
    %v8907 = vpop.permute.xlu0 %8906
    %8908 = vrot.lane.b32.xlu0 %v8844, 32
    %v8909 = vpop.permute.xlu0 %8908
    %8910 = vrot.lane.b32.xlu0 %v8846, 32
    %v8911 = vpop.permute.xlu0 %8910
    %8912 = vrot.lane.b32.xlu0 %v8848, 32
    %v8913 = vpop.permute.xlu0 %8912
    %8914 = vrot.lane.b32.xlu0 %v8850, 32
    %v8915 = vpop.permute.xlu0 %8914
    %8916 = vrot.lane.b32.xlu0 %v8852, 32
    %v8917 = vpop.permute.xlu0 %8916
    %8918 = vrot.lane.b32.xlu0 %v8854, 32
    %v8919 = vpop.permute.xlu0 %8918
    %8920 = vrot.lane.b32.xlu0 %v8856, 32
    %v8921 = vpop.permute.xlu0 %8920
    %8922 = vrot.lane.b32.xlu0 %v8858, 32
    %v8923 = vpop.permute.xlu0 %8922
    %8924 = vrot.lane.b32.xlu0 %v8860, 32
    %v8925 = vpop.permute.xlu0 %8924
    %8926 = vrot.lane.b32.xlu0 %v8862, 32
    %v8927 = vpop.permute.xlu0 %8926
    %8928 = vrot.lane.b32.xlu0 %v8864, 32
    %v8929 = vpop.permute.xlu0 %8928
    %8930 = vrot.lane.b32.xlu0 %v8866, 32
    %v8931 = vpop.permute.xlu0 %8930
    %8932 = vrot.lane.b32.xlu0 %v8868, 32
    %v8933 = vpop.permute.xlu0 %8932
    %8934 = vrot.lane.b32.xlu0 %v8871, 32
    %v8935 = vpop.permute.xlu0 %8934
    %8936 = vrot.lane.b32.xlu0 %v8873, 32
    %v8937 = vpop.permute.xlu0 %8936
    %8938 = vrot.lane.b32.xlu0 %v8875, 32
    %v8939 = vpop.permute.xlu0 %8938
    %8940 = vrot.lane.b32.xlu0 %v8877, 32
    %v8941 = vpop.permute.xlu0 %8940
    %8942 = vrot.lane.b32.xlu0 %v8879, 32
    %v8943 = vpop.permute.xlu0 %8942
    %8944 = vrot.lane.b32.xlu0 %v8881, 32
    %v8945 = vpop.permute.xlu0 %8944
    %8946 = vrot.lane.b32.xlu0 %v8883, 32
    %v8947 = vpop.permute.xlu0 %8946
    %8948 = vrot.lane.b32.xlu0 %v8885, 32
    %v8949 = vpop.permute.xlu0 %8948
    %8950 = vrot.lane.b32.xlu0 %v8887, 32
    %v8951 = vpop.permute.xlu0 %8950
    %8952 = vrot.lane.b32.xlu0 %v8889, 32
    %v8953 = vpop.permute.xlu0 %8952
    %8954 = vrot.lane.b32.xlu0 %v8891, 32
    %v8955 = vpop.permute.xlu0 %8954
    %8956 = vrot.lane.b32.xlu0 %v8893, 32
    %v8957 = vpop.permute.xlu0 %8956
    %8958 = vrot.lane.b32.xlu0 %v8895, 32
    %v8959 = vpop.permute.xlu0 %8958
    %8960 = vrot.lane.b32.xlu0 %v8897, 32
    %v8961 = vpop.permute.xlu0 %8960
    %8962 = vrot.lane.b32.xlu0 %v8899, 32
    %v8963 = vpop.permute.xlu0 %8962
    %8964 = vrot.lane.b32.xlu0 %v8901, 32
    %v8965 = vpop.permute.xlu0 %8964
    %vm8998 = vcmask 1045504
    %v8999 = vrot.slane %v8767, 2
    %v9000 = vrot.slane %v8768, 2
    %v9001 = vsel %vm8998, %v8999, %v9000
    %v9002 = vrot.slane %v8769, 2
    %v9003 = vsel %vm8998, %v9000, %v9002
    %v9004 = vrot.slane %v8770, 2
    %v9005 = vsel %vm8998, %v9002, %v9004
    %v9006 = vrot.slane %v8771, 2
    %v9007 = vsel %vm8998, %v9004, %v9006
    %v9008 = vrot.slane %v8772, 2
    %v9009 = vsel %vm8998, %v9006, %v9008
    %v9010 = vrot.slane %v8773, 2
    %v9011 = vsel %vm8998, %v9008, %v9010
    %v9012 = vrot.slane %v8774, 2
    %v9013 = vsel %vm8998, %v9010, %v9012
    %v9014 = vrot.slane %v8775, 2
    %v9015 = vsel %vm8998, %v9012, %v9014
    %v9016 = vrot.slane %v8776, 2
    %v9017 = vsel %vm8998, %v9014, %v9016
    %v9018 = vrot.slane %v8777, 2
    %v9019 = vsel %vm8998, %v9016, %v9018
    %v9020 = vrot.slane %v8778, 2
    %v9021 = vsel %vm8998, %v9018, %v9020
    %v9022 = vrot.slane %v8779, 2
    %v9023 = vsel %vm8998, %v9020, %v9022
    %v9024 = vrot.slane %v8780, 2
    %v9025 = vsel %vm8998, %v9022, %v9024
    %v9026 = vrot.slane %v8781, 2
    %v9027 = vsel %vm8998, %v9024, %v9026
    %v9028 = vrot.slane %v8782, 2
    %v9029 = vsel %vm8998, %v9026, %v9028
    %v9030 = vrot.slane %v8783, 2
    %v9031 = vsel %vm8998, %v9028, %v9030
    %v9032 = vrot.slane %v8784, 2
    %v9033 = vrot.slane %v8785, 2
    %v9034 = vsel %vm8998, %v9032, %v9033
    %v9035 = vrot.slane %v8786, 2
    %v9036 = vsel %vm8998, %v9033, %v9035
    %v9037 = vrot.slane %v8787, 2
    %v9038 = vsel %vm8998, %v9035, %v9037
    %v9039 = vrot.slane %v8788, 2
    %v9040 = vsel %vm8998, %v9037, %v9039
    %v9041 = vrot.slane %v8789, 2
    %v9042 = vsel %vm8998, %v9039, %v9041
    %v9043 = vrot.slane %v8790, 2
    %v9044 = vsel %vm8998, %v9041, %v9043
    %v9045 = vrot.slane %v8791, 2
    %v9046 = vsel %vm8998, %v9043, %v9045
    %v9047 = vrot.slane %v8792, 2
    %v9048 = vsel %vm8998, %v9045, %v9047
    %v9049 = vrot.slane %v8793, 2
    %v9050 = vsel %vm8998, %v9047, %v9049
    %v9051 = vrot.slane %v8794, 2
    %v9052 = vsel %vm8998, %v9049, %v9051
    %v9053 = vrot.slane %v8795, 2
    %v9054 = vsel %vm8998, %v9051, %v9053
    %v9055 = vrot.slane %v8796, 2
    %v9056 = vsel %vm8998, %v9053, %v9055
    %v9057 = vrot.slane %v8797, 2
    %v9058 = vsel %vm8998, %v9055, %v9057
    %v9059 = vrot.slane %v8798, 2
    %v9060 = vsel %vm8998, %v9057, %v9059
    %v9061 = vrot.slane %v8799, 2
    %v9062 = vsel %vm8998, %v9059, %v9061
    %v9063 = vrot.slane %v8800, 2
    %v9064 = vsel %vm8998, %v9061, %v9063
    %9065 = vrot.lane.b32.xlu0 %v9001, 64
    %v9066 = vpop.permute.xlu0 %9065
    %9067 = vrot.lane.b32.xlu0 %v9003, 64
    %v9068 = vpop.permute.xlu0 %9067
    %9069 = vrot.lane.b32.xlu0 %v9005, 64
    %v9070 = vpop.permute.xlu0 %9069
    %9071 = vrot.lane.b32.xlu0 %v9007, 64
    %v9072 = vpop.permute.xlu0 %9071
    %9073 = vrot.lane.b32.xlu0 %v9009, 64
    %v9074 = vpop.permute.xlu0 %9073
    %9075 = vrot.lane.b32.xlu0 %v9011, 64
    %v9076 = vpop.permute.xlu0 %9075
    %9077 = vrot.lane.b32.xlu0 %v9013, 64
    %v9078 = vpop.permute.xlu0 %9077
    %9079 = vrot.lane.b32.xlu0 %v9015, 64
    %v9080 = vpop.permute.xlu0 %9079
    %9081 = vrot.lane.b32.xlu0 %v9017, 64
    %v9082 = vpop.permute.xlu0 %9081
    %9083 = vrot.lane.b32.xlu0 %v9019, 64
    %v9084 = vpop.permute.xlu0 %9083
    %9085 = vrot.lane.b32.xlu0 %v9021, 64
    %v9086 = vpop.permute.xlu0 %9085
    %9087 = vrot.lane.b32.xlu0 %v9023, 64
    %v9088 = vpop.permute.xlu0 %9087
    %9089 = vrot.lane.b32.xlu0 %v9025, 64
    %v9090 = vpop.permute.xlu0 %9089
    %9091 = vrot.lane.b32.xlu0 %v9027, 64
    %v9092 = vpop.permute.xlu0 %9091
    %9093 = vrot.lane.b32.xlu0 %v9029, 64
    %v9094 = vpop.permute.xlu0 %9093
    %9095 = vrot.lane.b32.xlu0 %v9031, 64
    %v9096 = vpop.permute.xlu0 %9095
    %9097 = vrot.lane.b32.xlu0 %v9034, 64
    %v9098 = vpop.permute.xlu0 %9097
    %9099 = vrot.lane.b32.xlu0 %v9036, 64
    %v9100 = vpop.permute.xlu0 %9099
    %9101 = vrot.lane.b32.xlu0 %v9038, 64
    %v9102 = vpop.permute.xlu0 %9101
    %9103 = vrot.lane.b32.xlu0 %v9040, 64
    %v9104 = vpop.permute.xlu0 %9103
    %9105 = vrot.lane.b32.xlu0 %v9042, 64
    %v9106 = vpop.permute.xlu0 %9105
    %9107 = vrot.lane.b32.xlu0 %v9044, 64
    %v9108 = vpop.permute.xlu0 %9107
    %9109 = vrot.lane.b32.xlu0 %v9046, 64
    %v9110 = vpop.permute.xlu0 %9109
    %9111 = vrot.lane.b32.xlu0 %v9048, 64
    %v9112 = vpop.permute.xlu0 %9111
    %9113 = vrot.lane.b32.xlu0 %v9050, 64
    %v9114 = vpop.permute.xlu0 %9113
    %9115 = vrot.lane.b32.xlu0 %v9052, 64
    %v9116 = vpop.permute.xlu0 %9115
    %9117 = vrot.lane.b32.xlu0 %v9054, 64
    %v9118 = vpop.permute.xlu0 %9117
    %9119 = vrot.lane.b32.xlu0 %v9056, 64
    %v9120 = vpop.permute.xlu0 %9119
    %9121 = vrot.lane.b32.xlu0 %v9058, 64
    %v9122 = vpop.permute.xlu0 %9121
    %9123 = vrot.lane.b32.xlu0 %v9060, 64
    %v9124 = vpop.permute.xlu0 %9123
    %9125 = vrot.lane.b32.xlu0 %v9062, 64
    %v9126 = vpop.permute.xlu0 %9125
    %9127 = vrot.lane.b32.xlu0 %v9064, 64
    %v9128 = vpop.permute.xlu0 %9127
    %v9161 = vsel %vm418, %v8767, %v8903
    %v9162 = vsel %vm418, %v8768, %v8905
    %v9163 = vsel %vm418, %v8769, %v8907
    %v9164 = vsel %vm418, %v8770, %v8909
    %v9165 = vsel %vm418, %v8771, %v8911
    %v9166 = vsel %vm418, %v8772, %v8913
    %v9167 = vsel %vm418, %v8773, %v8915
    %v9168 = vsel %vm418, %v8774, %v8917
    %v9169 = vsel %vm418, %v8775, %v8919
    %v9170 = vsel %vm418, %v8776, %v8921
    %v9171 = vsel %vm418, %v8777, %v8923
    %v9172 = vsel %vm418, %v8778, %v8925
    %v9173 = vsel %vm418, %v8779, %v8927
    %v9174 = vsel %vm418, %v8780, %v8929
    %v9175 = vsel %vm418, %v8781, %v8931
    %v9176 = vsel %vm418, %v8782, %v8933
    %v9177 = vsel %vm418, %v8784, %v8935
    %v9178 = vsel %vm418, %v8785, %v8937
    %v9179 = vsel %vm418, %v8786, %v8939
    %v9180 = vsel %vm418, %v8787, %v8941
    %v9181 = vsel %vm418, %v8788, %v8943
    %v9182 = vsel %vm418, %v8789, %v8945
    %v9183 = vsel %vm418, %v8790, %v8947
    %v9184 = vsel %vm418, %v8791, %v8949
    %v9185 = vsel %vm418, %v8792, %v8951
    %v9186 = vsel %vm418, %v8793, %v8953
    %v9187 = vsel %vm418, %v8794, %v8955
    %v9188 = vsel %vm418, %v8795, %v8957
    %v9189 = vsel %vm418, %v8796, %v8959
    %v9190 = vsel %vm418, %v8797, %v8961
    %v9191 = vsel %vm418, %v8798, %v8963
    %v9192 = vsel %vm418, %v8799, %v8965
    %v9193 = vsel %vm453, %v9161, %v9066
    %v9194 = vsel %vm453, %v9162, %v9068
    %v9195 = vsel %vm453, %v9163, %v9070
    %v9196 = vsel %vm453, %v9164, %v9072
    %v9197 = vsel %vm453, %v9165, %v9074
    %v9198 = vsel %vm453, %v9166, %v9076
    %v9199 = vsel %vm453, %v9167, %v9078
    %v9200 = vsel %vm453, %v9168, %v9080
    %v9201 = vsel %vm453, %v9169, %v9082
    %v9202 = vsel %vm453, %v9170, %v9084
    %v9203 = vsel %vm453, %v9171, %v9086
    %v9204 = vsel %vm453, %v9172, %v9088
    %v9205 = vsel %vm453, %v9173, %v9090
    %v9206 = vsel %vm453, %v9174, %v9092
    %v9207 = vsel %vm453, %v9175, %v9094
    %v9208 = vsel %vm453, %v9176, %v9096
    %v9209 = vsel %vm453, %v9177, %v9098
    %v9210 = vsel %vm453, %v9178, %v9100
    %v9211 = vsel %vm453, %v9179, %v9102
    %v9212 = vsel %vm453, %v9180, %v9104
    %v9213 = vsel %vm453, %v9181, %v9106
    %v9214 = vsel %vm453, %v9182, %v9108
    %v9215 = vsel %vm453, %v9183, %v9110
    %v9216 = vsel %vm453, %v9184, %v9112
    %v9217 = vsel %vm453, %v9185, %v9114
    %v9218 = vsel %vm453, %v9186, %v9116
    %v9219 = vsel %vm453, %v9187, %v9118
    %v9220 = vsel %vm453, %v9188, %v9120
    %v9221 = vsel %vm453, %v9189, %v9122
    %v9222 = vsel %vm453, %v9190, %v9124
    %v9223 = vsel %vm453, %v9191, %v9126
    %v9224 = vsel %vm453, %v9192, %v9128
    %v9225 = vpack.c.bf16 %v9194, %v9193
    %v9226 = vpack.c.bf16 %v9196, %v9195
    %v9227 = vpack.c.bf16 %v9198, %v9197
    %v9228 = vpack.c.bf16 %v9200, %v9199
    %v9229 = vpack.c.bf16 %v9202, %v9201
    %v9230 = vpack.c.bf16 %v9204, %v9203
    %v9231 = vpack.c.bf16 %v9206, %v9205
    %v9232 = vpack.c.bf16 %v9208, %v9207
    %v9233 = vpack.c.bf16 %v9210, %v9209
    %v9234 = vpack.c.bf16 %v9212, %v9211
    %v9235 = vpack.c.bf16 %v9214, %v9213
    %v9236 = vpack.c.bf16 %v9216, %v9215
    %v9237 = vpack.c.bf16 %v9218, %v9217
    %v9238 = vpack.c.bf16 %v9220, %v9219
    %v9239 = vpack.c.bf16 %v9222, %v9221
    %v9240 = vpack.c.bf16 %v9224, %v9223
    %v9241 = vld [vmem:[%s5] sm:$0xf]
    %v9242 = vld [vmem:[%s5 + $0x4] sm:$0xf]
    %v9243 = vld [vmem:[%s5 + $0x8] sm:$0xf]
    %v9244 = vld [vmem:[%s5 + $0xc] sm:$0xf]
    %v9245 = vld [vmem:[%s5 + $0x10] sm:$0xf]
    %v9246 = vld [vmem:[%s5 + $0x14] sm:$0xf]
    %v9247 = vld [vmem:[%s5 + $0x18] sm:$0xf]
    %v9248 = vld [vmem:[%s5 + $0x1c] sm:$0xf]
    %v9249 = vld [vmem:[%s5 + $0x20] sm:$0xf]
    %v9250 = vld [vmem:[%s5 + $0x24] sm:$0xf]
    %v9251 = vld [vmem:[%s5 + $0x28] sm:$0xf]
    %v9252 = vld [vmem:[%s5 + $0x2c] sm:$0xf]
    %v9253 = vld [vmem:[%s6] sm:$0x1]
    %v9255 = vlaneseq
    %v9256 = vshrl.u32 %v9255, 7
    %v9257 = vsub.s32 0, %v9256
    %v9258 = vrot.slane %v9253, %v9257
    %v9272 = vunpack.c.l.b16 %v9241
    %v9273 = vunpack.c.l.b16 %v9242
    %v9274 = vunpack.c.l.b16 %v9243
    %v9275 = vunpack.c.l.b16 %v9244
    %v9276 = vunpack.c.l.b16 %v9245
    %v9277 = vunpack.c.l.b16 %v9246
    %v9278 = vunpack.c.l.b16 %v9247
    %v9279 = vunpack.c.l.b16 %v9248
    %v9280 = vunpack.c.l.b16 %v9249
    %v9281 = vunpack.c.l.b16 %v9250
    %v9282 = vunpack.c.l.b16 %v9251
    %v9283 = vunpack.c.l.b16 %v9252
    %v9284 = vpack.c.b16 %v9273, %v9272
    %v9285 = vpack.c.b16 %v9275, %v9274
    %v9286 = vpack.c.b16 %v9277, %v9276
    %v9287 = vpack.c.b16 %v9279, %v9278
    %v9288 = vpack.c.b16 %v9281, %v9280
    %v9289 = vpack.c.b16 %v9283, %v9282
    %v9297 = vsel %vm2253, %v9225, 0
    %v9300 = vsel %vm2253, %v9226, 0
    %v9303 = vsel %vm2253, %v9227, 0
    %v9306 = vsel %vm2253, %v9228, 0
    %v9309 = vsel %vm2253, %v9229, 0
    %v9312 = vsel %vm2253, %v9230, 0
    %v9315 = vsel %vm2253, %v9231, 0
    %v9318 = vsel %vm2253, %v9232, 0
    %v9321 = vsel %vm2253, %v9233, 0
    %v9324 = vsel %vm2253, %v9234, 0
    %v9327 = vsel %vm2253, %v9235, 0
    %v9330 = vsel %vm2253, %v9236, 0
    %v9333 = vsel %vm2253, %v9237, 0
    %v9336 = vsel %vm2253, %v9238, 0
    %v9339 = vsel %vm2253, %v9239, 0
    %v9342 = vsel %vm2253, %v9240, 0
    %9344 = vmatprep.subr.bf16.mxu0 0
    %9345 = vmatpush1.bf16.msra.mxu0 %v9284
    %9346 = vmatprep.subr.bf16.mxu0 0
    %9347 = vmatpush1.bf16.msra.mxu0 %v9285
    %9348 = vmatprep.subr.bf16.mxu0 0
    %9349 = vmatpush1.bf16.msra.mxu0 %v9286
    %9350 = vmatprep.subr.bf16.mxu0 0
    %9351 = vmatpush1.bf16.msra.mxu0 %v9287
    %9352 = vmatprep.subr.bf16.mxu0 0
    %9353 = vmatpush1.bf16.msra.mxu0 %v9288
    %9354 = vmatprep.subr.bf16.mxu0 0
    %9355 = vmatpush1.bf16.msra.mxu0 %v9289
    %9356 = vmatprep.subr.bf16.mxu0 0
    %9357 = vmatpush1.bf16.msra.mxu0 0
    %9358 = vmatprep.subr.bf16.mxu0 0
    %9359 = vmatpush1.bf16.msra.mxu0 0
    %9360 = vmatprep.subr.bf16.mxu0 0
    %9361 = vmatpush1.bf16.msra.mxu0 0
    %9362 = vmatprep.subr.bf16.mxu0 0
    %9363 = vmatpush1.bf16.msra.mxu0 0
    %9364 = vmatprep.subr.bf16.mxu0 0
    %9365 = vmatpush1.bf16.msra.mxu0 0
    %9366 = vmatprep.subr.bf16.mxu0 0
    %9367 = vmatpush1.bf16.msra.mxu0 0
    %9368 = vmatprep.subr.bf16.mxu0 0
    %9369 = vmatpush1.bf16.msra.mxu0 0
    %9370 = vmatprep.subr.bf16.mxu0 0
    %9371 = vmatpush1.bf16.msra.mxu0 0
    %9372 = vmatprep.subr.bf16.mxu0 0
    %9373 = vmatpush1.bf16.msra.mxu0 0
    %9374 = vmatprep.subr.bf16.mxu0 0
    %9375 = vmatpush1.bf16.msra.mxu0 0
    %9376 = vmatprep.mubr.bf16.mxu0 0
    %9377 = vmatmul.mubr.bf16.gmra.mrb[0].mxu0 %v9297
    %v9378 = vpop.f32.mrb[0].mxu0
    %v9379 = vadd.f32 %v9258, %v9378
    %v9380 = vpop.f32.mrb[0].mxu0
    %v9381 = vpop.f32.mrb[0].mxu0
    %v9382 = vadd.f32 %v9258, %v9381
    %v9383 = vpop.f32.mrb[0].mxu0
    %9384 = vmatprep.mubr.bf16.mxu0 0
    %9385 = vmatmul.mubr.bf16.gmra.mrb[0].mxu0 %v9300
    %v9386 = vpop.f32.mrb[0].mxu0
    %v9387 = vadd.f32 %v9258, %v9386
    %v9388 = vpop.f32.mrb[0].mxu0
    %v9389 = vpop.f32.mrb[0].mxu0
    %v9390 = vadd.f32 %v9258, %v9389
    %v9391 = vpop.f32.mrb[0].mxu0
    %9392 = vmatprep.mubr.bf16.mxu0 0
    %9393 = vmatmul.mubr.bf16.gmra.mrb[0].mxu0 %v9303
    %v9394 = vpop.f32.mrb[0].mxu0
    %v9395 = vadd.f32 %v9258, %v9394
    %v9396 = vpop.f32.mrb[0].mxu0
    %v9397 = vpop.f32.mrb[0].mxu0
    %v9398 = vadd.f32 %v9258, %v9397
    %v9399 = vpop.f32.mrb[0].mxu0
    %9400 = vmatprep.mubr.bf16.mxu0 0
    %9401 = vmatmul.mubr.bf16.gmra.mrb[0].mxu0 %v9306
    %v9402 = vpop.f32.mrb[0].mxu0
    %v9403 = vadd.f32 %v9258, %v9402
    %v9404 = vpop.f32.mrb[0].mxu0
    %v9405 = vpop.f32.mrb[0].mxu0
    %v9406 = vadd.f32 %v9258, %v9405
    %v9407 = vpop.f32.mrb[0].mxu0
    %9408 = vmatprep.mubr.bf16.mxu0 0
    %9409 = vmatmul.mubr.bf16.gmra.mrb[0].mxu0 %v9309
    %v9410 = vpop.f32.mrb[0].mxu0
    %v9411 = vadd.f32 %v9258, %v9410
    %v9412 = vpop.f32.mrb[0].mxu0
    %v9413 = vpop.f32.mrb[0].mxu0
    %v9414 = vadd.f32 %v9258, %v9413
    %v9415 = vpop.f32.mrb[0].mxu0
    %9416 = vmatprep.mubr.bf16.mxu0 0
    %9417 = vmatmul.mubr.bf16.gmra.mrb[0].mxu0 %v9312
    %v9418 = vpop.f32.mrb[0].mxu0
    %v9419 = vadd.f32 %v9258, %v9418
    %v9420 = vpop.f32.mrb[0].mxu0
    %v9421 = vpop.f32.mrb[0].mxu0
    %v9422 = vadd.f32 %v9258, %v9421
    %v9423 = vpop.f32.mrb[0].mxu0
    %9424 = vmatprep.mubr.bf16.mxu0 0
    %9425 = vmatmul.mubr.bf16.gmra.mrb[0].mxu0 %v9315
    %v9426 = vpop.f32.mrb[0].mxu0
    %v9427 = vadd.f32 %v9258, %v9426
    %v9428 = vpop.f32.mrb[0].mxu0
    %v9429 = vpop.f32.mrb[0].mxu0
    %v9430 = vadd.f32 %v9258, %v9429
    %v9431 = vpop.f32.mrb[0].mxu0
    %9432 = vmatprep.mubr.bf16.mxu0 0
    %9433 = vmatmul.mubr.bf16.gmra.mrb[0].mxu0 %v9318
    %v9434 = vpop.f32.mrb[0].mxu0
    %v9435 = vadd.f32 %v9258, %v9434
    %v9436 = vpop.f32.mrb[0].mxu0
    %v9437 = vpop.f32.mrb[0].mxu0
    %v9438 = vadd.f32 %v9258, %v9437
    %v9439 = vpop.f32.mrb[0].mxu0
    %9440 = vmatprep.mubr.bf16.mxu0 0
    %9441 = vmatmul.mubr.bf16.gmra.mrb[0].mxu0 %v9321
    %v9442 = vpop.f32.mrb[0].mxu0
    %v9443 = vadd.f32 %v9258, %v9442
    %v9444 = vpop.f32.mrb[0].mxu0
    %v9445 = vpop.f32.mrb[0].mxu0
    %v9446 = vadd.f32 %v9258, %v9445
    %v9447 = vpop.f32.mrb[0].mxu0
    %9448 = vmatprep.mubr.bf16.mxu0 0
    %9449 = vmatmul.mubr.bf16.gmra.mrb[0].mxu0 %v9324
    %v9450 = vpop.f32.mrb[0].mxu0
    %v9451 = vadd.f32 %v9258, %v9450
    %v9452 = vpop.f32.mrb[0].mxu0
    %v9453 = vpop.f32.mrb[0].mxu0
    %v9454 = vadd.f32 %v9258, %v9453
    %v9455 = vpop.f32.mrb[0].mxu0
    %9456 = vmatprep.mubr.bf16.mxu0 0
    %9457 = vmatmul.mubr.bf16.gmra.mrb[0].mxu0 %v9327
    %v9458 = vpop.f32.mrb[0].mxu0
    %v9459 = vadd.f32 %v9258, %v9458
    %v9460 = vpop.f32.mrb[0].mxu0
    %v9461 = vpop.f32.mrb[0].mxu0
    %v9462 = vadd.f32 %v9258, %v9461
    %v9463 = vpop.f32.mrb[0].mxu0
    %9464 = vmatprep.mubr.bf16.mxu0 0
    %9465 = vmatmul.mubr.bf16.gmra.mrb[0].mxu0 %v9330
    %v9466 = vpop.f32.mrb[0].mxu0
    %v9467 = vadd.f32 %v9258, %v9466
    %v9468 = vpop.f32.mrb[0].mxu0
    %v9469 = vpop.f32.mrb[0].mxu0
    %v9470 = vadd.f32 %v9258, %v9469
    %v9471 = vpop.f32.mrb[0].mxu0
    %9472 = vmatprep.mubr.bf16.mxu0 0
    %9473 = vmatmul.mubr.bf16.gmra.mrb[0].mxu0 %v9333
    %v9474 = vpop.f32.mrb[0].mxu0
    %v9475 = vadd.f32 %v9258, %v9474
    %v9476 = vpop.f32.mrb[0].mxu0
    %v9477 = vpop.f32.mrb[0].mxu0
    %v9478 = vadd.f32 %v9258, %v9477
    %v9479 = vpop.f32.mrb[0].mxu0
    %9480 = vmatprep.mubr.bf16.mxu0 0
    %9481 = vmatmul.mubr.bf16.gmra.mrb[0].mxu0 %v9336
    %v9482 = vpop.f32.mrb[0].mxu0
    %v9483 = vadd.f32 %v9258, %v9482
    %v9484 = vpop.f32.mrb[0].mxu0
    %v9485 = vpop.f32.mrb[0].mxu0
    %v9486 = vadd.f32 %v9258, %v9485
    %v9487 = vpop.f32.mrb[0].mxu0
    %9488 = vmatprep.mubr.bf16.mxu0 0
    %9489 = vmatmul.mubr.bf16.gmra.mrb[0].mxu0 %v9339
    %v9490 = vpop.f32.mrb[0].mxu0
    %v9491 = vadd.f32 %v9258, %v9490
    %v9492 = vpop.f32.mrb[0].mxu0
    %v9493 = vpop.f32.mrb[0].mxu0
    %v9494 = vadd.f32 %v9258, %v9493
    %v9495 = vpop.f32.mrb[0].mxu0
    %9496 = vmatprep.mubr.bf16.mxu0 0
    %9497 = vmatmul.mubr.bf16.gmra.mrb[0].mxu0 %v9342
    %v9498 = vpop.f32.mrb[0].mxu0
    %v9499 = vadd.f32 %v9258, %v9498
    %v9500 = vpop.f32.mrb[0].mxu0
    %v9501 = vpop.f32.mrb[0].mxu0
    %v9502 = vadd.f32 %v9258, %v9501
    %v9503 = vpop.f32.mrb[0].mxu0
    %9504 = vdwg.mxu0
    %v9505 = vmax.f32 %v9379, 0.0
    %v9506 = vmax.f32 %v9382, 0.0
    %v9507 = vmax.f32 %v9387, 0.0
    %v9508 = vmax.f32 %v9390, 0.0
    %v9509 = vmax.f32 %v9395, 0.0
    %v9510 = vmax.f32 %v9398, 0.0
    %v9511 = vmax.f32 %v9403, 0.0
    %v9512 = vmax.f32 %v9406, 0.0
    %v9513 = vmax.f32 %v9411, 0.0
    %v9514 = vmax.f32 %v9414, 0.0
    %v9515 = vmax.f32 %v9419, 0.0
    %v9516 = vmax.f32 %v9422, 0.0
    %v9517 = vmax.f32 %v9427, 0.0
    %v9518 = vmax.f32 %v9430, 0.0
    %v9519 = vmax.f32 %v9435, 0.0
    %v9520 = vmax.f32 %v9438, 0.0
    %v9521 = vmax.f32 %v9443, 0.0
    %v9522 = vmax.f32 %v9446, 0.0
    %v9523 = vmax.f32 %v9451, 0.0
    %v9524 = vmax.f32 %v9454, 0.0
    %v9525 = vmax.f32 %v9459, 0.0
    %v9526 = vmax.f32 %v9462, 0.0
    %v9527 = vmax.f32 %v9467, 0.0
    %v9528 = vmax.f32 %v9470, 0.0
    %v9529 = vmax.f32 %v9475, 0.0
    %v9530 = vmax.f32 %v9478, 0.0
    %v9531 = vmax.f32 %v9483, 0.0
    %v9532 = vmax.f32 %v9486, 0.0
    %v9533 = vmax.f32 %v9491, 0.0
    %v9534 = vmax.f32 %v9494, 0.0
    %v9535 = vmax.f32 %v9499, 0.0
    %v9536 = vmax.f32 %v9502, 0.0
    %v9537 = vld [vmem:[%s7] sm:$0x1]
    %v9538 = vld [vmem:[%s8] sm:$0x1]
    %v9539 = vsel %vm418, %v9505, 0.0
    %9540 = vadd.xlane.f32.xlu0 %v9539
    %v9541 = vpop.xlane.xlu0 %9540
    %v9542 = vsel %vm418, %v9506, 0.0
    %9543 = vadd.xlane.f32.xlu0 %v9542
    %v9544 = vpop.xlane.xlu0 %9543
    %v9545 = vsel %vm418, %v9507, 0.0
    %9546 = vadd.xlane.f32.xlu0 %v9545
    %v9547 = vpop.xlane.xlu0 %9546
    %v9548 = vsel %vm418, %v9508, 0.0
    %9549 = vadd.xlane.f32.xlu0 %v9548
    %v9550 = vpop.xlane.xlu0 %9549
    %v9551 = vsel %vm418, %v9509, 0.0
    %9552 = vadd.xlane.f32.xlu0 %v9551
    %v9553 = vpop.xlane.xlu0 %9552
    %v9554 = vsel %vm418, %v9510, 0.0
    %9555 = vadd.xlane.f32.xlu0 %v9554
    %v9556 = vpop.xlane.xlu0 %9555
    %v9557 = vsel %vm418, %v9511, 0.0
    %9558 = vadd.xlane.f32.xlu0 %v9557
    %v9559 = vpop.xlane.xlu0 %9558
    %v9560 = vsel %vm418, %v9512, 0.0
    %9561 = vadd.xlane.f32.xlu0 %v9560
    %v9562 = vpop.xlane.xlu0 %9561
    %v9563 = vsel %vm418, %v9513, 0.0
    %9564 = vadd.xlane.f32.xlu0 %v9563
    %v9565 = vpop.xlane.xlu0 %9564
    %v9566 = vsel %vm418, %v9514, 0.0
    %9567 = vadd.xlane.f32.xlu0 %v9566
    %v9568 = vpop.xlane.xlu0 %9567
    %v9569 = vsel %vm418, %v9515, 0.0
    %9570 = vadd.xlane.f32.xlu0 %v9569
    %v9571 = vpop.xlane.xlu0 %9570
    %v9572 = vsel %vm418, %v9516, 0.0
    %9573 = vadd.xlane.f32.xlu0 %v9572
    %v9574 = vpop.xlane.xlu0 %9573
    %v9575 = vsel %vm418, %v9517, 0.0
    %9576 = vadd.xlane.f32.xlu0 %v9575
    %v9577 = vpop.xlane.xlu0 %9576
    %v9578 = vsel %vm418, %v9518, 0.0
    %9579 = vadd.xlane.f32.xlu0 %v9578
    %v9580 = vpop.xlane.xlu0 %9579
    %v9581 = vsel %vm418, %v9519, 0.0
    %9582 = vadd.xlane.f32.xlu0 %v9581
    %v9583 = vpop.xlane.xlu0 %9582
    %v9584 = vsel %vm418, %v9520, 0.0
    %9585 = vadd.xlane.f32.xlu0 %v9584
    %v9586 = vpop.xlane.xlu0 %9585
    %v9587 = vsel %vm418, %v9521, 0.0
    %9588 = vadd.xlane.f32.xlu0 %v9587
    %v9589 = vpop.xlane.xlu0 %9588
    %v9590 = vsel %vm418, %v9522, 0.0
    %9591 = vadd.xlane.f32.xlu0 %v9590
    %v9592 = vpop.xlane.xlu0 %9591
    %v9593 = vsel %vm418, %v9523, 0.0
    %9594 = vadd.xlane.f32.xlu0 %v9593
    %v9595 = vpop.xlane.xlu0 %9594
    %v9596 = vsel %vm418, %v9524, 0.0
    %9597 = vadd.xlane.f32.xlu0 %v9596
    %v9598 = vpop.xlane.xlu0 %9597
    %v9599 = vsel %vm418, %v9525, 0.0
    %9600 = vadd.xlane.f32.xlu0 %v9599
    %v9601 = vpop.xlane.xlu0 %9600
    %v9602 = vsel %vm418, %v9526, 0.0
    %9603 = vadd.xlane.f32.xlu0 %v9602
    %v9604 = vpop.xlane.xlu0 %9603
    %v9605 = vsel %vm418, %v9527, 0.0
    %9606 = vadd.xlane.f32.xlu0 %v9605
    %v9607 = vpop.xlane.xlu0 %9606
    %v9608 = vsel %vm418, %v9528, 0.0
    %9609 = vadd.xlane.f32.xlu0 %v9608
    %v9610 = vpop.xlane.xlu0 %9609
    %v9611 = vsel %vm418, %v9529, 0.0
    %9612 = vadd.xlane.f32.xlu0 %v9611
    %v9613 = vpop.xlane.xlu0 %9612
    %v9614 = vsel %vm418, %v9530, 0.0
    %9615 = vadd.xlane.f32.xlu0 %v9614
    %v9616 = vpop.xlane.xlu0 %9615
    %v9617 = vsel %vm418, %v9531, 0.0
    %9618 = vadd.xlane.f32.xlu0 %v9617
    %v9619 = vpop.xlane.xlu0 %9618
    %v9620 = vsel %vm418, %v9532, 0.0
    %9621 = vadd.xlane.f32.xlu0 %v9620
    %v9622 = vpop.xlane.xlu0 %9621
    %v9623 = vsel %vm418, %v9533, 0.0
    %9624 = vadd.xlane.f32.xlu0 %v9623
    %v9625 = vpop.xlane.xlu0 %9624
    %v9626 = vsel %vm418, %v9534, 0.0
    %9627 = vadd.xlane.f32.xlu0 %v9626
    %v9628 = vpop.xlane.xlu0 %9627
    %v9629 = vsel %vm418, %v9535, 0.0
    %9630 = vadd.xlane.f32.xlu0 %v9629
    %v9631 = vpop.xlane.xlu0 %9630
    %v9632 = vsel %vm418, %v9536, 0.0
    %9633 = vadd.xlane.f32.xlu0 %v9632
    %v9634 = vpop.xlane.xlu0 %9633
    %v9635 = vmul.f32 %v9541, %v4145
    %v9636 = vmul.f32 %v9544, %v4145
    %v9637 = vmul.f32 %v9547, %v4145
    %v9638 = vmul.f32 %v9550, %v4145
    %v9639 = vmul.f32 %v9553, %v4145
    %v9640 = vmul.f32 %v9556, %v4145
    %v9641 = vmul.f32 %v9559, %v4145
    %v9642 = vmul.f32 %v9562, %v4145
    %v9643 = vmul.f32 %v9565, %v4145
    %v9644 = vmul.f32 %v9568, %v4145
    %v9645 = vmul.f32 %v9571, %v4145
    %v9646 = vmul.f32 %v9574, %v4145
    %v9647 = vmul.f32 %v9577, %v4145
    %v9648 = vmul.f32 %v9580, %v4145
    %v9649 = vmul.f32 %v9583, %v4145
    %v9650 = vmul.f32 %v9586, %v4145
    %v9651 = vmul.f32 %v9589, %v4145
    %v9652 = vmul.f32 %v9592, %v4145
    %v9653 = vmul.f32 %v9595, %v4145
    %v9654 = vmul.f32 %v9598, %v4145
    %v9655 = vmul.f32 %v9601, %v4145
    %v9656 = vmul.f32 %v9604, %v4145
    %v9657 = vmul.f32 %v9607, %v4145
    %v9658 = vmul.f32 %v9610, %v4145
    %v9659 = vmul.f32 %v9613, %v4145
    %v9660 = vmul.f32 %v9616, %v4145
    %v9661 = vmul.f32 %v9619, %v4145
    %v9662 = vmul.f32 %v9622, %v4145
    %v9663 = vmul.f32 %v9625, %v4145
    %v9664 = vmul.f32 %v9628, %v4145
    %v9665 = vmul.f32 %v9631, %v4145
    %v9666 = vmul.f32 %v9634, %v4145
    %v9667 = vsub.f32 %v9505, %v9635
    %v9668 = vsub.f32 %v9506, %v9636
    %v9669 = vsub.f32 %v9507, %v9637
    %v9670 = vsub.f32 %v9508, %v9638
    %v9671 = vsub.f32 %v9509, %v9639
    %v9672 = vsub.f32 %v9510, %v9640
    %v9673 = vsub.f32 %v9511, %v9641
    %v9674 = vsub.f32 %v9512, %v9642
    %v9675 = vsub.f32 %v9513, %v9643
    %v9676 = vsub.f32 %v9514, %v9644
    %v9677 = vsub.f32 %v9515, %v9645
    %v9678 = vsub.f32 %v9516, %v9646
    %v9679 = vsub.f32 %v9517, %v9647
    %v9680 = vsub.f32 %v9518, %v9648
    %v9681 = vsub.f32 %v9519, %v9649
    %v9682 = vsub.f32 %v9520, %v9650
    %v9683 = vsub.f32 %v9521, %v9651
    %v9684 = vsub.f32 %v9522, %v9652
    %v9685 = vsub.f32 %v9523, %v9653
    %v9686 = vsub.f32 %v9524, %v9654
    %v9687 = vsub.f32 %v9525, %v9655
    %v9688 = vsub.f32 %v9526, %v9656
    %v9689 = vsub.f32 %v9527, %v9657
    %v9690 = vsub.f32 %v9528, %v9658
    %v9691 = vsub.f32 %v9529, %v9659
    %v9692 = vsub.f32 %v9530, %v9660
    %v9693 = vsub.f32 %v9531, %v9661
    %v9694 = vsub.f32 %v9532, %v9662
    %v9695 = vsub.f32 %v9533, %v9663
    %v9696 = vsub.f32 %v9534, %v9664
    %v9697 = vsub.f32 %v9535, %v9665
    %v9698 = vsub.f32 %v9536, %v9666
    %v9699 = vmul.f32 %v9667, %v9667
    %v9700 = vmul.f32 %v9668, %v9668
    %v9701 = vmul.f32 %v9669, %v9669
    %v9702 = vmul.f32 %v9670, %v9670
    %v9703 = vmul.f32 %v9671, %v9671
    %v9704 = vmul.f32 %v9672, %v9672
    %v9705 = vmul.f32 %v9673, %v9673
    %v9706 = vmul.f32 %v9674, %v9674
    %v9707 = vmul.f32 %v9675, %v9675
    %v9708 = vmul.f32 %v9676, %v9676
    %v9709 = vmul.f32 %v9677, %v9677
    %v9710 = vmul.f32 %v9678, %v9678
    %v9711 = vmul.f32 %v9679, %v9679
    %v9712 = vmul.f32 %v9680, %v9680
    %v9713 = vmul.f32 %v9681, %v9681
    %v9714 = vmul.f32 %v9682, %v9682
    %v9715 = vmul.f32 %v9683, %v9683
    %v9716 = vmul.f32 %v9684, %v9684
    %v9717 = vmul.f32 %v9685, %v9685
    %v9718 = vmul.f32 %v9686, %v9686
    %v9719 = vmul.f32 %v9687, %v9687
    %v9720 = vmul.f32 %v9688, %v9688
    %v9721 = vmul.f32 %v9689, %v9689
    %v9722 = vmul.f32 %v9690, %v9690
    %v9723 = vmul.f32 %v9691, %v9691
    %v9724 = vmul.f32 %v9692, %v9692
    %v9725 = vmul.f32 %v9693, %v9693
    %v9726 = vmul.f32 %v9694, %v9694
    %v9727 = vmul.f32 %v9695, %v9695
    %v9728 = vmul.f32 %v9696, %v9696
    %v9729 = vmul.f32 %v9697, %v9697
    %v9730 = vmul.f32 %v9698, %v9698
    %v9731 = vsel %vm418, %v9699, 0.0
    %9732 = vadd.xlane.f32.xlu0 %v9731
    %v9733 = vpop.xlane.xlu0 %9732
    %v9734 = vsel %vm418, %v9700, 0.0
    %9735 = vadd.xlane.f32.xlu0 %v9734
    %v9736 = vpop.xlane.xlu0 %9735
    %v9737 = vsel %vm418, %v9701, 0.0
    %9738 = vadd.xlane.f32.xlu0 %v9737
    %v9739 = vpop.xlane.xlu0 %9738
    %v9740 = vsel %vm418, %v9702, 0.0
    %9741 = vadd.xlane.f32.xlu0 %v9740
    %v9742 = vpop.xlane.xlu0 %9741
    %v9743 = vsel %vm418, %v9703, 0.0
    %9744 = vadd.xlane.f32.xlu0 %v9743
    %v9745 = vpop.xlane.xlu0 %9744
    %v9746 = vsel %vm418, %v9704, 0.0
    %9747 = vadd.xlane.f32.xlu0 %v9746
    %v9748 = vpop.xlane.xlu0 %9747
    %v9749 = vsel %vm418, %v9705, 0.0
    %9750 = vadd.xlane.f32.xlu0 %v9749
    %v9751 = vpop.xlane.xlu0 %9750
    %v9752 = vsel %vm418, %v9706, 0.0
    %9753 = vadd.xlane.f32.xlu0 %v9752
    %v9754 = vpop.xlane.xlu0 %9753
    %v9755 = vsel %vm418, %v9707, 0.0
    %9756 = vadd.xlane.f32.xlu0 %v9755
    %v9757 = vpop.xlane.xlu0 %9756
    %v9758 = vsel %vm418, %v9708, 0.0
    %9759 = vadd.xlane.f32.xlu0 %v9758
    %v9760 = vpop.xlane.xlu0 %9759
    %v9761 = vsel %vm418, %v9709, 0.0
    %9762 = vadd.xlane.f32.xlu0 %v9761
    %v9763 = vpop.xlane.xlu0 %9762
    %v9764 = vsel %vm418, %v9710, 0.0
    %9765 = vadd.xlane.f32.xlu0 %v9764
    %v9766 = vpop.xlane.xlu0 %9765
    %v9767 = vsel %vm418, %v9711, 0.0
    %9768 = vadd.xlane.f32.xlu0 %v9767
    %v9769 = vpop.xlane.xlu0 %9768
    %v9770 = vsel %vm418, %v9712, 0.0
    %9771 = vadd.xlane.f32.xlu0 %v9770
    %v9772 = vpop.xlane.xlu0 %9771
    %v9773 = vsel %vm418, %v9713, 0.0
    %9774 = vadd.xlane.f32.xlu0 %v9773
    %v9775 = vpop.xlane.xlu0 %9774
    %v9776 = vsel %vm418, %v9714, 0.0
    %9777 = vadd.xlane.f32.xlu0 %v9776
    %v9778 = vpop.xlane.xlu0 %9777
    %v9779 = vsel %vm418, %v9715, 0.0
    %9780 = vadd.xlane.f32.xlu0 %v9779
    %v9781 = vpop.xlane.xlu0 %9780
    %v9782 = vsel %vm418, %v9716, 0.0
    %9783 = vadd.xlane.f32.xlu0 %v9782
    %v9784 = vpop.xlane.xlu0 %9783
    %v9785 = vsel %vm418, %v9717, 0.0
    %9786 = vadd.xlane.f32.xlu0 %v9785
    %v9787 = vpop.xlane.xlu0 %9786
    %v9788 = vsel %vm418, %v9718, 0.0
    %9789 = vadd.xlane.f32.xlu0 %v9788
    %v9790 = vpop.xlane.xlu0 %9789
    %v9791 = vsel %vm418, %v9719, 0.0
    %9792 = vadd.xlane.f32.xlu0 %v9791
    %v9793 = vpop.xlane.xlu0 %9792
    %v9794 = vsel %vm418, %v9720, 0.0
    %9795 = vadd.xlane.f32.xlu0 %v9794
    %v9796 = vpop.xlane.xlu0 %9795
    %v9797 = vsel %vm418, %v9721, 0.0
    %9798 = vadd.xlane.f32.xlu0 %v9797
    %v9799 = vpop.xlane.xlu0 %9798
    %v9800 = vsel %vm418, %v9722, 0.0
    %9801 = vadd.xlane.f32.xlu0 %v9800
    %v9802 = vpop.xlane.xlu0 %9801
    %v9803 = vsel %vm418, %v9723, 0.0
    %9804 = vadd.xlane.f32.xlu0 %v9803
    %v9805 = vpop.xlane.xlu0 %9804
    %v9806 = vsel %vm418, %v9724, 0.0
    %9807 = vadd.xlane.f32.xlu0 %v9806
    %v9808 = vpop.xlane.xlu0 %9807
    %v9809 = vsel %vm418, %v9725, 0.0
    %9810 = vadd.xlane.f32.xlu0 %v9809
    %v9811 = vpop.xlane.xlu0 %9810
    %v9812 = vsel %vm418, %v9726, 0.0
    %9813 = vadd.xlane.f32.xlu0 %v9812
    %v9814 = vpop.xlane.xlu0 %9813
    %v9815 = vsel %vm418, %v9727, 0.0
    %9816 = vadd.xlane.f32.xlu0 %v9815
    %v9817 = vpop.xlane.xlu0 %9816
    %v9818 = vsel %vm418, %v9728, 0.0
    %9819 = vadd.xlane.f32.xlu0 %v9818
    %v9820 = vpop.xlane.xlu0 %9819
    %v9821 = vsel %vm418, %v9729, 0.0
    %9822 = vadd.xlane.f32.xlu0 %v9821
    %v9823 = vpop.xlane.xlu0 %9822
    %v9824 = vsel %vm418, %v9730, 0.0
    %9825 = vadd.xlane.f32.xlu0 %v9824
    %v9826 = vpop.xlane.xlu0 %9825
    %v9827 = vmul.f32 %v9733, %v4145
    %v9828 = vmul.f32 %v9736, %v4145
    %v9829 = vmul.f32 %v9739, %v4145
    %v9830 = vmul.f32 %v9742, %v4145
    %v9831 = vmul.f32 %v9745, %v4145
    %v9832 = vmul.f32 %v9748, %v4145
    %v9833 = vmul.f32 %v9751, %v4145
    %v9834 = vmul.f32 %v9754, %v4145
    %v9835 = vmul.f32 %v9757, %v4145
    %v9836 = vmul.f32 %v9760, %v4145
    %v9837 = vmul.f32 %v9763, %v4145
    %v9838 = vmul.f32 %v9766, %v4145
    %v9839 = vmul.f32 %v9769, %v4145
    %v9840 = vmul.f32 %v9772, %v4145
    %v9841 = vmul.f32 %v9775, %v4145
    %v9842 = vmul.f32 %v9778, %v4145
    %v9843 = vmul.f32 %v9781, %v4145
    %v9844 = vmul.f32 %v9784, %v4145
    %v9845 = vmul.f32 %v9787, %v4145
    %v9846 = vmul.f32 %v9790, %v4145
    %v9847 = vmul.f32 %v9793, %v4145
    %v9848 = vmul.f32 %v9796, %v4145
    %v9849 = vmul.f32 %v9799, %v4145
    %v9850 = vmul.f32 %v9802, %v4145
    %v9851 = vmul.f32 %v9805, %v4145
    %v9852 = vmul.f32 %v9808, %v4145
    %v9853 = vmul.f32 %v9811, %v4145
    %v9854 = vmul.f32 %v9814, %v4145
    %v9855 = vmul.f32 %v9817, %v4145
    %v9856 = vmul.f32 %v9820, %v4145
    %v9857 = vmul.f32 %v9823, %v4145
    %v9858 = vmul.f32 %v9826, %v4145
    %v9859 = vadd.f32 %v9827, 1e-05
    %v9860 = vadd.f32 %v9828, 1e-05
    %v9861 = vadd.f32 %v9829, 1e-05
    %v9862 = vadd.f32 %v9830, 1e-05
    %v9863 = vadd.f32 %v9831, 1e-05
    %v9864 = vadd.f32 %v9832, 1e-05
    %v9865 = vadd.f32 %v9833, 1e-05
    %v9866 = vadd.f32 %v9834, 1e-05
    %v9867 = vadd.f32 %v9835, 1e-05
    %v9868 = vadd.f32 %v9836, 1e-05
    %v9869 = vadd.f32 %v9837, 1e-05
    %v9870 = vadd.f32 %v9838, 1e-05
    %v9871 = vadd.f32 %v9839, 1e-05
    %v9872 = vadd.f32 %v9840, 1e-05
    %v9873 = vadd.f32 %v9841, 1e-05
    %v9874 = vadd.f32 %v9842, 1e-05
    %v9875 = vadd.f32 %v9843, 1e-05
    %v9876 = vadd.f32 %v9844, 1e-05
    %v9877 = vadd.f32 %v9845, 1e-05
    %v9878 = vadd.f32 %v9846, 1e-05
    %v9879 = vadd.f32 %v9847, 1e-05
    %v9880 = vadd.f32 %v9848, 1e-05
    %v9881 = vadd.f32 %v9849, 1e-05
    %v9882 = vadd.f32 %v9850, 1e-05
    %v9883 = vadd.f32 %v9851, 1e-05
    %v9884 = vadd.f32 %v9852, 1e-05
    %v9885 = vadd.f32 %v9853, 1e-05
    %v9886 = vadd.f32 %v9854, 1e-05
    %v9887 = vadd.f32 %v9855, 1e-05
    %v9888 = vadd.f32 %v9856, 1e-05
    %v9889 = vadd.f32 %v9857, 1e-05
    %v9890 = vadd.f32 %v9858, 1e-05
    %v9891 = vrsqrt.pop %v9859
    %v9892 = vrsqrt.pop %v9860
    %v9893 = vrsqrt.pop %v9861
    %v9894 = vrsqrt.pop %v9862
    %v9895 = vrsqrt.pop %v9863
    %v9896 = vrsqrt.pop %v9864
    %v9897 = vrsqrt.pop %v9865
    %v9898 = vrsqrt.pop %v9866
    %v9899 = vrsqrt.pop %v9867
    %v9900 = vrsqrt.pop %v9868
    %v9901 = vrsqrt.pop %v9869
    %v9902 = vrsqrt.pop %v9870
    %v9903 = vrsqrt.pop %v9871
    %v9904 = vrsqrt.pop %v9872
    %v9905 = vrsqrt.pop %v9873
    %v9906 = vrsqrt.pop %v9874
    %v9907 = vrsqrt.pop %v9875
    %v9908 = vrsqrt.pop %v9876
    %v9909 = vrsqrt.pop %v9877
    %v9910 = vrsqrt.pop %v9878
    %v9911 = vrsqrt.pop %v9879
    %v9912 = vrsqrt.pop %v9880
    %v9913 = vrsqrt.pop %v9881
    %v9914 = vrsqrt.pop %v9882
    %v9915 = vrsqrt.pop %v9883
    %v9916 = vrsqrt.pop %v9884
    %v9917 = vrsqrt.pop %v9885
    %v9918 = vrsqrt.pop %v9886
    %v9919 = vrsqrt.pop %v9887
    %v9920 = vrsqrt.pop %v9888
    %v9921 = vrsqrt.pop %v9889
    %v9922 = vrsqrt.pop %v9890
    %v9923 = vmul.f32 %v9667, %v9891
    %v9924 = vmul.f32 %v9668, %v9892
    %v9925 = vmul.f32 %v9669, %v9893
    %v9926 = vmul.f32 %v9670, %v9894
    %v9927 = vmul.f32 %v9671, %v9895
    %v9928 = vmul.f32 %v9672, %v9896
    %v9929 = vmul.f32 %v9673, %v9897
    %v9930 = vmul.f32 %v9674, %v9898
    %v9931 = vmul.f32 %v9675, %v9899
    %v9932 = vmul.f32 %v9676, %v9900
    %v9933 = vmul.f32 %v9677, %v9901
    %v9934 = vmul.f32 %v9678, %v9902
    %v9935 = vmul.f32 %v9679, %v9903
    %v9936 = vmul.f32 %v9680, %v9904
    %v9937 = vmul.f32 %v9681, %v9905
    %v9938 = vmul.f32 %v9682, %v9906
    %v9939 = vmul.f32 %v9683, %v9907
    %v9940 = vmul.f32 %v9684, %v9908
    %v9941 = vmul.f32 %v9685, %v9909
    %v9942 = vmul.f32 %v9686, %v9910
    %v9943 = vmul.f32 %v9687, %v9911
    %v9944 = vmul.f32 %v9688, %v9912
    %v9945 = vmul.f32 %v9689, %v9913
    %v9946 = vmul.f32 %v9690, %v9914
    %v9947 = vmul.f32 %v9691, %v9915
    %v9948 = vmul.f32 %v9692, %v9916
    %v9949 = vmul.f32 %v9693, %v9917
    %v9950 = vmul.f32 %v9694, %v9918
    %v9951 = vmul.f32 %v9695, %v9919
    %v9952 = vmul.f32 %v9696, %v9920
    %v9953 = vmul.f32 %v9697, %v9921
    %v9954 = vmul.f32 %v9698, %v9922
    %v9956 = vlaneseq
    %v9957 = vshrl.u32 %v9956, 7
    %v9958 = vsub.s32 0, %v9957
    %v9959 = vrot.slane %v9537, %v9958
    %v9961 = vmul.f32 %v9923, %v9959
    %v9962 = vmul.f32 %v9924, %v9959
    %v9963 = vmul.f32 %v9925, %v9959
    %v9964 = vmul.f32 %v9926, %v9959
    %v9965 = vmul.f32 %v9927, %v9959
    %v9966 = vmul.f32 %v9928, %v9959
    %v9967 = vmul.f32 %v9929, %v9959
    %v9968 = vmul.f32 %v9930, %v9959
    %v9969 = vmul.f32 %v9931, %v9959
    %v9970 = vmul.f32 %v9932, %v9959
    %v9971 = vmul.f32 %v9933, %v9959
    %v9972 = vmul.f32 %v9934, %v9959
    %v9973 = vmul.f32 %v9935, %v9959
    %v9974 = vmul.f32 %v9936, %v9959
    %v9975 = vmul.f32 %v9937, %v9959
    %v9976 = vmul.f32 %v9938, %v9959
    %v9977 = vmul.f32 %v9939, %v9959
    %v9978 = vmul.f32 %v9940, %v9959
    %v9979 = vmul.f32 %v9941, %v9959
    %v9980 = vmul.f32 %v9942, %v9959
    %v9981 = vmul.f32 %v9943, %v9959
    %v9982 = vmul.f32 %v9944, %v9959
    %v9983 = vmul.f32 %v9945, %v9959
    %v9984 = vmul.f32 %v9946, %v9959
    %v9985 = vmul.f32 %v9947, %v9959
    %v9986 = vmul.f32 %v9948, %v9959
    %v9987 = vmul.f32 %v9949, %v9959
    %v9988 = vmul.f32 %v9950, %v9959
    %v9989 = vmul.f32 %v9951, %v9959
    %v9990 = vmul.f32 %v9952, %v9959
    %v9991 = vmul.f32 %v9953, %v9959
    %v9992 = vmul.f32 %v9954, %v9959
    %v9994 = vlaneseq
    %v9995 = vshrl.u32 %v9994, 7
    %v9996 = vsub.s32 0, %v9995
    %v9997 = vrot.slane %v9538, %v9996
    %v9999 = vadd.f32 %v9961, %v9997
    %v10000 = vadd.f32 %v9962, %v9997
    %v10001 = vadd.f32 %v9963, %v9997
    %v10002 = vadd.f32 %v9964, %v9997
    %v10003 = vadd.f32 %v9965, %v9997
    %v10004 = vadd.f32 %v9966, %v9997
    %v10005 = vadd.f32 %v9967, %v9997
    %v10006 = vadd.f32 %v9968, %v9997
    %v10007 = vadd.f32 %v9969, %v9997
    %v10008 = vadd.f32 %v9970, %v9997
    %v10009 = vadd.f32 %v9971, %v9997
    %v10010 = vadd.f32 %v9972, %v9997
    %v10011 = vadd.f32 %v9973, %v9997
    %v10012 = vadd.f32 %v9974, %v9997
    %v10013 = vadd.f32 %v9975, %v9997
    %v10014 = vadd.f32 %v9976, %v9997
    %v10015 = vadd.f32 %v9977, %v9997
    %v10016 = vadd.f32 %v9978, %v9997
    %v10017 = vadd.f32 %v9979, %v9997
    %v10018 = vadd.f32 %v9980, %v9997
    %v10019 = vadd.f32 %v9981, %v9997
    %v10020 = vadd.f32 %v9982, %v9997
    %v10021 = vadd.f32 %v9983, %v9997
    %v10022 = vadd.f32 %v9984, %v9997
    %v10023 = vadd.f32 %v9985, %v9997
    %v10024 = vadd.f32 %v9986, %v9997
    %v10025 = vadd.f32 %v9987, %v9997
    %v10026 = vadd.f32 %v9988, %v9997
    %v10027 = vadd.f32 %v9989, %v9997
    %v10028 = vadd.f32 %v9990, %v9997
    %v10029 = vadd.f32 %v9991, %v9997
    %v10030 = vadd.f32 %v9992, %v9997
    %v10031 = vld [vmem:[%s9] sm:$0x1]
    %v10033 = vlaneseq
    %v10034 = vshrl.u32 %v10033, 7
    %v10035 = vsub.s32 0, %v10034
    %v10036 = vrot.slane %v10031, %v10035
    %v10038 = vmul.f32 %v9999, %v10036
    %v10039 = vmul.f32 %v10000, %v10036
    %v10040 = vmul.f32 %v10001, %v10036
    %v10041 = vmul.f32 %v10002, %v10036
    %v10042 = vmul.f32 %v10003, %v10036
    %v10043 = vmul.f32 %v10004, %v10036
    %v10044 = vmul.f32 %v10005, %v10036
    %v10045 = vmul.f32 %v10006, %v10036
    %v10046 = vmul.f32 %v10007, %v10036
    %v10047 = vmul.f32 %v10008, %v10036
    %v10048 = vmul.f32 %v10009, %v10036
    %v10049 = vmul.f32 %v10010, %v10036
    %v10050 = vmul.f32 %v10011, %v10036
    %v10051 = vmul.f32 %v10012, %v10036
    %v10052 = vmul.f32 %v10013, %v10036
    %v10053 = vmul.f32 %v10014, %v10036
    %v10054 = vmul.f32 %v10015, %v10036
    %v10055 = vmul.f32 %v10016, %v10036
    %v10056 = vmul.f32 %v10017, %v10036
    %v10057 = vmul.f32 %v10018, %v10036
    %v10058 = vmul.f32 %v10019, %v10036
    %v10059 = vmul.f32 %v10020, %v10036
    %v10060 = vmul.f32 %v10021, %v10036
    %v10061 = vmul.f32 %v10022, %v10036
    %v10062 = vmul.f32 %v10023, %v10036
    %v10063 = vmul.f32 %v10024, %v10036
    %v10064 = vmul.f32 %v10025, %v10036
    %v10065 = vmul.f32 %v10026, %v10036
    %v10066 = vmul.f32 %v10027, %v10036
    %v10067 = vmul.f32 %v10028, %v10036
    %v10068 = vmul.f32 %v10029, %v10036
    %v10069 = vmul.f32 %v10030, %v10036
    %v10070 = vsel %vm418, %v10038, 0.0
    %10071 = vadd.xlane.f32.xlu0 %v10070
    %v10072 = vpop.xlane.xlu0 %10071
    %v10073 = vsel %vm418, %v10039, 0.0
    %10074 = vadd.xlane.f32.xlu0 %v10073
    %v10075 = vpop.xlane.xlu0 %10074
    %v10076 = vsel %vm418, %v10040, 0.0
    %10077 = vadd.xlane.f32.xlu0 %v10076
    %v10078 = vpop.xlane.xlu0 %10077
    %v10079 = vsel %vm418, %v10041, 0.0
    %10080 = vadd.xlane.f32.xlu0 %v10079
    %v10081 = vpop.xlane.xlu0 %10080
    %v10082 = vsel %vm418, %v10042, 0.0
    %10083 = vadd.xlane.f32.xlu0 %v10082
    %v10084 = vpop.xlane.xlu0 %10083
    %v10085 = vsel %vm418, %v10043, 0.0
    %10086 = vadd.xlane.f32.xlu0 %v10085
    %v10087 = vpop.xlane.xlu0 %10086
    %v10088 = vsel %vm418, %v10044, 0.0
    %10089 = vadd.xlane.f32.xlu0 %v10088
    %v10090 = vpop.xlane.xlu0 %10089
    %v10091 = vsel %vm418, %v10045, 0.0
    %10092 = vadd.xlane.f32.xlu0 %v10091
    %v10093 = vpop.xlane.xlu0 %10092
    %v10094 = vsel %vm418, %v10046, 0.0
    %10095 = vadd.xlane.f32.xlu0 %v10094
    %v10096 = vpop.xlane.xlu0 %10095
    %v10097 = vsel %vm418, %v10047, 0.0
    %10098 = vadd.xlane.f32.xlu0 %v10097
    %v10099 = vpop.xlane.xlu0 %10098
    %v10100 = vsel %vm418, %v10048, 0.0
    %10101 = vadd.xlane.f32.xlu0 %v10100
    %v10102 = vpop.xlane.xlu0 %10101
    %v10103 = vsel %vm418, %v10049, 0.0
    %10104 = vadd.xlane.f32.xlu0 %v10103
    %v10105 = vpop.xlane.xlu0 %10104
    %v10106 = vsel %vm418, %v10050, 0.0
    %10107 = vadd.xlane.f32.xlu0 %v10106
    %v10108 = vpop.xlane.xlu0 %10107
    %v10109 = vsel %vm418, %v10051, 0.0
    %10110 = vadd.xlane.f32.xlu0 %v10109
    %v10111 = vpop.xlane.xlu0 %10110
    %v10112 = vsel %vm418, %v10052, 0.0
    %10113 = vadd.xlane.f32.xlu0 %v10112
    %v10114 = vpop.xlane.xlu0 %10113
    %v10115 = vsel %vm418, %v10053, 0.0
    %10116 = vadd.xlane.f32.xlu0 %v10115
    %v10117 = vpop.xlane.xlu0 %10116
    %v10118 = vsel %vm418, %v10054, 0.0
    %10119 = vadd.xlane.f32.xlu0 %v10118
    %v10120 = vpop.xlane.xlu0 %10119
    %v10121 = vsel %vm418, %v10055, 0.0
    %10122 = vadd.xlane.f32.xlu0 %v10121
    %v10123 = vpop.xlane.xlu0 %10122
    %v10124 = vsel %vm418, %v10056, 0.0
    %10125 = vadd.xlane.f32.xlu0 %v10124
    %v10126 = vpop.xlane.xlu0 %10125
    %v10127 = vsel %vm418, %v10057, 0.0
    %10128 = vadd.xlane.f32.xlu0 %v10127
    %v10129 = vpop.xlane.xlu0 %10128
    %v10130 = vsel %vm418, %v10058, 0.0
    %10131 = vadd.xlane.f32.xlu0 %v10130
    %v10132 = vpop.xlane.xlu0 %10131
    %v10133 = vsel %vm418, %v10059, 0.0
    %10134 = vadd.xlane.f32.xlu0 %v10133
    %v10135 = vpop.xlane.xlu0 %10134
    %v10136 = vsel %vm418, %v10060, 0.0
    %10137 = vadd.xlane.f32.xlu0 %v10136
    %v10138 = vpop.xlane.xlu0 %10137
    %v10139 = vsel %vm418, %v10061, 0.0
    %10140 = vadd.xlane.f32.xlu0 %v10139
    %v10141 = vpop.xlane.xlu0 %10140
    %v10142 = vsel %vm418, %v10062, 0.0
    %10143 = vadd.xlane.f32.xlu0 %v10142
    %v10144 = vpop.xlane.xlu0 %10143
    %v10145 = vsel %vm418, %v10063, 0.0
    %10146 = vadd.xlane.f32.xlu0 %v10145
    %v10147 = vpop.xlane.xlu0 %10146
    %v10148 = vsel %vm418, %v10064, 0.0
    %10149 = vadd.xlane.f32.xlu0 %v10148
    %v10150 = vpop.xlane.xlu0 %10149
    %v10151 = vsel %vm418, %v10065, 0.0
    %10152 = vadd.xlane.f32.xlu0 %v10151
    %v10153 = vpop.xlane.xlu0 %10152
    %v10154 = vsel %vm418, %v10066, 0.0
    %10155 = vadd.xlane.f32.xlu0 %v10154
    %v10156 = vpop.xlane.xlu0 %10155
    %v10157 = vsel %vm418, %v10067, 0.0
    %10158 = vadd.xlane.f32.xlu0 %v10157
    %v10159 = vpop.xlane.xlu0 %10158
    %v10160 = vsel %vm418, %v10068, 0.0
    %10161 = vadd.xlane.f32.xlu0 %v10160
    %v10162 = vpop.xlane.xlu0 %10161
    %v10163 = vsel %vm418, %v10069, 0.0
    %10164 = vadd.xlane.f32.xlu0 %v10163
    %v10165 = vpop.xlane.xlu0 %10164
    %s10166 = sld [smem:[#allocation2]]
    %v10167 = vstv %s10166
    %v10168 = vadd.f32 %v10072, %v10167
    %v10169 = vadd.f32 %v10075, %v10167
    %v10170 = vadd.f32 %v10078, %v10167
    %v10171 = vadd.f32 %v10081, %v10167
    %v10172 = vadd.f32 %v10084, %v10167
    %v10173 = vadd.f32 %v10087, %v10167
    %v10174 = vadd.f32 %v10090, %v10167
    %v10175 = vadd.f32 %v10093, %v10167
    %v10176 = vadd.f32 %v10096, %v10167
    %v10177 = vadd.f32 %v10099, %v10167
    %v10178 = vadd.f32 %v10102, %v10167
    %v10179 = vadd.f32 %v10105, %v10167
    %v10180 = vadd.f32 %v10108, %v10167
    %v10181 = vadd.f32 %v10111, %v10167
    %v10182 = vadd.f32 %v10114, %v10167
    %v10183 = vadd.f32 %v10117, %v10167
    %v10184 = vadd.f32 %v10120, %v10167
    %v10185 = vadd.f32 %v10123, %v10167
    %v10186 = vadd.f32 %v10126, %v10167
    %v10187 = vadd.f32 %v10129, %v10167
    %v10188 = vadd.f32 %v10132, %v10167
    %v10189 = vadd.f32 %v10135, %v10167
    %v10190 = vadd.f32 %v10138, %v10167
    %v10191 = vadd.f32 %v10141, %v10167
    %v10192 = vadd.f32 %v10144, %v10167
    %v10193 = vadd.f32 %v10147, %v10167
    %v10194 = vadd.f32 %v10150, %v10167
    %v10195 = vadd.f32 %v10153, %v10167
    %v10196 = vadd.f32 %v10156, %v10167
    %v10197 = vadd.f32 %v10159, %v10167
    %v10198 = vadd.f32 %v10162, %v10167
    %v10199 = vadd.f32 %v10165, %v10167
    %v10200 = vld [vmem:[%s11] sm:$0x3]
    %vm10201 = vcmp.gt.f32.partialorder %v10200, 0.5
    %v10234 = vlaneseq
    %v10235 = vand.u32 %v10234, 127
    %v10236 = vlaneseq
    %v10237 = vshrl.u32 %v10236, 7
    %v10238 = vsub.s32 %v10235, %v10237
    %v10239 = vrot.slane %v10168, %v10238
    %v10240 = vadd.s32 %v10235, 4294967288
    %v10241 = vlaneseq
    %v10242 = vshrl.u32 %v10241, 7
    %v10243 = vsub.s32 %v10240, %v10242
    %v10244 = vrot.slane %v10169, %v10243
    %vm10245 = vcmask 130112
    %v10246 = vsel %vm10245, %v10244, %v10239
    %v10247 = vadd.s32 %v10235, 4294967280
    %v10248 = vlaneseq
    %v10249 = vshrl.u32 %v10248, 7
    %v10250 = vsub.s32 %v10247, %v10249
    %v10251 = vrot.slane %v10170, %v10250
    %vm10252 = vcmask 195712
    %v10253 = vsel %vm10252, %v10251, %v10246
    %v10254 = vadd.s32 %v10235, 4294967272
    %v10255 = vlaneseq
    %v10256 = vshrl.u32 %v10255, 7
    %v10257 = vsub.s32 %v10254, %v10256
    %v10258 = vrot.slane %v10171, %v10257
    %vm10259 = vcmask 261312
    %v10260 = vsel %vm10259, %v10258, %v10253
    %v10261 = vadd.s32 %v10235, 4294967264
    %v10262 = vlaneseq
    %v10263 = vshrl.u32 %v10262, 7
    %v10264 = vsub.s32 %v10261, %v10263
    %v10265 = vrot.slane %v10172, %v10264
    %vm10266 = vcmask 326912
    %v10267 = vsel %vm10266, %v10265, %v10260
    %v10268 = vadd.s32 %v10235, 4294967256
    %v10269 = vlaneseq
    %v10270 = vshrl.u32 %v10269, 7
    %v10271 = vsub.s32 %v10268, %v10270
    %v10272 = vrot.slane %v10173, %v10271
    %vm10273 = vcmask 392512
    %v10274 = vsel %vm10273, %v10272, %v10267
    %v10275 = vadd.s32 %v10235, 4294967248
    %v10276 = vlaneseq
    %v10277 = vshrl.u32 %v10276, 7
    %v10278 = vsub.s32 %v10275, %v10277
    %v10279 = vrot.slane %v10174, %v10278
    %vm10280 = vcmask 458112
    %v10281 = vsel %vm10280, %v10279, %v10274
    %v10282 = vadd.s32 %v10235, 4294967240
    %v10283 = vlaneseq
    %v10284 = vshrl.u32 %v10283, 7
    %v10285 = vsub.s32 %v10282, %v10284
    %v10286 = vrot.slane %v10175, %v10285
    %vm10287 = vcmask 523712
    %v10288 = vsel %vm10287, %v10286, %v10281
    %v10289 = vadd.s32 %v10235, 4294967232
    %v10290 = vlaneseq
    %v10291 = vshrl.u32 %v10290, 7
    %v10292 = vsub.s32 %v10289, %v10291
    %v10293 = vrot.slane %v10176, %v10292
    %vm10294 = vcmask 589312
    %v10295 = vsel %vm10294, %v10293, %v10288
    %v10296 = vadd.s32 %v10235, 4294967224
    %v10297 = vlaneseq
    %v10298 = vshrl.u32 %v10297, 7
    %v10299 = vsub.s32 %v10296, %v10298
    %v10300 = vrot.slane %v10177, %v10299
    %vm10301 = vcmask 654912
    %v10302 = vsel %vm10301, %v10300, %v10295
    %v10303 = vadd.s32 %v10235, 4294967216
    %v10304 = vlaneseq
    %v10305 = vshrl.u32 %v10304, 7
    %v10306 = vsub.s32 %v10303, %v10305
    %v10307 = vrot.slane %v10178, %v10306
    %vm10308 = vcmask 720512
    %v10309 = vsel %vm10308, %v10307, %v10302
    %v10310 = vadd.s32 %v10235, 4294967208
    %v10311 = vlaneseq
    %v10312 = vshrl.u32 %v10311, 7
    %v10313 = vsub.s32 %v10310, %v10312
    %v10314 = vrot.slane %v10179, %v10313
    %vm10315 = vcmask 786112
    %v10316 = vsel %vm10315, %v10314, %v10309
    %v10317 = vadd.s32 %v10235, 4294967200
    %v10318 = vlaneseq
    %v10319 = vshrl.u32 %v10318, 7
    %v10320 = vsub.s32 %v10317, %v10319
    %v10321 = vrot.slane %v10180, %v10320
    %vm10322 = vcmask 851712
    %v10323 = vsel %vm10322, %v10321, %v10316
    %v10324 = vadd.s32 %v10235, 4294967192
    %v10325 = vlaneseq
    %v10326 = vshrl.u32 %v10325, 7
    %v10327 = vsub.s32 %v10324, %v10326
    %v10328 = vrot.slane %v10181, %v10327
    %vm10329 = vcmask 917312
    %v10330 = vsel %vm10329, %v10328, %v10323
    %v10331 = vadd.s32 %v10235, 4294967184
    %v10332 = vlaneseq
    %v10333 = vshrl.u32 %v10332, 7
    %v10334 = vsub.s32 %v10331, %v10333
    %v10335 = vrot.slane %v10182, %v10334
    %vm10336 = vcmask 982912
    %v10337 = vsel %vm10336, %v10335, %v10330
    %v10338 = vadd.s32 %v10235, 4294967176
    %v10339 = vlaneseq
    %v10340 = vshrl.u32 %v10339, 7
    %v10341 = vsub.s32 %v10338, %v10340
    %v10342 = vrot.slane %v10183, %v10341
    %vm10343 = vcmask 1048512
    %v10344 = vsel %vm10343, %v10342, %v10337
    %v10345 = vlaneseq
    %v10346 = vshrl.u32 %v10345, 7
    %v10347 = vsub.s32 %v10235, %v10346
    %v10348 = vrot.slane %v10184, %v10347
    %v10349 = vlaneseq
    %v10350 = vshrl.u32 %v10349, 7
    %v10351 = vsub.s32 %v10240, %v10350
    %v10352 = vrot.slane %v10185, %v10351
    %v10353 = vsel %vm10245, %v10352, %v10348
    %v10354 = vlaneseq
    %v10355 = vshrl.u32 %v10354, 7
    %v10356 = vsub.s32 %v10247, %v10355
    %v10357 = vrot.slane %v10186, %v10356
    %v10358 = vsel %vm10252, %v10357, %v10353
    %v10359 = vlaneseq
    %v10360 = vshrl.u32 %v10359, 7
    %v10361 = vsub.s32 %v10254, %v10360
    %v10362 = vrot.slane %v10187, %v10361
    %v10363 = vsel %vm10259, %v10362, %v10358
    %v10364 = vlaneseq
    %v10365 = vshrl.u32 %v10364, 7
    %v10366 = vsub.s32 %v10261, %v10365
    %v10367 = vrot.slane %v10188, %v10366
    %v10368 = vsel %vm10266, %v10367, %v10363
    %v10369 = vlaneseq
    %v10370 = vshrl.u32 %v10369, 7
    %v10371 = vsub.s32 %v10268, %v10370
    %v10372 = vrot.slane %v10189, %v10371
    %v10373 = vsel %vm10273, %v10372, %v10368
    %v10374 = vlaneseq
    %v10375 = vshrl.u32 %v10374, 7
    %v10376 = vsub.s32 %v10275, %v10375
    %v10377 = vrot.slane %v10190, %v10376
    %v10378 = vsel %vm10280, %v10377, %v10373
    %v10379 = vlaneseq
    %v10380 = vshrl.u32 %v10379, 7
    %v10381 = vsub.s32 %v10282, %v10380
    %v10382 = vrot.slane %v10191, %v10381
    %v10383 = vsel %vm10287, %v10382, %v10378
    %v10384 = vlaneseq
    %v10385 = vshrl.u32 %v10384, 7
    %v10386 = vsub.s32 %v10289, %v10385
    %v10387 = vrot.slane %v10192, %v10386
    %v10388 = vsel %vm10294, %v10387, %v10383
    %v10389 = vlaneseq
    %v10390 = vshrl.u32 %v10389, 7
    %v10391 = vsub.s32 %v10296, %v10390
    %v10392 = vrot.slane %v10193, %v10391
    %v10393 = vsel %vm10301, %v10392, %v10388
    %v10394 = vlaneseq
    %v10395 = vshrl.u32 %v10394, 7
    %v10396 = vsub.s32 %v10303, %v10395
    %v10397 = vrot.slane %v10194, %v10396
    %v10398 = vsel %vm10308, %v10397, %v10393
    %v10399 = vlaneseq
    %v10400 = vshrl.u32 %v10399, 7
    %v10401 = vsub.s32 %v10310, %v10400
    %v10402 = vrot.slane %v10195, %v10401
    %v10403 = vsel %vm10315, %v10402, %v10398
    %v10404 = vlaneseq
    %v10405 = vshrl.u32 %v10404, 7
    %v10406 = vsub.s32 %v10317, %v10405
    %v10407 = vrot.slane %v10196, %v10406
    %v10408 = vsel %vm10322, %v10407, %v10403
    %v10409 = vlaneseq
    %v10410 = vshrl.u32 %v10409, 7
    %v10411 = vsub.s32 %v10324, %v10410
    %v10412 = vrot.slane %v10197, %v10411
    %v10413 = vsel %vm10329, %v10412, %v10408
    %v10414 = vlaneseq
    %v10415 = vshrl.u32 %v10414, 7
    %v10416 = vsub.s32 %v10331, %v10415
    %v10417 = vrot.slane %v10198, %v10416
    %v10418 = vsel %vm10336, %v10417, %v10413
    %v10419 = vlaneseq
    %v10420 = vshrl.u32 %v10419, 7
    %v10421 = vsub.s32 %v10338, %v10420
    %v10422 = vrot.slane %v10199, %v10421
    %v10423 = vsel %vm10343, %v10422, %v10418
    %vm10424 = vcmask 1041409
    %v10425 = vsel %vm10424, %v10423, %v10344
    %v10427 = vsel %vm10201, 0.0, %v10425
    %10428 = vst [vmem:[#allocation3] sm:$0x3] %v10427
    // Predicated region
    $region50: #{style_predictor.1} parent=1 // pred_check
      _
    $region51: #{style_predictor.1} parent=1 // pred_check_branch
      %10430 = sbr.rel (0) target = $region53
    $region52: #{style_predictor.1} parent=1 // pred_region
      %s10432 = ssub.s32 32, 32
      %10433 = vsyncadd [#allocation4], %s10432
      %s10435 = sshll.u32 [#allocation3], 4
      %s10436 = int_to_ptr.vmem [resolvable:$true] %s10435
      %10438 = dma.vmem_to_hbm [thread:$0]  %s10436, 32, %s12, [#allocation4]
    $region53: #{style_predictor.1} parent=1 // pred_fallthru
      _
    // Predicated region
    $region54: #{style_predictor.1} parent=1 // pred_check
      _
    $region55: #{style_predictor.1} parent=1 // pred_check_branch
      %10440 = sbr.rel (0) target = $region57
    $region56: #{style_predictor.1} parent=1 // pred_region
      %10441 = dma.done [#allocation4], 32
    $region57: #{style_predictor.1} parent=1 // pred_fallthru
      _
    %10442 = vsyncpa [#allocation4], 1

</llo_original>
